<compile_context>
chip_gen: v6e
topology: v6e:2x2x1
jax: 0.10.0
libtpu: 0.0.40
codegen_flags: <defaults>
</compile_context>

<pallas_src>
import functools

import jax
import jax.numpy as jnp
from jax import lax
from jax.experimental import pallas as pl
from jax.experimental.pallas import tpu as pltpu

_EPS = 1e-5
_SLOPE = 0.2
_CDT = jnp.bfloat16          # GEMM operand / inter-layer activation dtype


# -----------------------------------------------------------------------------
# Kernels
# -----------------------------------------------------------------------------
def _pointwise_kernel(w_ref, p_ref, aux_ref, o_ref, *, act, rank1):
    """out = act(scale * (W @ P) + shift).  W:(Co,K) bf16, P:(K,TM) bf16, aux:(2,Co,1) f32."""
    if rank1:  # K == 1: rank-1 outer product on the VPU, skip the MXU.
        acc = w_ref[...].astype(jnp.float32) * p_ref[...].astype(jnp.float32)
    else:
        acc = jnp.dot(w_ref[...], p_ref[...], preferred_element_type=jnp.float32)
    y = acc * aux_ref[0] + aux_ref[1]
    if act == "relu":
        y = jnp.maximum(y, 0.0)
    elif act == "leaky":
        y = jnp.where(y >= 0.0, y, _SLOPE * y)
    elif act == "sigmoid":
        y = pl.reciprocal(1.0 + jnp.exp(-y), approx=True)
    o_ref[...] = y.astype(o_ref.dtype)


def _gemm_pointwise(w, p, scale, shift, act, out_dtype):
    co, k = w.shape
    m = p.shape[1]
    aux = jnp.stack([scale, shift]).astype(jnp.float32).reshape(2, co, 1)
    tm = m
    for cand in (2048, 1024, 512, 256, 128):   # lane tile: 512..2048 when possible
        if m % cand == 0:
            tm = cand
            break
    kern = functools.partial(_pointwise_kernel, act=act, rank1=(k == 1))
    return pl.pallas_call(
        kern,
        out_shape=jax.ShapeDtypeStruct((co, m), out_dtype),
        grid=(m // tm,),
        in_specs=[
            pl.BlockSpec((co, k), lambda j: (0, 0)),
            pl.BlockSpec((k, tm), lambda j: (0, j)),
            pl.BlockSpec((2, co, 1), lambda j: (0, 0, 0)),
        ],
        out_specs=pl.BlockSpec((co, tm), lambda j: (0, j)),
        compiler_params=pltpu.CompilerParams(
            dimension_semantics=("parallel",),
            vmem_limit_bytes=32 * 1024 * 1024),
    )(w, p, aux)


def _instnorm_kernel(w_ref, p_ref, aux_ref, o_ref, *, n, m):
    """Conv GEMM + per-sample InstanceNorm(affine) + LeakyReLU, batch folded into lanes."""
    acc = jnp.dot(w_ref[...], p_ref[...], preferred_element_type=jnp.float32)  # (Co, n*m)
    gamma, beta = aux_ref[0], aux_ref[1]
    pieces = []
    for g in range(n):                                   # static unroll over samples
        a = acc[:, g * m:(g + 1) * m]
        mu = jnp.mean(a, axis=1, keepdims=True)
        var = jnp.mean(jnp.square(a - mu), axis=1, keepdims=True)
        y = (a - mu) * lax.rsqrt(var + _EPS) * gamma + beta
        pieces.append(jnp.where(y >= 0.0, y, _SLOPE * y))
    out = pieces[0] if n == 1 else jnp.concatenate(pieces, axis=1)
    o_ref[...] = out.astype(o_ref.dtype)


def _gemm_instnorm(w, p, gamma, beta, n, m, out_dtype):
    co = w.shape[0]
    aux = jnp.stack([gamma, beta]).astype(jnp.float32).reshape(2, co, 1)
    kern = functools.partial(_instnorm_kernel, n=n, m=m)
    vmem = lambda: pl.BlockSpec(memory_space=pltpu.MemorySpace.VMEM)
    return pl.pallas_call(
        kern,
        out_shape=jax.ShapeDtypeStruct((co, n * m), out_dtype),
        in_specs=[vmem(), vmem(), vmem()],
        out_specs=vmem(),
    )(w, p, aux)


def _tail_kernel(w5_ref, p5_ref, aux5_ref, w6_ref, b6_ref, o_ref, *, n, m):
    """d5 (conv + InstanceNorm + LeakyReLU) fused with d6 (full-window conv + bias)."""
    acc = jnp.dot(w5_ref[...], p5_ref[...], preferred_element_type=jnp.float32)  # (Co5, n*m)
    gamma, beta = aux5_ref[0], aux5_ref[1]
    w6 = w6_ref[...]                                     # (Co5, m) f32
    vals = []
    for g in range(n):
        a = acc[:, g * m:(g + 1) * m]
        mu = jnp.mean(a, axis=1, keepdims=True)
        var = jnp.mean(jnp.square(a - mu), axis=1, keepdims=True)
        y = (a - mu) * lax.rsqrt(var + _EPS) * gamma + beta
        y = jnp.where(y >= 0.0, y, _SLOPE * y)
        s = jnp.sum(w6 * y, axis=1, keepdims=True)       # lane reduce   -> (Co5, 1)
        vals.append(jnp.sum(s, axis=0, keepdims=True))   # sublane reduce -> (1, 1)
    row = vals[0] if n == 1 else jnp.concatenate(vals, axis=1)   # (1, n)
    o_ref[...] = (row + b6_ref[...]).astype(o_ref.dtype)


# -----------------------------------------------------------------------------
# Wrapper-side layout plumbing (channel-major, no transposes between layers)
# -----------------------------------------------------------------------------
def _im2col_cm(x_cm, k, stride, pad):
    """Channel-major im2col: (C,N,H,W) -> (C*k*k, N*Ho*Wo) via a contiguous reshape."""
    c, n, h, w = x_cm.shape
    ho = (h + 2 * pad - k) // stride + 1
    wo = (w + 2 * pad - k) // stride + 1
    xp = jnp.pad(x_cm, ((0, 0), (0, 0), (pad, pad), (pad, pad)))
    taps = [xp[:, :, kh:kh + stride * (ho - 1) + 1:stride,
                     kw:kw + stride * (wo - 1) + 1:stride]
            for kh in range(k) for kw in range(k)]
    patches = jnp.stack(taps, axis=1)                    # (C, k*k, N, Ho, Wo)
    return patches.reshape(c * k * k, n * ho * wo), ho, wo


def conv2d_pointwise(x_cm, w_oihw, scale, shift, act, k, stride, pad):
    c, n = x_cm.shape[0], x_cm.shape[1]
    patches, ho, wo = _im2col_cm(x_cm, k, stride, pad)
    co = w_oihw.shape[0]
    wmat = w_oihw.reshape(co, c * k * k).astype(_CDT)
    out = _gemm_pointwise(wmat, patches, scale, shift, act, _CDT)
    return out.reshape(co, n, ho, wo)


def conv2d_instnorm(x_cm, w_oihw, gamma, beta):
    c, n = x_cm.shape[0], x_cm.shape[1]
    patches, ho, wo = _im2col_cm(x_cm, 4, 2, 1)
    co = w_oihw.shape[0]
    wmat = w_oihw.reshape(co, c * 16).astype(_CDT)
    out = _gemm_instnorm(wmat, patches, gamma, beta, n, ho * wo, _CDT)
    return out.reshape(co, n, ho, wo)


def convT_1x1_pointwise(x_cm, wt, scale, shift, act):
    """ConvTranspose2d(k=1, s=1, p=0, bias=False): K=1 -> VPU rank-1 path."""
    ci, n, h, w = x_cm.shape
    co = wt.shape[1]
    wmat = wt[:, :, 0, 0].T.astype(_CDT)                 # (Co, Ci)
    patches = x_cm.reshape(ci, n * h * w)
    out = _gemm_pointwise(wmat, patches, scale, shift, act, _CDT)
    return out.reshape(co, n, h, w)


# Output phase r (resp. c) of ConvTranspose2d(k=4,s=2,p=1) uses kernel-tap rows
# _PHASE_TAPS[r] (cols _PHASE_TAPS[c]) of the 1-padded input.
_PHASE_TAPS = ((3, 1), (2, 0))


def convT_4x4_s2_pointwise(x_cm, wt, scale, shift, act):
    """ConvTranspose2d(k=4,s=2,p=1) + scale/shift + act as ONE merged-phase GEMM."""
    ci, n, h, w = x_cm.shape
    co = wt.shape[1]
    xp = jnp.pad(x_cm, ((0, 0), (0, 0), (1, 1), (1, 1)))
    taps = [xp[:, :, oh:oh + h, ow:ow + w] for oh in range(3) for ow in range(3)]
    patches = jnp.stack(taps, axis=1).reshape(ci * 9, n * h * w)     # K = ci*9 + oh*3 + ow
    wt32 = wt.astype(jnp.float32)
    wm = jnp.zeros((2, 2, co, ci, 3, 3), jnp.float32)
    for r in range(2):
        for c in range(2):
            for dh in range(2):
                for dw in range(2):
                    wm = wm.at[r, c, :, :, r + dh, c + dw].set(
                        wt32[:, :, _PHASE_TAPS[r][dh], _PHASE_TAPS[c][dw]].T)
    wmat = wm.reshape(4 * co, ci * 9).astype(_CDT)                   # block weight
    out = _gemm_pointwise(wmat, patches, jnp.tile(scale, 4), jnp.tile(shift, 4), act, _CDT)
    out = out.reshape(2, 2, co, n, h, w)
    out = jnp.transpose(out, (2, 3, 4, 0, 5, 1))                     # (Co, N, H, r, W, c)
    return out.reshape(co, n, 2 * h, 2 * w)


def _tail_d5_d6(h_cm, w5_oihw, gamma5, beta5, w6_oihw, b6):
    """d5 + d6 fused into a single pallas_call (valid for img_size=128: d5 out is 4x4)."""
    c, n = h_cm.shape[0], h_cm.shape[1]
    patches, ho, wo = _im2col_cm(h_cm, 4, 2, 1)          # (c*16, n*ho*wo)
    co5 = w5_oihw.shape[0]
    w5 = w5_oihw.reshape(co5, c * 16).astype(_CDT)
    aux5 = jnp.stack([gamma5, beta5]).astype(jnp.float32).reshape(2, co5, 1)
    w6 = w6_oihw.reshape(co5, ho * wo).astype(jnp.float32)   # d6 window == full d5 output
    b6 = b6.reshape(1, 1).astype(jnp.float32)
    kern = functools.partial(_tail_kernel, n=n, m=ho * wo)
    vmem = lambda: pl.BlockSpec(memory_space=pltpu.MemorySpace.VMEM)
    return pl.pallas_call(
        kern,
        out_shape=jax.ShapeDtypeStruct((1, n), jnp.float32),
        in_specs=[vmem() for _ in range(5)],
        out_specs=vmem(),
    )(w5, patches, aux5, w6, b6)


# -----------------------------------------------------------------------------
# DSDiscriminator forward (embed branch -> concat -> disc branch)
# -----------------------------------------------------------------------------
def ds_discriminator_forward(params, labels, x, img_size):
    p = params
    n = labels.shape[0]

    def bn_fold(s):                                     # eval-mode BatchNorm -> scale/shift
        scale = s["g"] * lax.rsqrt(s["rv"] + _EPS)
        return scale, s["b"] - s["rm"] * scale

    # channel-major bf16 entry layout (one transpose each at the model boundary)
    lab_cm = jnp.transpose(labels, (1, 0, 2, 3)).astype(_CDT)
    x_cm = jnp.transpose(x, (1, 0, 2, 3)).astype(_CDT)

    # ---- embed branch ----
    s, b = bn_fold(p["e1_bn"])
    h = convT_1x1_pointwise(lab_cm, p["e1_w"], s, b, "relu")
    s, b = bn_fold(p["e2_bn"])
    h = convT_4x4_s2_pointwise(h, p["e2_w"], s, b, "relu")
    s, b = bn_fold(p["e3_bn"])
    h = convT_4x4_s2_pointwise(h, p["e3_w"], s, b, "relu")
    co4 = p["e4_w"].shape[1]
    h = convT_4x4_s2_pointwise(h, p["e4_w"], jnp.ones((co4,), jnp.float32),
                               p["e4_b"], "sigmoid")
    # torch .view(N, 1, img, img) is a no-op in channel-major layout when channels_img == 1
    emb = h.reshape(1, n, img_size, img_size)

    # ---- disc branch ----
    z = jnp.concatenate([x_cm, emb], axis=0)
    h = conv2d_pointwise(z, p["d1_w"], jnp.ones_like(p["d1_b"]), p["d1_b"],
                         "leaky", 4, 2, 1)
    h = conv2d_instnorm(h, p["d2_w"], p["d2_g"], p["d2_b"])
    h = conv2d_instnorm(h, p["d3_w"], p["d3_g"], p["d3_b"])
    h = conv2d_instnorm(h, p["d4_w"], p["d4_g"], p["d4_b"])
    out = _tail_d5_d6(h, p["d5_w"], p["d5_g"], p["d5_b"], p["d6_w"], p["d6_b"])  # (1, N)
    return out.reshape(n, 1, 1, 1)


# -----------------------------------------------------------------------------
# Plain-JAX reference (lax convs; operands cast to bf16 / f32 accumulation to
# mirror the kernels' MXU numerics) and parameter construction.
# -----------------------------------------------------------------------------
def _reference_forward(params, labels, x, img_size, eps=1e-5):
    p = params
    cdt = jnp.bfloat16

    def conv(h, w, b, stride, pad):
        y = lax.conv_general_dilated(h.astype(cdt), w.astype(cdt), (stride, stride),
                                     ((pad, pad), (pad, pad)),
                                     dimension_numbers=("NCHW", "OIHW", "NCHW"),
                                     preferred_element_type=jnp.float32)
        return y if b is None else y + b[None, :, None, None]

    def convT(h, wt, b, k, stride, pad):
        w = jnp.flip(wt, axis=(2, 3)).transpose(1, 0, 2, 3)
        y = lax.conv_general_dilated(h.astype(cdt), w.astype(cdt), (1, 1),
                                     ((k - 1 - pad, k - 1 - pad),) * 2,
                                     lhs_dilation=(stride, stride),
                                     dimension_numbers=("NCHW", "OIHW", "NCHW"),
                                     preferred_element_type=jnp.float32)
        return y if b is None else y + b[None, :, None, None]

    def bn(h, s):
        scale = s["g"][None, :, None, None] / jnp.sqrt(s["rv"][None, :, None, None] + eps)
        return (h - s["rm"][None, :, None, None]) * scale + s["b"][None, :, None, None]

    def instnorm(h, g, b):
        mu = jnp.mean(h, axis=(2, 3), keepdims=True)
        var = jnp.mean(jnp.square(h - mu), axis=(2, 3), keepdims=True)
        return (h - mu) / jnp.sqrt(var + eps) * g[None, :, None, None] + b[None, :, None, None]

    lrelu = lambda h: jnp.where(h >= 0.0, h, 0.2 * h)

    h = jnp.maximum(bn(convT(labels, p["e1_w"], None, 1, 1, 0), p["e1_bn"]), 0.0)
    h = jnp.maximum(bn(convT(h, p["e2_w"], None, 4, 2, 1), p["e2_bn"]), 0.0)
    h = jnp.maximum(bn(convT(h, p["e3_w"], None, 4, 2, 1), p["e3_bn"]), 0.0)
    h = jax.nn.sigmoid(convT(h, p["e4_w"], p["e4_b"], 4, 2, 1))
    emb = h.reshape(labels.shape[0], 1, img_size, img_size)
    z = jnp.concatenate([x, emb], axis=1)
    h = lrelu(conv(z, p["d1_w"], p["d1_b"], 2, 1))
    h = lrelu(instnorm(conv(h, p["d2_w"], None, 2, 1), p["d2_g"], p["d2_b"]))
    h = lrelu(instnorm(conv(h, p["d3_w"], None, 2, 1), p["d3_g"], p["d3_b"]))
    h = lrelu(instnorm(conv(h, p["d4_w"], None, 2, 1), p["d4_g"], p["d4_b"]))
    h = lrelu(instnorm(conv(h, p["d5_w"], None, 2, 1), p["d5_g"], p["d5_b"]))
    return conv(h, p["d6_w"], p["d6_b"], 2, 0)


def init_params(key, channels_img, features_d):
    """Synthetic deterministic parameters (init scheme is irrelevant to forward semantics)."""
    fd = features_d
    keys = iter(jax.random.split(key, 48))
    f32 = jnp.float32
    w = lambda shape: 0.1 * jax.random.normal(next(keys), shape, f32)
    vec = lambda c: 0.1 * jax.random.normal(next(keys), (c,), f32)
    bn = lambda c: dict(g=1.0 + vec(c), b=vec(c), rm=vec(c),
                        rv=1.0 + 0.3 * jax.random.uniform(next(keys), (c,), f32))
    p = {}
    # embed branch
    p["e1_w"] = w((channels_img, fd * 16, 1, 1)); p["e1_bn"] = bn(fd * 16)
    p["e2_w"] = w((fd * 16, fd * 8, 4, 4));       p["e2_bn"] = bn(fd * 8)
    p["e3_w"] = w((fd * 8, fd * 4, 4, 4));        p["e3_bn"] = bn(fd * 4)
    p["e4_w"] = w((fd * 4, channels_img, 4, 4));  p["e4_b"] = vec(channels_img)
    # disc branch
    p["d1_w"] = w((fd, channels_img * 2, 4, 4));  p["d1_b"] = vec(fd)
    p["d2_w"] = w((fd * 2, fd, 4, 4)); p["d2_g"] = 1.0 + vec(fd * 2); p["d2_b"] = vec(fd * 2)
    p["d3_w"] = w((fd * 4, fd * 2, 4, 4)); p["d3_g"] = 1.0 + vec(fd * 4); p["d3_b"] = vec(fd * 4)
    p["d4_w"] = w((fd * 6, fd * 4, 4, 4)); p["d4_g"] = 1.0 + vec(fd * 6); p["d4_b"] = vec(fd * 6)
    p["d5_w"] = w((fd * 8, fd * 6, 4, 4)); p["d5_g"] = 1.0 + vec(fd * 8); p["d5_b"] = vec(fd * 8)
    p["d6_w"] = w((1, fd * 8, 4, 4));             p["d6_b"] = vec(1)
    return p


if __name__ == "__main__":
    # Smallest shapes consistent with the module: the disc stack downsamples the image
    # six times (5x k4s2p1 + final k4s2p0), so img_size must be 128; labels enter at
    # img_size/8.  channels_img=1 (required for the cat/view to be consistent),
    # features_d=4, num_classes is unused by forward.
    N, channels_img, features_d, img_size = 2, 1, 4, 128

    key = jax.random.PRNGKey(0)
    kp, kl, kx = jax.random.split(key, 3)
    params = init_params(kp, channels_img, features_d)
    labels = jax.random.normal(kl, (N, channels_img, img_size // 8, img_size // 8), jnp.float32)
    x = jax.random.normal(kx, (N, channels_img, img_size, img_size), jnp.float32)

    fwd = jax.jit(functools.partial(ds_discriminator_forward, img_size=img_size))
    out = jax.block_until_ready(fwd(params, labels, x))

    ref = _reference_forward(params, labels, x, img_size)
    assert out.shape == (N, 1, 1, 1), out.shape
    assert jnp.allclose(out, ref, atol=3e-2, rtol=3e-2), (out, ref)

    print("KERNEL_OK")
</pallas_src>

<mosaic_0001>
module attributes {stable_mosaic.version = 11 : i64} {
  func.func @_pointwise_kernel(%arg0: i32, %arg1: memref<64x1xbf16, #tpu.memory_space<vmem>>, %arg2: memref<1x512xbf16, #tpu.memory_space<vmem>>, %arg3: memref<2x64x1xf32, #tpu.memory_space<vmem>>, %arg4: memref<64x512xbf16, #tpu.memory_space<vmem>>) attributes {dimension_semantics = [#tpu.dimension_semantics<parallel>], iteration_bounds = array<i64: 1>, scalar_prefetch = 0 : i64, scratch_operands = 0 : i64, tpu.core_type = #tpu.core_type<tc>, window_params = [{pipeline_mode = #tpu.pipeline_mode<synchronous>, transform_indices = @transform_0, window_bounds = array<i64: 64, 1>}, {transform_indices = @transform_1, window_bounds = array<i64: 1, 512>}, {pipeline_mode = #tpu.pipeline_mode<synchronous>, transform_indices = @transform_2, window_bounds = array<i64: 2, 64, 1>}, {transform_indices = @transform_3, window_bounds = array<i64: 64, 512>}]} {
    %c0 = arith.constant 0 : index
    %c0_0 = arith.constant 0 : index
    %0 = vector.load %arg1[%c0, %c0_0] : memref<64x1xbf16, #tpu.memory_space<vmem>>, vector<64x1xbf16>
    %1 = arith.extf %0 : vector<64x1xbf16> to vector<64x1xf32>
    %c0_1 = arith.constant 0 : index
    %c0_2 = arith.constant 0 : index
    %2 = vector.load %arg2[%c0_1, %c0_2] : memref<1x512xbf16, #tpu.memory_space<vmem>>, vector<1x512xbf16>
    %3 = arith.extf %2 : vector<1x512xbf16> to vector<1x512xf32>
    %4 = vector.broadcast %1 : vector<64x1xf32> to vector<64x512xf32>
    %5 = vector.broadcast %3 : vector<1x512xf32> to vector<64x512xf32>
    %6 = arith.mulf %4, %5 : vector<64x512xf32>
    %c0_3 = arith.constant 0 : index
    %c0_4 = arith.constant 0 : index
    %c0_5 = arith.constant 0 : index
    %7 = vector.load %arg3[%c0_3, %c0_4, %c0_5] : memref<2x64x1xf32, #tpu.memory_space<vmem>>, vector<1x64x1xf32>
    %8 = vector.shape_cast %7 : vector<1x64x1xf32> to vector<64x1xf32>
    %9 = vector.broadcast %8 : vector<64x1xf32> to vector<64x512xf32>
    %10 = arith.mulf %6, %9 : vector<64x512xf32>
    %c1 = arith.constant 1 : index
    %c0_6 = arith.constant 0 : index
    %c0_7 = arith.constant 0 : index
    %11 = vector.load %arg3[%c1, %c0_6, %c0_7] : memref<2x64x1xf32, #tpu.memory_space<vmem>>, vector<1x64x1xf32>
    %12 = vector.shape_cast %11 : vector<1x64x1xf32> to vector<64x1xf32>
    %13 = vector.broadcast %12 : vector<64x1xf32> to vector<64x512xf32>
    %14 = arith.addf %10, %13 : vector<64x512xf32>
    %cst = arith.constant 0.000000e+00 : f32
    %15 = vector.broadcast %cst : f32 to vector<64x512xf32>
    %16 = arith.maximumf %14, %15 : vector<64x512xf32>
    %17 = arith.truncf %16 : vector<64x512xf32> to vector<64x512xbf16>
    %c0_8 = arith.constant 0 : index
    %c0_9 = arith.constant 0 : index
    %18 = vector.load %arg4[%c0_8, %c0_9] : memref<64x512xbf16, #tpu.memory_space<vmem>>, vector<64x512xbf16>
    tpu.vector_store %arg4[%c0_8, %c0_9], %17 {strides = array<i32>} : memref<64x512xbf16, #tpu.memory_space<vmem>>, vector<64x512xbf16>,
    return
  }
  func.func @transform_0(%arg0: i32) -> (i32, i32) {
    %c0_i32 = arith.constant 0 : i32
    %c0_i32_0 = arith.constant 0 : i32
    %c0_i32_1 = arith.constant 0 : i32
    return %c0_i32, %c0_i32_0 : i32, i32
  }
  func.func @transform_1(%arg0: i32) -> (i32, i32) {
    %c0_i32 = arith.constant 0 : i32
    %c0_i32_0 = arith.constant 0 : i32
    return %c0_i32, %arg0 : i32, i32
  }
  func.func @transform_2(%arg0: i32) -> (i32, i32, i32) {
    %c0_i32 = arith.constant 0 : i32
    %c0_i32_0 = arith.constant 0 : i32
    %c0_i32_1 = arith.constant 0 : i32
    %c0_i32_2 = arith.constant 0 : i32
    return %c0_i32, %c0_i32_0, %c0_i32_1 : i32, i32, i32
  }
  func.func @transform_3(%arg0: i32) -> (i32, i32) {
    %c0_i32 = arith.constant 0 : i32
    %c0_i32_0 = arith.constant 0 : i32
    return %c0_i32, %arg0 : i32, i32
  }
}

module attributes {stable_mosaic.version = 11 : i64} {
  func.func @_pointwise_kernel(%arg0: i32, %arg1: memref<128x576xbf16, #tpu.memory_space<vmem>>, %arg2: memref<576x512xbf16, #tpu.memory_space<vmem>>, %arg3: memref<2x128x1xf32, #tpu.memory_space<vmem>>, %arg4: memref<128x512xbf16, #tpu.memory_space<vmem>>) attributes {dimension_semantics = [#tpu.dimension_semantics<parallel>], iteration_bounds = array<i64: 1>, scalar_prefetch = 0 : i64, scratch_operands = 0 : i64, tpu.core_type = #tpu.core_type<tc>, window_params = [{pipeline_mode = #tpu.pipeline_mode<synchronous>, transform_indices = @transform_0, window_bounds = array<i64: 128, 576>}, {transform_indices = @transform_1, window_bounds = array<i64: 576, 512>}, {pipeline_mode = #tpu.pipeline_mode<synchronous>, transform_indices = @transform_2, window_bounds = array<i64: 2, 128, 1>}, {transform_indices = @transform_3, window_bounds = array<i64: 128, 512>}]} {
    %c0 = arith.constant 0 : index
    %c0_0 = arith.constant 0 : index
    %0 = vector.load %arg1[%c0, %c0_0] : memref<128x576xbf16, #tpu.memory_space<vmem>>, vector<128x576xbf16>
    %c0_1 = arith.constant 0 : index
    %c0_2 = arith.constant 0 : index
    %1 = vector.load %arg2[%c0_1, %c0_2] : memref<576x512xbf16, #tpu.memory_space<vmem>>, vector<576x512xbf16>
    %cst = arith.constant dense<0.000000e+00> : vector<128x512xf32>
    %2 = tpu.matmul %0, %1, %cst {dimension_numbers = #tpu.dot_dimension_numbers<[1], [0], [0], [1], [0, 0, 1, 1], [], []>} : vector<128x576xbf16>, vector<576x512xbf16>, vector<128x512xf32> -> vector<128x512xf32>
    %c0_3 = arith.constant 0 : index
    %c0_4 = arith.constant 0 : index
    %c0_5 = arith.constant 0 : index
    %3 = vector.load %arg3[%c0_3, %c0_4, %c0_5] : memref<2x128x1xf32, #tpu.memory_space<vmem>>, vector<1x128x1xf32>
    %4 = vector.shape_cast %3 : vector<1x128x1xf32> to vector<128x1xf32>
    %5 = vector.broadcast %4 : vector<128x1xf32> to vector<128x512xf32>
    %6 = arith.mulf %2, %5 : vector<128x512xf32>
    %c1 = arith.constant 1 : index
    %c0_6 = arith.constant 0 : index
    %c0_7 = arith.constant 0 : index
    %7 = vector.load %arg3[%c1, %c0_6, %c0_7] : memref<2x128x1xf32, #tpu.memory_space<vmem>>, vector<1x128x1xf32>
    %8 = vector.shape_cast %7 : vector<1x128x1xf32> to vector<128x1xf32>
    %9 = vector.broadcast %8 : vector<128x1xf32> to vector<128x512xf32>
    %10 = arith.addf %6, %9 : vector<128x512xf32>
    %cst_8 = arith.constant 0.000000e+00 : f32
    %11 = vector.broadcast %cst_8 : f32 to vector<128x512xf32>
    %12 = arith.maximumf %10, %11 : vector<128x512xf32>
    %13 = arith.truncf %12 : vector<128x512xf32> to vector<128x512xbf16>
    %c0_9 = arith.constant 0 : index
    %c0_10 = arith.constant 0 : index
    %14 = vector.load %arg4[%c0_9, %c0_10] : memref<128x512xbf16, #tpu.memory_space<vmem>>, vector<128x512xbf16>
    tpu.vector_store %arg4[%c0_9, %c0_10], %13 {strides = array<i32>} : memref<128x512xbf16, #tpu.memory_space<vmem>>, vector<128x512xbf16>,
    return
  }
  func.func @transform_0(%arg0: i32) -> (i32, i32) {
    %c0_i32 = arith.constant 0 : i32
    %c0_i32_0 = arith.constant 0 : i32
    %c0_i32_1 = arith.constant 0 : i32
    return %c0_i32, %c0_i32_0 : i32, i32
  }
  func.func @transform_1(%arg0: i32) -> (i32, i32) {
    %c0_i32 = arith.constant 0 : i32
    %c0_i32_0 = arith.constant 0 : i32
    return %c0_i32, %arg0 : i32, i32
  }
  func.func @transform_2(%arg0: i32) -> (i32, i32, i32) {
    %c0_i32 = arith.constant 0 : i32
    %c0_i32_0 = arith.constant 0 : i32
    %c0_i32_1 = arith.constant 0 : i32
    %c0_i32_2 = arith.constant 0 : i32
    return %c0_i32, %c0_i32_0, %c0_i32_1 : i32, i32, i32
  }
  func.func @transform_3(%arg0: i32) -> (i32, i32) {
    %c0_i32 = arith.constant 0 : i32
    %c0_i32_0 = arith.constant 0 : i32
    return %c0_i32, %arg0 : i32, i32
  }
}

module attributes {stable_mosaic.version = 11 : i64} {
  func.func @_pointwise_kernel(%arg0: i32, %arg1: memref<64x288xbf16, #tpu.memory_space<vmem>>, %arg2: memref<288x2048xbf16, #tpu.memory_space<vmem>>, %arg3: memref<2x64x1xf32, #tpu.memory_space<vmem>>, %arg4: memref<64x2048xbf16, #tpu.memory_space<vmem>>) attributes {dimension_semantics = [#tpu.dimension_semantics<parallel>], iteration_bounds = array<i64: 1>, scalar_prefetch = 0 : i64, scratch_operands = 0 : i64, tpu.core_type = #tpu.core_type<tc>, window_params = [{pipeline_mode = #tpu.pipeline_mode<synchronous>, transform_indices = @transform_0, window_bounds = array<i64: 64, 288>}, {transform_indices = @transform_1, window_bounds = array<i64: 288, 2048>}, {pipeline_mode = #tpu.pipeline_mode<synchronous>, transform_indices = @transform_2, window_bounds = array<i64: 2, 64, 1>}, {transform_indices = @transform_3, window_bounds = array<i64: 64, 2048>}]} {
    %c0 = arith.constant 0 : index
    %c0_0 = arith.constant 0 : index
    %0 = vector.load %arg1[%c0, %c0_0] : memref<64x288xbf16, #tpu.memory_space<vmem>>, vector<64x288xbf16>
    %c0_1 = arith.constant 0 : index
    %c0_2 = arith.constant 0 : index
    %1 = vector.load %arg2[%c0_1, %c0_2] : memref<288x2048xbf16, #tpu.memory_space<vmem>>, vector<288x2048xbf16>
    %cst = arith.constant dense<0.000000e+00> : vector<64x2048xf32>
    %2 = tpu.matmul %0, %1, %cst {dimension_numbers = #tpu.dot_dimension_numbers<[1], [0], [0], [1], [0, 0, 1, 1], [], []>} : vector<64x288xbf16>, vector<288x2048xbf16>, vector<64x2048xf32> -> vector<64x2048xf32>
    %c0_3 = arith.constant 0 : index
    %c0_4 = arith.constant 0 : index
    %c0_5 = arith.constant 0 : index
    %3 = vector.load %arg3[%c0_3, %c0_4, %c0_5] : memref<2x64x1xf32, #tpu.memory_space<vmem>>, vector<1x64x1xf32>
    %4 = vector.shape_cast %3 : vector<1x64x1xf32> to vector<64x1xf32>
    %5 = vector.broadcast %4 : vector<64x1xf32> to vector<64x2048xf32>
    %6 = arith.mulf %2, %5 : vector<64x2048xf32>
    %c1 = arith.constant 1 : index
    %c0_6 = arith.constant 0 : index
    %c0_7 = arith.constant 0 : index
    %7 = vector.load %arg3[%c1, %c0_6, %c0_7] : memref<2x64x1xf32, #tpu.memory_space<vmem>>, vector<1x64x1xf32>
    %8 = vector.shape_cast %7 : vector<1x64x1xf32> to vector<64x1xf32>
    %9 = vector.broadcast %8 : vector<64x1xf32> to vector<64x2048xf32>
    %10 = arith.addf %6, %9 : vector<64x2048xf32>
    %cst_8 = arith.constant 0.000000e+00 : f32
    %11 = vector.broadcast %cst_8 : f32 to vector<64x2048xf32>
    %12 = arith.maximumf %10, %11 : vector<64x2048xf32>
    %13 = arith.truncf %12 : vector<64x2048xf32> to vector<64x2048xbf16>
    %c0_9 = arith.constant 0 : index
    %c0_10 = arith.constant 0 : index
    %14 = vector.load %arg4[%c0_9, %c0_10] : memref<64x2048xbf16, #tpu.memory_space<vmem>>, vector<64x2048xbf16>
    tpu.vector_store %arg4[%c0_9, %c0_10], %13 {strides = array<i32>} : memref<64x2048xbf16, #tpu.memory_space<vmem>>, vector<64x2048xbf16>,
    return
  }
  func.func @transform_0(%arg0: i32) -> (i32, i32) {
    %c0_i32 = arith.constant 0 : i32
    %c0_i32_0 = arith.constant 0 : i32
    %c0_i32_1 = arith.constant 0 : i32
    return %c0_i32, %c0_i32_0 : i32, i32
  }
  func.func @transform_1(%arg0: i32) -> (i32, i32) {
    %c0_i32 = arith.constant 0 : i32
    %c0_i32_0 = arith.constant 0 : i32
    return %c0_i32, %arg0 : i32, i32
  }
  func.func @transform_2(%arg0: i32) -> (i32, i32, i32) {
    %c0_i32 = arith.constant 0 : i32
    %c0_i32_0 = arith.constant 0 : i32
    %c0_i32_1 = arith.constant 0 : i32
    %c0_i32_2 = arith.constant 0 : i32
    return %c0_i32, %c0_i32_0, %c0_i32_1 : i32, i32, i32
  }
  func.func @transform_3(%arg0: i32) -> (i32, i32) {
    %c0_i32 = arith.constant 0 : i32
    %c0_i32_0 = arith.constant 0 : i32
    return %c0_i32, %arg0 : i32, i32
  }
}

module attributes {stable_mosaic.version = 11 : i64} {
  func.func @_pointwise_kernel(%arg0: i32, %arg1: memref<4x144xbf16, #tpu.memory_space<vmem>>, %arg2: memref<144x2048xbf16, #tpu.memory_space<vmem>>, %arg3: memref<2x4x1xf32, #tpu.memory_space<vmem>>, %arg4: memref<4x2048xbf16, #tpu.memory_space<vmem>>) attributes {dimension_semantics = [#tpu.dimension_semantics<parallel>], iteration_bounds = array<i64: 4>, scalar_prefetch = 0 : i64, scratch_operands = 0 : i64, tpu.core_type = #tpu.core_type<tc>, window_params = [{pipeline_mode = #tpu.pipeline_mode<synchronous>, transform_indices = @transform_0, window_bounds = array<i64: 4, 144>}, {transform_indices = @transform_1, window_bounds = array<i64: 144, 2048>}, {pipeline_mode = #tpu.pipeline_mode<synchronous>, transform_indices = @transform_2, window_bounds = array<i64: 2, 4, 1>}, {transform_indices = @transform_3, window_bounds = array<i64: 4, 2048>}]} {
    %c0 = arith.constant 0 : index
    %c0_0 = arith.constant 0 : index
    %0 = vector.load %arg1[%c0, %c0_0] : memref<4x144xbf16, #tpu.memory_space<vmem>>, vector<4x144xbf16>
    %c0_1 = arith.constant 0 : index
    %c0_2 = arith.constant 0 : index
    %1 = vector.load %arg2[%c0_1, %c0_2] : memref<144x2048xbf16, #tpu.memory_space<vmem>>, vector<144x2048xbf16>
    %cst = arith.constant dense<0.000000e+00> : vector<4x2048xf32>
    %2 = tpu.matmul %0, %1, %cst {dimension_numbers = #tpu.dot_dimension_numbers<[1], [0], [0], [1], [0, 0, 1, 1], [], []>} : vector<4x144xbf16>, vector<144x2048xbf16>, vector<4x2048xf32> -> vector<4x2048xf32>
    %c0_3 = arith.constant 0 : index
    %c0_4 = arith.constant 0 : index
    %c0_5 = arith.constant 0 : index
    %3 = vector.load %arg3[%c0_3, %c0_4, %c0_5] : memref<2x4x1xf32, #tpu.memory_space<vmem>>, vector<1x4x1xf32>
    %4 = vector.shape_cast %3 : vector<1x4x1xf32> to vector<4x1xf32>
    %5 = vector.broadcast %4 : vector<4x1xf32> to vector<4x2048xf32>
    %6 = arith.mulf %2, %5 : vector<4x2048xf32>
    %c1 = arith.constant 1 : index
    %c0_6 = arith.constant 0 : index
    %c0_7 = arith.constant 0 : index
    %7 = vector.load %arg3[%c1, %c0_6, %c0_7] : memref<2x4x1xf32, #tpu.memory_space<vmem>>, vector<1x4x1xf32>
    %8 = vector.shape_cast %7 : vector<1x4x1xf32> to vector<4x1xf32>
    %9 = vector.broadcast %8 : vector<4x1xf32> to vector<4x2048xf32>
    %10 = arith.addf %6, %9 : vector<4x2048xf32>
    %cst_8 = arith.constant 0.000000e+00 : f32
    %11 = vector.broadcast %cst_8 : f32 to vector<4x2048xf32>
    %12 = arith.subf %11, %10 : vector<4x2048xf32>
    %13 = math.exp %12 : vector<4x2048xf32>
    %cst_9 = arith.constant 1.000000e+00 : f32
    %14 = vector.broadcast %cst_9 : f32 to vector<4x2048xf32>
    %15 = arith.addf %14, %13 : vector<4x2048xf32>
    %16 = tpu.reciprocal %15 {approx = true} : vector<4x2048xf32> -> vector<4x2048xf32>
    %17 = arith.truncf %16 : vector<4x2048xf32> to vector<4x2048xbf16>
    %c0_10 = arith.constant 0 : index
    %c0_11 = arith.constant 0 : index
    %18 = vector.load %arg4[%c0_10, %c0_11] : memref<4x2048xbf16, #tpu.memory_space<vmem>>, vector<4x2048xbf16>
    tpu.vector_store %arg4[%c0_10, %c0_11], %17 {strides = array<i32>} : memref<4x2048xbf16, #tpu.memory_space<vmem>>, vector<4x2048xbf16>,
    return
  }
  func.func @transform_0(%arg0: i32) -> (i32, i32) {
    %c0_i32 = arith.constant 0 : i32
    %c0_i32_0 = arith.constant 0 : i32
    %c0_i32_1 = arith.constant 0 : i32
    return %c0_i32, %c0_i32_0 : i32, i32
  }
  func.func @transform_1(%arg0: i32) -> (i32, i32) {
    %c0_i32 = arith.constant 0 : i32
    %c0_i32_0 = arith.constant 0 : i32
    return %c0_i32, %arg0 : i32, i32
  }
  func.func @transform_2(%arg0: i32) -> (i32, i32, i32) {
    %c0_i32 = arith.constant 0 : i32
    %c0_i32_0 = arith.constant 0 : i32
    %c0_i32_1 = arith.constant 0 : i32
    %c0_i32_2 = arith.constant 0 : i32
    return %c0_i32, %c0_i32_0, %c0_i32_1 : i32, i32, i32
  }
  func.func @transform_3(%arg0: i32) -> (i32, i32) {
    %c0_i32 = arith.constant 0 : i32
    %c0_i32_0 = arith.constant 0 : i32
    return %c0_i32, %arg0 : i32, i32
  }
}

module attributes {stable_mosaic.version = 11 : i64} {
  func.func @_pointwise_kernel(%arg0: i32, %arg1: memref<4x32xbf16, #tpu.memory_space<vmem>>, %arg2: memref<32x2048xbf16, #tpu.memory_space<vmem>>, %arg3: memref<2x4x1xf32, #tpu.memory_space<vmem>>, %arg4: memref<4x2048xbf16, #tpu.memory_space<vmem>>) attributes {dimension_semantics = [#tpu.dimension_semantics<parallel>], iteration_bounds = array<i64: 4>, scalar_prefetch = 0 : i64, scratch_operands = 0 : i64, tpu.core_type = #tpu.core_type<tc>, window_params = [{pipeline_mode = #tpu.pipeline_mode<synchronous>, transform_indices = @transform_0, window_bounds = array<i64: 4, 32>}, {transform_indices = @transform_1, window_bounds = array<i64: 32, 2048>}, {pipeline_mode = #tpu.pipeline_mode<synchronous>, transform_indices = @transform_2, window_bounds = array<i64: 2, 4, 1>}, {transform_indices = @transform_3, window_bounds = array<i64: 4, 2048>}]} {
    %c0 = arith.constant 0 : index
    %c0_0 = arith.constant 0 : index
    %0 = vector.load %arg1[%c0, %c0_0] : memref<4x32xbf16, #tpu.memory_space<vmem>>, vector<4x32xbf16>
    %c0_1 = arith.constant 0 : index
    %c0_2 = arith.constant 0 : index
    %1 = vector.load %arg2[%c0_1, %c0_2] : memref<32x2048xbf16, #tpu.memory_space<vmem>>, vector<32x2048xbf16>
    %cst = arith.constant dense<0.000000e+00> : vector<4x2048xf32>
    %2 = tpu.matmul %0, %1, %cst {dimension_numbers = #tpu.dot_dimension_numbers<[1], [0], [0], [1], [0, 0, 1, 1], [], []>} : vector<4x32xbf16>, vector<32x2048xbf16>, vector<4x2048xf32> -> vector<4x2048xf32>
    %c0_3 = arith.constant 0 : index
    %c0_4 = arith.constant 0 : index
    %c0_5 = arith.constant 0 : index
    %3 = vector.load %arg3[%c0_3, %c0_4, %c0_5] : memref<2x4x1xf32, #tpu.memory_space<vmem>>, vector<1x4x1xf32>
    %4 = vector.shape_cast %3 : vector<1x4x1xf32> to vector<4x1xf32>
    %5 = vector.broadcast %4 : vector<4x1xf32> to vector<4x2048xf32>
    %6 = arith.mulf %2, %5 : vector<4x2048xf32>
    %c1 = arith.constant 1 : index
    %c0_6 = arith.constant 0 : index
    %c0_7 = arith.constant 0 : index
    %7 = vector.load %arg3[%c1, %c0_6, %c0_7] : memref<2x4x1xf32, #tpu.memory_space<vmem>>, vector<1x4x1xf32>
    %8 = vector.shape_cast %7 : vector<1x4x1xf32> to vector<4x1xf32>
    %9 = vector.broadcast %8 : vector<4x1xf32> to vector<4x2048xf32>
    %10 = arith.addf %6, %9 : vector<4x2048xf32>
    %cst_8 = arith.constant 0.000000e+00 : f32
    %11 = vector.broadcast %cst_8 : f32 to vector<4x2048xf32>
    %12 = arith.cmpf oge, %10, %11 : vector<4x2048xf32>
    %cst_9 = arith.constant 2.000000e-01 : f32
    %13 = vector.broadcast %cst_9 : f32 to vector<4x2048xf32>
    %14 = arith.mulf %13, %10 : vector<4x2048xf32>
    %15 = arith.select %12, %10, %14 : vector<4x2048xi1>, vector<4x2048xf32>
    %16 = arith.truncf %15 : vector<4x2048xf32> to vector<4x2048xbf16>
    %c0_10 = arith.constant 0 : index
    %c0_11 = arith.constant 0 : index
    %17 = vector.load %arg4[%c0_10, %c0_11] : memref<4x2048xbf16, #tpu.memory_space<vmem>>, vector<4x2048xbf16>
    tpu.vector_store %arg4[%c0_10, %c0_11], %16 {strides = array<i32>} : memref<4x2048xbf16, #tpu.memory_space<vmem>>, vector<4x2048xbf16>,
    return
  }
  func.func @transform_0(%arg0: i32) -> (i32, i32) {
    %c0_i32 = arith.constant 0 : i32
    %c0_i32_0 = arith.constant 0 : i32
    %c0_i32_1 = arith.constant 0 : i32
    return %c0_i32, %c0_i32_0 : i32, i32
  }
  func.func @transform_1(%arg0: i32) -> (i32, i32) {
    %c0_i32 = arith.constant 0 : i32
    %c0_i32_0 = arith.constant 0 : i32
    return %c0_i32, %arg0 : i32, i32
  }
  func.func @transform_2(%arg0: i32) -> (i32, i32, i32) {
    %c0_i32 = arith.constant 0 : i32
    %c0_i32_0 = arith.constant 0 : i32
    %c0_i32_1 = arith.constant 0 : i32
    %c0_i32_2 = arith.constant 0 : i32
    return %c0_i32, %c0_i32_0, %c0_i32_1 : i32, i32, i32
  }
  func.func @transform_3(%arg0: i32) -> (i32, i32) {
    %c0_i32 = arith.constant 0 : i32
    %c0_i32_0 = arith.constant 0 : i32
    return %c0_i32, %arg0 : i32, i32
  }
}

module attributes {stable_mosaic.version = 11 : i64} {
  func.func @_instnorm_kernel(%arg0: memref<8x64xbf16, #tpu.memory_space<vmem>>, %arg1: memref<64x2048xbf16, #tpu.memory_space<vmem>>, %arg2: memref<2x8x1xf32, #tpu.memory_space<vmem>>, %arg3: memref<8x2048xbf16, #tpu.memory_space<vmem>>) attributes {dimension_semantics = [], scalar_prefetch = 0 : i64, scratch_operands = 0 : i64, tpu.core_type = #tpu.core_type<tc>} {
    %c0 = arith.constant 0 : index
    %c0_0 = arith.constant 0 : index
    %0 = vector.load %arg0[%c0, %c0_0] : memref<8x64xbf16, #tpu.memory_space<vmem>>, vector<8x64xbf16>
    %c0_1 = arith.constant 0 : index
    %c0_2 = arith.constant 0 : index
    %1 = vector.load %arg1[%c0_1, %c0_2] : memref<64x2048xbf16, #tpu.memory_space<vmem>>, vector<64x2048xbf16>
    %cst = arith.constant dense<0.000000e+00> : vector<8x2048xf32>
    %2 = tpu.matmul %0, %1, %cst {dimension_numbers = #tpu.dot_dimension_numbers<[1], [0], [0], [1], [0, 0, 1, 1], [], []>} : vector<8x64xbf16>, vector<64x2048xbf16>, vector<8x2048xf32> -> vector<8x2048xf32>
    %c0_3 = arith.constant 0 : index
    %c0_4 = arith.constant 0 : index
    %c0_5 = arith.constant 0 : index
    %3 = vector.load %arg2[%c0_3, %c0_4, %c0_5] : memref<2x8x1xf32, #tpu.memory_space<vmem>>, vector<1x8x1xf32>
    %4 = vector.shape_cast %3 : vector<1x8x1xf32> to vector<8x1xf32>
    %c1 = arith.constant 1 : index
    %c0_6 = arith.constant 0 : index
    %c0_7 = arith.constant 0 : index
    %5 = vector.load %arg2[%c1, %c0_6, %c0_7] : memref<2x8x1xf32, #tpu.memory_space<vmem>>, vector<1x8x1xf32>
    %6 = vector.shape_cast %5 : vector<1x8x1xf32> to vector<8x1xf32>
    %7 = vector.extract_strided_slice %2 {offsets = [0, 0], sizes = [8, 1024], strides = [1, 1]} : vector<8x2048xf32> to vector<8x1024xf32>
    %cst_8 = arith.constant dense<0.000000e+00> : vector<8xf32>
    %8 = vector.multi_reduction <add>, %7, %cst_8 [1] : vector<8x1024xf32> to vector<8xf32>
    %9 = vector.shape_cast %8 : vector<8xf32> to vector<8x1xf32>
    %cst_9 = arith.constant 1.024000e+03 : f32
    %10 = vector.broadcast %cst_9 : f32 to vector<8x1xf32>
    %11 = arith.divf %9, %10 : vector<8x1xf32>
    %12 = vector.broadcast %11 : vector<8x1xf32> to vector<8x1024xf32>
    %13 = arith.subf %7, %12 : vector<8x1024xf32>
    %14 = arith.mulf %13, %13 : vector<8x1024xf32>
    %cst_10 = arith.constant dense<0.000000e+00> : vector<8xf32>
    %15 = vector.multi_reduction <add>, %14, %cst_10 [1] : vector<8x1024xf32> to vector<8xf32>
    %16 = vector.shape_cast %15 : vector<8xf32> to vector<8x1xf32>
    %cst_11 = arith.constant 1.024000e+03 : f32
    %17 = vector.broadcast %cst_11 : f32 to vector<8x1xf32>
    %18 = arith.divf %16, %17 : vector<8x1xf32>
    %19 = vector.broadcast %11 : vector<8x1xf32> to vector<8x1024xf32>
    %20 = arith.subf %7, %19 : vector<8x1024xf32>
    %cst_12 = arith.constant 9.99999974E-6 : f32
    %21 = vector.broadcast %cst_12 : f32 to vector<8x1xf32>
    %22 = arith.addf %18, %21 : vector<8x1xf32>
    %23 = math.rsqrt %22 : vector<8x1xf32>
    %24 = vector.broadcast %23 : vector<8x1xf32> to vector<8x1024xf32>
    %25 = arith.mulf %20, %24 : vector<8x1024xf32>
    %26 = vector.broadcast %4 : vector<8x1xf32> to vector<8x1024xf32>
    %27 = arith.mulf %25, %26 : vector<8x1024xf32>
    %28 = vector.broadcast %6 : vector<8x1xf32> to vector<8x1024xf32>
    %29 = arith.addf %27, %28 : vector<8x1024xf32>
    %cst_13 = arith.constant 0.000000e+00 : f32
    %30 = vector.broadcast %cst_13 : f32 to vector<8x1024xf32>
    %31 = arith.cmpf oge, %29, %30 : vector<8x1024xf32>
    %cst_14 = arith.constant 2.000000e-01 : f32
    %32 = vector.broadcast %cst_14 : f32 to vector<8x1024xf32>
    %33 = arith.mulf %32, %29 : vector<8x1024xf32>
    %34 = arith.select %31, %29, %33 : vector<8x1024xi1>, vector<8x1024xf32>
    %35 = vector.extract_strided_slice %2 {offsets = [0, 1024], sizes = [8, 1024], strides = [1, 1]} : vector<8x2048xf32> to vector<8x1024xf32>
    %cst_15 = arith.constant dense<0.000000e+00> : vector<8xf32>
    %36 = vector.multi_reduction <add>, %35, %cst_15 [1] : vector<8x1024xf32> to vector<8xf32>
    %37 = vector.shape_cast %36 : vector<8xf32> to vector<8x1xf32>
    %cst_16 = arith.constant 1.024000e+03 : f32
    %38 = vector.broadcast %cst_16 : f32 to vector<8x1xf32>
    %39 = arith.divf %37, %38 : vector<8x1xf32>
    %40 = vector.broadcast %39 : vector<8x1xf32> to vector<8x1024xf32>
    %41 = arith.subf %35, %40 : vector<8x1024xf32>
    %42 = arith.mulf %41, %41 : vector<8x1024xf32>
    %cst_17 = arith.constant dense<0.000000e+00> : vector<8xf32>
    %43 = vector.multi_reduction <add>, %42, %cst_17 [1] : vector<8x1024xf32> to vector<8xf32>
    %44 = vector.shape_cast %43 : vector<8xf32> to vector<8x1xf32>
    %cst_18 = arith.constant 1.024000e+03 : f32
    %45 = vector.broadcast %cst_18 : f32 to vector<8x1xf32>
    %46 = arith.divf %44, %45 : vector<8x1xf32>
    %47 = vector.broadcast %39 : vector<8x1xf32> to vector<8x1024xf32>
    %48 = arith.subf %35, %47 : vector<8x1024xf32>
    %cst_19 = arith.constant 9.99999974E-6 : f32
    %49 = vector.broadcast %cst_19 : f32 to vector<8x1xf32>
    %50 = arith.addf %46, %49 : vector<8x1xf32>
    %51 = math.rsqrt %50 : vector<8x1xf32>
    %52 = vector.broadcast %51 : vector<8x1xf32> to vector<8x1024xf32>
    %53 = arith.mulf %48, %52 : vector<8x1024xf32>
    %54 = vector.broadcast %4 : vector<8x1xf32> to vector<8x1024xf32>
    %55 = arith.mulf %53, %54 : vector<8x1024xf32>
    %56 = vector.broadcast %6 : vector<8x1xf32> to vector<8x1024xf32>
    %57 = arith.addf %55, %56 : vector<8x1024xf32>
    %cst_20 = arith.constant 0.000000e+00 : f32
    %58 = vector.broadcast %cst_20 : f32 to vector<8x1024xf32>
    %59 = arith.cmpf oge, %57, %58 : vector<8x1024xf32>
    %cst_21 = arith.constant 2.000000e-01 : f32
    %60 = vector.broadcast %cst_21 : f32 to vector<8x1024xf32>
    %61 = arith.mulf %60, %57 : vector<8x1024xf32>
    %62 = arith.select %59, %57, %61 : vector<8x1024xi1>, vector<8x1024xf32>
    %63 = tpu.concatenate %34, %62 in 1 : vector<8x1024xf32>, vector<8x1024xf32> -> vector<8x2048xf32>
    %64 = arith.truncf %63 : vector<8x2048xf32> to vector<8x2048xbf16>
    %c0_22 = arith.constant 0 : index
    %c0_23 = arith.constant 0 : index
    %65 = vector.load %arg3[%c0_22, %c0_23] : memref<8x2048xbf16, #tpu.memory_space<vmem>>, vector<8x2048xbf16>
    tpu.vector_store %arg3[%c0_22, %c0_23], %64 {strides = array<i32>} : memref<8x2048xbf16, #tpu.memory_space<vmem>>, vector<8x2048xbf16>,
    return
  }
}

module attributes {stable_mosaic.version = 11 : i64} {
  func.func @_instnorm_kernel(%arg0: memref<16x128xbf16, #tpu.memory_space<vmem>>, %arg1: memref<128x512xbf16, #tpu.memory_space<vmem>>, %arg2: memref<2x16x1xf32, #tpu.memory_space<vmem>>, %arg3: memref<16x512xbf16, #tpu.memory_space<vmem>>) attributes {dimension_semantics = [], scalar_prefetch = 0 : i64, scratch_operands = 0 : i64, tpu.core_type = #tpu.core_type<tc>} {
    %c0 = arith.constant 0 : index
    %c0_0 = arith.constant 0 : index
    %0 = vector.load %arg0[%c0, %c0_0] : memref<16x128xbf16, #tpu.memory_space<vmem>>, vector<16x128xbf16>
    %c0_1 = arith.constant 0 : index
    %c0_2 = arith.constant 0 : index
    %1 = vector.load %arg1[%c0_1, %c0_2] : memref<128x512xbf16, #tpu.memory_space<vmem>>, vector<128x512xbf16>
    %cst = arith.constant dense<0.000000e+00> : vector<16x512xf32>
    %2 = tpu.matmul %0, %1, %cst {dimension_numbers = #tpu.dot_dimension_numbers<[1], [0], [0], [1], [0, 0, 1, 1], [], []>} : vector<16x128xbf16>, vector<128x512xbf16>, vector<16x512xf32> -> vector<16x512xf32>
    %c0_3 = arith.constant 0 : index
    %c0_4 = arith.constant 0 : index
    %c0_5 = arith.constant 0 : index
    %3 = vector.load %arg2[%c0_3, %c0_4, %c0_5] : memref<2x16x1xf32, #tpu.memory_space<vmem>>, vector<1x16x1xf32>
    %4 = vector.shape_cast %3 : vector<1x16x1xf32> to vector<16x1xf32>
    %c1 = arith.constant 1 : index
    %c0_6 = arith.constant 0 : index
    %c0_7 = arith.constant 0 : index
    %5 = vector.load %arg2[%c1, %c0_6, %c0_7] : memref<2x16x1xf32, #tpu.memory_space<vmem>>, vector<1x16x1xf32>
    %6 = vector.shape_cast %5 : vector<1x16x1xf32> to vector<16x1xf32>
    %7 = vector.extract_strided_slice %2 {offsets = [0, 0], sizes = [16, 256], strides = [1, 1]} : vector<16x512xf32> to vector<16x256xf32>
    %cst_8 = arith.constant dense<0.000000e+00> : vector<16xf32>
    %8 = vector.multi_reduction <add>, %7, %cst_8 [1] : vector<16x256xf32> to vector<16xf32>
    %9 = vector.shape_cast %8 : vector<16xf32> to vector<16x1xf32>
    %cst_9 = arith.constant 2.560000e+02 : f32
    %10 = vector.broadcast %cst_9 : f32 to vector<16x1xf32>
    %11 = arith.divf %9, %10 : vector<16x1xf32>
    %12 = vector.broadcast %11 : vector<16x1xf32> to vector<16x256xf32>
    %13 = arith.subf %7, %12 : vector<16x256xf32>
    %14 = arith.mulf %13, %13 : vector<16x256xf32>
    %cst_10 = arith.constant dense<0.000000e+00> : vector<16xf32>
    %15 = vector.multi_reduction <add>, %14, %cst_10 [1] : vector<16x256xf32> to vector<16xf32>
    %16 = vector.shape_cast %15 : vector<16xf32> to vector<16x1xf32>
    %cst_11 = arith.constant 2.560000e+02 : f32
    %17 = vector.broadcast %cst_11 : f32 to vector<16x1xf32>
    %18 = arith.divf %16, %17 : vector<16x1xf32>
    %19 = vector.broadcast %11 : vector<16x1xf32> to vector<16x256xf32>
    %20 = arith.subf %7, %19 : vector<16x256xf32>
    %cst_12 = arith.constant 9.99999974E-6 : f32
    %21 = vector.broadcast %cst_12 : f32 to vector<16x1xf32>
    %22 = arith.addf %18, %21 : vector<16x1xf32>
    %23 = math.rsqrt %22 : vector<16x1xf32>
    %24 = vector.broadcast %23 : vector<16x1xf32> to vector<16x256xf32>
    %25 = arith.mulf %20, %24 : vector<16x256xf32>
    %26 = vector.broadcast %4 : vector<16x1xf32> to vector<16x256xf32>
    %27 = arith.mulf %25, %26 : vector<16x256xf32>
    %28 = vector.broadcast %6 : vector<16x1xf32> to vector<16x256xf32>
    %29 = arith.addf %27, %28 : vector<16x256xf32>
    %cst_13 = arith.constant 0.000000e+00 : f32
    %30 = vector.broadcast %cst_13 : f32 to vector<16x256xf32>
    %31 = arith.cmpf oge, %29, %30 : vector<16x256xf32>
    %cst_14 = arith.constant 2.000000e-01 : f32
    %32 = vector.broadcast %cst_14 : f32 to vector<16x256xf32>
    %33 = arith.mulf %32, %29 : vector<16x256xf32>
    %34 = arith.select %31, %29, %33 : vector<16x256xi1>, vector<16x256xf32>
    %35 = vector.extract_strided_slice %2 {offsets = [0, 256], sizes = [16, 256], strides = [1, 1]} : vector<16x512xf32> to vector<16x256xf32>
    %cst_15 = arith.constant dense<0.000000e+00> : vector<16xf32>
    %36 = vector.multi_reduction <add>, %35, %cst_15 [1] : vector<16x256xf32> to vector<16xf32>
    %37 = vector.shape_cast %36 : vector<16xf32> to vector<16x1xf32>
    %cst_16 = arith.constant 2.560000e+02 : f32
    %38 = vector.broadcast %cst_16 : f32 to vector<16x1xf32>
    %39 = arith.divf %37, %38 : vector<16x1xf32>
    %40 = vector.broadcast %39 : vector<16x1xf32> to vector<16x256xf32>
    %41 = arith.subf %35, %40 : vector<16x256xf32>
    %42 = arith.mulf %41, %41 : vector<16x256xf32>
    %cst_17 = arith.constant dense<0.000000e+00> : vector<16xf32>
    %43 = vector.multi_reduction <add>, %42, %cst_17 [1] : vector<16x256xf32> to vector<16xf32>
    %44 = vector.shape_cast %43 : vector<16xf32> to vector<16x1xf32>
    %cst_18 = arith.constant 2.560000e+02 : f32
    %45 = vector.broadcast %cst_18 : f32 to vector<16x1xf32>
    %46 = arith.divf %44, %45 : vector<16x1xf32>
    %47 = vector.broadcast %39 : vector<16x1xf32> to vector<16x256xf32>
    %48 = arith.subf %35, %47 : vector<16x256xf32>
    %cst_19 = arith.constant 9.99999974E-6 : f32
    %49 = vector.broadcast %cst_19 : f32 to vector<16x1xf32>
    %50 = arith.addf %46, %49 : vector<16x1xf32>
    %51 = math.rsqrt %50 : vector<16x1xf32>
    %52 = vector.broadcast %51 : vector<16x1xf32> to vector<16x256xf32>
    %53 = arith.mulf %48, %52 : vector<16x256xf32>
    %54 = vector.broadcast %4 : vector<16x1xf32> to vector<16x256xf32>
    %55 = arith.mulf %53, %54 : vector<16x256xf32>
    %56 = vector.broadcast %6 : vector<16x1xf32> to vector<16x256xf32>
    %57 = arith.addf %55, %56 : vector<16x256xf32>
    %cst_20 = arith.constant 0.000000e+00 : f32
    %58 = vector.broadcast %cst_20 : f32 to vector<16x256xf32>
    %59 = arith.cmpf oge, %57, %58 : vector<16x256xf32>
    %cst_21 = arith.constant 2.000000e-01 : f32
    %60 = vector.broadcast %cst_21 : f32 to vector<16x256xf32>
    %61 = arith.mulf %60, %57 : vector<16x256xf32>
    %62 = arith.select %59, %57, %61 : vector<16x256xi1>, vector<16x256xf32>
    %63 = tpu.concatenate %34, %62 in 1 : vector<16x256xf32>, vector<16x256xf32> -> vector<16x512xf32>
    %64 = arith.truncf %63 : vector<16x512xf32> to vector<16x512xbf16>
    %c0_22 = arith.constant 0 : index
    %c0_23 = arith.constant 0 : index
    %65 = vector.load %arg3[%c0_22, %c0_23] : memref<16x512xbf16, #tpu.memory_space<vmem>>, vector<16x512xbf16>
    tpu.vector_store %arg3[%c0_22, %c0_23], %64 {strides = array<i32>} : memref<16x512xbf16, #tpu.memory_space<vmem>>, vector<16x512xbf16>,
    return
  }
}

module attributes {stable_mosaic.version = 11 : i64} {
  func.func @_instnorm_kernel(%arg0: memref<24x256xbf16, #tpu.memory_space<vmem>>, %arg1: memref<256x128xbf16, #tpu.memory_space<vmem>>, %arg2: memref<2x24x1xf32, #tpu.memory_space<vmem>>, %arg3: memref<24x128xbf16, #tpu.memory_space<vmem>>) attributes {dimension_semantics = [], scalar_prefetch = 0 : i64, scratch_operands = 0 : i64, tpu.core_type = #tpu.core_type<tc>} {
    %c0 = arith.constant 0 : index
    %c0_0 = arith.constant 0 : index
    %0 = vector.load %arg0[%c0, %c0_0] : memref<24x256xbf16, #tpu.memory_space<vmem>>, vector<24x256xbf16>
    %c0_1 = arith.constant 0 : index
    %c0_2 = arith.constant 0 : index
    %1 = vector.load %arg1[%c0_1, %c0_2] : memref<256x128xbf16, #tpu.memory_space<vmem>>, vector<256x128xbf16>
    %cst = arith.constant dense<0.000000e+00> : vector<24x128xf32>
    %2 = tpu.matmul %0, %1, %cst {dimension_numbers = #tpu.dot_dimension_numbers<[1], [0], [0], [1], [0, 0, 1, 1], [], []>} : vector<24x256xbf16>, vector<256x128xbf16>, vector<24x128xf32> -> vector<24x128xf32>
    %c0_3 = arith.constant 0 : index
    %c0_4 = arith.constant 0 : index
    %c0_5 = arith.constant 0 : index
    %3 = vector.load %arg2[%c0_3, %c0_4, %c0_5] : memref<2x24x1xf32, #tpu.memory_space<vmem>>, vector<1x24x1xf32>
    %4 = vector.shape_cast %3 : vector<1x24x1xf32> to vector<24x1xf32>
    %c1 = arith.constant 1 : index
    %c0_6 = arith.constant 0 : index
    %c0_7 = arith.constant 0 : index
    %5 = vector.load %arg2[%c1, %c0_6, %c0_7] : memref<2x24x1xf32, #tpu.memory_space<vmem>>, vector<1x24x1xf32>
    %6 = vector.shape_cast %5 : vector<1x24x1xf32> to vector<24x1xf32>
    %7 = vector.extract_strided_slice %2 {offsets = [0, 0], sizes = [24, 64], strides = [1, 1]} : vector<24x128xf32> to vector<24x64xf32>
    %cst_8 = arith.constant dense<0.000000e+00> : vector<24xf32>
    %8 = vector.multi_reduction <add>, %7, %cst_8 [1] : vector<24x64xf32> to vector<24xf32>
    %9 = vector.shape_cast %8 : vector<24xf32> to vector<24x1xf32>
    %cst_9 = arith.constant 6.400000e+01 : f32
    %10 = vector.broadcast %cst_9 : f32 to vector<24x1xf32>
    %11 = arith.divf %9, %10 : vector<24x1xf32>
    %12 = vector.broadcast %11 : vector<24x1xf32> to vector<24x64xf32>
    %13 = arith.subf %7, %12 : vector<24x64xf32>
    %14 = arith.mulf %13, %13 : vector<24x64xf32>
    %cst_10 = arith.constant dense<0.000000e+00> : vector<24xf32>
    %15 = vector.multi_reduction <add>, %14, %cst_10 [1] : vector<24x64xf32> to vector<24xf32>
    %16 = vector.shape_cast %15 : vector<24xf32> to vector<24x1xf32>
    %cst_11 = arith.constant 6.400000e+01 : f32
    %17 = vector.broadcast %cst_11 : f32 to vector<24x1xf32>
    %18 = arith.divf %16, %17 : vector<24x1xf32>
    %19 = vector.broadcast %11 : vector<24x1xf32> to vector<24x64xf32>
    %20 = arith.subf %7, %19 : vector<24x64xf32>
    %cst_12 = arith.constant 9.99999974E-6 : f32
    %21 = vector.broadcast %cst_12 : f32 to vector<24x1xf32>
    %22 = arith.addf %18, %21 : vector<24x1xf32>
    %23 = math.rsqrt %22 : vector<24x1xf32>
    %24 = vector.broadcast %23 : vector<24x1xf32> to vector<24x64xf32>
    %25 = arith.mulf %20, %24 : vector<24x64xf32>
    %26 = vector.broadcast %4 : vector<24x1xf32> to vector<24x64xf32>
    %27 = arith.mulf %25, %26 : vector<24x64xf32>
    %28 = vector.broadcast %6 : vector<24x1xf32> to vector<24x64xf32>
    %29 = arith.addf %27, %28 : vector<24x64xf32>
    %cst_13 = arith.constant 0.000000e+00 : f32
    %30 = vector.broadcast %cst_13 : f32 to vector<24x64xf32>
    %31 = arith.cmpf oge, %29, %30 : vector<24x64xf32>
    %cst_14 = arith.constant 2.000000e-01 : f32
    %32 = vector.broadcast %cst_14 : f32 to vector<24x64xf32>
    %33 = arith.mulf %32, %29 : vector<24x64xf32>
    %34 = arith.select %31, %29, %33 : vector<24x64xi1>, vector<24x64xf32>
    %35 = vector.extract_strided_slice %2 {offsets = [0, 64], sizes = [24, 64], strides = [1, 1]} : vector<24x128xf32> to vector<24x64xf32>
    %cst_15 = arith.constant dense<0.000000e+00> : vector<24xf32>
    %36 = vector.multi_reduction <add>, %35, %cst_15 [1] : vector<24x64xf32> to vector<24xf32>
    %37 = vector.shape_cast %36 : vector<24xf32> to vector<24x1xf32>
    %cst_16 = arith.constant 6.400000e+01 : f32
    %38 = vector.broadcast %cst_16 : f32 to vector<24x1xf32>
    %39 = arith.divf %37, %38 : vector<24x1xf32>
    %40 = vector.broadcast %39 : vector<24x1xf32> to vector<24x64xf32>
    %41 = arith.subf %35, %40 : vector<24x64xf32>
    %42 = arith.mulf %41, %41 : vector<24x64xf32>
    %cst_17 = arith.constant dense<0.000000e+00> : vector<24xf32>
    %43 = vector.multi_reduction <add>, %42, %cst_17 [1] : vector<24x64xf32> to vector<24xf32>
    %44 = vector.shape_cast %43 : vector<24xf32> to vector<24x1xf32>
    %cst_18 = arith.constant 6.400000e+01 : f32
    %45 = vector.broadcast %cst_18 : f32 to vector<24x1xf32>
    %46 = arith.divf %44, %45 : vector<24x1xf32>
    %47 = vector.broadcast %39 : vector<24x1xf32> to vector<24x64xf32>
    %48 = arith.subf %35, %47 : vector<24x64xf32>
    %cst_19 = arith.constant 9.99999974E-6 : f32
    %49 = vector.broadcast %cst_19 : f32 to vector<24x1xf32>
    %50 = arith.addf %46, %49 : vector<24x1xf32>
    %51 = math.rsqrt %50 : vector<24x1xf32>
    %52 = vector.broadcast %51 : vector<24x1xf32> to vector<24x64xf32>
    %53 = arith.mulf %48, %52 : vector<24x64xf32>
    %54 = vector.broadcast %4 : vector<24x1xf32> to vector<24x64xf32>
    %55 = arith.mulf %53, %54 : vector<24x64xf32>
    %56 = vector.broadcast %6 : vector<24x1xf32> to vector<24x64xf32>
    %57 = arith.addf %55, %56 : vector<24x64xf32>
    %cst_20 = arith.constant 0.000000e+00 : f32
    %58 = vector.broadcast %cst_20 : f32 to vector<24x64xf32>
    %59 = arith.cmpf oge, %57, %58 : vector<24x64xf32>
    %cst_21 = arith.constant 2.000000e-01 : f32
    %60 = vector.broadcast %cst_21 : f32 to vector<24x64xf32>
    %61 = arith.mulf %60, %57 : vector<24x64xf32>
    %62 = arith.select %59, %57, %61 : vector<24x64xi1>, vector<24x64xf32>
    %63 = tpu.concatenate %34, %62 in 1 : vector<24x64xf32>, vector<24x64xf32> -> vector<24x128xf32>
    %64 = arith.truncf %63 : vector<24x128xf32> to vector<24x128xbf16>
    %c0_22 = arith.constant 0 : index
    %c0_23 = arith.constant 0 : index
    %65 = vector.load %arg3[%c0_22, %c0_23] : memref<24x128xbf16, #tpu.memory_space<vmem>>, vector<24x128xbf16>
    tpu.vector_store %arg3[%c0_22, %c0_23], %64 {strides = array<i32>} : memref<24x128xbf16, #tpu.memory_space<vmem>>, vector<24x128xbf16>,
    return
  }
}

module attributes {stable_mosaic.version = 11 : i64} {
  func.func @_tail_kernel(%arg0: memref<32x384xbf16, #tpu.memory_space<vmem>>, %arg1: memref<384x32xbf16, #tpu.memory_space<vmem>>, %arg2: memref<2x32x1xf32, #tpu.memory_space<vmem>>, %arg3: memref<32x16xf32, #tpu.memory_space<vmem>>, %arg4: memref<1x1xf32, #tpu.memory_space<vmem>>, %arg5: memref<1x2xf32, #tpu.memory_space<vmem>>) attributes {dimension_semantics = [], scalar_prefetch = 0 : i64, scratch_operands = 0 : i64, tpu.core_type = #tpu.core_type<tc>} {
    %c0 = arith.constant 0 : index
    %c0_0 = arith.constant 0 : index
    %0 = vector.load %arg0[%c0, %c0_0] : memref<32x384xbf16, #tpu.memory_space<vmem>>, vector<32x384xbf16>
    %c0_1 = arith.constant 0 : index
    %c0_2 = arith.constant 0 : index
    %1 = vector.load %arg1[%c0_1, %c0_2] : memref<384x32xbf16, #tpu.memory_space<vmem>>, vector<384x32xbf16>
    %cst = arith.constant dense<0.000000e+00> : vector<32x32xf32>
    %2 = tpu.matmul %0, %1, %cst {dimension_numbers = #tpu.dot_dimension_numbers<[1], [0], [0], [1], [0, 0, 1, 1], [], []>} : vector<32x384xbf16>, vector<384x32xbf16>, vector<32x32xf32> -> vector<32x32xf32>
    %c0_3 = arith.constant 0 : index
    %c0_4 = arith.constant 0 : index
    %c0_5 = arith.constant 0 : index
    %3 = vector.load %arg2[%c0_3, %c0_4, %c0_5] : memref<2x32x1xf32, #tpu.memory_space<vmem>>, vector<1x32x1xf32>
    %4 = vector.shape_cast %3 : vector<1x32x1xf32> to vector<32x1xf32>
    %c1 = arith.constant 1 : index
    %c0_6 = arith.constant 0 : index
    %c0_7 = arith.constant 0 : index
    %5 = vector.load %arg2[%c1, %c0_6, %c0_7] : memref<2x32x1xf32, #tpu.memory_space<vmem>>, vector<1x32x1xf32>
    %6 = vector.shape_cast %5 : vector<1x32x1xf32> to vector<32x1xf32>
    %c0_8 = arith.constant 0 : index
    %c0_9 = arith.constant 0 : index
    %7 = vector.load %arg3[%c0_8, %c0_9] : memref<32x16xf32, #tpu.memory_space<vmem>>, vector<32x16xf32>
    %8 = vector.extract_strided_slice %2 {offsets = [0, 0], sizes = [32, 16], strides = [1, 1]} : vector<32x32xf32> to vector<32x16xf32>
    %cst_10 = arith.constant dense<0.000000e+00> : vector<32xf32>
    %9 = vector.multi_reduction <add>, %8, %cst_10 [1] : vector<32x16xf32> to vector<32xf32>
    %10 = vector.shape_cast %9 : vector<32xf32> to vector<32x1xf32>
    %cst_11 = arith.constant 1.600000e+01 : f32
    %11 = vector.broadcast %cst_11 : f32 to vector<32x1xf32>
    %12 = arith.divf %10, %11 : vector<32x1xf32>
    %13 = vector.broadcast %12 : vector<32x1xf32> to vector<32x16xf32>
    %14 = arith.subf %8, %13 : vector<32x16xf32>
    %15 = arith.mulf %14, %14 : vector<32x16xf32>
    %cst_12 = arith.constant dense<0.000000e+00> : vector<32xf32>
    %16 = vector.multi_reduction <add>, %15, %cst_12 [1] : vector<32x16xf32> to vector<32xf32>
    %17 = vector.shape_cast %16 : vector<32xf32> to vector<32x1xf32>
    %cst_13 = arith.constant 1.600000e+01 : f32
    %18 = vector.broadcast %cst_13 : f32 to vector<32x1xf32>
    %19 = arith.divf %17, %18 : vector<32x1xf32>
    %20 = vector.broadcast %12 : vector<32x1xf32> to vector<32x16xf32>
    %21 = arith.subf %8, %20 : vector<32x16xf32>
    %cst_14 = arith.constant 9.99999974E-6 : f32
    %22 = vector.broadcast %cst_14 : f32 to vector<32x1xf32>
    %23 = arith.addf %19, %22 : vector<32x1xf32>
    %24 = math.rsqrt %23 : vector<32x1xf32>
    %25 = vector.broadcast %24 : vector<32x1xf32> to vector<32x16xf32>
    %26 = arith.mulf %21, %25 : vector<32x16xf32>
    %27 = vector.broadcast %4 : vector<32x1xf32> to vector<32x16xf32>
    %28 = arith.mulf %26, %27 : vector<32x16xf32>
    %29 = vector.broadcast %6 : vector<32x1xf32> to vector<32x16xf32>
    %30 = arith.addf %28, %29 : vector<32x16xf32>
    %cst_15 = arith.constant 0.000000e+00 : f32
    %31 = vector.broadcast %cst_15 : f32 to vector<32x16xf32>
    %32 = arith.cmpf oge, %30, %31 : vector<32x16xf32>
    %cst_16 = arith.constant 2.000000e-01 : f32
    %33 = vector.broadcast %cst_16 : f32 to vector<32x16xf32>
    %34 = arith.mulf %33, %30 : vector<32x16xf32>
    %35 = arith.select %32, %30, %34 : vector<32x16xi1>, vector<32x16xf32>
    %36 = arith.mulf %7, %35 : vector<32x16xf32>
    %cst_17 = arith.constant dense<0.000000e+00> : vector<32xf32>
    %37 = vector.multi_reduction <add>, %36, %cst_17 [1] : vector<32x16xf32> to vector<32xf32>
    %38 = vector.shape_cast %37 : vector<32xf32> to vector<32x1xf32>
    %cst_18 = arith.constant dense<0.000000e+00> : vector<1xf32>
    %39 = vector.multi_reduction <add>, %38, %cst_18 [0] : vector<32x1xf32> to vector<1xf32>
    %40 = vector.shape_cast %39 : vector<1xf32> to vector<1x1xf32>
    %41 = vector.extract_strided_slice %2 {offsets = [0, 16], sizes = [32, 16], strides = [1, 1]} : vector<32x32xf32> to vector<32x16xf32>
    %cst_19 = arith.constant dense<0.000000e+00> : vector<32xf32>
    %42 = vector.multi_reduction <add>, %41, %cst_19 [1] : vector<32x16xf32> to vector<32xf32>
    %43 = vector.shape_cast %42 : vector<32xf32> to vector<32x1xf32>
    %cst_20 = arith.constant 1.600000e+01 : f32
    %44 = vector.broadcast %cst_20 : f32 to vector<32x1xf32>
    %45 = arith.divf %43, %44 : vector<32x1xf32>
    %46 = vector.broadcast %45 : vector<32x1xf32> to vector<32x16xf32>
    %47 = arith.subf %41, %46 : vector<32x16xf32>
    %48 = arith.mulf %47, %47 : vector<32x16xf32>
    %cst_21 = arith.constant dense<0.000000e+00> : vector<32xf32>
    %49 = vector.multi_reduction <add>, %48, %cst_21 [1] : vector<32x16xf32> to vector<32xf32>
    %50 = vector.shape_cast %49 : vector<32xf32> to vector<32x1xf32>
    %cst_22 = arith.constant 1.600000e+01 : f32
    %51 = vector.broadcast %cst_22 : f32 to vector<32x1xf32>
    %52 = arith.divf %50, %51 : vector<32x1xf32>
    %53 = vector.broadcast %45 : vector<32x1xf32> to vector<32x16xf32>
    %54 = arith.subf %41, %53 : vector<32x16xf32>
    %cst_23 = arith.constant 9.99999974E-6 : f32
    %55 = vector.broadcast %cst_23 : f32 to vector<32x1xf32>
    %56 = arith.addf %52, %55 : vector<32x1xf32>
    %57 = math.rsqrt %56 : vector<32x1xf32>
    %58 = vector.broadcast %57 : vector<32x1xf32> to vector<32x16xf32>
    %59 = arith.mulf %54, %58 : vector<32x16xf32>
    %60 = vector.broadcast %4 : vector<32x1xf32> to vector<32x16xf32>
    %61 = arith.mulf %59, %60 : vector<32x16xf32>
    %62 = vector.broadcast %6 : vector<32x1xf32> to vector<32x16xf32>
    %63 = arith.addf %61, %62 : vector<32x16xf32>
    %cst_24 = arith.constant 0.000000e+00 : f32
    %64 = vector.broadcast %cst_24 : f32 to vector<32x16xf32>
    %65 = arith.cmpf oge, %63, %64 : vector<32x16xf32>
    %cst_25 = arith.constant 2.000000e-01 : f32
    %66 = vector.broadcast %cst_25 : f32 to vector<32x16xf32>
    %67 = arith.mulf %66, %63 : vector<32x16xf32>
    %68 = arith.select %65, %63, %67 : vector<32x16xi1>, vector<32x16xf32>
    %69 = arith.mulf %7, %68 : vector<32x16xf32>
    %cst_26 = arith.constant dense<0.000000e+00> : vector<32xf32>
    %70 = vector.multi_reduction <add>, %69, %cst_26 [1] : vector<32x16xf32> to vector<32xf32>
    %71 = vector.shape_cast %70 : vector<32xf32> to vector<32x1xf32>
    %cst_27 = arith.constant dense<0.000000e+00> : vector<1xf32>
    %72 = vector.multi_reduction <add>, %71, %cst_27 [0] : vector<32x1xf32> to vector<1xf32>
    %73 = vector.shape_cast %72 : vector<1xf32> to vector<1x1xf32>
    %74 = tpu.concatenate %40, %73 in 1 : vector<1x1xf32>, vector<1x1xf32> -> vector<1x2xf32>
    %c0_28 = arith.constant 0 : index
    %c0_29 = arith.constant 0 : index
    %75 = vector.load %arg4[%c0_28, %c0_29] : memref<1x1xf32, #tpu.memory_space<vmem>>, vector<1x1xf32>
    %76 = vector.broadcast %75 : vector<1x1xf32> to vector<1x2xf32>
    %77 = arith.addf %74, %76 : vector<1x2xf32>
    %c0_30 = arith.constant 0 : index
    %c0_31 = arith.constant 0 : index
    %78 = vector.load %arg5[%c0_30, %c0_31] : memref<1x2xf32, #tpu.memory_space<vmem>>, vector<1x2xf32>
    tpu.vector_store %arg5[%c0_30, %c0_31], %77 {strides = array<i32>} : memref<1x2xf32, #tpu.memory_space<vmem>>, vector<1x2xf32>,
    return
  }
}

</mosaic_0001>

<llo_original>
// kernel: tile.42
$region0: #{tile.42}
  #allocation0 [shape = 's32[1]{0}', space=sflag, size = 0x4, scoped, tag = 'scoped memory for tile.42']
  %s0 = inlined_call_operand.vmem [shape: f32[16], index: 0, kind: input, shape index: {}]
  %s1 = inlined_call_operand.vmem [shape: f32[4,16], index: 1, kind: output, shape index: {}]
  // Predicated region
  $region2: #{tile.42} parent=0 // pred_check
    _
  $region3: #{tile.42} parent=0 // pred_check_branch
    %3 = sbr.rel (0) target = $region5
  $region4: #{tile.42} parent=0 // pred_region
    _
  $region5: #{tile.42} parent=0 // pred_fallthru
    _
  %v4 = vld [vmem:[%s0] ss:$0 sm:$0xff]
  %5 = vst [vmem:[%s1] sm:$0xf] %v4

// kernel: tile.32
$region0: #{tile.32}
  #allocation0 [shape = 's32[1]{0}', space=sflag, size = 0x4, scoped, tag = 'scoped memory for tile.32']
  %s0 = inlined_call_operand.vmem [shape: f32[32], index: 0, kind: input, shape index: {}]
  %s1 = inlined_call_operand.vmem [shape: f32[4,32], index: 1, kind: output, shape index: {}]
  // Predicated region
  $region2: #{tile.32} parent=0 // pred_check
    _
  $region3: #{tile.32} parent=0 // pred_check_branch
    %3 = sbr.rel (0) target = $region5
  $region4: #{tile.32} parent=0 // pred_region
    _
  $region5: #{tile.32} parent=0 // pred_fallthru
    _
  %v4 = vld [vmem:[%s0] ss:$0 sm:$0xff]
  %5 = vst [vmem:[%s1] sm:$0xf] %v4

// kernel: tile.44
$region0: #{tile.44}
  %s0 = inlined_call_operand.vmem [shape: f32[4,16], index: 0, kind: input, shape index: {}]
  %s1 = inlined_call_operand.vmem [shape: f32[1,64], index: 1, kind: output, shape index: {}]
  $region1: #{tile.44} parent=0
    #allocation0 [shape = 'u8[4096]{0}', space=vmem, size = 0x1000, scoped, tag = 'scoped mem for output reshape']
    #allocation1 [shape = 'u8[4096]{0}', space=vmem, size = 0x1000, scoped, tag = 'scoped mem for input reshape']
    %s3 = sshll.u32 1, 4
    %s4 = ssub.s32 %s3, 1
    %v5 = vld [vmem:[%s0] sm:%s4]
    %6 = vst [vmem:[#allocation1] sm:%s4] %v5
    %v7 = vld [vmem:[#allocation1] sm:$0x1]
    %vm8 = vcmask 130048
    %9 = vst.msk [vmem:[#allocation0] sm:$0x1] %vm8, %v7
    %s10 = scalar_lea.vmem [#allocation1], 3
    %v11 = vld [vmem:[%s10] sm:$0x1]
    %12 = vrot.lane.b32.xlu0 %v11, 48
    %v13 = vpop.permute.xlu0 %12
    %vm14 = vcmask 523648
    %15 = vst.msk [vmem:[#allocation0] sm:$0x1] %vm14, %v13
    %s16 = scalar_lea.vmem [#allocation1], 2
    %v17 = vld [vmem:[%s16] sm:$0x1]
    %18 = vrot.lane.b32.xlu0 %v17, 32
    %v19 = vpop.permute.xlu0 %18
    %vm20 = vcmask 392448
    %21 = vst.msk [vmem:[#allocation0] sm:$0x1] %vm20, %v19
    %s22 = scalar_lea.vmem [#allocation1], 1
    %v23 = vld [vmem:[%s22] sm:$0x1]
    %24 = vrot.lane.b32.xlu0 %v23, 16
    %v25 = vpop.permute.xlu0 %24
    %vm26 = vcmask 261248
    %27 = vst.msk [vmem:[#allocation0] sm:$0x1] %vm26, %v25
    %s29 = sshll.u32 1, 1
    %s30 = ssub.s32 %s29, 1
    %v32 = vld [vmem:[#allocation0] sm:%s30]
    %s33 = sshll.u32 1, 1
    %s34 = ssub.s32 %s33, 1
    %35 = vst [vmem:[%s1] sm:%s34] %v32

// kernel: tile.34
$region0: #{tile.34}
  %s0 = inlined_call_operand.vmem [shape: f32[4,32], index: 0, kind: input, shape index: {}]
  %s1 = inlined_call_operand.vmem [shape: f32[1,128], index: 1, kind: output, shape index: {}]
  $region1: #{tile.34} parent=0
    #allocation0 [shape = 'u8[4096]{0}', space=vmem, size = 0x1000, scoped, tag = 'scoped mem for output reshape']
    #allocation1 [shape = 'u8[4096]{0}', space=vmem, size = 0x1000, scoped, tag = 'scoped mem for input reshape']
    %s3 = sshll.u32 1, 4
    %s4 = ssub.s32 %s3, 1
    %v5 = vld [vmem:[%s0] sm:%s4]
    %6 = vst [vmem:[#allocation1] sm:%s4] %v5
    %v7 = vld [vmem:[#allocation1] sm:$0x1]
    %vm8 = vcmask 261120
    %9 = vst.msk [vmem:[#allocation0] sm:$0x1] %vm8, %v7
    %s10 = scalar_lea.vmem [#allocation1], 3
    %v11 = vld [vmem:[%s10] sm:$0x1]
    %12 = vrot.lane.b32.xlu0 %v11, 96
    %v13 = vpop.permute.xlu0 %12
    %vm14 = vcmask 1048320
    %15 = vst.msk [vmem:[#allocation0] sm:$0x1] %vm14, %v13
    %s16 = scalar_lea.vmem [#allocation1], 2
    %v17 = vld [vmem:[%s16] sm:$0x1]
    %18 = vrot.lane.b32.xlu0 %v17, 64
    %v19 = vpop.permute.xlu0 %18
    %vm20 = vcmask 785920
    %21 = vst.msk [vmem:[#allocation0] sm:$0x1] %vm20, %v19
    %s22 = scalar_lea.vmem [#allocation1], 1
    %v23 = vld [vmem:[%s22] sm:$0x1]
    %24 = vrot.lane.b32.xlu0 %v23, 32
    %v25 = vpop.permute.xlu0 %24
    %vm26 = vcmask 523520
    %27 = vst.msk [vmem:[#allocation0] sm:$0x1] %vm26, %v25
    %s29 = sshll.u32 1, 1
    %s30 = ssub.s32 %s29, 1
    %v32 = vld [vmem:[#allocation0] sm:%s30]
    %s33 = sshll.u32 1, 1
    %s34 = ssub.s32 %s33, 1
    %35 = vst [vmem:[%s1] sm:%s34] %v32

// kernel: ds_discriminator_forward.9
$region0: #{ds_discriminator_forward.9}
  #allocation0 [shape = 'u32[]', space=smem, size = 0x4, offset = 0x4, fixed_abs, tag = 'smem constant byte address 0x4 - core index']
  #allocation1 [shape = 'u32[144,128]{1,0:T(1,128)}', space=vmem, size = 0x12000, scoped, tag = 'internal scratch']
  %s0 = inlined_call_operand.vmem [shape: bf16[64,1], index: 0, kind: input, shape index: {}]
  %s1 = inlined_call_operand.vmem [shape: bf16[1,512], index: 1, kind: input, shape index: {}]
  %s2 = inlined_call_operand.vmem [shape: f32[2,64,1], index: 2, kind: input, shape index: {}]
  %s3 = inlined_call_operand.vmem [shape: bf16[64,512], index: 3, kind: output, shape index: {}]
  %s4 = sld [smem:[#allocation0]]
  $region22: #{ds_discriminator_forward.9} parent=0
    _
  %s6 = ssub.s32 1, %s4
  %s7 = scalar_select 0, %s6, %s4
  // Predicated region
  $region2: #{ds_discriminator_forward.9} parent=0 // pred_check
    _
  $region3: #{ds_discriminator_forward.9} parent=0 // pred_check_branch
    %9 = sbr.rel (0) target = $region5
  $region4: #{ds_discriminator_forward.9} parent=0 // pred_region
    _
  $region5: #{ds_discriminator_forward.9} parent=0 // pred_fallthru
    _
  // Predicated region
  $region6: #{ds_discriminator_forward.9} parent=0 // pred_check
    _
  $region7: #{ds_discriminator_forward.9} parent=0 // pred_check_branch
    %11 = sbr.rel (0) target = $region9
  $region8: #{ds_discriminator_forward.9} parent=0 // pred_region
    _
  $region9: #{ds_discriminator_forward.9} parent=0 // pred_fallthru
    _
  // Predicated region
  $region10: #{ds_discriminator_forward.9} parent=0 // pred_check
    _
  $region11: #{ds_discriminator_forward.9} parent=0 // pred_check_branch
    %13 = sbr.rel (0) target = $region13
  $region12: #{ds_discriminator_forward.9} parent=0 // pred_region
    _
  $region13: #{ds_discriminator_forward.9} parent=0 // pred_fallthru
    _
  %v14 = vld [vmem:[%s0] sm:$0xf]
  %v15 = vld [vmem:[%s0 + $0x4] sm:$0xf]
  %v16 = vld [vmem:[%s0 + $0x8] sm:$0xf]
  %v17 = vld [vmem:[%s0 + $0xc] sm:$0xf]
  %v18 = vld [vmem:[%s0 + $0x10] sm:$0xf]
  %v19 = vld [vmem:[%s0 + $0x14] sm:$0xf]
  %v20 = vld [vmem:[%s0 + $0x18] sm:$0xf]
  %v21 = vld [vmem:[%s0 + $0x1c] sm:$0xf]
  %v22 = vunpack.c.l.bf16 %v14
  %v23 = vunpack.c.l.bf16 %v15
  %v24 = vunpack.c.l.bf16 %v16
  %v25 = vunpack.c.l.bf16 %v17
  %v26 = vunpack.c.l.bf16 %v18
  %v27 = vunpack.c.l.bf16 %v19
  %v28 = vunpack.c.l.bf16 %v20
  %v29 = vunpack.c.l.bf16 %v21
  %v30 = vld [vmem:[%s1] sm:$0xf]
  %v31 = vunpack.c.l.bf16 %v30
  %33 = vset.pattern.permute.xlu0 0
  %34 = vperm.xlu0 %33, %v22
  %v35 = vpop.permute.xlu0 %34
  %38 = vset.pattern.permute.xlu0 0
  %39 = vperm.xlu0 %38, %v23
  %v40 = vpop.permute.xlu0 %39
  %43 = vset.pattern.permute.xlu0 0
  %44 = vperm.xlu0 %43, %v24
  %v45 = vpop.permute.xlu0 %44
  %48 = vset.pattern.permute.xlu0 0
  %49 = vperm.xlu0 %48, %v25
  %v50 = vpop.permute.xlu0 %49
  %53 = vset.pattern.permute.xlu0 0
  %54 = vperm.xlu0 %53, %v26
  %v55 = vpop.permute.xlu0 %54
  %58 = vset.pattern.permute.xlu0 0
  %59 = vperm.xlu0 %58, %v27
  %v60 = vpop.permute.xlu0 %59
  %63 = vset.pattern.permute.xlu0 0
  %64 = vperm.xlu0 %63, %v28
  %v65 = vpop.permute.xlu0 %64
  %68 = vset.pattern.permute.xlu0 0
  %69 = vperm.xlu0 %68, %v29
  %v70 = vpop.permute.xlu0 %69
  %v73 = vlaneseq
  %v74 = vshrl.u32 %v73, 7
  %v75 = vsub.s32 0, %v74
  %v76 = vrot.slane %v31, %v75
  %v77 = vlaneseq
  %v78 = vshrl.u32 %v77, 7
  %v79 = vsub.s32 2, %v78
  %v80 = vrot.slane %v31, %v79
  %v81 = vlaneseq
  %v82 = vshrl.u32 %v81, 7
  %v83 = vsub.s32 4, %v82
  %v84 = vrot.slane %v31, %v83
  %v85 = vlaneseq
  %v86 = vshrl.u32 %v85, 7
  %v87 = vsub.s32 6, %v86
  %v88 = vrot.slane %v31, %v87
  %v93 = vlaneseq
  %v94 = vshrl.u32 %v93, 7
  %v95 = vsub.s32 0, %v94
  %v96 = vrot.slane %v76, %v95
  %v97 = vlaneseq
  %v98 = vshrl.u32 %v97, 7
  %v99 = vsub.s32 0, %v98
  %v100 = vrot.slane %v80, %v99
  %v101 = vlaneseq
  %v102 = vshrl.u32 %v101, 7
  %v103 = vsub.s32 0, %v102
  %v104 = vrot.slane %v84, %v103
  %v105 = vlaneseq
  %v106 = vshrl.u32 %v105, 7
  %v107 = vsub.s32 0, %v106
  %v108 = vrot.slane %v88, %v107
  %v109 = vmul.f32 %v35, %v96
  %v110 = vmul.f32 %v35, %v100
  %v111 = vmul.f32 %v35, %v104
  %v112 = vmul.f32 %v35, %v108
  %v113 = vmul.f32 %v40, %v96
  %v114 = vmul.f32 %v40, %v100
  %v115 = vmul.f32 %v40, %v104
  %v116 = vmul.f32 %v40, %v108
  %v117 = vmul.f32 %v45, %v96
  %v118 = vmul.f32 %v45, %v100
  %v119 = vmul.f32 %v45, %v104
  %v120 = vmul.f32 %v45, %v108
  %v121 = vmul.f32 %v50, %v96
  %v122 = vmul.f32 %v50, %v100
  %v123 = vmul.f32 %v50, %v104
  %v124 = vmul.f32 %v50, %v108
  %v125 = vmul.f32 %v55, %v96
  %v126 = vmul.f32 %v55, %v100
  %v127 = vmul.f32 %v55, %v104
  %v128 = vmul.f32 %v55, %v108
  %v129 = vmul.f32 %v60, %v96
  %v130 = vmul.f32 %v60, %v100
  %v131 = vmul.f32 %v60, %v104
  %v132 = vmul.f32 %v60, %v108
  %v133 = vmul.f32 %v65, %v96
  %v134 = vmul.f32 %v65, %v100
  %v135 = vmul.f32 %v65, %v104
  %v136 = vmul.f32 %v65, %v108
  %v137 = vmul.f32 %v70, %v96
  %v138 = vmul.f32 %v70, %v100
  %v139 = vmul.f32 %v70, %v104
  %v140 = vmul.f32 %v70, %v108
  %v141 = vld [vmem:[%s2] sm:$0xff]
  %v142 = vld [vmem:[%s2 + $0x8] sm:$0xff]
  %v143 = vld [vmem:[%s2 + $0x10] sm:$0xff]
  %v144 = vld [vmem:[%s2 + $0x18] sm:$0xff]
  %v145 = vld [vmem:[%s2 + $0x20] sm:$0xff]
  %v146 = vld [vmem:[%s2 + $0x28] sm:$0xff]
  %v147 = vld [vmem:[%s2 + $0x30] sm:$0xff]
  %v148 = vld [vmem:[%s2 + $0x38] sm:$0xff]
  %150 = vset.pattern.permute.xlu0 0
  %151 = vperm.xlu0 %150, %v141
  %v152 = vpop.permute.xlu0 %151
  %155 = vset.pattern.permute.xlu0 0
  %156 = vperm.xlu0 %155, %v142
  %v157 = vpop.permute.xlu0 %156
  %160 = vset.pattern.permute.xlu0 0
  %161 = vperm.xlu0 %160, %v143
  %v162 = vpop.permute.xlu0 %161
  %165 = vset.pattern.permute.xlu0 0
  %166 = vperm.xlu0 %165, %v144
  %v167 = vpop.permute.xlu0 %166
  %170 = vset.pattern.permute.xlu0 0
  %171 = vperm.xlu0 %170, %v145
  %v172 = vpop.permute.xlu0 %171
  %175 = vset.pattern.permute.xlu0 0
  %176 = vperm.xlu0 %175, %v146
  %v177 = vpop.permute.xlu0 %176
  %180 = vset.pattern.permute.xlu0 0
  %181 = vperm.xlu0 %180, %v147
  %v182 = vpop.permute.xlu0 %181
  %185 = vset.pattern.permute.xlu0 0
  %186 = vperm.xlu0 %185, %v148
  %v187 = vpop.permute.xlu0 %186
  %v189 = vmul.f32 %v109, %v152
  %v190 = vmul.f32 %v110, %v152
  %v191 = vmul.f32 %v111, %v152
  %v192 = vmul.f32 %v112, %v152
  %v193 = vmul.f32 %v113, %v157
  %v194 = vmul.f32 %v114, %v157
  %v195 = vmul.f32 %v115, %v157
  %v196 = vmul.f32 %v116, %v157
  %v197 = vmul.f32 %v117, %v162
  %v198 = vmul.f32 %v118, %v162
  %v199 = vmul.f32 %v119, %v162
  %v200 = vmul.f32 %v120, %v162
  %v201 = vmul.f32 %v121, %v167
  %v202 = vmul.f32 %v122, %v167
  %v203 = vmul.f32 %v123, %v167
  %v204 = vmul.f32 %v124, %v167
  %v205 = vmul.f32 %v125, %v172
  %v206 = vmul.f32 %v126, %v172
  %v207 = vmul.f32 %v127, %v172
  %v208 = vmul.f32 %v128, %v172
  %v209 = vmul.f32 %v129, %v177
  %v210 = vmul.f32 %v130, %v177
  %v211 = vmul.f32 %v131, %v177
  %v212 = vmul.f32 %v132, %v177
  %v213 = vmul.f32 %v133, %v182
  %v214 = vmul.f32 %v134, %v182
  %v215 = vmul.f32 %v135, %v182
  %v216 = vmul.f32 %v136, %v182
  %v217 = vmul.f32 %v137, %v187
  %v218 = vmul.f32 %v138, %v187
  %v219 = vmul.f32 %v139, %v187
  %v220 = vmul.f32 %v140, %v187
  %s221 = scalar_lea.vmem %s2, 64
  %v222 = vld [vmem:[%s221] sm:$0xff]
  %v223 = vld [vmem:[%s221 + $0x8] sm:$0xff]
  %v224 = vld [vmem:[%s221 + $0x10] sm:$0xff]
  %v225 = vld [vmem:[%s221 + $0x18] sm:$0xff]
  %v226 = vld [vmem:[%s221 + $0x20] sm:$0xff]
  %v227 = vld [vmem:[%s221 + $0x28] sm:$0xff]
  %v228 = vld [vmem:[%s221 + $0x30] sm:$0xff]
  %v229 = vld [vmem:[%s221 + $0x38] sm:$0xff]
  %231 = vset.pattern.permute.xlu0 0
  %232 = vperm.xlu0 %231, %v222
  %v233 = vpop.permute.xlu0 %232
  %236 = vset.pattern.permute.xlu0 0
  %237 = vperm.xlu0 %236, %v223
  %v238 = vpop.permute.xlu0 %237
  %241 = vset.pattern.permute.xlu0 0
  %242 = vperm.xlu0 %241, %v224
  %v243 = vpop.permute.xlu0 %242
  %246 = vset.pattern.permute.xlu0 0
  %247 = vperm.xlu0 %246, %v225
  %v248 = vpop.permute.xlu0 %247
  %251 = vset.pattern.permute.xlu0 0
  %252 = vperm.xlu0 %251, %v226
  %v253 = vpop.permute.xlu0 %252
  %256 = vset.pattern.permute.xlu0 0
  %257 = vperm.xlu0 %256, %v227
  %v258 = vpop.permute.xlu0 %257
  %261 = vset.pattern.permute.xlu0 0
  %262 = vperm.xlu0 %261, %v228
  %v263 = vpop.permute.xlu0 %262
  %266 = vset.pattern.permute.xlu0 0
  %267 = vperm.xlu0 %266, %v229
  %v268 = vpop.permute.xlu0 %267
  %v270 = vadd.f32 %v189, %v233
  %v271 = vadd.f32 %v190, %v233
  %v272 = vadd.f32 %v191, %v233
  %v273 = vadd.f32 %v192, %v233
  %v274 = vadd.f32 %v193, %v238
  %v275 = vadd.f32 %v194, %v238
  %v276 = vadd.f32 %v195, %v238
  %v277 = vadd.f32 %v196, %v238
  %v278 = vadd.f32 %v197, %v243
  %v279 = vadd.f32 %v198, %v243
  %v280 = vadd.f32 %v199, %v243
  %v281 = vadd.f32 %v200, %v243
  %v282 = vadd.f32 %v201, %v248
  %v283 = vadd.f32 %v202, %v248
  %v284 = vadd.f32 %v203, %v248
  %v285 = vadd.f32 %v204, %v248
  %v286 = vadd.f32 %v205, %v253
  %v287 = vadd.f32 %v206, %v253
  %v288 = vadd.f32 %v207, %v253
  %v289 = vadd.f32 %v208, %v253
  %v290 = vadd.f32 %v209, %v258
  %v291 = vadd.f32 %v210, %v258
  %v292 = vadd.f32 %v211, %v258
  %v293 = vadd.f32 %v212, %v258
  %v294 = vadd.f32 %v213, %v263
  %v295 = vadd.f32 %v214, %v263
  %v296 = vadd.f32 %v215, %v263
  %v297 = vadd.f32 %v216, %v263
  %v298 = vadd.f32 %v217, %v268
  %v299 = vadd.f32 %v218, %v268
  %v300 = vadd.f32 %v219, %v268
  %v301 = vadd.f32 %v220, %v268
  %v302 = vmax.f32 %v270, 0.0
  %v303 = vmax.f32 %v271, 0.0
  %v304 = vmax.f32 %v272, 0.0
  %v305 = vmax.f32 %v273, 0.0
  %v306 = vmax.f32 %v274, 0.0
  %v307 = vmax.f32 %v275, 0.0
  %v308 = vmax.f32 %v276, 0.0
  %v309 = vmax.f32 %v277, 0.0
  %v310 = vmax.f32 %v278, 0.0
  %v311 = vmax.f32 %v279, 0.0
  %v312 = vmax.f32 %v280, 0.0
  %v313 = vmax.f32 %v281, 0.0
  %v314 = vmax.f32 %v282, 0.0
  %v315 = vmax.f32 %v283, 0.0
  %v316 = vmax.f32 %v284, 0.0
  %v317 = vmax.f32 %v285, 0.0
  %v318 = vmax.f32 %v286, 0.0
  %v319 = vmax.f32 %v287, 0.0
  %v320 = vmax.f32 %v288, 0.0
  %v321 = vmax.f32 %v289, 0.0
  %v322 = vmax.f32 %v290, 0.0
  %v323 = vmax.f32 %v291, 0.0
  %v324 = vmax.f32 %v292, 0.0
  %v325 = vmax.f32 %v293, 0.0
  %v326 = vmax.f32 %v294, 0.0
  %v327 = vmax.f32 %v295, 0.0
  %v328 = vmax.f32 %v296, 0.0
  %v329 = vmax.f32 %v297, 0.0
  %v330 = vmax.f32 %v298, 0.0
  %v331 = vmax.f32 %v299, 0.0
  %v332 = vmax.f32 %v300, 0.0
  %v333 = vmax.f32 %v301, 0.0
  %v334 = vpack.c.bf16 %v306, %v302
  %v335 = vpack.c.bf16 %v307, %v303
  %v336 = vpack.c.bf16 %v308, %v304
  %v337 = vpack.c.bf16 %v309, %v305
  %v338 = vpack.c.bf16 %v314, %v310
  %v339 = vpack.c.bf16 %v315, %v311
  %v340 = vpack.c.bf16 %v316, %v312
  %v341 = vpack.c.bf16 %v317, %v313
  %v342 = vpack.c.bf16 %v322, %v318
  %v343 = vpack.c.bf16 %v323, %v319
  %v344 = vpack.c.bf16 %v324, %v320
  %v345 = vpack.c.bf16 %v325, %v321
  %v346 = vpack.c.bf16 %v330, %v326
  %v347 = vpack.c.bf16 %v331, %v327
  %v348 = vpack.c.bf16 %v332, %v328
  %v349 = vpack.c.bf16 %v333, %v329
  %v366 = vunpack.c.l.b16 %v334
  %v367 = vunpack.c.l.b16 %v335
  %v368 = vunpack.c.l.b16 %v336
  %v369 = vunpack.c.l.b16 %v337
  %v370 = vunpack.c.h.b16 %v334
  %v371 = vunpack.c.h.b16 %v335
  %v372 = vunpack.c.h.b16 %v336
  %v373 = vunpack.c.h.b16 %v337
  %v374 = vunpack.c.l.b16 %v338
  %v375 = vunpack.c.l.b16 %v339
  %v376 = vunpack.c.l.b16 %v340
  %v377 = vunpack.c.l.b16 %v341
  %v378 = vunpack.c.h.b16 %v338
  %v379 = vunpack.c.h.b16 %v339
  %v380 = vunpack.c.h.b16 %v340
  %v381 = vunpack.c.h.b16 %v341
  %v382 = vunpack.c.l.b16 %v342
  %v383 = vunpack.c.l.b16 %v343
  %v384 = vunpack.c.l.b16 %v344
  %v385 = vunpack.c.l.b16 %v345
  %v386 = vunpack.c.h.b16 %v342
  %v387 = vunpack.c.h.b16 %v343
  %v388 = vunpack.c.h.b16 %v344
  %v389 = vunpack.c.h.b16 %v345
  %v390 = vunpack.c.l.b16 %v346
  %v391 = vunpack.c.l.b16 %v347
  %v392 = vunpack.c.l.b16 %v348
  %v393 = vunpack.c.l.b16 %v349
  %v394 = vunpack.c.h.b16 %v346
  %v395 = vunpack.c.h.b16 %v347
  %v396 = vunpack.c.h.b16 %v348
  %v397 = vunpack.c.h.b16 %v349
  %v398 = vpack.c.b16 %v367, %v366
  %v399 = vpack.c.b16 %v369, %v368
  %v400 = vpack.c.b16 %v371, %v370
  %v401 = vpack.c.b16 %v373, %v372
  %v402 = vpack.c.b16 %v375, %v374
  %v403 = vpack.c.b16 %v377, %v376
  %v404 = vpack.c.b16 %v379, %v378
  %v405 = vpack.c.b16 %v381, %v380
  %v406 = vpack.c.b16 %v383, %v382
  %v407 = vpack.c.b16 %v385, %v384
  %v408 = vpack.c.b16 %v387, %v386
  %v409 = vpack.c.b16 %v389, %v388
  %v410 = vpack.c.b16 %v391, %v390
  %v411 = vpack.c.b16 %v393, %v392
  %v412 = vpack.c.b16 %v395, %v394
  %v413 = vpack.c.b16 %v397, %v396
  %430 = vst [vmem:[%s3] sm:$0xff] %v398
  %431 = vst [vmem:[%s3 + $0x8] sm:$0xff] %v399
  %432 = vst [vmem:[%s3 + $0x10] sm:$0xff] %v400
  %433 = vst [vmem:[%s3 + $0x18] sm:$0xff] %v401
  %434 = vst [vmem:[%s3 + $0x20] sm:$0xff] %v402
  %435 = vst [vmem:[%s3 + $0x28] sm:$0xff] %v403
  %436 = vst [vmem:[%s3 + $0x30] sm:$0xff] %v404
  %437 = vst [vmem:[%s3 + $0x38] sm:$0xff] %v405
  %438 = vst [vmem:[%s3 + $0x40] sm:$0xff] %v406
  %439 = vst [vmem:[%s3 + $0x48] sm:$0xff] %v407
  %440 = vst [vmem:[%s3 + $0x50] sm:$0xff] %v408
  %441 = vst [vmem:[%s3 + $0x58] sm:$0xff] %v409
  %442 = vst [vmem:[%s3 + $0x60] sm:$0xff] %v410
  %443 = vst [vmem:[%s3 + $0x68] sm:$0xff] %v411
  %444 = vst [vmem:[%s3 + $0x70] sm:$0xff] %v412
  %445 = vst [vmem:[%s3 + $0x78] sm:$0xff] %v413
  // Predicated region
  $region14: #{ds_discriminator_forward.9} parent=0 // pred_check
    _
  $region15: #{ds_discriminator_forward.9} parent=0 // pred_check_branch
    %447 = sbr.rel (0) target = $region17
  $region16: #{ds_discriminator_forward.9} parent=0 // pred_region
    _
  $region17: #{ds_discriminator_forward.9} parent=0 // pred_fallthru
    _
  // Predicated region
  $region18: #{ds_discriminator_forward.9} parent=0 // pred_check
    _
  $region19: #{ds_discriminator_forward.9} parent=0 // pred_check_branch
    %449 = sbr.rel (0) target = $region21
  $region20: #{ds_discriminator_forward.9} parent=0 // pred_region
    _
  $region21: #{ds_discriminator_forward.9} parent=0 // pred_fallthru
    _

// kernel: ds_discriminator_forward.10
$region0: #{ds_discriminator_forward.10}
  #allocation0 [shape = 'u32[]', space=smem, size = 0x4, offset = 0x4, fixed_abs, tag = 'smem constant byte address 0x4 - core index']
  #allocation1 [shape = 'u32[144,128]{1,0:T(1,128)}', space=vmem, size = 0x12000, scoped, tag = 'internal scratch']
  %s0 = inlined_call_operand.vmem [shape: bf16[128,576], index: 0, kind: input, shape index: {}]
  %s1 = inlined_call_operand.vmem [shape: bf16[576,512], index: 1, kind: input, shape index: {}]
  %s2 = inlined_call_operand.vmem [shape: f32[2,128,1], index: 2, kind: input, shape index: {}]
  %s3 = inlined_call_operand.vmem [shape: bf16[128,512], index: 3, kind: output, shape index: {}]
  %s4 = sld [smem:[#allocation0]]
  $region22: #{ds_discriminator_forward.10} parent=0
    _
  %s6 = ssub.s32 1, %s4
  %s7 = scalar_select 0, %s6, %s4
  // Predicated region
  $region2: #{ds_discriminator_forward.10} parent=0 // pred_check
    _
  $region3: #{ds_discriminator_forward.10} parent=0 // pred_check_branch
    %9 = sbr.rel (0) target = $region5
  $region4: #{ds_discriminator_forward.10} parent=0 // pred_region
    _
  $region5: #{ds_discriminator_forward.10} parent=0 // pred_fallthru
    _
  // Predicated region
  $region6: #{ds_discriminator_forward.10} parent=0 // pred_check
    _
  $region7: #{ds_discriminator_forward.10} parent=0 // pred_check_branch
    %11 = sbr.rel (0) target = $region9
  $region8: #{ds_discriminator_forward.10} parent=0 // pred_region
    _
  $region9: #{ds_discriminator_forward.10} parent=0 // pred_fallthru
    _
  // Predicated region
  $region10: #{ds_discriminator_forward.10} parent=0 // pred_check
    _
  $region11: #{ds_discriminator_forward.10} parent=0 // pred_check_branch
    %13 = sbr.rel (0) target = $region13
  $region12: #{ds_discriminator_forward.10} parent=0 // pred_region
    _
  $region13: #{ds_discriminator_forward.10} parent=0 // pred_fallthru
    _
  %v15 = vld [vmem:[%s0] sm:$0xff]
  %v16 = vld [vmem:[%s0 + $0x8] sm:$0xff]
  %v17 = vld [vmem:[%s0 + $0x10] sm:$0xf]
  %v18 = vld [vmem:[%s0 + $0x14] sm:$0xff]
  %v19 = vld [vmem:[%s0 + $0x1c] sm:$0xff]
  %v20 = vld [vmem:[%s0 + $0x24] sm:$0xf]
  %v21 = vld [vmem:[%s0 + $0x28] sm:$0xff]
  %v22 = vld [vmem:[%s0 + $0x30] sm:$0xff]
  %v23 = vld [vmem:[%s0 + $0x38] sm:$0xf]
  %v24 = vld [vmem:[%s0 + $0x3c] sm:$0xff]
  %v25 = vld [vmem:[%s0 + $0x44] sm:$0xff]
  %v26 = vld [vmem:[%s0 + $0x4c] sm:$0xf]
  %v27 = vld [vmem:[%s0 + $0x50] sm:$0xff]
  %v28 = vld [vmem:[%s0 + $0x58] sm:$0xff]
  %v29 = vld [vmem:[%s0 + $0x60] sm:$0xf]
  %v30 = vld [vmem:[%s0 + $0x64] sm:$0xff]
  %v31 = vld [vmem:[%s0 + $0x6c] sm:$0xff]
  %v32 = vld [vmem:[%s0 + $0x74] sm:$0xf]
  %v33 = vld [vmem:[%s0 + $0x78] sm:$0xff]
  %v34 = vld [vmem:[%s0 + $0x80] sm:$0xff]
  %v35 = vld [vmem:[%s0 + $0x88] sm:$0xf]
  %v36 = vld [vmem:[%s0 + $0x8c] sm:$0xff]
  %v37 = vld [vmem:[%s0 + $0x94] sm:$0xff]
  %v38 = vld [vmem:[%s0 + $0x9c] sm:$0xf]
  %v39 = vld [vmem:[%s0 + $0xa0] sm:$0xff]
  %v40 = vld [vmem:[%s0 + $0xa8] sm:$0xff]
  %v41 = vld [vmem:[%s0 + $0xb0] sm:$0xf]
  %v42 = vld [vmem:[%s0 + $0xb4] sm:$0xff]
  %v43 = vld [vmem:[%s0 + $0xbc] sm:$0xff]
  %v44 = vld [vmem:[%s0 + $0xc4] sm:$0xf]
  %v45 = vld [vmem:[%s0 + $0xc8] sm:$0xff]
  %v46 = vld [vmem:[%s0 + $0xd0] sm:$0xff]
  %v47 = vld [vmem:[%s0 + $0xd8] sm:$0xf]
  %v48 = vld [vmem:[%s0 + $0xdc] sm:$0xff]
  %v49 = vld [vmem:[%s0 + $0xe4] sm:$0xff]
  %v50 = vld [vmem:[%s0 + $0xec] sm:$0xf]
  %v51 = vld [vmem:[%s0 + $0xf0] sm:$0xff]
  %v52 = vld [vmem:[%s0 + $0xf8] sm:$0xff]
  %v53 = vld [vmem:[%s0 + $0x100] sm:$0xf]
  %v54 = vld [vmem:[%s0 + $0x104] sm:$0xff]
  %v55 = vld [vmem:[%s0 + $0x10c] sm:$0xff]
  %v56 = vld [vmem:[%s0 + $0x114] sm:$0xf]
  %v57 = vld [vmem:[%s0 + $0x118] sm:$0xff]
  %v58 = vld [vmem:[%s0 + $0x120] sm:$0xff]
  %v59 = vld [vmem:[%s0 + $0x128] sm:$0xf]
  %v60 = vld [vmem:[%s0 + $0x12c] sm:$0xff]
  %v61 = vld [vmem:[%s0 + $0x134] sm:$0xff]
  %v62 = vld [vmem:[%s0 + $0x13c] sm:$0xf]
  %v63 = vld [vmem:[%s1] sm:$0xff]
  %v64 = vld [vmem:[%s1 + $0x8] sm:$0xff]
  %v65 = vld [vmem:[%s1 + $0x10] sm:$0xff]
  %v66 = vld [vmem:[%s1 + $0x18] sm:$0xff]
  %v67 = vld [vmem:[%s1 + $0x20] sm:$0xff]
  %v68 = vld [vmem:[%s1 + $0x28] sm:$0xff]
  %v69 = vld [vmem:[%s1 + $0x30] sm:$0xff]
  %v70 = vld [vmem:[%s1 + $0x38] sm:$0xff]
  %v71 = vld [vmem:[%s1 + $0x40] sm:$0xff]
  %v72 = vld [vmem:[%s1 + $0x48] sm:$0xff]
  %v73 = vld [vmem:[%s1 + $0x50] sm:$0xff]
  %v74 = vld [vmem:[%s1 + $0x58] sm:$0xff]
  %v75 = vld [vmem:[%s1 + $0x60] sm:$0xff]
  %v76 = vld [vmem:[%s1 + $0x68] sm:$0xff]
  %v77 = vld [vmem:[%s1 + $0x70] sm:$0xff]
  %v78 = vld [vmem:[%s1 + $0x78] sm:$0xff]
  %v79 = vld [vmem:[%s1 + $0x80] sm:$0xff]
  %v80 = vld [vmem:[%s1 + $0x88] sm:$0xff]
  %v81 = vld [vmem:[%s1 + $0x90] sm:$0xff]
  %v82 = vld [vmem:[%s1 + $0x98] sm:$0xff]
  %v83 = vld [vmem:[%s1 + $0xa0] sm:$0xff]
  %v84 = vld [vmem:[%s1 + $0xa8] sm:$0xff]
  %v85 = vld [vmem:[%s1 + $0xb0] sm:$0xff]
  %v86 = vld [vmem:[%s1 + $0xb8] sm:$0xff]
  %v87 = vld [vmem:[%s1 + $0xc0] sm:$0xff]
  %v88 = vld [vmem:[%s1 + $0xc8] sm:$0xff]
  %v89 = vld [vmem:[%s1 + $0xd0] sm:$0xff]
  %v90 = vld [vmem:[%s1 + $0xd8] sm:$0xff]
  %v91 = vld [vmem:[%s1 + $0xe0] sm:$0xff]
  %v92 = vld [vmem:[%s1 + $0xe8] sm:$0xff]
  %v93 = vld [vmem:[%s1 + $0xf0] sm:$0xff]
  %v94 = vld [vmem:[%s1 + $0xf8] sm:$0xff]
  %v95 = vld [vmem:[%s1 + $0x100] sm:$0xff]
  %v96 = vld [vmem:[%s1 + $0x108] sm:$0xff]
  %v97 = vld [vmem:[%s1 + $0x110] sm:$0xff]
  %v98 = vld [vmem:[%s1 + $0x118] sm:$0xff]
  %v99 = vld [vmem:[%s1 + $0x120] sm:$0xff]
  %v100 = vld [vmem:[%s1 + $0x128] sm:$0xff]
  %v101 = vld [vmem:[%s1 + $0x130] sm:$0xff]
  %v102 = vld [vmem:[%s1 + $0x138] sm:$0xff]
  %v103 = vld [vmem:[%s1 + $0x140] sm:$0xff]
  %v104 = vld [vmem:[%s1 + $0x148] sm:$0xff]
  %v105 = vld [vmem:[%s1 + $0x150] sm:$0xff]
  %v106 = vld [vmem:[%s1 + $0x158] sm:$0xff]
  %v107 = vld [vmem:[%s1 + $0x160] sm:$0xff]
  %v108 = vld [vmem:[%s1 + $0x168] sm:$0xff]
  %v109 = vld [vmem:[%s1 + $0x170] sm:$0xff]
  %v110 = vld [vmem:[%s1 + $0x178] sm:$0xff]
  %v111 = vld [vmem:[%s1 + $0x180] sm:$0xff]
  %v112 = vld [vmem:[%s1 + $0x188] sm:$0xff]
  %v113 = vld [vmem:[%s1 + $0x190] sm:$0xff]
  %v114 = vld [vmem:[%s1 + $0x198] sm:$0xff]
  %v115 = vld [vmem:[%s1 + $0x1a0] sm:$0xff]
  %v116 = vld [vmem:[%s1 + $0x1a8] sm:$0xff]
  %v117 = vld [vmem:[%s1 + $0x1b0] sm:$0xff]
  %v118 = vld [vmem:[%s1 + $0x1b8] sm:$0xff]
  %v119 = vld [vmem:[%s1 + $0x1c0] sm:$0xff]
  %v120 = vld [vmem:[%s1 + $0x1c8] sm:$0xff]
  %v121 = vld [vmem:[%s1 + $0x1d0] sm:$0xff]
  %v122 = vld [vmem:[%s1 + $0x1d8] sm:$0xff]
  %v123 = vld [vmem:[%s1 + $0x1e0] sm:$0xff]
  %v124 = vld [vmem:[%s1 + $0x1e8] sm:$0xff]
  %v125 = vld [vmem:[%s1 + $0x1f0] sm:$0xff]
  %v126 = vld [vmem:[%s1 + $0x1f8] sm:$0xff]
  %v127 = vld [vmem:[%s1 + $0x200] sm:$0xff]
  %v128 = vld [vmem:[%s1 + $0x208] sm:$0xff]
  %v129 = vld [vmem:[%s1 + $0x210] sm:$0xff]
  %v130 = vld [vmem:[%s1 + $0x218] sm:$0xff]
  %v131 = vld [vmem:[%s1 + $0x220] sm:$0xff]
  %v132 = vld [vmem:[%s1 + $0x228] sm:$0xff]
  %v133 = vld [vmem:[%s1 + $0x230] sm:$0xff]
  %v134 = vld [vmem:[%s1 + $0x238] sm:$0xff]
  %v135 = vld [vmem:[%s1 + $0x240] sm:$0xff]
  %v136 = vld [vmem:[%s1 + $0x248] sm:$0xff]
  %v137 = vld [vmem:[%s1 + $0x250] sm:$0xff]
  %v138 = vld [vmem:[%s1 + $0x258] sm:$0xff]
  %v139 = vld [vmem:[%s1 + $0x260] sm:$0xff]
  %v140 = vld [vmem:[%s1 + $0x268] sm:$0xff]
  %v141 = vld [vmem:[%s1 + $0x270] sm:$0xff]
  %v142 = vld [vmem:[%s1 + $0x278] sm:$0xff]
  %v143 = vld [vmem:[%s1 + $0x280] sm:$0xff]
  %v144 = vld [vmem:[%s1 + $0x288] sm:$0xff]
  %v145 = vld [vmem:[%s1 + $0x290] sm:$0xff]
  %v146 = vld [vmem:[%s1 + $0x298] sm:$0xff]
  %v147 = vld [vmem:[%s1 + $0x2a0] sm:$0xff]
  %v148 = vld [vmem:[%s1 + $0x2a8] sm:$0xff]
  %v149 = vld [vmem:[%s1 + $0x2b0] sm:$0xff]
  %v150 = vld [vmem:[%s1 + $0x2b8] sm:$0xff]
  %v151 = vld [vmem:[%s1 + $0x2c0] sm:$0xff]
  %v152 = vld [vmem:[%s1 + $0x2c8] sm:$0xff]
  %v153 = vld [vmem:[%s1 + $0x2d0] sm:$0xff]
  %v154 = vld [vmem:[%s1 + $0x2d8] sm:$0xff]
  %v155 = vld [vmem:[%s1 + $0x2e0] sm:$0xff]
  %v156 = vld [vmem:[%s1 + $0x2e8] sm:$0xff]
  %v157 = vld [vmem:[%s1 + $0x2f0] sm:$0xff]
  %v158 = vld [vmem:[%s1 + $0x2f8] sm:$0xff]
  %v159 = vld [vmem:[%s1 + $0x300] sm:$0xff]
  %v160 = vld [vmem:[%s1 + $0x308] sm:$0xff]
  %v161 = vld [vmem:[%s1 + $0x310] sm:$0xff]
  %v162 = vld [vmem:[%s1 + $0x318] sm:$0xff]
  %v163 = vld [vmem:[%s1 + $0x320] sm:$0xff]
  %v164 = vld [vmem:[%s1 + $0x328] sm:$0xff]
  %v165 = vld [vmem:[%s1 + $0x330] sm:$0xff]
  %v166 = vld [vmem:[%s1 + $0x338] sm:$0xff]
  %v167 = vld [vmem:[%s1 + $0x340] sm:$0xff]
  %v168 = vld [vmem:[%s1 + $0x348] sm:$0xff]
  %v169 = vld [vmem:[%s1 + $0x350] sm:$0xff]
  %v170 = vld [vmem:[%s1 + $0x358] sm:$0xff]
  %v171 = vld [vmem:[%s1 + $0x360] sm:$0xff]
  %v172 = vld [vmem:[%s1 + $0x368] sm:$0xff]
  %v173 = vld [vmem:[%s1 + $0x370] sm:$0xff]
  %v174 = vld [vmem:[%s1 + $0x378] sm:$0xff]
  %v175 = vld [vmem:[%s1 + $0x380] sm:$0xff]
  %v176 = vld [vmem:[%s1 + $0x388] sm:$0xff]
  %v177 = vld [vmem:[%s1 + $0x390] sm:$0xff]
  %v178 = vld [vmem:[%s1 + $0x398] sm:$0xff]
  %v179 = vld [vmem:[%s1 + $0x3a0] sm:$0xff]
  %v180 = vld [vmem:[%s1 + $0x3a8] sm:$0xff]
  %v181 = vld [vmem:[%s1 + $0x3b0] sm:$0xff]
  %v182 = vld [vmem:[%s1 + $0x3b8] sm:$0xff]
  %v183 = vld [vmem:[%s1 + $0x3c0] sm:$0xff]
  %v184 = vld [vmem:[%s1 + $0x3c8] sm:$0xff]
  %v185 = vld [vmem:[%s1 + $0x3d0] sm:$0xff]
  %v186 = vld [vmem:[%s1 + $0x3d8] sm:$0xff]
  %v187 = vld [vmem:[%s1 + $0x3e0] sm:$0xff]
  %v188 = vld [vmem:[%s1 + $0x3e8] sm:$0xff]
  %v189 = vld [vmem:[%s1 + $0x3f0] sm:$0xff]
  %v190 = vld [vmem:[%s1 + $0x3f8] sm:$0xff]
  %v191 = vld [vmem:[%s1 + $0x400] sm:$0xff]
  %v192 = vld [vmem:[%s1 + $0x408] sm:$0xff]
  %v193 = vld [vmem:[%s1 + $0x410] sm:$0xff]
  %v194 = vld [vmem:[%s1 + $0x418] sm:$0xff]
  %v195 = vld [vmem:[%s1 + $0x420] sm:$0xff]
  %v196 = vld [vmem:[%s1 + $0x428] sm:$0xff]
  %v197 = vld [vmem:[%s1 + $0x430] sm:$0xff]
  %v198 = vld [vmem:[%s1 + $0x438] sm:$0xff]
  %v199 = vld [vmem:[%s1 + $0x440] sm:$0xff]
  %v200 = vld [vmem:[%s1 + $0x448] sm:$0xff]
  %v201 = vld [vmem:[%s1 + $0x450] sm:$0xff]
  %v202 = vld [vmem:[%s1 + $0x458] sm:$0xff]
  %v203 = vld [vmem:[%s1 + $0x460] sm:$0xff]
  %v204 = vld [vmem:[%s1 + $0x468] sm:$0xff]
  %v205 = vld [vmem:[%s1 + $0x470] sm:$0xff]
  %v206 = vld [vmem:[%s1 + $0x478] sm:$0xff]
  %v255 = vunpack.c.l.b16 %v15
  %v256 = vunpack.c.h.b16 %v15
  %v257 = vunpack.c.l.b16 %v16
  %v258 = vunpack.c.h.b16 %v16
  %v259 = vunpack.c.l.b16 %v17
  %v260 = vunpack.c.l.b16 %v18
  %v261 = vunpack.c.h.b16 %v18
  %v262 = vunpack.c.l.b16 %v19
  %v263 = vunpack.c.h.b16 %v19
  %v264 = vunpack.c.l.b16 %v20
  %v265 = vunpack.c.l.b16 %v21
  %v266 = vunpack.c.h.b16 %v21
  %v267 = vunpack.c.l.b16 %v22
  %v268 = vunpack.c.h.b16 %v22
  %v269 = vunpack.c.l.b16 %v23
  %v270 = vunpack.c.l.b16 %v24
  %v271 = vunpack.c.h.b16 %v24
  %v272 = vunpack.c.l.b16 %v25
  %v273 = vunpack.c.h.b16 %v25
  %v274 = vunpack.c.l.b16 %v26
  %v275 = vunpack.c.l.b16 %v27
  %v276 = vunpack.c.h.b16 %v27
  %v277 = vunpack.c.l.b16 %v28
  %v278 = vunpack.c.h.b16 %v28
  %v279 = vunpack.c.l.b16 %v29
  %v280 = vunpack.c.l.b16 %v30
  %v281 = vunpack.c.h.b16 %v30
  %v282 = vunpack.c.l.b16 %v31
  %v283 = vunpack.c.h.b16 %v31
  %v284 = vunpack.c.l.b16 %v32
  %v285 = vunpack.c.l.b16 %v33
  %v286 = vunpack.c.h.b16 %v33
  %v287 = vunpack.c.l.b16 %v34
  %v288 = vunpack.c.h.b16 %v34
  %v289 = vunpack.c.l.b16 %v35
  %v290 = vunpack.c.l.b16 %v36
  %v291 = vunpack.c.h.b16 %v36
  %v292 = vunpack.c.l.b16 %v37
  %v293 = vunpack.c.h.b16 %v37
  %v294 = vunpack.c.l.b16 %v38
  %v295 = vunpack.c.l.b16 %v39
  %v296 = vunpack.c.h.b16 %v39
  %v297 = vunpack.c.l.b16 %v40
  %v298 = vunpack.c.h.b16 %v40
  %v299 = vunpack.c.l.b16 %v41
  %v300 = vunpack.c.l.b16 %v42
  %v301 = vunpack.c.h.b16 %v42
  %v302 = vunpack.c.l.b16 %v43
  %v303 = vunpack.c.h.b16 %v43
  %v304 = vunpack.c.l.b16 %v44
  %v305 = vunpack.c.l.b16 %v45
  %v306 = vunpack.c.h.b16 %v45
  %v307 = vunpack.c.l.b16 %v46
  %v308 = vunpack.c.h.b16 %v46
  %v309 = vunpack.c.l.b16 %v47
  %v310 = vunpack.c.l.b16 %v48
  %v311 = vunpack.c.h.b16 %v48
  %v312 = vunpack.c.l.b16 %v49
  %v313 = vunpack.c.h.b16 %v49
  %v314 = vunpack.c.l.b16 %v50
  %v315 = vunpack.c.l.b16 %v51
  %v316 = vunpack.c.h.b16 %v51
  %v317 = vunpack.c.l.b16 %v52
  %v318 = vunpack.c.h.b16 %v52
  %v319 = vunpack.c.l.b16 %v53
  %v320 = vunpack.c.l.b16 %v54
  %v321 = vunpack.c.h.b16 %v54
  %v322 = vunpack.c.l.b16 %v55
  %v323 = vunpack.c.h.b16 %v55
  %v324 = vunpack.c.l.b16 %v56
  %v325 = vunpack.c.l.b16 %v57
  %v326 = vunpack.c.h.b16 %v57
  %v327 = vunpack.c.l.b16 %v58
  %v328 = vunpack.c.h.b16 %v58
  %v329 = vunpack.c.l.b16 %v59
  %v330 = vunpack.c.l.b16 %v60
  %v331 = vunpack.c.h.b16 %v60
  %v332 = vunpack.c.l.b16 %v61
  %v333 = vunpack.c.h.b16 %v61
  %v334 = vunpack.c.l.b16 %v62
  %v335 = vpack.c.b16 %v260, %v255
  %v336 = vpack.c.b16 %v261, %v256
  %v337 = vpack.c.b16 %v262, %v257
  %v338 = vpack.c.b16 %v263, %v258
  %v339 = vpack.c.b16 %v264, %v259
  %v340 = vpack.c.b16 %v270, %v265
  %v341 = vpack.c.b16 %v271, %v266
  %v342 = vpack.c.b16 %v272, %v267
  %v343 = vpack.c.b16 %v273, %v268
  %v344 = vpack.c.b16 %v274, %v269
  %v345 = vpack.c.b16 %v280, %v275
  %v346 = vpack.c.b16 %v281, %v276
  %v347 = vpack.c.b16 %v282, %v277
  %v348 = vpack.c.b16 %v283, %v278
  %v349 = vpack.c.b16 %v284, %v279
  %v350 = vpack.c.b16 %v290, %v285
  %v351 = vpack.c.b16 %v291, %v286
  %v352 = vpack.c.b16 %v292, %v287
  %v353 = vpack.c.b16 %v293, %v288
  %v354 = vpack.c.b16 %v294, %v289
  %v355 = vpack.c.b16 %v300, %v295
  %v356 = vpack.c.b16 %v301, %v296
  %v357 = vpack.c.b16 %v302, %v297
  %v358 = vpack.c.b16 %v303, %v298
  %v359 = vpack.c.b16 %v304, %v299
  %v360 = vpack.c.b16 %v310, %v305
  %v361 = vpack.c.b16 %v311, %v306
  %v362 = vpack.c.b16 %v312, %v307
  %v363 = vpack.c.b16 %v313, %v308
  %v364 = vpack.c.b16 %v314, %v309
  %v365 = vpack.c.b16 %v320, %v315
  %v366 = vpack.c.b16 %v321, %v316
  %v367 = vpack.c.b16 %v322, %v317
  %v368 = vpack.c.b16 %v323, %v318
  %v369 = vpack.c.b16 %v324, %v319
  %v370 = vpack.c.b16 %v330, %v325
  %v371 = vpack.c.b16 %v331, %v326
  %v372 = vpack.c.b16 %v332, %v327
  %v373 = vpack.c.b16 %v333, %v328
  %v374 = vpack.c.b16 %v334, %v329
  %v551 = vunpack.c.l.b16 %v63
  %v552 = vunpack.c.h.b16 %v63
  %v553 = vunpack.c.l.b16 %v64
  %v554 = vunpack.c.h.b16 %v64
  %v555 = vunpack.c.l.b16 %v65
  %v556 = vunpack.c.h.b16 %v65
  %v557 = vunpack.c.l.b16 %v66
  %v558 = vunpack.c.h.b16 %v66
  %v559 = vunpack.c.l.b16 %v67
  %v560 = vunpack.c.h.b16 %v67
  %v561 = vunpack.c.l.b16 %v68
  %v562 = vunpack.c.h.b16 %v68
  %v563 = vunpack.c.l.b16 %v69
  %v564 = vunpack.c.h.b16 %v69
  %v565 = vunpack.c.l.b16 %v70
  %v566 = vunpack.c.h.b16 %v70
  %v567 = vunpack.c.l.b16 %v71
  %v568 = vunpack.c.h.b16 %v71
  %v569 = vunpack.c.l.b16 %v72
  %v570 = vunpack.c.h.b16 %v72
  %v571 = vunpack.c.l.b16 %v73
  %v572 = vunpack.c.h.b16 %v73
  %v573 = vunpack.c.l.b16 %v74
  %v574 = vunpack.c.h.b16 %v74
  %v575 = vunpack.c.l.b16 %v75
  %v576 = vunpack.c.h.b16 %v75
  %v577 = vunpack.c.l.b16 %v76
  %v578 = vunpack.c.h.b16 %v76
  %v579 = vunpack.c.l.b16 %v77
  %v580 = vunpack.c.h.b16 %v77
  %v581 = vunpack.c.l.b16 %v78
  %v582 = vunpack.c.h.b16 %v78
  %v583 = vunpack.c.l.b16 %v79
  %v584 = vunpack.c.h.b16 %v79
  %v585 = vunpack.c.l.b16 %v80
  %v586 = vunpack.c.h.b16 %v80
  %v587 = vunpack.c.l.b16 %v81
  %v588 = vunpack.c.h.b16 %v81
  %v589 = vunpack.c.l.b16 %v82
  %v590 = vunpack.c.h.b16 %v82
  %v591 = vunpack.c.l.b16 %v83
  %v592 = vunpack.c.h.b16 %v83
  %v593 = vunpack.c.l.b16 %v84
  %v594 = vunpack.c.h.b16 %v84
  %v595 = vunpack.c.l.b16 %v85
  %v596 = vunpack.c.h.b16 %v85
  %v597 = vunpack.c.l.b16 %v86
  %v598 = vunpack.c.h.b16 %v86
  %v599 = vunpack.c.l.b16 %v87
  %v600 = vunpack.c.h.b16 %v87
  %v601 = vunpack.c.l.b16 %v88
  %v602 = vunpack.c.h.b16 %v88
  %v603 = vunpack.c.l.b16 %v89
  %v604 = vunpack.c.h.b16 %v89
  %v605 = vunpack.c.l.b16 %v90
  %v606 = vunpack.c.h.b16 %v90
  %v607 = vunpack.c.l.b16 %v91
  %v608 = vunpack.c.h.b16 %v91
  %v609 = vunpack.c.l.b16 %v92
  %v610 = vunpack.c.h.b16 %v92
  %v611 = vunpack.c.l.b16 %v93
  %v612 = vunpack.c.h.b16 %v93
  %v613 = vunpack.c.l.b16 %v94
  %v614 = vunpack.c.h.b16 %v94
  %v615 = vunpack.c.l.b16 %v95
  %v616 = vunpack.c.h.b16 %v95
  %v617 = vunpack.c.l.b16 %v96
  %v618 = vunpack.c.h.b16 %v96
  %v619 = vunpack.c.l.b16 %v97
  %v620 = vunpack.c.h.b16 %v97
  %v621 = vunpack.c.l.b16 %v98
  %v622 = vunpack.c.h.b16 %v98
  %v623 = vunpack.c.l.b16 %v99
  %v624 = vunpack.c.h.b16 %v99
  %v625 = vunpack.c.l.b16 %v100
  %v626 = vunpack.c.h.b16 %v100
  %v627 = vunpack.c.l.b16 %v101
  %v628 = vunpack.c.h.b16 %v101
  %v629 = vunpack.c.l.b16 %v102
  %v630 = vunpack.c.h.b16 %v102
  %v631 = vunpack.c.l.b16 %v103
  %v632 = vunpack.c.h.b16 %v103
  %v633 = vunpack.c.l.b16 %v104
  %v634 = vunpack.c.h.b16 %v104
  %v635 = vunpack.c.l.b16 %v105
  %v636 = vunpack.c.h.b16 %v105
  %v637 = vunpack.c.l.b16 %v106
  %v638 = vunpack.c.h.b16 %v106
  %v639 = vunpack.c.l.b16 %v107
  %v640 = vunpack.c.h.b16 %v107
  %v641 = vunpack.c.l.b16 %v108
  %v642 = vunpack.c.h.b16 %v108
  %v643 = vunpack.c.l.b16 %v109
  %v644 = vunpack.c.h.b16 %v109
  %v645 = vunpack.c.l.b16 %v110
  %v646 = vunpack.c.h.b16 %v110
  %v647 = vunpack.c.l.b16 %v111
  %v648 = vunpack.c.h.b16 %v111
  %v649 = vunpack.c.l.b16 %v112
  %v650 = vunpack.c.h.b16 %v112
  %v651 = vunpack.c.l.b16 %v113
  %v652 = vunpack.c.h.b16 %v113
  %v653 = vunpack.c.l.b16 %v114
  %v654 = vunpack.c.h.b16 %v114
  %v655 = vunpack.c.l.b16 %v115
  %v656 = vunpack.c.h.b16 %v115
  %v657 = vunpack.c.l.b16 %v116
  %v658 = vunpack.c.h.b16 %v116
  %v659 = vunpack.c.l.b16 %v117
  %v660 = vunpack.c.h.b16 %v117
  %v661 = vunpack.c.l.b16 %v118
  %v662 = vunpack.c.h.b16 %v118
  %v663 = vunpack.c.l.b16 %v119
  %v664 = vunpack.c.h.b16 %v119
  %v665 = vunpack.c.l.b16 %v120
  %v666 = vunpack.c.h.b16 %v120
  %v667 = vunpack.c.l.b16 %v121
  %v668 = vunpack.c.h.b16 %v121
  %v669 = vunpack.c.l.b16 %v122
  %v670 = vunpack.c.h.b16 %v122
  %v671 = vunpack.c.l.b16 %v123
  %v672 = vunpack.c.h.b16 %v123
  %v673 = vunpack.c.l.b16 %v124
  %v674 = vunpack.c.h.b16 %v124
  %v675 = vunpack.c.l.b16 %v125
  %v676 = vunpack.c.h.b16 %v125
  %v677 = vunpack.c.l.b16 %v126
  %v678 = vunpack.c.h.b16 %v126
  %v679 = vunpack.c.l.b16 %v127
  %v680 = vunpack.c.h.b16 %v127
  %v681 = vunpack.c.l.b16 %v128
  %v682 = vunpack.c.h.b16 %v128
  %v683 = vunpack.c.l.b16 %v129
  %v684 = vunpack.c.h.b16 %v129
  %v685 = vunpack.c.l.b16 %v130
  %v686 = vunpack.c.h.b16 %v130
  %v687 = vunpack.c.l.b16 %v131
  %v688 = vunpack.c.h.b16 %v131
  %v689 = vunpack.c.l.b16 %v132
  %v690 = vunpack.c.h.b16 %v132
  %v691 = vunpack.c.l.b16 %v133
  %v692 = vunpack.c.h.b16 %v133
  %v693 = vunpack.c.l.b16 %v134
  %v694 = vunpack.c.h.b16 %v134
  %v695 = vunpack.c.l.b16 %v135
  %v696 = vunpack.c.h.b16 %v135
  %v697 = vunpack.c.l.b16 %v136
  %v698 = vunpack.c.h.b16 %v136
  %v699 = vunpack.c.l.b16 %v137
  %v700 = vunpack.c.h.b16 %v137
  %v701 = vunpack.c.l.b16 %v138
  %v702 = vunpack.c.h.b16 %v138
  %v703 = vunpack.c.l.b16 %v139
  %v704 = vunpack.c.h.b16 %v139
  %v705 = vunpack.c.l.b16 %v140
  %v706 = vunpack.c.h.b16 %v140
  %v707 = vunpack.c.l.b16 %v141
  %v708 = vunpack.c.h.b16 %v141
  %v709 = vunpack.c.l.b16 %v142
  %v710 = vunpack.c.h.b16 %v142
  %v711 = vunpack.c.l.b16 %v143
  %v712 = vunpack.c.h.b16 %v143
  %v713 = vunpack.c.l.b16 %v144
  %v714 = vunpack.c.h.b16 %v144
  %v715 = vunpack.c.l.b16 %v145
  %v716 = vunpack.c.h.b16 %v145
  %v717 = vunpack.c.l.b16 %v146
  %v718 = vunpack.c.h.b16 %v146
  %v719 = vunpack.c.l.b16 %v147
  %v720 = vunpack.c.h.b16 %v147
  %v721 = vunpack.c.l.b16 %v148
  %v722 = vunpack.c.h.b16 %v148
  %v723 = vunpack.c.l.b16 %v149
  %v724 = vunpack.c.h.b16 %v149
  %v725 = vunpack.c.l.b16 %v150
  %v726 = vunpack.c.h.b16 %v150
  %v727 = vunpack.c.l.b16 %v151
  %v728 = vunpack.c.h.b16 %v151
  %v729 = vunpack.c.l.b16 %v152
  %v730 = vunpack.c.h.b16 %v152
  %v731 = vunpack.c.l.b16 %v153
  %v732 = vunpack.c.h.b16 %v153
  %v733 = vunpack.c.l.b16 %v154
  %v734 = vunpack.c.h.b16 %v154
  %v735 = vunpack.c.l.b16 %v155
  %v736 = vunpack.c.h.b16 %v155
  %v737 = vunpack.c.l.b16 %v156
  %v738 = vunpack.c.h.b16 %v156
  %v739 = vunpack.c.l.b16 %v157
  %v740 = vunpack.c.h.b16 %v157
  %v741 = vunpack.c.l.b16 %v158
  %v742 = vunpack.c.h.b16 %v158
  %v743 = vunpack.c.l.b16 %v159
  %v744 = vunpack.c.h.b16 %v159
  %v745 = vunpack.c.l.b16 %v160
  %v746 = vunpack.c.h.b16 %v160
  %v747 = vunpack.c.l.b16 %v161
  %v748 = vunpack.c.h.b16 %v161
  %v749 = vunpack.c.l.b16 %v162
  %v750 = vunpack.c.h.b16 %v162
  %v751 = vunpack.c.l.b16 %v163
  %v752 = vunpack.c.h.b16 %v163
  %v753 = vunpack.c.l.b16 %v164
  %v754 = vunpack.c.h.b16 %v164
  %v755 = vunpack.c.l.b16 %v165
  %v756 = vunpack.c.h.b16 %v165
  %v757 = vunpack.c.l.b16 %v166
  %v758 = vunpack.c.h.b16 %v166
  %v759 = vunpack.c.l.b16 %v167
  %v760 = vunpack.c.h.b16 %v167
  %v761 = vunpack.c.l.b16 %v168
  %v762 = vunpack.c.h.b16 %v168
  %v763 = vunpack.c.l.b16 %v169
  %v764 = vunpack.c.h.b16 %v169
  %v765 = vunpack.c.l.b16 %v170
  %v766 = vunpack.c.h.b16 %v170
  %v767 = vunpack.c.l.b16 %v171
  %v768 = vunpack.c.h.b16 %v171
  %v769 = vunpack.c.l.b16 %v172
  %v770 = vunpack.c.h.b16 %v172
  %v771 = vunpack.c.l.b16 %v173
  %v772 = vunpack.c.h.b16 %v173
  %v773 = vunpack.c.l.b16 %v174
  %v774 = vunpack.c.h.b16 %v174
  %v775 = vunpack.c.l.b16 %v175
  %v776 = vunpack.c.h.b16 %v175
  %v777 = vunpack.c.l.b16 %v176
  %v778 = vunpack.c.h.b16 %v176
  %v779 = vunpack.c.l.b16 %v177
  %v780 = vunpack.c.h.b16 %v177
  %v781 = vunpack.c.l.b16 %v178
  %v782 = vunpack.c.h.b16 %v178
  %v783 = vunpack.c.l.b16 %v179
  %v784 = vunpack.c.h.b16 %v179
  %v785 = vunpack.c.l.b16 %v180
  %v786 = vunpack.c.h.b16 %v180
  %v787 = vunpack.c.l.b16 %v181
  %v788 = vunpack.c.h.b16 %v181
  %v789 = vunpack.c.l.b16 %v182
  %v790 = vunpack.c.h.b16 %v182
  %v791 = vunpack.c.l.b16 %v183
  %v792 = vunpack.c.h.b16 %v183
  %v793 = vunpack.c.l.b16 %v184
  %v794 = vunpack.c.h.b16 %v184
  %v795 = vunpack.c.l.b16 %v185
  %v796 = vunpack.c.h.b16 %v185
  %v797 = vunpack.c.l.b16 %v186
  %v798 = vunpack.c.h.b16 %v186
  %v799 = vunpack.c.l.b16 %v187
  %v800 = vunpack.c.h.b16 %v187
  %v801 = vunpack.c.l.b16 %v188
  %v802 = vunpack.c.h.b16 %v188
  %v803 = vunpack.c.l.b16 %v189
  %v804 = vunpack.c.h.b16 %v189
  %v805 = vunpack.c.l.b16 %v190
  %v806 = vunpack.c.h.b16 %v190
  %v807 = vunpack.c.l.b16 %v191
  %v808 = vunpack.c.h.b16 %v191
  %v809 = vunpack.c.l.b16 %v192
  %v810 = vunpack.c.h.b16 %v192
  %v811 = vunpack.c.l.b16 %v193
  %v812 = vunpack.c.h.b16 %v193
  %v813 = vunpack.c.l.b16 %v194
  %v814 = vunpack.c.h.b16 %v194
  %v815 = vunpack.c.l.b16 %v195
  %v816 = vunpack.c.h.b16 %v195
  %v817 = vunpack.c.l.b16 %v196
  %v818 = vunpack.c.h.b16 %v196
  %v819 = vunpack.c.l.b16 %v197
  %v820 = vunpack.c.h.b16 %v197
  %v821 = vunpack.c.l.b16 %v198
  %v822 = vunpack.c.h.b16 %v198
  %v823 = vunpack.c.l.b16 %v199
  %v824 = vunpack.c.h.b16 %v199
  %v825 = vunpack.c.l.b16 %v200
  %v826 = vunpack.c.h.b16 %v200
  %v827 = vunpack.c.l.b16 %v201
  %v828 = vunpack.c.h.b16 %v201
  %v829 = vunpack.c.l.b16 %v202
  %v830 = vunpack.c.h.b16 %v202
  %v831 = vunpack.c.l.b16 %v203
  %v832 = vunpack.c.h.b16 %v203
  %v833 = vunpack.c.l.b16 %v204
  %v834 = vunpack.c.h.b16 %v204
  %v835 = vunpack.c.l.b16 %v205
  %v836 = vunpack.c.h.b16 %v205
  %v837 = vunpack.c.l.b16 %v206
  %v838 = vunpack.c.h.b16 %v206
  %v839 = vpack.c.b16 %v555, %v551
  %v840 = vpack.c.b16 %v556, %v552
  %v841 = vpack.c.b16 %v557, %v553
  %v842 = vpack.c.b16 %v558, %v554
  %v843 = vpack.c.b16 %v563, %v559
  %v844 = vpack.c.b16 %v564, %v560
  %v845 = vpack.c.b16 %v565, %v561
  %v846 = vpack.c.b16 %v566, %v562
  %v847 = vpack.c.b16 %v571, %v567
  %v848 = vpack.c.b16 %v572, %v568
  %v849 = vpack.c.b16 %v573, %v569
  %v850 = vpack.c.b16 %v574, %v570
  %v851 = vpack.c.b16 %v579, %v575
  %v852 = vpack.c.b16 %v580, %v576
  %v853 = vpack.c.b16 %v581, %v577
  %v854 = vpack.c.b16 %v582, %v578
  %v855 = vpack.c.b16 %v587, %v583
  %v856 = vpack.c.b16 %v588, %v584
  %v857 = vpack.c.b16 %v589, %v585
  %v858 = vpack.c.b16 %v590, %v586
  %v859 = vpack.c.b16 %v595, %v591
  %v860 = vpack.c.b16 %v596, %v592
  %v861 = vpack.c.b16 %v597, %v593
  %v862 = vpack.c.b16 %v598, %v594
  %v863 = vpack.c.b16 %v603, %v599
  %v864 = vpack.c.b16 %v604, %v600
  %v865 = vpack.c.b16 %v605, %v601
  %v866 = vpack.c.b16 %v606, %v602
  %v867 = vpack.c.b16 %v611, %v607
  %v868 = vpack.c.b16 %v612, %v608
  %v869 = vpack.c.b16 %v613, %v609
  %v870 = vpack.c.b16 %v614, %v610
  %v871 = vpack.c.b16 %v619, %v615
  %v872 = vpack.c.b16 %v620, %v616
  %v873 = vpack.c.b16 %v621, %v617
  %v874 = vpack.c.b16 %v622, %v618
  %v875 = vpack.c.b16 %v627, %v623
  %v876 = vpack.c.b16 %v628, %v624
  %v877 = vpack.c.b16 %v629, %v625
  %v878 = vpack.c.b16 %v630, %v626
  %v879 = vpack.c.b16 %v635, %v631
  %v880 = vpack.c.b16 %v636, %v632
  %v881 = vpack.c.b16 %v637, %v633
  %v882 = vpack.c.b16 %v638, %v634
  %v883 = vpack.c.b16 %v643, %v639
  %v884 = vpack.c.b16 %v644, %v640
  %v885 = vpack.c.b16 %v645, %v641
  %v886 = vpack.c.b16 %v646, %v642
  %v887 = vpack.c.b16 %v651, %v647
  %v888 = vpack.c.b16 %v652, %v648
  %v889 = vpack.c.b16 %v653, %v649
  %v890 = vpack.c.b16 %v654, %v650
  %v891 = vpack.c.b16 %v659, %v655
  %v892 = vpack.c.b16 %v660, %v656
  %v893 = vpack.c.b16 %v661, %v657
  %v894 = vpack.c.b16 %v662, %v658
  %v895 = vpack.c.b16 %v667, %v663
  %v896 = vpack.c.b16 %v668, %v664
  %v897 = vpack.c.b16 %v669, %v665
  %v898 = vpack.c.b16 %v670, %v666
  %v899 = vpack.c.b16 %v675, %v671
  %v900 = vpack.c.b16 %v676, %v672
  %v901 = vpack.c.b16 %v677, %v673
  %v902 = vpack.c.b16 %v678, %v674
  %v903 = vpack.c.b16 %v683, %v679
  %v904 = vpack.c.b16 %v684, %v680
  %v905 = vpack.c.b16 %v685, %v681
  %v906 = vpack.c.b16 %v686, %v682
  %v907 = vpack.c.b16 %v691, %v687
  %v908 = vpack.c.b16 %v692, %v688
  %v909 = vpack.c.b16 %v693, %v689
  %v910 = vpack.c.b16 %v694, %v690
  %v911 = vpack.c.b16 %v699, %v695
  %v912 = vpack.c.b16 %v700, %v696
  %v913 = vpack.c.b16 %v701, %v697
  %v914 = vpack.c.b16 %v702, %v698
  %v915 = vpack.c.b16 %v707, %v703
  %v916 = vpack.c.b16 %v708, %v704
  %v917 = vpack.c.b16 %v709, %v705
  %v918 = vpack.c.b16 %v710, %v706
  %v919 = vpack.c.b16 %v715, %v711
  %v920 = vpack.c.b16 %v716, %v712
  %v921 = vpack.c.b16 %v717, %v713
  %v922 = vpack.c.b16 %v718, %v714
  %v923 = vpack.c.b16 %v723, %v719
  %v924 = vpack.c.b16 %v724, %v720
  %v925 = vpack.c.b16 %v725, %v721
  %v926 = vpack.c.b16 %v726, %v722
  %v927 = vpack.c.b16 %v731, %v727
  %v928 = vpack.c.b16 %v732, %v728
  %v929 = vpack.c.b16 %v733, %v729
  %v930 = vpack.c.b16 %v734, %v730
  %v931 = vpack.c.b16 %v739, %v735
  %v932 = vpack.c.b16 %v740, %v736
  %v933 = vpack.c.b16 %v741, %v737
  %v934 = vpack.c.b16 %v742, %v738
  %v935 = vpack.c.b16 %v747, %v743
  %v936 = vpack.c.b16 %v748, %v744
  %v937 = vpack.c.b16 %v749, %v745
  %v938 = vpack.c.b16 %v750, %v746
  %v939 = vpack.c.b16 %v755, %v751
  %v940 = vpack.c.b16 %v756, %v752
  %v941 = vpack.c.b16 %v757, %v753
  %v942 = vpack.c.b16 %v758, %v754
  %v943 = vpack.c.b16 %v763, %v759
  %v944 = vpack.c.b16 %v764, %v760
  %v945 = vpack.c.b16 %v765, %v761
  %v946 = vpack.c.b16 %v766, %v762
  %v947 = vpack.c.b16 %v771, %v767
  %v948 = vpack.c.b16 %v772, %v768
  %v949 = vpack.c.b16 %v773, %v769
  %v950 = vpack.c.b16 %v774, %v770
  %v951 = vpack.c.b16 %v779, %v775
  %v952 = vpack.c.b16 %v780, %v776
  %v953 = vpack.c.b16 %v781, %v777
  %v954 = vpack.c.b16 %v782, %v778
  %v955 = vpack.c.b16 %v787, %v783
  %v956 = vpack.c.b16 %v788, %v784
  %v957 = vpack.c.b16 %v789, %v785
  %v958 = vpack.c.b16 %v790, %v786
  %v959 = vpack.c.b16 %v795, %v791
  %v960 = vpack.c.b16 %v796, %v792
  %v961 = vpack.c.b16 %v797, %v793
  %v962 = vpack.c.b16 %v798, %v794
  %v963 = vpack.c.b16 %v803, %v799
  %v964 = vpack.c.b16 %v804, %v800
  %v965 = vpack.c.b16 %v805, %v801
  %v966 = vpack.c.b16 %v806, %v802
  %v967 = vpack.c.b16 %v811, %v807
  %v968 = vpack.c.b16 %v812, %v808
  %v969 = vpack.c.b16 %v813, %v809
  %v970 = vpack.c.b16 %v814, %v810
  %v971 = vpack.c.b16 %v819, %v815
  %v972 = vpack.c.b16 %v820, %v816
  %v973 = vpack.c.b16 %v821, %v817
  %v974 = vpack.c.b16 %v822, %v818
  %v975 = vpack.c.b16 %v827, %v823
  %v976 = vpack.c.b16 %v828, %v824
  %v977 = vpack.c.b16 %v829, %v825
  %v978 = vpack.c.b16 %v830, %v826
  %v979 = vpack.c.b16 %v835, %v831
  %v980 = vpack.c.b16 %v836, %v832
  %v981 = vpack.c.b16 %v837, %v833
  %v982 = vpack.c.b16 %v838, %v834
  %vm1127 = vcmask 523264
  %v1129 = vsel %vm1127, %v339, 0
  %v1132 = vsel %vm1127, %v344, 0
  %v1135 = vsel %vm1127, %v349, 0
  %v1138 = vsel %vm1127, %v354, 0
  %v1141 = vsel %vm1127, %v359, 0
  %v1144 = vsel %vm1127, %v364, 0
  %v1147 = vsel %vm1127, %v369, 0
  %v1150 = vsel %vm1127, %v374, 0
  %1152 = vmatprep.subr.bf16.mxu0 %v868
  %1153 = vmatpush1.bf16.msra.mxu0 %v867
  %1154 = vmatprep.subr.bf16.mxu0 %v864
  %1155 = vmatpush1.bf16.msra.mxu0 %v863
  %1156 = vmatprep.subr.bf16.mxu0 %v860
  %1157 = vmatpush1.bf16.msra.mxu0 %v859
  %1158 = vmatprep.subr.bf16.mxu0 %v856
  %1159 = vmatpush1.bf16.msra.mxu0 %v855
  %1160 = vmatprep.subr.bf16.mxu0 %v852
  %1161 = vmatpush1.bf16.msra.mxu0 %v851
  %1162 = vmatprep.subr.bf16.mxu0 %v848
  %1163 = vmatpush1.bf16.msra.mxu0 %v847
  %1164 = vmatprep.subr.bf16.mxu0 %v844
  %1165 = vmatpush1.bf16.msra.mxu0 %v843
  %1166 = vmatprep.subr.bf16.mxu0 %v840
  %1167 = vmatpush1.bf16.msra.mxu0 %v839
  %1168 = vmatprep.subr.bf16.mxu0 %v900
  %1169 = vmatpush2.bf16.msra.mxu0 %v899
  %1170 = vmatprep.subr.bf16.mxu0 %v896
  %1171 = vmatpush2.bf16.msra.mxu0 %v895
  %1172 = vmatprep.subr.bf16.mxu0 %v892
  %1173 = vmatpush2.bf16.msra.mxu0 %v891
  %1174 = vmatprep.subr.bf16.mxu0 %v888
  %1175 = vmatpush2.bf16.msra.mxu0 %v887
  %1176 = vmatprep.subr.bf16.mxu0 %v884
  %1177 = vmatpush2.bf16.msra.mxu0 %v883
  %1178 = vmatprep.subr.bf16.mxu0 %v880
  %1179 = vmatpush2.bf16.msra.mxu0 %v879
  %1180 = vmatprep.subr.bf16.mxu0 %v876
  %1181 = vmatpush2.bf16.msra.mxu0 %v875
  %1182 = vmatprep.subr.bf16.mxu0 %v872
  %1183 = vmatpush2.bf16.msra.mxu0 %v871
  %1184 = vmatprep.mubr.bf16.mxu0 %v336
  %1185 = vmatmul.mubr.bf16.gmra.mxu0 %v335
  %v1186 = vpop.f32.mrf.mxu0
  %v1187 = vadd.f32 0.0, %v1186
  %v1188 = vpop.f32.mrf.mxu0
  %v1189 = vadd.f32 0.0, %v1188
  %v1190 = vpop.f32.mrf.mxu0
  %v1191 = vadd.f32 0.0, %v1190
  %v1192 = vpop.f32.mrf.mxu0
  %v1193 = vadd.f32 0.0, %v1192
  %1194 = vmatprep.mubr.bf16.mxu0 %v341
  %1195 = vmatmul.mubr.bf16.gmra.mxu0 %v340
  %v1196 = vpop.f32.mrf.mxu0
  %v1197 = vadd.f32 0.0, %v1196
  %v1198 = vpop.f32.mrf.mxu0
  %v1199 = vadd.f32 0.0, %v1198
  %v1200 = vpop.f32.mrf.mxu0
  %v1201 = vadd.f32 0.0, %v1200
  %v1202 = vpop.f32.mrf.mxu0
  %v1203 = vadd.f32 0.0, %v1202
  %1204 = vmatprep.mubr.bf16.mxu0 %v346
  %1205 = vmatmul.mubr.bf16.gmra.mxu0 %v345
  %v1206 = vpop.f32.mrf.mxu0
  %v1207 = vadd.f32 0.0, %v1206
  %v1208 = vpop.f32.mrf.mxu0
  %v1209 = vadd.f32 0.0, %v1208
  %v1210 = vpop.f32.mrf.mxu0
  %v1211 = vadd.f32 0.0, %v1210
  %v1212 = vpop.f32.mrf.mxu0
  %v1213 = vadd.f32 0.0, %v1212
  %1214 = vmatprep.mubr.bf16.mxu0 %v351
  %1215 = vmatmul.mubr.bf16.gmra.mxu0 %v350
  %v1216 = vpop.f32.mrf.mxu0
  %v1217 = vadd.f32 0.0, %v1216
  %v1218 = vpop.f32.mrf.mxu0
  %v1219 = vadd.f32 0.0, %v1218
  %v1220 = vpop.f32.mrf.mxu0
  %v1221 = vadd.f32 0.0, %v1220
  %v1222 = vpop.f32.mrf.mxu0
  %v1223 = vadd.f32 0.0, %v1222
  %1224 = vmatprep.mubr.bf16.mxu0 %v356
  %1225 = vmatmul.mubr.bf16.gmra.mxu0 %v355
  %v1226 = vpop.f32.mrf.mxu0
  %v1227 = vadd.f32 0.0, %v1226
  %v1228 = vpop.f32.mrf.mxu0
  %v1229 = vadd.f32 0.0, %v1228
  %v1230 = vpop.f32.mrf.mxu0
  %v1231 = vadd.f32 0.0, %v1230
  %v1232 = vpop.f32.mrf.mxu0
  %v1233 = vadd.f32 0.0, %v1232
  %1234 = vmatprep.mubr.bf16.mxu0 %v361
  %1235 = vmatmul.mubr.bf16.gmra.mxu0 %v360
  %v1236 = vpop.f32.mrf.mxu0
  %v1237 = vadd.f32 0.0, %v1236
  %v1238 = vpop.f32.mrf.mxu0
  %v1239 = vadd.f32 0.0, %v1238
  %v1240 = vpop.f32.mrf.mxu0
  %v1241 = vadd.f32 0.0, %v1240
  %v1242 = vpop.f32.mrf.mxu0
  %v1243 = vadd.f32 0.0, %v1242
  %1244 = vmatprep.mubr.bf16.mxu0 %v366
  %1245 = vmatmul.mubr.bf16.gmra.mxu0 %v365
  %v1246 = vpop.f32.mrf.mxu0
  %v1247 = vadd.f32 0.0, %v1246
  %v1248 = vpop.f32.mrf.mxu0
  %v1249 = vadd.f32 0.0, %v1248
  %v1250 = vpop.f32.mrf.mxu0
  %v1251 = vadd.f32 0.0, %v1250
  %v1252 = vpop.f32.mrf.mxu0
  %v1253 = vadd.f32 0.0, %v1252
  %1254 = vmatprep.mubr.bf16.mxu0 %v371
  %1255 = vmatmul.mubr.bf16.gmra.mxu0 %v370
  %v1256 = vpop.f32.mrf.mxu0
  %v1257 = vadd.f32 0.0, %v1256
  %v1258 = vpop.f32.mrf.mxu0
  %v1259 = vadd.f32 0.0, %v1258
  %v1260 = vpop.f32.mrf.mxu0
  %v1261 = vadd.f32 0.0, %v1260
  %v1262 = vpop.f32.mrf.mxu0
  %v1263 = vadd.f32 0.0, %v1262
  %1264 = vdwg.mxu0
  %1265 = vmatprep.subr.bf16.mxu0 %v932
  %1266 = vmatpush1.bf16.msra.mxu0 %v931
  %1267 = vmatprep.subr.bf16.mxu0 %v928
  %1268 = vmatpush1.bf16.msra.mxu0 %v927
  %1269 = vmatprep.subr.bf16.mxu0 %v924
  %1270 = vmatpush1.bf16.msra.mxu0 %v923
  %1271 = vmatprep.subr.bf16.mxu0 %v920
  %1272 = vmatpush1.bf16.msra.mxu0 %v919
  %1273 = vmatprep.subr.bf16.mxu0 %v916
  %1274 = vmatpush1.bf16.msra.mxu0 %v915
  %1275 = vmatprep.subr.bf16.mxu0 %v912
  %1276 = vmatpush1.bf16.msra.mxu0 %v911
  %1277 = vmatprep.subr.bf16.mxu0 %v908
  %1278 = vmatpush1.bf16.msra.mxu0 %v907
  %1279 = vmatprep.subr.bf16.mxu0 %v904
  %1280 = vmatpush1.bf16.msra.mxu0 %v903
  %1281 = vmatprep.subr.bf16.mxu0 %v964
  %1282 = vmatpush2.bf16.msra.mxu0 %v963
  %1283 = vmatprep.subr.bf16.mxu0 %v960
  %1284 = vmatpush2.bf16.msra.mxu0 %v959
  %1285 = vmatprep.subr.bf16.mxu0 %v956
  %1286 = vmatpush2.bf16.msra.mxu0 %v955
  %1287 = vmatprep.subr.bf16.mxu0 %v952
  %1288 = vmatpush2.bf16.msra.mxu0 %v951
  %1289 = vmatprep.subr.bf16.mxu0 %v948
  %1290 = vmatpush2.bf16.msra.mxu0 %v947
  %1291 = vmatprep.subr.bf16.mxu0 %v944
  %1292 = vmatpush2.bf16.msra.mxu0 %v943
  %1293 = vmatprep.subr.bf16.mxu0 %v940
  %1294 = vmatpush2.bf16.msra.mxu0 %v939
  %1295 = vmatprep.subr.bf16.mxu0 %v936
  %1296 = vmatpush2.bf16.msra.mxu0 %v935
  %1297 = vmatprep.mubr.bf16.mxu0 %v338
  %1298 = vmatmul.mubr.bf16.gmra.mxu0 %v337
  %v1299 = vpop.f32.mrf.mxu0
  %v1300 = vadd.f32 %v1187, %v1299
  %v1301 = vpop.f32.mrf.mxu0
  %v1302 = vadd.f32 %v1189, %v1301
  %v1303 = vpop.f32.mrf.mxu0
  %v1304 = vadd.f32 %v1191, %v1303
  %v1305 = vpop.f32.mrf.mxu0
  %v1306 = vadd.f32 %v1193, %v1305
  %1307 = vmatprep.mubr.bf16.mxu0 %v343
  %1308 = vmatmul.mubr.bf16.gmra.mxu0 %v342
  %v1309 = vpop.f32.mrf.mxu0
  %v1310 = vadd.f32 %v1197, %v1309
  %v1311 = vpop.f32.mrf.mxu0
  %v1312 = vadd.f32 %v1199, %v1311
  %v1313 = vpop.f32.mrf.mxu0
  %v1314 = vadd.f32 %v1201, %v1313
  %v1315 = vpop.f32.mrf.mxu0
  %v1316 = vadd.f32 %v1203, %v1315
  %1317 = vmatprep.mubr.bf16.mxu0 %v348
  %1318 = vmatmul.mubr.bf16.gmra.mxu0 %v347
  %v1319 = vpop.f32.mrf.mxu0
  %v1320 = vadd.f32 %v1207, %v1319
  %v1321 = vpop.f32.mrf.mxu0
  %v1322 = vadd.f32 %v1209, %v1321
  %v1323 = vpop.f32.mrf.mxu0
  %v1324 = vadd.f32 %v1211, %v1323
  %v1325 = vpop.f32.mrf.mxu0
  %v1326 = vadd.f32 %v1213, %v1325
  %1327 = vmatprep.mubr.bf16.mxu0 %v353
  %1328 = vmatmul.mubr.bf16.gmra.mxu0 %v352
  %v1329 = vpop.f32.mrf.mxu0
  %v1330 = vadd.f32 %v1217, %v1329
  %v1331 = vpop.f32.mrf.mxu0
  %v1332 = vadd.f32 %v1219, %v1331
  %v1333 = vpop.f32.mrf.mxu0
  %v1334 = vadd.f32 %v1221, %v1333
  %v1335 = vpop.f32.mrf.mxu0
  %v1336 = vadd.f32 %v1223, %v1335
  %1337 = vmatprep.mubr.bf16.mxu0 %v358
  %1338 = vmatmul.mubr.bf16.gmra.mxu0 %v357
  %v1339 = vpop.f32.mrf.mxu0
  %v1340 = vadd.f32 %v1227, %v1339
  %v1341 = vpop.f32.mrf.mxu0
  %v1342 = vadd.f32 %v1229, %v1341
  %v1343 = vpop.f32.mrf.mxu0
  %v1344 = vadd.f32 %v1231, %v1343
  %v1345 = vpop.f32.mrf.mxu0
  %v1346 = vadd.f32 %v1233, %v1345
  %1347 = vmatprep.mubr.bf16.mxu0 %v363
  %1348 = vmatmul.mubr.bf16.gmra.mxu0 %v362
  %v1349 = vpop.f32.mrf.mxu0
  %v1350 = vadd.f32 %v1237, %v1349
  %v1351 = vpop.f32.mrf.mxu0
  %v1352 = vadd.f32 %v1239, %v1351
  %v1353 = vpop.f32.mrf.mxu0
  %v1354 = vadd.f32 %v1241, %v1353
  %v1355 = vpop.f32.mrf.mxu0
  %v1356 = vadd.f32 %v1243, %v1355
  %1357 = vmatprep.mubr.bf16.mxu0 %v368
  %1358 = vmatmul.mubr.bf16.gmra.mxu0 %v367
  %v1359 = vpop.f32.mrf.mxu0
  %v1360 = vadd.f32 %v1247, %v1359
  %v1361 = vpop.f32.mrf.mxu0
  %v1362 = vadd.f32 %v1249, %v1361
  %v1363 = vpop.f32.mrf.mxu0
  %v1364 = vadd.f32 %v1251, %v1363
  %v1365 = vpop.f32.mrf.mxu0
  %v1366 = vadd.f32 %v1253, %v1365
  %1367 = vmatprep.mubr.bf16.mxu0 %v373
  %1368 = vmatmul.mubr.bf16.gmra.mxu0 %v372
  %v1369 = vpop.f32.mrf.mxu0
  %v1370 = vadd.f32 %v1257, %v1369
  %v1371 = vpop.f32.mrf.mxu0
  %v1372 = vadd.f32 %v1259, %v1371
  %v1373 = vpop.f32.mrf.mxu0
  %v1374 = vadd.f32 %v1261, %v1373
  %v1375 = vpop.f32.mrf.mxu0
  %v1376 = vadd.f32 %v1263, %v1375
  %1377 = vdwg.mxu0
  %1378 = vmatprep.subr.bf16.mxu0 0
  %1379 = vmatpush1.bf16.msra.mxu0 0
  %1380 = vmatprep.subr.bf16.mxu0 0
  %1381 = vmatpush1.bf16.msra.mxu0 0
  %1382 = vmatprep.subr.bf16.mxu0 0
  %1383 = vmatpush1.bf16.msra.mxu0 0
  %1384 = vmatprep.subr.bf16.mxu0 0
  %1385 = vmatpush1.bf16.msra.mxu0 0
  %1386 = vmatprep.subr.bf16.mxu0 %v980
  %1387 = vmatpush1.bf16.msra.mxu0 %v979
  %1388 = vmatprep.subr.bf16.mxu0 %v976
  %1389 = vmatpush1.bf16.msra.mxu0 %v975
  %1390 = vmatprep.subr.bf16.mxu0 %v972
  %1391 = vmatpush1.bf16.msra.mxu0 %v971
  %1392 = vmatprep.subr.bf16.mxu0 %v968
  %1393 = vmatpush1.bf16.msra.mxu0 %v967
  %1394 = vmatprep.subr.bf16.mxu0 0
  %1395 = vmatpush2.bf16.msra.mxu0 0
  %1396 = vmatprep.subr.bf16.mxu0 0
  %1397 = vmatpush2.bf16.msra.mxu0 0
  %1398 = vmatprep.subr.bf16.mxu0 0
  %1399 = vmatpush2.bf16.msra.mxu0 0
  %1400 = vmatprep.subr.bf16.mxu0 0
  %1401 = vmatpush2.bf16.msra.mxu0 0
  %1402 = vmatprep.subr.bf16.mxu0 0
  %1403 = vmatpush2.bf16.msra.mxu0 0
  %1404 = vmatprep.subr.bf16.mxu0 0
  %1405 = vmatpush2.bf16.msra.mxu0 0
  %1406 = vmatprep.subr.bf16.mxu0 0
  %1407 = vmatpush2.bf16.msra.mxu0 0
  %1408 = vmatprep.subr.bf16.mxu0 0
  %1409 = vmatpush2.bf16.msra.mxu0 0
  %1410 = vmatprep.mubr.bf16.mxu0 0
  %1411 = vmatmul.mubr.bf16.gmra.mxu0 %v1129
  %v1412 = vpop.f32.mrf.mxu0
  %v1413 = vadd.f32 %v1300, %v1412
  %v1414 = vpop.f32.mrf.mxu0
  %v1415 = vadd.f32 %v1302, %v1414
  %v1416 = vpop.f32.mrf.mxu0
  %v1417 = vadd.f32 %v1304, %v1416
  %v1418 = vpop.f32.mrf.mxu0
  %v1419 = vadd.f32 %v1306, %v1418
  %1420 = vmatprep.mubr.bf16.mxu0 0
  %1421 = vmatmul.mubr.bf16.gmra.mxu0 %v1132
  %v1422 = vpop.f32.mrf.mxu0
  %v1423 = vadd.f32 %v1310, %v1422
  %v1424 = vpop.f32.mrf.mxu0
  %v1425 = vadd.f32 %v1312, %v1424
  %v1426 = vpop.f32.mrf.mxu0
  %v1427 = vadd.f32 %v1314, %v1426
  %v1428 = vpop.f32.mrf.mxu0
  %v1429 = vadd.f32 %v1316, %v1428
  %1430 = vmatprep.mubr.bf16.mxu0 0
  %1431 = vmatmul.mubr.bf16.gmra.mxu0 %v1135
  %v1432 = vpop.f32.mrf.mxu0
  %v1433 = vadd.f32 %v1320, %v1432
  %v1434 = vpop.f32.mrf.mxu0
  %v1435 = vadd.f32 %v1322, %v1434
  %v1436 = vpop.f32.mrf.mxu0
  %v1437 = vadd.f32 %v1324, %v1436
  %v1438 = vpop.f32.mrf.mxu0
  %v1439 = vadd.f32 %v1326, %v1438
  %1440 = vmatprep.mubr.bf16.mxu0 0
  %1441 = vmatmul.mubr.bf16.gmra.mxu0 %v1138
  %v1442 = vpop.f32.mrf.mxu0
  %v1443 = vadd.f32 %v1330, %v1442
  %v1444 = vpop.f32.mrf.mxu0
  %v1445 = vadd.f32 %v1332, %v1444
  %v1446 = vpop.f32.mrf.mxu0
  %v1447 = vadd.f32 %v1334, %v1446
  %v1448 = vpop.f32.mrf.mxu0
  %v1449 = vadd.f32 %v1336, %v1448
  %1450 = vmatprep.mubr.bf16.mxu0 0
  %1451 = vmatmul.mubr.bf16.gmra.mxu0 %v1141
  %v1452 = vpop.f32.mrf.mxu0
  %v1453 = vadd.f32 %v1340, %v1452
  %v1454 = vpop.f32.mrf.mxu0
  %v1455 = vadd.f32 %v1342, %v1454
  %v1456 = vpop.f32.mrf.mxu0
  %v1457 = vadd.f32 %v1344, %v1456
  %v1458 = vpop.f32.mrf.mxu0
  %v1459 = vadd.f32 %v1346, %v1458
  %1460 = vmatprep.mubr.bf16.mxu0 0
  %1461 = vmatmul.mubr.bf16.gmra.mxu0 %v1144
  %v1462 = vpop.f32.mrf.mxu0
  %v1463 = vadd.f32 %v1350, %v1462
  %v1464 = vpop.f32.mrf.mxu0
  %v1465 = vadd.f32 %v1352, %v1464
  %v1466 = vpop.f32.mrf.mxu0
  %v1467 = vadd.f32 %v1354, %v1466
  %v1468 = vpop.f32.mrf.mxu0
  %v1469 = vadd.f32 %v1356, %v1468
  %1470 = vmatprep.mubr.bf16.mxu0 0
  %1471 = vmatmul.mubr.bf16.gmra.mxu0 %v1147
  %v1472 = vpop.f32.mrf.mxu0
  %v1473 = vadd.f32 %v1360, %v1472
  %v1474 = vpop.f32.mrf.mxu0
  %v1475 = vadd.f32 %v1362, %v1474
  %v1476 = vpop.f32.mrf.mxu0
  %v1477 = vadd.f32 %v1364, %v1476
  %v1478 = vpop.f32.mrf.mxu0
  %v1479 = vadd.f32 %v1366, %v1478
  %1480 = vmatprep.mubr.bf16.mxu0 0
  %1481 = vmatmul.mubr.bf16.gmra.mxu0 %v1150
  %v1482 = vpop.f32.mrf.mxu0
  %v1483 = vadd.f32 %v1370, %v1482
  %v1484 = vpop.f32.mrf.mxu0
  %v1485 = vadd.f32 %v1372, %v1484
  %v1486 = vpop.f32.mrf.mxu0
  %v1487 = vadd.f32 %v1374, %v1486
  %v1488 = vpop.f32.mrf.mxu0
  %v1489 = vadd.f32 %v1376, %v1488
  %1490 = vdwg.mxu0
  %1491 = vmatprep.subr.bf16.mxu0 %v870
  %1492 = vmatpush1.bf16.msra.mxu0 %v869
  %1493 = vmatprep.subr.bf16.mxu0 %v866
  %1494 = vmatpush1.bf16.msra.mxu0 %v865
  %1495 = vmatprep.subr.bf16.mxu0 %v862
  %1496 = vmatpush1.bf16.msra.mxu0 %v861
  %1497 = vmatprep.subr.bf16.mxu0 %v858
  %1498 = vmatpush1.bf16.msra.mxu0 %v857
  %1499 = vmatprep.subr.bf16.mxu0 %v854
  %1500 = vmatpush1.bf16.msra.mxu0 %v853
  %1501 = vmatprep.subr.bf16.mxu0 %v850
  %1502 = vmatpush1.bf16.msra.mxu0 %v849
  %1503 = vmatprep.subr.bf16.mxu0 %v846
  %1504 = vmatpush1.bf16.msra.mxu0 %v845
  %1505 = vmatprep.subr.bf16.mxu0 %v842
  %1506 = vmatpush1.bf16.msra.mxu0 %v841
  %1507 = vmatprep.subr.bf16.mxu0 %v902
  %1508 = vmatpush2.bf16.msra.mxu0 %v901
  %1509 = vmatprep.subr.bf16.mxu0 %v898
  %1510 = vmatpush2.bf16.msra.mxu0 %v897
  %1511 = vmatprep.subr.bf16.mxu0 %v894
  %1512 = vmatpush2.bf16.msra.mxu0 %v893
  %1513 = vmatprep.subr.bf16.mxu0 %v890
  %1514 = vmatpush2.bf16.msra.mxu0 %v889
  %1515 = vmatprep.subr.bf16.mxu0 %v886
  %1516 = vmatpush2.bf16.msra.mxu0 %v885
  %1517 = vmatprep.subr.bf16.mxu0 %v882
  %1518 = vmatpush2.bf16.msra.mxu0 %v881
  %1519 = vmatprep.subr.bf16.mxu0 %v878
  %1520 = vmatpush2.bf16.msra.mxu0 %v877
  %1521 = vmatprep.subr.bf16.mxu0 %v874
  %1522 = vmatpush2.bf16.msra.mxu0 %v873
  %1523 = vmatprep.mubr.bf16.mxu0 %v336
  %1524 = vmatmul.mubr.bf16.gmra.mxu0 %v335
  %v1525 = vpop.f32.mrf.mxu0
  %v1526 = vadd.f32 0.0, %v1525
  %v1527 = vpop.f32.mrf.mxu0
  %v1528 = vadd.f32 0.0, %v1527
  %v1529 = vpop.f32.mrf.mxu0
  %v1530 = vadd.f32 0.0, %v1529
  %v1531 = vpop.f32.mrf.mxu0
  %v1532 = vadd.f32 0.0, %v1531
  %1533 = vmatprep.mubr.bf16.mxu0 %v341
  %1534 = vmatmul.mubr.bf16.gmra.mxu0 %v340
  %v1535 = vpop.f32.mrf.mxu0
  %v1536 = vadd.f32 0.0, %v1535
  %v1537 = vpop.f32.mrf.mxu0
  %v1538 = vadd.f32 0.0, %v1537
  %v1539 = vpop.f32.mrf.mxu0
  %v1540 = vadd.f32 0.0, %v1539
  %v1541 = vpop.f32.mrf.mxu0
  %v1542 = vadd.f32 0.0, %v1541
  %1543 = vmatprep.mubr.bf16.mxu0 %v346
  %1544 = vmatmul.mubr.bf16.gmra.mxu0 %v345
  %v1545 = vpop.f32.mrf.mxu0
  %v1546 = vadd.f32 0.0, %v1545
  %v1547 = vpop.f32.mrf.mxu0
  %v1548 = vadd.f32 0.0, %v1547
  %v1549 = vpop.f32.mrf.mxu0
  %v1550 = vadd.f32 0.0, %v1549
  %v1551 = vpop.f32.mrf.mxu0
  %v1552 = vadd.f32 0.0, %v1551
  %1553 = vmatprep.mubr.bf16.mxu0 %v351
  %1554 = vmatmul.mubr.bf16.gmra.mxu0 %v350
  %v1555 = vpop.f32.mrf.mxu0
  %v1556 = vadd.f32 0.0, %v1555
  %v1557 = vpop.f32.mrf.mxu0
  %v1558 = vadd.f32 0.0, %v1557
  %v1559 = vpop.f32.mrf.mxu0
  %v1560 = vadd.f32 0.0, %v1559
  %v1561 = vpop.f32.mrf.mxu0
  %v1562 = vadd.f32 0.0, %v1561
  %1563 = vmatprep.mubr.bf16.mxu0 %v356
  %1564 = vmatmul.mubr.bf16.gmra.mxu0 %v355
  %v1565 = vpop.f32.mrf.mxu0
  %v1566 = vadd.f32 0.0, %v1565
  %v1567 = vpop.f32.mrf.mxu0
  %v1568 = vadd.f32 0.0, %v1567
  %v1569 = vpop.f32.mrf.mxu0
  %v1570 = vadd.f32 0.0, %v1569
  %v1571 = vpop.f32.mrf.mxu0
  %v1572 = vadd.f32 0.0, %v1571
  %1573 = vmatprep.mubr.bf16.mxu0 %v361
  %1574 = vmatmul.mubr.bf16.gmra.mxu0 %v360
  %v1575 = vpop.f32.mrf.mxu0
  %v1576 = vadd.f32 0.0, %v1575
  %v1577 = vpop.f32.mrf.mxu0
  %v1578 = vadd.f32 0.0, %v1577
  %v1579 = vpop.f32.mrf.mxu0
  %v1580 = vadd.f32 0.0, %v1579
  %v1581 = vpop.f32.mrf.mxu0
  %v1582 = vadd.f32 0.0, %v1581
  %1583 = vmatprep.mubr.bf16.mxu0 %v366
  %1584 = vmatmul.mubr.bf16.gmra.mxu0 %v365
  %v1585 = vpop.f32.mrf.mxu0
  %v1586 = vadd.f32 0.0, %v1585
  %v1587 = vpop.f32.mrf.mxu0
  %v1588 = vadd.f32 0.0, %v1587
  %v1589 = vpop.f32.mrf.mxu0
  %v1590 = vadd.f32 0.0, %v1589
  %v1591 = vpop.f32.mrf.mxu0
  %v1592 = vadd.f32 0.0, %v1591
  %1593 = vmatprep.mubr.bf16.mxu0 %v371
  %1594 = vmatmul.mubr.bf16.gmra.mxu0 %v370
  %v1595 = vpop.f32.mrf.mxu0
  %v1596 = vadd.f32 0.0, %v1595
  %v1597 = vpop.f32.mrf.mxu0
  %v1598 = vadd.f32 0.0, %v1597
  %v1599 = vpop.f32.mrf.mxu0
  %v1600 = vadd.f32 0.0, %v1599
  %v1601 = vpop.f32.mrf.mxu0
  %v1602 = vadd.f32 0.0, %v1601
  %1603 = vdwg.mxu0
  %1604 = vmatprep.subr.bf16.mxu0 %v934
  %1605 = vmatpush1.bf16.msra.mxu0 %v933
  %1606 = vmatprep.subr.bf16.mxu0 %v930
  %1607 = vmatpush1.bf16.msra.mxu0 %v929
  %1608 = vmatprep.subr.bf16.mxu0 %v926
  %1609 = vmatpush1.bf16.msra.mxu0 %v925
  %1610 = vmatprep.subr.bf16.mxu0 %v922
  %1611 = vmatpush1.bf16.msra.mxu0 %v921
  %1612 = vmatprep.subr.bf16.mxu0 %v918
  %1613 = vmatpush1.bf16.msra.mxu0 %v917
  %1614 = vmatprep.subr.bf16.mxu0 %v914
  %1615 = vmatpush1.bf16.msra.mxu0 %v913
  %1616 = vmatprep.subr.bf16.mxu0 %v910
  %1617 = vmatpush1.bf16.msra.mxu0 %v909
  %1618 = vmatprep.subr.bf16.mxu0 %v906
  %1619 = vmatpush1.bf16.msra.mxu0 %v905
  %1620 = vmatprep.subr.bf16.mxu0 %v966
  %1621 = vmatpush2.bf16.msra.mxu0 %v965
  %1622 = vmatprep.subr.bf16.mxu0 %v962
  %1623 = vmatpush2.bf16.msra.mxu0 %v961
  %1624 = vmatprep.subr.bf16.mxu0 %v958
  %1625 = vmatpush2.bf16.msra.mxu0 %v957
  %1626 = vmatprep.subr.bf16.mxu0 %v954
  %1627 = vmatpush2.bf16.msra.mxu0 %v953
  %1628 = vmatprep.subr.bf16.mxu0 %v950
  %1629 = vmatpush2.bf16.msra.mxu0 %v949
  %1630 = vmatprep.subr.bf16.mxu0 %v946
  %1631 = vmatpush2.bf16.msra.mxu0 %v945
  %1632 = vmatprep.subr.bf16.mxu0 %v942
  %1633 = vmatpush2.bf16.msra.mxu0 %v941
  %1634 = vmatprep.subr.bf16.mxu0 %v938
  %1635 = vmatpush2.bf16.msra.mxu0 %v937
  %1636 = vmatprep.mubr.bf16.mxu0 %v338
  %1637 = vmatmul.mubr.bf16.gmra.mxu0 %v337
  %v1638 = vpop.f32.mrf.mxu0
  %v1639 = vadd.f32 %v1526, %v1638
  %v1640 = vpop.f32.mrf.mxu0
  %v1641 = vadd.f32 %v1528, %v1640
  %v1642 = vpop.f32.mrf.mxu0
  %v1643 = vadd.f32 %v1530, %v1642
  %v1644 = vpop.f32.mrf.mxu0
  %v1645 = vadd.f32 %v1532, %v1644
  %1646 = vmatprep.mubr.bf16.mxu0 %v343
  %1647 = vmatmul.mubr.bf16.gmra.mxu0 %v342
  %v1648 = vpop.f32.mrf.mxu0
  %v1649 = vadd.f32 %v1536, %v1648
  %v1650 = vpop.f32.mrf.mxu0
  %v1651 = vadd.f32 %v1538, %v1650
  %v1652 = vpop.f32.mrf.mxu0
  %v1653 = vadd.f32 %v1540, %v1652
  %v1654 = vpop.f32.mrf.mxu0
  %v1655 = vadd.f32 %v1542, %v1654
  %1656 = vmatprep.mubr.bf16.mxu0 %v348
  %1657 = vmatmul.mubr.bf16.gmra.mxu0 %v347
  %v1658 = vpop.f32.mrf.mxu0
  %v1659 = vadd.f32 %v1546, %v1658
  %v1660 = vpop.f32.mrf.mxu0
  %v1661 = vadd.f32 %v1548, %v1660
  %v1662 = vpop.f32.mrf.mxu0
  %v1663 = vadd.f32 %v1550, %v1662
  %v1664 = vpop.f32.mrf.mxu0
  %v1665 = vadd.f32 %v1552, %v1664
  %1666 = vmatprep.mubr.bf16.mxu0 %v353
  %1667 = vmatmul.mubr.bf16.gmra.mxu0 %v352
  %v1668 = vpop.f32.mrf.mxu0
  %v1669 = vadd.f32 %v1556, %v1668
  %v1670 = vpop.f32.mrf.mxu0
  %v1671 = vadd.f32 %v1558, %v1670
  %v1672 = vpop.f32.mrf.mxu0
  %v1673 = vadd.f32 %v1560, %v1672
  %v1674 = vpop.f32.mrf.mxu0
  %v1675 = vadd.f32 %v1562, %v1674
  %1676 = vmatprep.mubr.bf16.mxu0 %v358
  %1677 = vmatmul.mubr.bf16.gmra.mxu0 %v357
  %v1678 = vpop.f32.mrf.mxu0
  %v1679 = vadd.f32 %v1566, %v1678
  %v1680 = vpop.f32.mrf.mxu0
  %v1681 = vadd.f32 %v1568, %v1680
  %v1682 = vpop.f32.mrf.mxu0
  %v1683 = vadd.f32 %v1570, %v1682
  %v1684 = vpop.f32.mrf.mxu0
  %v1685 = vadd.f32 %v1572, %v1684
  %1686 = vmatprep.mubr.bf16.mxu0 %v363
  %1687 = vmatmul.mubr.bf16.gmra.mxu0 %v362
  %v1688 = vpop.f32.mrf.mxu0
  %v1689 = vadd.f32 %v1576, %v1688
  %v1690 = vpop.f32.mrf.mxu0
  %v1691 = vadd.f32 %v1578, %v1690
  %v1692 = vpop.f32.mrf.mxu0
  %v1693 = vadd.f32 %v1580, %v1692
  %v1694 = vpop.f32.mrf.mxu0
  %v1695 = vadd.f32 %v1582, %v1694
  %1696 = vmatprep.mubr.bf16.mxu0 %v368
  %1697 = vmatmul.mubr.bf16.gmra.mxu0 %v367
  %v1698 = vpop.f32.mrf.mxu0
  %v1699 = vadd.f32 %v1586, %v1698
  %v1700 = vpop.f32.mrf.mxu0
  %v1701 = vadd.f32 %v1588, %v1700
  %v1702 = vpop.f32.mrf.mxu0
  %v1703 = vadd.f32 %v1590, %v1702
  %v1704 = vpop.f32.mrf.mxu0
  %v1705 = vadd.f32 %v1592, %v1704
  %1706 = vmatprep.mubr.bf16.mxu0 %v373
  %1707 = vmatmul.mubr.bf16.gmra.mxu0 %v372
  %v1708 = vpop.f32.mrf.mxu0
  %v1709 = vadd.f32 %v1596, %v1708
  %v1710 = vpop.f32.mrf.mxu0
  %v1711 = vadd.f32 %v1598, %v1710
  %v1712 = vpop.f32.mrf.mxu0
  %v1713 = vadd.f32 %v1600, %v1712
  %v1714 = vpop.f32.mrf.mxu0
  %v1715 = vadd.f32 %v1602, %v1714
  %1716 = vdwg.mxu0
  %1717 = vmatprep.subr.bf16.mxu0 0
  %1718 = vmatpush1.bf16.msra.mxu0 0
  %1719 = vmatprep.subr.bf16.mxu0 0
  %1720 = vmatpush1.bf16.msra.mxu0 0
  %1721 = vmatprep.subr.bf16.mxu0 0
  %1722 = vmatpush1.bf16.msra.mxu0 0
  %1723 = vmatprep.subr.bf16.mxu0 0
  %1724 = vmatpush1.bf16.msra.mxu0 0
  %1725 = vmatprep.subr.bf16.mxu0 %v982
  %1726 = vmatpush1.bf16.msra.mxu0 %v981
  %1727 = vmatprep.subr.bf16.mxu0 %v978
  %1728 = vmatpush1.bf16.msra.mxu0 %v977
  %1729 = vmatprep.subr.bf16.mxu0 %v974
  %1730 = vmatpush1.bf16.msra.mxu0 %v973
  %1731 = vmatprep.subr.bf16.mxu0 %v970
  %1732 = vmatpush1.bf16.msra.mxu0 %v969
  %1733 = vmatprep.subr.bf16.mxu0 0
  %1734 = vmatpush2.bf16.msra.mxu0 0
  %1735 = vmatprep.subr.bf16.mxu0 0
  %1736 = vmatpush2.bf16.msra.mxu0 0
  %1737 = vmatprep.subr.bf16.mxu0 0
  %1738 = vmatpush2.bf16.msra.mxu0 0
  %1739 = vmatprep.subr.bf16.mxu0 0
  %1740 = vmatpush2.bf16.msra.mxu0 0
  %1741 = vmatprep.subr.bf16.mxu0 0
  %1742 = vmatpush2.bf16.msra.mxu0 0
  %1743 = vmatprep.subr.bf16.mxu0 0
  %1744 = vmatpush2.bf16.msra.mxu0 0
  %1745 = vmatprep.subr.bf16.mxu0 0
  %1746 = vmatpush2.bf16.msra.mxu0 0
  %1747 = vmatprep.subr.bf16.mxu0 0
  %1748 = vmatpush2.bf16.msra.mxu0 0
  %1749 = vmatprep.mubr.bf16.mxu0 0
  %1750 = vmatmul.mubr.bf16.gmra.mxu0 %v1129
  %v1751 = vpop.f32.mrf.mxu0
  %v1752 = vadd.f32 %v1639, %v1751
  %v1753 = vpop.f32.mrf.mxu0
  %v1754 = vadd.f32 %v1641, %v1753
  %v1755 = vpop.f32.mrf.mxu0
  %v1756 = vadd.f32 %v1643, %v1755
  %v1757 = vpop.f32.mrf.mxu0
  %v1758 = vadd.f32 %v1645, %v1757
  %1759 = vmatprep.mubr.bf16.mxu0 0
  %1760 = vmatmul.mubr.bf16.gmra.mxu0 %v1132
  %v1761 = vpop.f32.mrf.mxu0
  %v1762 = vadd.f32 %v1649, %v1761
  %v1763 = vpop.f32.mrf.mxu0
  %v1764 = vadd.f32 %v1651, %v1763
  %v1765 = vpop.f32.mrf.mxu0
  %v1766 = vadd.f32 %v1653, %v1765
  %v1767 = vpop.f32.mrf.mxu0
  %v1768 = vadd.f32 %v1655, %v1767
  %1769 = vmatprep.mubr.bf16.mxu0 0
  %1770 = vmatmul.mubr.bf16.gmra.mxu0 %v1135
  %v1771 = vpop.f32.mrf.mxu0
  %v1772 = vadd.f32 %v1659, %v1771
  %v1773 = vpop.f32.mrf.mxu0
  %v1774 = vadd.f32 %v1661, %v1773
  %v1775 = vpop.f32.mrf.mxu0
  %v1776 = vadd.f32 %v1663, %v1775
  %v1777 = vpop.f32.mrf.mxu0
  %v1778 = vadd.f32 %v1665, %v1777
  %1779 = vmatprep.mubr.bf16.mxu0 0
  %1780 = vmatmul.mubr.bf16.gmra.mxu0 %v1138
  %v1781 = vpop.f32.mrf.mxu0
  %v1782 = vadd.f32 %v1669, %v1781
  %v1783 = vpop.f32.mrf.mxu0
  %v1784 = vadd.f32 %v1671, %v1783
  %v1785 = vpop.f32.mrf.mxu0
  %v1786 = vadd.f32 %v1673, %v1785
  %v1787 = vpop.f32.mrf.mxu0
  %v1788 = vadd.f32 %v1675, %v1787
  %1789 = vmatprep.mubr.bf16.mxu0 0
  %1790 = vmatmul.mubr.bf16.gmra.mxu0 %v1141
  %v1791 = vpop.f32.mrf.mxu0
  %v1792 = vadd.f32 %v1679, %v1791
  %v1793 = vpop.f32.mrf.mxu0
  %v1794 = vadd.f32 %v1681, %v1793
  %v1795 = vpop.f32.mrf.mxu0
  %v1796 = vadd.f32 %v1683, %v1795
  %v1797 = vpop.f32.mrf.mxu0
  %v1798 = vadd.f32 %v1685, %v1797
  %1799 = vmatprep.mubr.bf16.mxu0 0
  %1800 = vmatmul.mubr.bf16.gmra.mxu0 %v1144
  %v1801 = vpop.f32.mrf.mxu0
  %v1802 = vadd.f32 %v1689, %v1801
  %v1803 = vpop.f32.mrf.mxu0
  %v1804 = vadd.f32 %v1691, %v1803
  %v1805 = vpop.f32.mrf.mxu0
  %v1806 = vadd.f32 %v1693, %v1805
  %v1807 = vpop.f32.mrf.mxu0
  %v1808 = vadd.f32 %v1695, %v1807
  %1809 = vmatprep.mubr.bf16.mxu0 0
  %1810 = vmatmul.mubr.bf16.gmra.mxu0 %v1147
  %v1811 = vpop.f32.mrf.mxu0
  %v1812 = vadd.f32 %v1699, %v1811
  %v1813 = vpop.f32.mrf.mxu0
  %v1814 = vadd.f32 %v1701, %v1813
  %v1815 = vpop.f32.mrf.mxu0
  %v1816 = vadd.f32 %v1703, %v1815
  %v1817 = vpop.f32.mrf.mxu0
  %v1818 = vadd.f32 %v1705, %v1817
  %1819 = vmatprep.mubr.bf16.mxu0 0
  %1820 = vmatmul.mubr.bf16.gmra.mxu0 %v1150
  %v1821 = vpop.f32.mrf.mxu0
  %v1822 = vadd.f32 %v1709, %v1821
  %v1823 = vpop.f32.mrf.mxu0
  %v1824 = vadd.f32 %v1711, %v1823
  %v1825 = vpop.f32.mrf.mxu0
  %v1826 = vadd.f32 %v1713, %v1825
  %v1827 = vpop.f32.mrf.mxu0
  %v1828 = vadd.f32 %v1715, %v1827
  %1829 = vdwg.mxu0
  %v1830 = vld [vmem:[%s2] sm:$0xff]
  %v1831 = vld [vmem:[%s2 + $0x8] sm:$0xff]
  %v1832 = vld [vmem:[%s2 + $0x10] sm:$0xff]
  %v1833 = vld [vmem:[%s2 + $0x18] sm:$0xff]
  %v1834 = vld [vmem:[%s2 + $0x20] sm:$0xff]
  %v1835 = vld [vmem:[%s2 + $0x28] sm:$0xff]
  %v1836 = vld [vmem:[%s2 + $0x30] sm:$0xff]
  %v1837 = vld [vmem:[%s2 + $0x38] sm:$0xff]
  %v1838 = vld [vmem:[%s2 + $0x40] sm:$0xff]
  %v1839 = vld [vmem:[%s2 + $0x48] sm:$0xff]
  %v1840 = vld [vmem:[%s2 + $0x50] sm:$0xff]
  %v1841 = vld [vmem:[%s2 + $0x58] sm:$0xff]
  %v1842 = vld [vmem:[%s2 + $0x60] sm:$0xff]
  %v1843 = vld [vmem:[%s2 + $0x68] sm:$0xff]
  %v1844 = vld [vmem:[%s2 + $0x70] sm:$0xff]
  %v1845 = vld [vmem:[%s2 + $0x78] sm:$0xff]
  %1847 = vset.pattern.permute.xlu0 0
  %1848 = vperm.xlu0 %1847, %v1830
  %v1849 = vpop.permute.xlu0 %1848
  %1852 = vset.pattern.permute.xlu0 0
  %1853 = vperm.xlu0 %1852, %v1831
  %v1854 = vpop.permute.xlu0 %1853
  %1857 = vset.pattern.permute.xlu0 0
  %1858 = vperm.xlu0 %1857, %v1832
  %v1859 = vpop.permute.xlu0 %1858
  %1862 = vset.pattern.permute.xlu0 0
  %1863 = vperm.xlu0 %1862, %v1833
  %v1864 = vpop.permute.xlu0 %1863
  %1867 = vset.pattern.permute.xlu0 0
  %1868 = vperm.xlu0 %1867, %v1834
  %v1869 = vpop.permute.xlu0 %1868
  %1872 = vset.pattern.permute.xlu0 0
  %1873 = vperm.xlu0 %1872, %v1835
  %v1874 = vpop.permute.xlu0 %1873
  %1877 = vset.pattern.permute.xlu0 0
  %1878 = vperm.xlu0 %1877, %v1836
  %v1879 = vpop.permute.xlu0 %1878
  %1882 = vset.pattern.permute.xlu0 0
  %1883 = vperm.xlu0 %1882, %v1837
  %v1884 = vpop.permute.xlu0 %1883
  %1887 = vset.pattern.permute.xlu0 0
  %1888 = vperm.xlu0 %1887, %v1838
  %v1889 = vpop.permute.xlu0 %1888
  %1892 = vset.pattern.permute.xlu0 0
  %1893 = vperm.xlu0 %1892, %v1839
  %v1894 = vpop.permute.xlu0 %1893
  %1897 = vset.pattern.permute.xlu0 0
  %1898 = vperm.xlu0 %1897, %v1840
  %v1899 = vpop.permute.xlu0 %1898
  %1902 = vset.pattern.permute.xlu0 0
  %1903 = vperm.xlu0 %1902, %v1841
  %v1904 = vpop.permute.xlu0 %1903
  %1907 = vset.pattern.permute.xlu0 0
  %1908 = vperm.xlu0 %1907, %v1842
  %v1909 = vpop.permute.xlu0 %1908
  %1912 = vset.pattern.permute.xlu0 0
  %1913 = vperm.xlu0 %1912, %v1843
  %v1914 = vpop.permute.xlu0 %1913
  %1917 = vset.pattern.permute.xlu0 0
  %1918 = vperm.xlu0 %1917, %v1844
  %v1919 = vpop.permute.xlu0 %1918
  %1922 = vset.pattern.permute.xlu0 0
  %1923 = vperm.xlu0 %1922, %v1845
  %v1924 = vpop.permute.xlu0 %1923
  %v1926 = vmul.f32 %v1413, %v1849
  %v1927 = vmul.f32 %v1415, %v1849
  %v1928 = vmul.f32 %v1752, %v1849
  %v1929 = vmul.f32 %v1754, %v1849
  %v1930 = vmul.f32 %v1417, %v1854
  %v1931 = vmul.f32 %v1419, %v1854
  %v1932 = vmul.f32 %v1756, %v1854
  %v1933 = vmul.f32 %v1758, %v1854
  %v1934 = vmul.f32 %v1423, %v1859
  %v1935 = vmul.f32 %v1425, %v1859
  %v1936 = vmul.f32 %v1762, %v1859
  %v1937 = vmul.f32 %v1764, %v1859
  %v1938 = vmul.f32 %v1427, %v1864
  %v1939 = vmul.f32 %v1429, %v1864
  %v1940 = vmul.f32 %v1766, %v1864
  %v1941 = vmul.f32 %v1768, %v1864
  %v1942 = vmul.f32 %v1433, %v1869
  %v1943 = vmul.f32 %v1435, %v1869
  %v1944 = vmul.f32 %v1772, %v1869
  %v1945 = vmul.f32 %v1774, %v1869
  %v1946 = vmul.f32 %v1437, %v1874
  %v1947 = vmul.f32 %v1439, %v1874
  %v1948 = vmul.f32 %v1776, %v1874
  %v1949 = vmul.f32 %v1778, %v1874
  %v1950 = vmul.f32 %v1443, %v1879
  %v1951 = vmul.f32 %v1445, %v1879
  %v1952 = vmul.f32 %v1782, %v1879
  %v1953 = vmul.f32 %v1784, %v1879
  %v1954 = vmul.f32 %v1447, %v1884
  %v1955 = vmul.f32 %v1449, %v1884
  %v1956 = vmul.f32 %v1786, %v1884
  %v1957 = vmul.f32 %v1788, %v1884
  %v1958 = vmul.f32 %v1453, %v1889
  %v1959 = vmul.f32 %v1455, %v1889
  %v1960 = vmul.f32 %v1792, %v1889
  %v1961 = vmul.f32 %v1794, %v1889
  %v1962 = vmul.f32 %v1457, %v1894
  %v1963 = vmul.f32 %v1459, %v1894
  %v1964 = vmul.f32 %v1796, %v1894
  %v1965 = vmul.f32 %v1798, %v1894
  %v1966 = vmul.f32 %v1463, %v1899
  %v1967 = vmul.f32 %v1465, %v1899
  %v1968 = vmul.f32 %v1802, %v1899
  %v1969 = vmul.f32 %v1804, %v1899
  %v1970 = vmul.f32 %v1467, %v1904
  %v1971 = vmul.f32 %v1469, %v1904
  %v1972 = vmul.f32 %v1806, %v1904
  %v1973 = vmul.f32 %v1808, %v1904
  %v1974 = vmul.f32 %v1473, %v1909
  %v1975 = vmul.f32 %v1475, %v1909
  %v1976 = vmul.f32 %v1812, %v1909
  %v1977 = vmul.f32 %v1814, %v1909
  %v1978 = vmul.f32 %v1477, %v1914
  %v1979 = vmul.f32 %v1479, %v1914
  %v1980 = vmul.f32 %v1816, %v1914
  %v1981 = vmul.f32 %v1818, %v1914
  %v1982 = vmul.f32 %v1483, %v1919
  %v1983 = vmul.f32 %v1485, %v1919
  %v1984 = vmul.f32 %v1822, %v1919
  %v1985 = vmul.f32 %v1824, %v1919
  %v1986 = vmul.f32 %v1487, %v1924
  %v1987 = vmul.f32 %v1489, %v1924
  %v1988 = vmul.f32 %v1826, %v1924
  %v1989 = vmul.f32 %v1828, %v1924
  %s1990 = scalar_lea.vmem %s2, 128
  %v1991 = vld [vmem:[%s1990] sm:$0xff]
  %v1992 = vld [vmem:[%s1990 + $0x8] sm:$0xff]
  %v1993 = vld [vmem:[%s1990 + $0x10] sm:$0xff]
  %v1994 = vld [vmem:[%s1990 + $0x18] sm:$0xff]
  %v1995 = vld [vmem:[%s1990 + $0x20] sm:$0xff]
  %v1996 = vld [vmem:[%s1990 + $0x28] sm:$0xff]
  %v1997 = vld [vmem:[%s1990 + $0x30] sm:$0xff]
  %v1998 = vld [vmem:[%s1990 + $0x38] sm:$0xff]
  %v1999 = vld [vmem:[%s1990 + $0x40] sm:$0xff]
  %v2000 = vld [vmem:[%s1990 + $0x48] sm:$0xff]
  %v2001 = vld [vmem:[%s1990 + $0x50] sm:$0xff]
  %v2002 = vld [vmem:[%s1990 + $0x58] sm:$0xff]
  %v2003 = vld [vmem:[%s1990 + $0x60] sm:$0xff]
  %v2004 = vld [vmem:[%s1990 + $0x68] sm:$0xff]
  %v2005 = vld [vmem:[%s1990 + $0x70] sm:$0xff]
  %v2006 = vld [vmem:[%s1990 + $0x78] sm:$0xff]
  %2008 = vset.pattern.permute.xlu0 0
  %2009 = vperm.xlu0 %2008, %v1991
  %v2010 = vpop.permute.xlu0 %2009
  %2013 = vset.pattern.permute.xlu0 0
  %2014 = vperm.xlu0 %2013, %v1992
  %v2015 = vpop.permute.xlu0 %2014
  %2018 = vset.pattern.permute.xlu0 0
  %2019 = vperm.xlu0 %2018, %v1993
  %v2020 = vpop.permute.xlu0 %2019
  %2023 = vset.pattern.permute.xlu0 0
  %2024 = vperm.xlu0 %2023, %v1994
  %v2025 = vpop.permute.xlu0 %2024
  %2028 = vset.pattern.permute.xlu0 0
  %2029 = vperm.xlu0 %2028, %v1995
  %v2030 = vpop.permute.xlu0 %2029
  %2033 = vset.pattern.permute.xlu0 0
  %2034 = vperm.xlu0 %2033, %v1996
  %v2035 = vpop.permute.xlu0 %2034
  %2038 = vset.pattern.permute.xlu0 0
  %2039 = vperm.xlu0 %2038, %v1997
  %v2040 = vpop.permute.xlu0 %2039
  %2043 = vset.pattern.permute.xlu0 0
  %2044 = vperm.xlu0 %2043, %v1998
  %v2045 = vpop.permute.xlu0 %2044
  %2048 = vset.pattern.permute.xlu0 0
  %2049 = vperm.xlu0 %2048, %v1999
  %v2050 = vpop.permute.xlu0 %2049
  %2053 = vset.pattern.permute.xlu0 0
  %2054 = vperm.xlu0 %2053, %v2000
  %v2055 = vpop.permute.xlu0 %2054
  %2058 = vset.pattern.permute.xlu0 0
  %2059 = vperm.xlu0 %2058, %v2001
  %v2060 = vpop.permute.xlu0 %2059
  %2063 = vset.pattern.permute.xlu0 0
  %2064 = vperm.xlu0 %2063, %v2002
  %v2065 = vpop.permute.xlu0 %2064
  %2068 = vset.pattern.permute.xlu0 0
  %2069 = vperm.xlu0 %2068, %v2003
  %v2070 = vpop.permute.xlu0 %2069
  %2073 = vset.pattern.permute.xlu0 0
  %2074 = vperm.xlu0 %2073, %v2004
  %v2075 = vpop.permute.xlu0 %2074
  %2078 = vset.pattern.permute.xlu0 0
  %2079 = vperm.xlu0 %2078, %v2005
  %v2080 = vpop.permute.xlu0 %2079
  %2083 = vset.pattern.permute.xlu0 0
  %2084 = vperm.xlu0 %2083, %v2006
  %v2085 = vpop.permute.xlu0 %2084
  %v2087 = vadd.f32 %v1926, %v2010
  %v2088 = vadd.f32 %v1927, %v2010
  %v2089 = vadd.f32 %v1928, %v2010
  %v2090 = vadd.f32 %v1929, %v2010
  %v2091 = vadd.f32 %v1930, %v2015
  %v2092 = vadd.f32 %v1931, %v2015
  %v2093 = vadd.f32 %v1932, %v2015
  %v2094 = vadd.f32 %v1933, %v2015
  %v2095 = vadd.f32 %v1934, %v2020
  %v2096 = vadd.f32 %v1935, %v2020
  %v2097 = vadd.f32 %v1936, %v2020
  %v2098 = vadd.f32 %v1937, %v2020
  %v2099 = vadd.f32 %v1938, %v2025
  %v2100 = vadd.f32 %v1939, %v2025
  %v2101 = vadd.f32 %v1940, %v2025
  %v2102 = vadd.f32 %v1941, %v2025
  %v2103 = vadd.f32 %v1942, %v2030
  %v2104 = vadd.f32 %v1943, %v2030
  %v2105 = vadd.f32 %v1944, %v2030
  %v2106 = vadd.f32 %v1945, %v2030
  %v2107 = vadd.f32 %v1946, %v2035
  %v2108 = vadd.f32 %v1947, %v2035
  %v2109 = vadd.f32 %v1948, %v2035
  %v2110 = vadd.f32 %v1949, %v2035
  %v2111 = vadd.f32 %v1950, %v2040
  %v2112 = vadd.f32 %v1951, %v2040
  %v2113 = vadd.f32 %v1952, %v2040
  %v2114 = vadd.f32 %v1953, %v2040
  %v2115 = vadd.f32 %v1954, %v2045
  %v2116 = vadd.f32 %v1955, %v2045
  %v2117 = vadd.f32 %v1956, %v2045
  %v2118 = vadd.f32 %v1957, %v2045
  %v2119 = vadd.f32 %v1958, %v2050
  %v2120 = vadd.f32 %v1959, %v2050
  %v2121 = vadd.f32 %v1960, %v2050
  %v2122 = vadd.f32 %v1961, %v2050
  %v2123 = vadd.f32 %v1962, %v2055
  %v2124 = vadd.f32 %v1963, %v2055
  %v2125 = vadd.f32 %v1964, %v2055
  %v2126 = vadd.f32 %v1965, %v2055
  %v2127 = vadd.f32 %v1966, %v2060
  %v2128 = vadd.f32 %v1967, %v2060
  %v2129 = vadd.f32 %v1968, %v2060
  %v2130 = vadd.f32 %v1969, %v2060
  %v2131 = vadd.f32 %v1970, %v2065
  %v2132 = vadd.f32 %v1971, %v2065
  %v2133 = vadd.f32 %v1972, %v2065
  %v2134 = vadd.f32 %v1973, %v2065
  %v2135 = vadd.f32 %v1974, %v2070
  %v2136 = vadd.f32 %v1975, %v2070
  %v2137 = vadd.f32 %v1976, %v2070
  %v2138 = vadd.f32 %v1977, %v2070
  %v2139 = vadd.f32 %v1978, %v2075
  %v2140 = vadd.f32 %v1979, %v2075
  %v2141 = vadd.f32 %v1980, %v2075
  %v2142 = vadd.f32 %v1981, %v2075
  %v2143 = vadd.f32 %v1982, %v2080
  %v2144 = vadd.f32 %v1983, %v2080
  %v2145 = vadd.f32 %v1984, %v2080
  %v2146 = vadd.f32 %v1985, %v2080
  %v2147 = vadd.f32 %v1986, %v2085
  %v2148 = vadd.f32 %v1987, %v2085
  %v2149 = vadd.f32 %v1988, %v2085
  %v2150 = vadd.f32 %v1989, %v2085
  %v2151 = vmax.f32 %v2087, 0.0
  %v2152 = vmax.f32 %v2088, 0.0
  %v2153 = vmax.f32 %v2089, 0.0
  %v2154 = vmax.f32 %v2090, 0.0
  %v2155 = vmax.f32 %v2091, 0.0
  %v2156 = vmax.f32 %v2092, 0.0
  %v2157 = vmax.f32 %v2093, 0.0
  %v2158 = vmax.f32 %v2094, 0.0
  %v2159 = vmax.f32 %v2095, 0.0
  %v2160 = vmax.f32 %v2096, 0.0
  %v2161 = vmax.f32 %v2097, 0.0
  %v2162 = vmax.f32 %v2098, 0.0
  %v2163 = vmax.f32 %v2099, 0.0
  %v2164 = vmax.f32 %v2100, 0.0
  %v2165 = vmax.f32 %v2101, 0.0
  %v2166 = vmax.f32 %v2102, 0.0
  %v2167 = vmax.f32 %v2103, 0.0
  %v2168 = vmax.f32 %v2104, 0.0
  %v2169 = vmax.f32 %v2105, 0.0
  %v2170 = vmax.f32 %v2106, 0.0
  %v2171 = vmax.f32 %v2107, 0.0
  %v2172 = vmax.f32 %v2108, 0.0
  %v2173 = vmax.f32 %v2109, 0.0
  %v2174 = vmax.f32 %v2110, 0.0
  %v2175 = vmax.f32 %v2111, 0.0
  %v2176 = vmax.f32 %v2112, 0.0
  %v2177 = vmax.f32 %v2113, 0.0
  %v2178 = vmax.f32 %v2114, 0.0
  %v2179 = vmax.f32 %v2115, 0.0
  %v2180 = vmax.f32 %v2116, 0.0
  %v2181 = vmax.f32 %v2117, 0.0
  %v2182 = vmax.f32 %v2118, 0.0
  %v2183 = vmax.f32 %v2119, 0.0
  %v2184 = vmax.f32 %v2120, 0.0
  %v2185 = vmax.f32 %v2121, 0.0
  %v2186 = vmax.f32 %v2122, 0.0
  %v2187 = vmax.f32 %v2123, 0.0
  %v2188 = vmax.f32 %v2124, 0.0
  %v2189 = vmax.f32 %v2125, 0.0
  %v2190 = vmax.f32 %v2126, 0.0
  %v2191 = vmax.f32 %v2127, 0.0
  %v2192 = vmax.f32 %v2128, 0.0
  %v2193 = vmax.f32 %v2129, 0.0
  %v2194 = vmax.f32 %v2130, 0.0
  %v2195 = vmax.f32 %v2131, 0.0
  %v2196 = vmax.f32 %v2132, 0.0
  %v2197 = vmax.f32 %v2133, 0.0
  %v2198 = vmax.f32 %v2134, 0.0
  %v2199 = vmax.f32 %v2135, 0.0
  %v2200 = vmax.f32 %v2136, 0.0
  %v2201 = vmax.f32 %v2137, 0.0
  %v2202 = vmax.f32 %v2138, 0.0
  %v2203 = vmax.f32 %v2139, 0.0
  %v2204 = vmax.f32 %v2140, 0.0
  %v2205 = vmax.f32 %v2141, 0.0
  %v2206 = vmax.f32 %v2142, 0.0
  %v2207 = vmax.f32 %v2143, 0.0
  %v2208 = vmax.f32 %v2144, 0.0
  %v2209 = vmax.f32 %v2145, 0.0
  %v2210 = vmax.f32 %v2146, 0.0
  %v2211 = vmax.f32 %v2147, 0.0
  %v2212 = vmax.f32 %v2148, 0.0
  %v2213 = vmax.f32 %v2149, 0.0
  %v2214 = vmax.f32 %v2150, 0.0
  %v2215 = vpack.c.bf16 %v2155, %v2151
  %v2216 = vpack.c.bf16 %v2156, %v2152
  %v2217 = vpack.c.bf16 %v2157, %v2153
  %v2218 = vpack.c.bf16 %v2158, %v2154
  %v2219 = vpack.c.bf16 %v2163, %v2159
  %v2220 = vpack.c.bf16 %v2164, %v2160
  %v2221 = vpack.c.bf16 %v2165, %v2161
  %v2222 = vpack.c.bf16 %v2166, %v2162
  %v2223 = vpack.c.bf16 %v2171, %v2167
  %v2224 = vpack.c.bf16 %v2172, %v2168
  %v2225 = vpack.c.bf16 %v2173, %v2169
  %v2226 = vpack.c.bf16 %v2174, %v2170
  %v2227 = vpack.c.bf16 %v2179, %v2175
  %v2228 = vpack.c.bf16 %v2180, %v2176
  %v2229 = vpack.c.bf16 %v2181, %v2177
  %v2230 = vpack.c.bf16 %v2182, %v2178
  %v2231 = vpack.c.bf16 %v2187, %v2183
  %v2232 = vpack.c.bf16 %v2188, %v2184
  %v2233 = vpack.c.bf16 %v2189, %v2185
  %v2234 = vpack.c.bf16 %v2190, %v2186
  %v2235 = vpack.c.bf16 %v2195, %v2191
  %v2236 = vpack.c.bf16 %v2196, %v2192
  %v2237 = vpack.c.bf16 %v2197, %v2193
  %v2238 = vpack.c.bf16 %v2198, %v2194
  %v2239 = vpack.c.bf16 %v2203, %v2199
  %v2240 = vpack.c.bf16 %v2204, %v2200
  %v2241 = vpack.c.bf16 %v2205, %v2201
  %v2242 = vpack.c.bf16 %v2206, %v2202
  %v2243 = vpack.c.bf16 %v2211, %v2207
  %v2244 = vpack.c.bf16 %v2212, %v2208
  %v2245 = vpack.c.bf16 %v2213, %v2209
  %v2246 = vpack.c.bf16 %v2214, %v2210
  %v2279 = vunpack.c.l.b16 %v2215
  %v2280 = vunpack.c.l.b16 %v2216
  %v2281 = vunpack.c.l.b16 %v2217
  %v2282 = vunpack.c.l.b16 %v2218
  %v2283 = vunpack.c.h.b16 %v2215
  %v2284 = vunpack.c.h.b16 %v2216
  %v2285 = vunpack.c.h.b16 %v2217
  %v2286 = vunpack.c.h.b16 %v2218
  %v2287 = vunpack.c.l.b16 %v2219
  %v2288 = vunpack.c.l.b16 %v2220
  %v2289 = vunpack.c.l.b16 %v2221
  %v2290 = vunpack.c.l.b16 %v2222
  %v2291 = vunpack.c.h.b16 %v2219
  %v2292 = vunpack.c.h.b16 %v2220
  %v2293 = vunpack.c.h.b16 %v2221
  %v2294 = vunpack.c.h.b16 %v2222
  %v2295 = vunpack.c.l.b16 %v2223
  %v2296 = vunpack.c.l.b16 %v2224
  %v2297 = vunpack.c.l.b16 %v2225
  %v2298 = vunpack.c.l.b16 %v2226
  %v2299 = vunpack.c.h.b16 %v2223
  %v2300 = vunpack.c.h.b16 %v2224
  %v2301 = vunpack.c.h.b16 %v2225
  %v2302 = vunpack.c.h.b16 %v2226
  %v2303 = vunpack.c.l.b16 %v2227
  %v2304 = vunpack.c.l.b16 %v2228
  %v2305 = vunpack.c.l.b16 %v2229
  %v2306 = vunpack.c.l.b16 %v2230
  %v2307 = vunpack.c.h.b16 %v2227
  %v2308 = vunpack.c.h.b16 %v2228
  %v2309 = vunpack.c.h.b16 %v2229
  %v2310 = vunpack.c.h.b16 %v2230
  %v2311 = vunpack.c.l.b16 %v2231
  %v2312 = vunpack.c.l.b16 %v2232
  %v2313 = vunpack.c.l.b16 %v2233
  %v2314 = vunpack.c.l.b16 %v2234
  %v2315 = vunpack.c.h.b16 %v2231
  %v2316 = vunpack.c.h.b16 %v2232
  %v2317 = vunpack.c.h.b16 %v2233
  %v2318 = vunpack.c.h.b16 %v2234
  %v2319 = vunpack.c.l.b16 %v2235
  %v2320 = vunpack.c.l.b16 %v2236
  %v2321 = vunpack.c.l.b16 %v2237
  %v2322 = vunpack.c.l.b16 %v2238
  %v2323 = vunpack.c.h.b16 %v2235
  %v2324 = vunpack.c.h.b16 %v2236
  %v2325 = vunpack.c.h.b16 %v2237
  %v2326 = vunpack.c.h.b16 %v2238
  %v2327 = vunpack.c.l.b16 %v2239
  %v2328 = vunpack.c.l.b16 %v2240
  %v2329 = vunpack.c.l.b16 %v2241
  %v2330 = vunpack.c.l.b16 %v2242
  %v2331 = vunpack.c.h.b16 %v2239
  %v2332 = vunpack.c.h.b16 %v2240
  %v2333 = vunpack.c.h.b16 %v2241
  %v2334 = vunpack.c.h.b16 %v2242
  %v2335 = vunpack.c.l.b16 %v2243
  %v2336 = vunpack.c.l.b16 %v2244
  %v2337 = vunpack.c.l.b16 %v2245
  %v2338 = vunpack.c.l.b16 %v2246
  %v2339 = vunpack.c.h.b16 %v2243
  %v2340 = vunpack.c.h.b16 %v2244
  %v2341 = vunpack.c.h.b16 %v2245
  %v2342 = vunpack.c.h.b16 %v2246
  %v2343 = vpack.c.b16 %v2280, %v2279
  %v2344 = vpack.c.b16 %v2282, %v2281
  %v2345 = vpack.c.b16 %v2284, %v2283
  %v2346 = vpack.c.b16 %v2286, %v2285
  %v2347 = vpack.c.b16 %v2288, %v2287
  %v2348 = vpack.c.b16 %v2290, %v2289
  %v2349 = vpack.c.b16 %v2292, %v2291
  %v2350 = vpack.c.b16 %v2294, %v2293
  %v2351 = vpack.c.b16 %v2296, %v2295
  %v2352 = vpack.c.b16 %v2298, %v2297
  %v2353 = vpack.c.b16 %v2300, %v2299
  %v2354 = vpack.c.b16 %v2302, %v2301
  %v2355 = vpack.c.b16 %v2304, %v2303
  %v2356 = vpack.c.b16 %v2306, %v2305
  %v2357 = vpack.c.b16 %v2308, %v2307
  %v2358 = vpack.c.b16 %v2310, %v2309
  %v2359 = vpack.c.b16 %v2312, %v2311
  %v2360 = vpack.c.b16 %v2314, %v2313
  %v2361 = vpack.c.b16 %v2316, %v2315
  %v2362 = vpack.c.b16 %v2318, %v2317
  %v2363 = vpack.c.b16 %v2320, %v2319
  %v2364 = vpack.c.b16 %v2322, %v2321
  %v2365 = vpack.c.b16 %v2324, %v2323
  %v2366 = vpack.c.b16 %v2326, %v2325
  %v2367 = vpack.c.b16 %v2328, %v2327
  %v2368 = vpack.c.b16 %v2330, %v2329
  %v2369 = vpack.c.b16 %v2332, %v2331
  %v2370 = vpack.c.b16 %v2334, %v2333
  %v2371 = vpack.c.b16 %v2336, %v2335
  %v2372 = vpack.c.b16 %v2338, %v2337
  %v2373 = vpack.c.b16 %v2340, %v2339
  %v2374 = vpack.c.b16 %v2342, %v2341
  %2407 = vst [vmem:[%s3] sm:$0xff] %v2343
  %2408 = vst [vmem:[%s3 + $0x8] sm:$0xff] %v2344
  %2409 = vst [vmem:[%s3 + $0x10] sm:$0xff] %v2345
  %2410 = vst [vmem:[%s3 + $0x18] sm:$0xff] %v2346
  %2411 = vst [vmem:[%s3 + $0x20] sm:$0xff] %v2347
  %2412 = vst [vmem:[%s3 + $0x28] sm:$0xff] %v2348
  %2413 = vst [vmem:[%s3 + $0x30] sm:$0xff] %v2349
  %2414 = vst [vmem:[%s3 + $0x38] sm:$0xff] %v2350
  %2415 = vst [vmem:[%s3 + $0x40] sm:$0xff] %v2351
  %2416 = vst [vmem:[%s3 + $0x48] sm:$0xff] %v2352
  %2417 = vst [vmem:[%s3 + $0x50] sm:$0xff] %v2353
  %2418 = vst [vmem:[%s3 + $0x58] sm:$0xff] %v2354
  %2419 = vst [vmem:[%s3 + $0x60] sm:$0xff] %v2355
  %2420 = vst [vmem:[%s3 + $0x68] sm:$0xff] %v2356
  %2421 = vst [vmem:[%s3 + $0x70] sm:$0xff] %v2357
  %2422 = vst [vmem:[%s3 + $0x78] sm:$0xff] %v2358
  %2423 = vst [vmem:[%s3 + $0x80] sm:$0xff] %v2359
  %2424 = vst [vmem:[%s3 + $0x88] sm:$0xff] %v2360
  %2425 = vst [vmem:[%s3 + $0x90] sm:$0xff] %v2361
  %2426 = vst [vmem:[%s3 + $0x98] sm:$0xff] %v2362
  %2427 = vst [vmem:[%s3 + $0xa0] sm:$0xff] %v2363
  %2428 = vst [vmem:[%s3 + $0xa8] sm:$0xff] %v2364
  %2429 = vst [vmem:[%s3 + $0xb0] sm:$0xff] %v2365
  %2430 = vst [vmem:[%s3 + $0xb8] sm:$0xff] %v2366
  %2431 = vst [vmem:[%s3 + $0xc0] sm:$0xff] %v2367
  %2432 = vst [vmem:[%s3 + $0xc8] sm:$0xff] %v2368
  %2433 = vst [vmem:[%s3 + $0xd0] sm:$0xff] %v2369
  %2434 = vst [vmem:[%s3 + $0xd8] sm:$0xff] %v2370
  %2435 = vst [vmem:[%s3 + $0xe0] sm:$0xff] %v2371
  %2436 = vst [vmem:[%s3 + $0xe8] sm:$0xff] %v2372
  %2437 = vst [vmem:[%s3 + $0xf0] sm:$0xff] %v2373
  %2438 = vst [vmem:[%s3 + $0xf8] sm:$0xff] %v2374
  // Predicated region
  $region14: #{ds_discriminator_forward.10} parent=0 // pred_check
    _
  $region15: #{ds_discriminator_forward.10} parent=0 // pred_check_branch
    %2440 = sbr.rel (0) target = $region17
  $region16: #{ds_discriminator_forward.10} parent=0 // pred_region
    _
  $region17: #{ds_discriminator_forward.10} parent=0 // pred_fallthru
    _
  // Predicated region
  $region18: #{ds_discriminator_forward.10} parent=0 // pred_check
    _
  $region19: #{ds_discriminator_forward.10} parent=0 // pred_check_branch
    %2442 = sbr.rel (0) target = $region21
  $region20: #{ds_discriminator_forward.10} parent=0 // pred_region
    _
  $region21: #{ds_discriminator_forward.10} parent=0 // pred_fallthru
    _

// kernel: ds_discriminator_forward.11
$region0: #{ds_discriminator_forward.11}
  #allocation0 [shape = 'u32[]', space=smem, size = 0x4, offset = 0x4, fixed_abs, tag = 'smem constant byte address 0x4 - core index']
  #allocation1 [shape = 'u32[144,128]{1,0:T(1,128)}', space=vmem, size = 0x12000, scoped, tag = 'internal scratch']
  %s0 = inlined_call_operand.vmem [shape: bf16[64,288], index: 0, kind: input, shape index: {}]
  %s1 = inlined_call_operand.vmem [shape: bf16[288,2048], index: 1, kind: input, shape index: {}]
  %s2 = inlined_call_operand.vmem [shape: f32[2,64,1], index: 2, kind: input, shape index: {}]
  %s3 = inlined_call_operand.vmem [shape: bf16[64,2048], index: 3, kind: output, shape index: {}]
  %s4 = sld [smem:[#allocation0]]
  $region22: #{ds_discriminator_forward.11} parent=0
    _
  %s6 = ssub.s32 1, %s4
  %s7 = scalar_select 0, %s6, %s4
  // Predicated region
  $region2: #{ds_discriminator_forward.11} parent=0 // pred_check
    _
  $region3: #{ds_discriminator_forward.11} parent=0 // pred_check_branch
    %9 = sbr.rel (0) target = $region5
  $region4: #{ds_discriminator_forward.11} parent=0 // pred_region
    _
  $region5: #{ds_discriminator_forward.11} parent=0 // pred_fallthru
    _
  // Predicated region
  $region6: #{ds_discriminator_forward.11} parent=0 // pred_check
    _
  $region7: #{ds_discriminator_forward.11} parent=0 // pred_check_branch
    %11 = sbr.rel (0) target = $region9
  $region8: #{ds_discriminator_forward.11} parent=0 // pred_region
    _
  $region9: #{ds_discriminator_forward.11} parent=0 // pred_fallthru
    _
  // Predicated region
  $region10: #{ds_discriminator_forward.11} parent=0 // pred_check
    _
  $region11: #{ds_discriminator_forward.11} parent=0 // pred_check_branch
    %13 = sbr.rel (0) target = $region13
  $region12: #{ds_discriminator_forward.11} parent=0 // pred_region
    _
  $region13: #{ds_discriminator_forward.11} parent=0 // pred_fallthru
    _
  %v15 = vld [vmem:[%s0] sm:$0xff]
  %v16 = vld [vmem:[%s0 + $0x8] sm:$0xf]
  %v17 = vld [vmem:[%s0 + $0xc] sm:$0xff]
  %v18 = vld [vmem:[%s0 + $0x14] sm:$0xf]
  %v19 = vld [vmem:[%s0 + $0x18] sm:$0xff]
  %v20 = vld [vmem:[%s0 + $0x20] sm:$0xf]
  %v21 = vld [vmem:[%s0 + $0x24] sm:$0xff]
  %v22 = vld [vmem:[%s0 + $0x2c] sm:$0xf]
  %v23 = vld [vmem:[%s0 + $0x30] sm:$0xff]
  %v24 = vld [vmem:[%s0 + $0x38] sm:$0xf]
  %v25 = vld [vmem:[%s0 + $0x3c] sm:$0xff]
  %v26 = vld [vmem:[%s0 + $0x44] sm:$0xf]
  %v27 = vld [vmem:[%s0 + $0x48] sm:$0xff]
  %v28 = vld [vmem:[%s0 + $0x50] sm:$0xf]
  %v29 = vld [vmem:[%s0 + $0x54] sm:$0xff]
  %v30 = vld [vmem:[%s0 + $0x5c] sm:$0xf]
  %v31 = vld [vmem:[%s1] sm:$0xff]
  %v32 = vld [vmem:[%s1 + $0x8] sm:$0xff]
  %v33 = vld [vmem:[%s1 + $0x10] sm:$0xff]
  %v34 = vld [vmem:[%s1 + $0x18] sm:$0xff]
  %v35 = vld [vmem:[%s1 + $0x20] sm:$0xff]
  %v36 = vld [vmem:[%s1 + $0x28] sm:$0xff]
  %v37 = vld [vmem:[%s1 + $0x30] sm:$0xff]
  %v38 = vld [vmem:[%s1 + $0x38] sm:$0xff]
  %v39 = vld [vmem:[%s1 + $0x40] sm:$0xff]
  %v40 = vld [vmem:[%s1 + $0x48] sm:$0xff]
  %v41 = vld [vmem:[%s1 + $0x50] sm:$0xff]
  %v42 = vld [vmem:[%s1 + $0x58] sm:$0xff]
  %v43 = vld [vmem:[%s1 + $0x60] sm:$0xff]
  %v44 = vld [vmem:[%s1 + $0x68] sm:$0xff]
  %v45 = vld [vmem:[%s1 + $0x70] sm:$0xff]
  %v46 = vld [vmem:[%s1 + $0x78] sm:$0xff]
  %v47 = vld [vmem:[%s1 + $0x80] sm:$0xff]
  %v48 = vld [vmem:[%s1 + $0x88] sm:$0xff]
  %v49 = vld [vmem:[%s1 + $0x90] sm:$0xff]
  %v50 = vld [vmem:[%s1 + $0x98] sm:$0xff]
  %v51 = vld [vmem:[%s1 + $0xa0] sm:$0xff]
  %v52 = vld [vmem:[%s1 + $0xa8] sm:$0xff]
  %v53 = vld [vmem:[%s1 + $0xb0] sm:$0xff]
  %v54 = vld [vmem:[%s1 + $0xb8] sm:$0xff]
  %v55 = vld [vmem:[%s1 + $0xc0] sm:$0xff]
  %v56 = vld [vmem:[%s1 + $0xc8] sm:$0xff]
  %v57 = vld [vmem:[%s1 + $0xd0] sm:$0xff]
  %v58 = vld [vmem:[%s1 + $0xd8] sm:$0xff]
  %v59 = vld [vmem:[%s1 + $0xe0] sm:$0xff]
  %v60 = vld [vmem:[%s1 + $0xe8] sm:$0xff]
  %v61 = vld [vmem:[%s1 + $0xf0] sm:$0xff]
  %v62 = vld [vmem:[%s1 + $0xf8] sm:$0xff]
  %v63 = vld [vmem:[%s1 + $0x100] sm:$0xff]
  %v64 = vld [vmem:[%s1 + $0x108] sm:$0xff]
  %v65 = vld [vmem:[%s1 + $0x110] sm:$0xff]
  %v66 = vld [vmem:[%s1 + $0x118] sm:$0xff]
  %v67 = vld [vmem:[%s1 + $0x120] sm:$0xff]
  %v68 = vld [vmem:[%s1 + $0x128] sm:$0xff]
  %v69 = vld [vmem:[%s1 + $0x130] sm:$0xff]
  %v70 = vld [vmem:[%s1 + $0x138] sm:$0xff]
  %v71 = vld [vmem:[%s1 + $0x140] sm:$0xff]
  %v72 = vld [vmem:[%s1 + $0x148] sm:$0xff]
  %v73 = vld [vmem:[%s1 + $0x150] sm:$0xff]
  %v74 = vld [vmem:[%s1 + $0x158] sm:$0xff]
  %v75 = vld [vmem:[%s1 + $0x160] sm:$0xff]
  %v76 = vld [vmem:[%s1 + $0x168] sm:$0xff]
  %v77 = vld [vmem:[%s1 + $0x170] sm:$0xff]
  %v78 = vld [vmem:[%s1 + $0x178] sm:$0xff]
  %v79 = vld [vmem:[%s1 + $0x180] sm:$0xff]
  %v80 = vld [vmem:[%s1 + $0x188] sm:$0xff]
  %v81 = vld [vmem:[%s1 + $0x190] sm:$0xff]
  %v82 = vld [vmem:[%s1 + $0x198] sm:$0xff]
  %v83 = vld [vmem:[%s1 + $0x1a0] sm:$0xff]
  %v84 = vld [vmem:[%s1 + $0x1a8] sm:$0xff]
  %v85 = vld [vmem:[%s1 + $0x1b0] sm:$0xff]
  %v86 = vld [vmem:[%s1 + $0x1b8] sm:$0xff]
  %v87 = vld [vmem:[%s1 + $0x1c0] sm:$0xff]
  %v88 = vld [vmem:[%s1 + $0x1c8] sm:$0xff]
  %v89 = vld [vmem:[%s1 + $0x1d0] sm:$0xff]
  %v90 = vld [vmem:[%s1 + $0x1d8] sm:$0xff]
  %v91 = vld [vmem:[%s1 + $0x1e0] sm:$0xff]
  %v92 = vld [vmem:[%s1 + $0x1e8] sm:$0xff]
  %v93 = vld [vmem:[%s1 + $0x1f0] sm:$0xff]
  %v94 = vld [vmem:[%s1 + $0x1f8] sm:$0xff]
  %v95 = vld [vmem:[%s1 + $0x200] sm:$0xff]
  %v96 = vld [vmem:[%s1 + $0x208] sm:$0xff]
  %v97 = vld [vmem:[%s1 + $0x210] sm:$0xff]
  %v98 = vld [vmem:[%s1 + $0x218] sm:$0xff]
  %v99 = vld [vmem:[%s1 + $0x220] sm:$0xff]
  %v100 = vld [vmem:[%s1 + $0x228] sm:$0xff]
  %v101 = vld [vmem:[%s1 + $0x230] sm:$0xff]
  %v102 = vld [vmem:[%s1 + $0x238] sm:$0xff]
  %v103 = vld [vmem:[%s1 + $0x240] sm:$0xff]
  %v104 = vld [vmem:[%s1 + $0x248] sm:$0xff]
  %v105 = vld [vmem:[%s1 + $0x250] sm:$0xff]
  %v106 = vld [vmem:[%s1 + $0x258] sm:$0xff]
  %v107 = vld [vmem:[%s1 + $0x260] sm:$0xff]
  %v108 = vld [vmem:[%s1 + $0x268] sm:$0xff]
  %v109 = vld [vmem:[%s1 + $0x270] sm:$0xff]
  %v110 = vld [vmem:[%s1 + $0x278] sm:$0xff]
  %v111 = vld [vmem:[%s1 + $0x280] sm:$0xff]
  %v112 = vld [vmem:[%s1 + $0x288] sm:$0xff]
  %v113 = vld [vmem:[%s1 + $0x290] sm:$0xff]
  %v114 = vld [vmem:[%s1 + $0x298] sm:$0xff]
  %v115 = vld [vmem:[%s1 + $0x2a0] sm:$0xff]
  %v116 = vld [vmem:[%s1 + $0x2a8] sm:$0xff]
  %v117 = vld [vmem:[%s1 + $0x2b0] sm:$0xff]
  %v118 = vld [vmem:[%s1 + $0x2b8] sm:$0xff]
  %v119 = vld [vmem:[%s1 + $0x2c0] sm:$0xff]
  %v120 = vld [vmem:[%s1 + $0x2c8] sm:$0xff]
  %v121 = vld [vmem:[%s1 + $0x2d0] sm:$0xff]
  %v122 = vld [vmem:[%s1 + $0x2d8] sm:$0xff]
  %v123 = vld [vmem:[%s1 + $0x2e0] sm:$0xff]
  %v124 = vld [vmem:[%s1 + $0x2e8] sm:$0xff]
  %v125 = vld [vmem:[%s1 + $0x2f0] sm:$0xff]
  %v126 = vld [vmem:[%s1 + $0x2f8] sm:$0xff]
  %v127 = vld [vmem:[%s1 + $0x300] sm:$0xff]
  %v128 = vld [vmem:[%s1 + $0x308] sm:$0xff]
  %v129 = vld [vmem:[%s1 + $0x310] sm:$0xff]
  %v130 = vld [vmem:[%s1 + $0x318] sm:$0xff]
  %v131 = vld [vmem:[%s1 + $0x320] sm:$0xff]
  %v132 = vld [vmem:[%s1 + $0x328] sm:$0xff]
  %v133 = vld [vmem:[%s1 + $0x330] sm:$0xff]
  %v134 = vld [vmem:[%s1 + $0x338] sm:$0xff]
  %v135 = vld [vmem:[%s1 + $0x340] sm:$0xff]
  %v136 = vld [vmem:[%s1 + $0x348] sm:$0xff]
  %v137 = vld [vmem:[%s1 + $0x350] sm:$0xff]
  %v138 = vld [vmem:[%s1 + $0x358] sm:$0xff]
  %v139 = vld [vmem:[%s1 + $0x360] sm:$0xff]
  %v140 = vld [vmem:[%s1 + $0x368] sm:$0xff]
  %v141 = vld [vmem:[%s1 + $0x370] sm:$0xff]
  %v142 = vld [vmem:[%s1 + $0x378] sm:$0xff]
  %v143 = vld [vmem:[%s1 + $0x380] sm:$0xff]
  %v144 = vld [vmem:[%s1 + $0x388] sm:$0xff]
  %v145 = vld [vmem:[%s1 + $0x390] sm:$0xff]
  %v146 = vld [vmem:[%s1 + $0x398] sm:$0xff]
  %v147 = vld [vmem:[%s1 + $0x3a0] sm:$0xff]
  %v148 = vld [vmem:[%s1 + $0x3a8] sm:$0xff]
  %v149 = vld [vmem:[%s1 + $0x3b0] sm:$0xff]
  %v150 = vld [vmem:[%s1 + $0x3b8] sm:$0xff]
  %v151 = vld [vmem:[%s1 + $0x3c0] sm:$0xff]
  %v152 = vld [vmem:[%s1 + $0x3c8] sm:$0xff]
  %v153 = vld [vmem:[%s1 + $0x3d0] sm:$0xff]
  %v154 = vld [vmem:[%s1 + $0x3d8] sm:$0xff]
  %v155 = vld [vmem:[%s1 + $0x3e0] sm:$0xff]
  %v156 = vld [vmem:[%s1 + $0x3e8] sm:$0xff]
  %v157 = vld [vmem:[%s1 + $0x3f0] sm:$0xff]
  %v158 = vld [vmem:[%s1 + $0x3f8] sm:$0xff]
  %v159 = vld [vmem:[%s1 + $0x400] sm:$0xff]
  %v160 = vld [vmem:[%s1 + $0x408] sm:$0xff]
  %v161 = vld [vmem:[%s1 + $0x410] sm:$0xff]
  %v162 = vld [vmem:[%s1 + $0x418] sm:$0xff]
  %v163 = vld [vmem:[%s1 + $0x420] sm:$0xff]
  %v164 = vld [vmem:[%s1 + $0x428] sm:$0xff]
  %v165 = vld [vmem:[%s1 + $0x430] sm:$0xff]
  %v166 = vld [vmem:[%s1 + $0x438] sm:$0xff]
  %v167 = vld [vmem:[%s1 + $0x440] sm:$0xff]
  %v168 = vld [vmem:[%s1 + $0x448] sm:$0xff]
  %v169 = vld [vmem:[%s1 + $0x450] sm:$0xff]
  %v170 = vld [vmem:[%s1 + $0x458] sm:$0xff]
  %v171 = vld [vmem:[%s1 + $0x460] sm:$0xff]
  %v172 = vld [vmem:[%s1 + $0x468] sm:$0xff]
  %v173 = vld [vmem:[%s1 + $0x470] sm:$0xff]
  %v174 = vld [vmem:[%s1 + $0x478] sm:$0xff]
  %v175 = vld [vmem:[%s1 + $0x480] sm:$0xff]
  %v176 = vld [vmem:[%s1 + $0x488] sm:$0xff]
  %v177 = vld [vmem:[%s1 + $0x490] sm:$0xff]
  %v178 = vld [vmem:[%s1 + $0x498] sm:$0xff]
  %v179 = vld [vmem:[%s1 + $0x4a0] sm:$0xff]
  %v180 = vld [vmem:[%s1 + $0x4a8] sm:$0xff]
  %v181 = vld [vmem:[%s1 + $0x4b0] sm:$0xff]
  %v182 = vld [vmem:[%s1 + $0x4b8] sm:$0xff]
  %v183 = vld [vmem:[%s1 + $0x4c0] sm:$0xff]
  %v184 = vld [vmem:[%s1 + $0x4c8] sm:$0xff]
  %v185 = vld [vmem:[%s1 + $0x4d0] sm:$0xff]
  %v186 = vld [vmem:[%s1 + $0x4d8] sm:$0xff]
  %v187 = vld [vmem:[%s1 + $0x4e0] sm:$0xff]
  %v188 = vld [vmem:[%s1 + $0x4e8] sm:$0xff]
  %v189 = vld [vmem:[%s1 + $0x4f0] sm:$0xff]
  %v190 = vld [vmem:[%s1 + $0x4f8] sm:$0xff]
  %v191 = vld [vmem:[%s1 + $0x500] sm:$0xff]
  %v192 = vld [vmem:[%s1 + $0x508] sm:$0xff]
  %v193 = vld [vmem:[%s1 + $0x510] sm:$0xff]
  %v194 = vld [vmem:[%s1 + $0x518] sm:$0xff]
  %v195 = vld [vmem:[%s1 + $0x520] sm:$0xff]
  %v196 = vld [vmem:[%s1 + $0x528] sm:$0xff]
  %v197 = vld [vmem:[%s1 + $0x530] sm:$0xff]
  %v198 = vld [vmem:[%s1 + $0x538] sm:$0xff]
  %v199 = vld [vmem:[%s1 + $0x540] sm:$0xff]
  %v200 = vld [vmem:[%s1 + $0x548] sm:$0xff]
  %v201 = vld [vmem:[%s1 + $0x550] sm:$0xff]
  %v202 = vld [vmem:[%s1 + $0x558] sm:$0xff]
  %v203 = vld [vmem:[%s1 + $0x560] sm:$0xff]
  %v204 = vld [vmem:[%s1 + $0x568] sm:$0xff]
  %v205 = vld [vmem:[%s1 + $0x570] sm:$0xff]
  %v206 = vld [vmem:[%s1 + $0x578] sm:$0xff]
  %v207 = vld [vmem:[%s1 + $0x580] sm:$0xff]
  %v208 = vld [vmem:[%s1 + $0x588] sm:$0xff]
  %v209 = vld [vmem:[%s1 + $0x590] sm:$0xff]
  %v210 = vld [vmem:[%s1 + $0x598] sm:$0xff]
  %v211 = vld [vmem:[%s1 + $0x5a0] sm:$0xff]
  %v212 = vld [vmem:[%s1 + $0x5a8] sm:$0xff]
  %v213 = vld [vmem:[%s1 + $0x5b0] sm:$0xff]
  %v214 = vld [vmem:[%s1 + $0x5b8] sm:$0xff]
  %v215 = vld [vmem:[%s1 + $0x5c0] sm:$0xff]
  %v216 = vld [vmem:[%s1 + $0x5c8] sm:$0xff]
  %v217 = vld [vmem:[%s1 + $0x5d0] sm:$0xff]
  %v218 = vld [vmem:[%s1 + $0x5d8] sm:$0xff]
  %v219 = vld [vmem:[%s1 + $0x5e0] sm:$0xff]
  %v220 = vld [vmem:[%s1 + $0x5e8] sm:$0xff]
  %v221 = vld [vmem:[%s1 + $0x5f0] sm:$0xff]
  %v222 = vld [vmem:[%s1 + $0x5f8] sm:$0xff]
  %v223 = vld [vmem:[%s1 + $0x600] sm:$0xff]
  %v224 = vld [vmem:[%s1 + $0x608] sm:$0xff]
  %v225 = vld [vmem:[%s1 + $0x610] sm:$0xff]
  %v226 = vld [vmem:[%s1 + $0x618] sm:$0xff]
  %v227 = vld [vmem:[%s1 + $0x620] sm:$0xff]
  %v228 = vld [vmem:[%s1 + $0x628] sm:$0xff]
  %v229 = vld [vmem:[%s1 + $0x630] sm:$0xff]
  %v230 = vld [vmem:[%s1 + $0x638] sm:$0xff]
  %v231 = vld [vmem:[%s1 + $0x640] sm:$0xff]
  %v232 = vld [vmem:[%s1 + $0x648] sm:$0xff]
  %v233 = vld [vmem:[%s1 + $0x650] sm:$0xff]
  %v234 = vld [vmem:[%s1 + $0x658] sm:$0xff]
  %v235 = vld [vmem:[%s1 + $0x660] sm:$0xff]
  %v236 = vld [vmem:[%s1 + $0x668] sm:$0xff]
  %v237 = vld [vmem:[%s1 + $0x670] sm:$0xff]
  %v238 = vld [vmem:[%s1 + $0x678] sm:$0xff]
  %v239 = vld [vmem:[%s1 + $0x680] sm:$0xff]
  %v240 = vld [vmem:[%s1 + $0x688] sm:$0xff]
  %v241 = vld [vmem:[%s1 + $0x690] sm:$0xff]
  %v242 = vld [vmem:[%s1 + $0x698] sm:$0xff]
  %v243 = vld [vmem:[%s1 + $0x6a0] sm:$0xff]
  %v244 = vld [vmem:[%s1 + $0x6a8] sm:$0xff]
  %v245 = vld [vmem:[%s1 + $0x6b0] sm:$0xff]
  %v246 = vld [vmem:[%s1 + $0x6b8] sm:$0xff]
  %v247 = vld [vmem:[%s1 + $0x6c0] sm:$0xff]
  %v248 = vld [vmem:[%s1 + $0x6c8] sm:$0xff]
  %v249 = vld [vmem:[%s1 + $0x6d0] sm:$0xff]
  %v250 = vld [vmem:[%s1 + $0x6d8] sm:$0xff]
  %v251 = vld [vmem:[%s1 + $0x6e0] sm:$0xff]
  %v252 = vld [vmem:[%s1 + $0x6e8] sm:$0xff]
  %v253 = vld [vmem:[%s1 + $0x6f0] sm:$0xff]
  %v254 = vld [vmem:[%s1 + $0x6f8] sm:$0xff]
  %v255 = vld [vmem:[%s1 + $0x700] sm:$0xff]
  %v256 = vld [vmem:[%s1 + $0x708] sm:$0xff]
  %v257 = vld [vmem:[%s1 + $0x710] sm:$0xff]
  %v258 = vld [vmem:[%s1 + $0x718] sm:$0xff]
  %v259 = vld [vmem:[%s1 + $0x720] sm:$0xff]
  %v260 = vld [vmem:[%s1 + $0x728] sm:$0xff]
  %v261 = vld [vmem:[%s1 + $0x730] sm:$0xff]
  %v262 = vld [vmem:[%s1 + $0x738] sm:$0xff]
  %v263 = vld [vmem:[%s1 + $0x740] sm:$0xff]
  %v264 = vld [vmem:[%s1 + $0x748] sm:$0xff]
  %v265 = vld [vmem:[%s1 + $0x750] sm:$0xff]
  %v266 = vld [vmem:[%s1 + $0x758] sm:$0xff]
  %v267 = vld [vmem:[%s1 + $0x760] sm:$0xff]
  %v268 = vld [vmem:[%s1 + $0x768] sm:$0xff]
  %v269 = vld [vmem:[%s1 + $0x770] sm:$0xff]
  %v270 = vld [vmem:[%s1 + $0x778] sm:$0xff]
  %v271 = vld [vmem:[%s1 + $0x780] sm:$0xff]
  %v272 = vld [vmem:[%s1 + $0x788] sm:$0xff]
  %v273 = vld [vmem:[%s1 + $0x790] sm:$0xff]
  %v274 = vld [vmem:[%s1 + $0x798] sm:$0xff]
  %v275 = vld [vmem:[%s1 + $0x7a0] sm:$0xff]
  %v276 = vld [vmem:[%s1 + $0x7a8] sm:$0xff]
  %v277 = vld [vmem:[%s1 + $0x7b0] sm:$0xff]
  %v278 = vld [vmem:[%s1 + $0x7b8] sm:$0xff]
  %v279 = vld [vmem:[%s1 + $0x7c0] sm:$0xff]
  %v280 = vld [vmem:[%s1 + $0x7c8] sm:$0xff]
  %v281 = vld [vmem:[%s1 + $0x7d0] sm:$0xff]
  %v282 = vld [vmem:[%s1 + $0x7d8] sm:$0xff]
  %v283 = vld [vmem:[%s1 + $0x7e0] sm:$0xff]
  %v284 = vld [vmem:[%s1 + $0x7e8] sm:$0xff]
  %v285 = vld [vmem:[%s1 + $0x7f0] sm:$0xff]
  %v286 = vld [vmem:[%s1 + $0x7f8] sm:$0xff]
  %v287 = vld [vmem:[%s1 + $0x800] sm:$0xff]
  %v288 = vld [vmem:[%s1 + $0x808] sm:$0xff]
  %v289 = vld [vmem:[%s1 + $0x810] sm:$0xff]
  %v290 = vld [vmem:[%s1 + $0x818] sm:$0xff]
  %v291 = vld [vmem:[%s1 + $0x820] sm:$0xff]
  %v292 = vld [vmem:[%s1 + $0x828] sm:$0xff]
  %v293 = vld [vmem:[%s1 + $0x830] sm:$0xff]
  %v294 = vld [vmem:[%s1 + $0x838] sm:$0xff]
  %v295 = vld [vmem:[%s1 + $0x840] sm:$0xff]
  %v296 = vld [vmem:[%s1 + $0x848] sm:$0xff]
  %v297 = vld [vmem:[%s1 + $0x850] sm:$0xff]
  %v298 = vld [vmem:[%s1 + $0x858] sm:$0xff]
  %v299 = vld [vmem:[%s1 + $0x860] sm:$0xff]
  %v300 = vld [vmem:[%s1 + $0x868] sm:$0xff]
  %v301 = vld [vmem:[%s1 + $0x870] sm:$0xff]
  %v302 = vld [vmem:[%s1 + $0x878] sm:$0xff]
  %v303 = vld [vmem:[%s1 + $0x880] sm:$0xff]
  %v304 = vld [vmem:[%s1 + $0x888] sm:$0xff]
  %v305 = vld [vmem:[%s1 + $0x890] sm:$0xff]
  %v306 = vld [vmem:[%s1 + $0x898] sm:$0xff]
  %v307 = vld [vmem:[%s1 + $0x8a0] sm:$0xff]
  %v308 = vld [vmem:[%s1 + $0x8a8] sm:$0xff]
  %v309 = vld [vmem:[%s1 + $0x8b0] sm:$0xff]
  %v310 = vld [vmem:[%s1 + $0x8b8] sm:$0xff]
  %v311 = vld [vmem:[%s1 + $0x8c0] sm:$0xff]
  %v312 = vld [vmem:[%s1 + $0x8c8] sm:$0xff]
  %v313 = vld [vmem:[%s1 + $0x8d0] sm:$0xff]
  %v314 = vld [vmem:[%s1 + $0x8d8] sm:$0xff]
  %v315 = vld [vmem:[%s1 + $0x8e0] sm:$0xff]
  %v316 = vld [vmem:[%s1 + $0x8e8] sm:$0xff]
  %v317 = vld [vmem:[%s1 + $0x8f0] sm:$0xff]
  %v318 = vld [vmem:[%s1 + $0x8f8] sm:$0xff]
  %v335 = vunpack.c.l.b16 %v15
  %v336 = vunpack.c.h.b16 %v15
  %v337 = vunpack.c.l.b16 %v16
  %v338 = vunpack.c.l.b16 %v17
  %v339 = vunpack.c.h.b16 %v17
  %v340 = vunpack.c.l.b16 %v18
  %v341 = vunpack.c.l.b16 %v19
  %v342 = vunpack.c.h.b16 %v19
  %v343 = vunpack.c.l.b16 %v20
  %v344 = vunpack.c.l.b16 %v21
  %v345 = vunpack.c.h.b16 %v21
  %v346 = vunpack.c.l.b16 %v22
  %v347 = vunpack.c.l.b16 %v23
  %v348 = vunpack.c.h.b16 %v23
  %v349 = vunpack.c.l.b16 %v24
  %v350 = vunpack.c.l.b16 %v25
  %v351 = vunpack.c.h.b16 %v25
  %v352 = vunpack.c.l.b16 %v26
  %v353 = vunpack.c.l.b16 %v27
  %v354 = vunpack.c.h.b16 %v27
  %v355 = vunpack.c.l.b16 %v28
  %v356 = vunpack.c.l.b16 %v29
  %v357 = vunpack.c.h.b16 %v29
  %v358 = vunpack.c.l.b16 %v30
  %v359 = vpack.c.b16 %v338, %v335
  %v360 = vpack.c.b16 %v339, %v336
  %v361 = vpack.c.b16 %v340, %v337
  %v362 = vpack.c.b16 %v344, %v341
  %v363 = vpack.c.b16 %v345, %v342
  %v364 = vpack.c.b16 %v346, %v343
  %v365 = vpack.c.b16 %v350, %v347
  %v366 = vpack.c.b16 %v351, %v348
  %v367 = vpack.c.b16 %v352, %v349
  %v368 = vpack.c.b16 %v356, %v353
  %v369 = vpack.c.b16 %v357, %v354
  %v370 = vpack.c.b16 %v358, %v355
  %v667 = vunpack.c.l.b16 %v31
  %v668 = vunpack.c.h.b16 %v31
  %v669 = vunpack.c.l.b16 %v32
  %v670 = vunpack.c.h.b16 %v32
  %v671 = vunpack.c.l.b16 %v33
  %v672 = vunpack.c.h.b16 %v33
  %v673 = vunpack.c.l.b16 %v34
  %v674 = vunpack.c.h.b16 %v34
  %v675 = vunpack.c.l.b16 %v35
  %v676 = vunpack.c.h.b16 %v35
  %v677 = vunpack.c.l.b16 %v36
  %v678 = vunpack.c.h.b16 %v36
  %v679 = vunpack.c.l.b16 %v37
  %v680 = vunpack.c.h.b16 %v37
  %v681 = vunpack.c.l.b16 %v38
  %v682 = vunpack.c.h.b16 %v38
  %v683 = vunpack.c.l.b16 %v39
  %v684 = vunpack.c.h.b16 %v39
  %v685 = vunpack.c.l.b16 %v40
  %v686 = vunpack.c.h.b16 %v40
  %v687 = vunpack.c.l.b16 %v41
  %v688 = vunpack.c.h.b16 %v41
  %v689 = vunpack.c.l.b16 %v42
  %v690 = vunpack.c.h.b16 %v42
  %v691 = vunpack.c.l.b16 %v43
  %v692 = vunpack.c.h.b16 %v43
  %v693 = vunpack.c.l.b16 %v44
  %v694 = vunpack.c.h.b16 %v44
  %v695 = vunpack.c.l.b16 %v45
  %v696 = vunpack.c.h.b16 %v45
  %v697 = vunpack.c.l.b16 %v46
  %v698 = vunpack.c.h.b16 %v46
  %v699 = vunpack.c.l.b16 %v47
  %v700 = vunpack.c.h.b16 %v47
  %v701 = vunpack.c.l.b16 %v48
  %v702 = vunpack.c.h.b16 %v48
  %v703 = vunpack.c.l.b16 %v49
  %v704 = vunpack.c.h.b16 %v49
  %v705 = vunpack.c.l.b16 %v50
  %v706 = vunpack.c.h.b16 %v50
  %v707 = vunpack.c.l.b16 %v51
  %v708 = vunpack.c.h.b16 %v51
  %v709 = vunpack.c.l.b16 %v52
  %v710 = vunpack.c.h.b16 %v52
  %v711 = vunpack.c.l.b16 %v53
  %v712 = vunpack.c.h.b16 %v53
  %v713 = vunpack.c.l.b16 %v54
  %v714 = vunpack.c.h.b16 %v54
  %v715 = vunpack.c.l.b16 %v55
  %v716 = vunpack.c.h.b16 %v55
  %v717 = vunpack.c.l.b16 %v56
  %v718 = vunpack.c.h.b16 %v56
  %v719 = vunpack.c.l.b16 %v57
  %v720 = vunpack.c.h.b16 %v57
  %v721 = vunpack.c.l.b16 %v58
  %v722 = vunpack.c.h.b16 %v58
  %v723 = vunpack.c.l.b16 %v59
  %v724 = vunpack.c.h.b16 %v59
  %v725 = vunpack.c.l.b16 %v60
  %v726 = vunpack.c.h.b16 %v60
  %v727 = vunpack.c.l.b16 %v61
  %v728 = vunpack.c.h.b16 %v61
  %v729 = vunpack.c.l.b16 %v62
  %v730 = vunpack.c.h.b16 %v62
  %v731 = vunpack.c.l.b16 %v63
  %v732 = vunpack.c.h.b16 %v63
  %v733 = vunpack.c.l.b16 %v64
  %v734 = vunpack.c.h.b16 %v64
  %v735 = vunpack.c.l.b16 %v65
  %v736 = vunpack.c.h.b16 %v65
  %v737 = vunpack.c.l.b16 %v66
  %v738 = vunpack.c.h.b16 %v66
  %v739 = vunpack.c.l.b16 %v67
  %v740 = vunpack.c.h.b16 %v67
  %v741 = vunpack.c.l.b16 %v68
  %v742 = vunpack.c.h.b16 %v68
  %v743 = vunpack.c.l.b16 %v69
  %v744 = vunpack.c.h.b16 %v69
  %v745 = vunpack.c.l.b16 %v70
  %v746 = vunpack.c.h.b16 %v70
  %v747 = vunpack.c.l.b16 %v71
  %v748 = vunpack.c.h.b16 %v71
  %v749 = vunpack.c.l.b16 %v72
  %v750 = vunpack.c.h.b16 %v72
  %v751 = vunpack.c.l.b16 %v73
  %v752 = vunpack.c.h.b16 %v73
  %v753 = vunpack.c.l.b16 %v74
  %v754 = vunpack.c.h.b16 %v74
  %v755 = vunpack.c.l.b16 %v75
  %v756 = vunpack.c.h.b16 %v75
  %v757 = vunpack.c.l.b16 %v76
  %v758 = vunpack.c.h.b16 %v76
  %v759 = vunpack.c.l.b16 %v77
  %v760 = vunpack.c.h.b16 %v77
  %v761 = vunpack.c.l.b16 %v78
  %v762 = vunpack.c.h.b16 %v78
  %v763 = vunpack.c.l.b16 %v79
  %v764 = vunpack.c.h.b16 %v79
  %v765 = vunpack.c.l.b16 %v80
  %v766 = vunpack.c.h.b16 %v80
  %v767 = vunpack.c.l.b16 %v81
  %v768 = vunpack.c.h.b16 %v81
  %v769 = vunpack.c.l.b16 %v82
  %v770 = vunpack.c.h.b16 %v82
  %v771 = vunpack.c.l.b16 %v83
  %v772 = vunpack.c.h.b16 %v83
  %v773 = vunpack.c.l.b16 %v84
  %v774 = vunpack.c.h.b16 %v84
  %v775 = vunpack.c.l.b16 %v85
  %v776 = vunpack.c.h.b16 %v85
  %v777 = vunpack.c.l.b16 %v86
  %v778 = vunpack.c.h.b16 %v86
  %v779 = vunpack.c.l.b16 %v87
  %v780 = vunpack.c.h.b16 %v87
  %v781 = vunpack.c.l.b16 %v88
  %v782 = vunpack.c.h.b16 %v88
  %v783 = vunpack.c.l.b16 %v89
  %v784 = vunpack.c.h.b16 %v89
  %v785 = vunpack.c.l.b16 %v90
  %v786 = vunpack.c.h.b16 %v90
  %v787 = vunpack.c.l.b16 %v91
  %v788 = vunpack.c.h.b16 %v91
  %v789 = vunpack.c.l.b16 %v92
  %v790 = vunpack.c.h.b16 %v92
  %v791 = vunpack.c.l.b16 %v93
  %v792 = vunpack.c.h.b16 %v93
  %v793 = vunpack.c.l.b16 %v94
  %v794 = vunpack.c.h.b16 %v94
  %v795 = vunpack.c.l.b16 %v95
  %v796 = vunpack.c.h.b16 %v95
  %v797 = vunpack.c.l.b16 %v96
  %v798 = vunpack.c.h.b16 %v96
  %v799 = vunpack.c.l.b16 %v97
  %v800 = vunpack.c.h.b16 %v97
  %v801 = vunpack.c.l.b16 %v98
  %v802 = vunpack.c.h.b16 %v98
  %v803 = vunpack.c.l.b16 %v99
  %v804 = vunpack.c.h.b16 %v99
  %v805 = vunpack.c.l.b16 %v100
  %v806 = vunpack.c.h.b16 %v100
  %v807 = vunpack.c.l.b16 %v101
  %v808 = vunpack.c.h.b16 %v101
  %v809 = vunpack.c.l.b16 %v102
  %v810 = vunpack.c.h.b16 %v102
  %v811 = vunpack.c.l.b16 %v103
  %v812 = vunpack.c.h.b16 %v103
  %v813 = vunpack.c.l.b16 %v104
  %v814 = vunpack.c.h.b16 %v104
  %v815 = vunpack.c.l.b16 %v105
  %v816 = vunpack.c.h.b16 %v105
  %v817 = vunpack.c.l.b16 %v106
  %v818 = vunpack.c.h.b16 %v106
  %v819 = vunpack.c.l.b16 %v107
  %v820 = vunpack.c.h.b16 %v107
  %v821 = vunpack.c.l.b16 %v108
  %v822 = vunpack.c.h.b16 %v108
  %v823 = vunpack.c.l.b16 %v109
  %v824 = vunpack.c.h.b16 %v109
  %v825 = vunpack.c.l.b16 %v110
  %v826 = vunpack.c.h.b16 %v110
  %v827 = vunpack.c.l.b16 %v111
  %v828 = vunpack.c.h.b16 %v111
  %v829 = vunpack.c.l.b16 %v112
  %v830 = vunpack.c.h.b16 %v112
  %v831 = vunpack.c.l.b16 %v113
  %v832 = vunpack.c.h.b16 %v113
  %v833 = vunpack.c.l.b16 %v114
  %v834 = vunpack.c.h.b16 %v114
  %v835 = vunpack.c.l.b16 %v115
  %v836 = vunpack.c.h.b16 %v115
  %v837 = vunpack.c.l.b16 %v116
  %v838 = vunpack.c.h.b16 %v116
  %v839 = vunpack.c.l.b16 %v117
  %v840 = vunpack.c.h.b16 %v117
  %v841 = vunpack.c.l.b16 %v118
  %v842 = vunpack.c.h.b16 %v118
  %v843 = vunpack.c.l.b16 %v119
  %v844 = vunpack.c.h.b16 %v119
  %v845 = vunpack.c.l.b16 %v120
  %v846 = vunpack.c.h.b16 %v120
  %v847 = vunpack.c.l.b16 %v121
  %v848 = vunpack.c.h.b16 %v121
  %v849 = vunpack.c.l.b16 %v122
  %v850 = vunpack.c.h.b16 %v122
  %v851 = vunpack.c.l.b16 %v123
  %v852 = vunpack.c.h.b16 %v123
  %v853 = vunpack.c.l.b16 %v124
  %v854 = vunpack.c.h.b16 %v124
  %v855 = vunpack.c.l.b16 %v125
  %v856 = vunpack.c.h.b16 %v125
  %v857 = vunpack.c.l.b16 %v126
  %v858 = vunpack.c.h.b16 %v126
  %v859 = vunpack.c.l.b16 %v127
  %v860 = vunpack.c.h.b16 %v127
  %v861 = vunpack.c.l.b16 %v128
  %v862 = vunpack.c.h.b16 %v128
  %v863 = vunpack.c.l.b16 %v129
  %v864 = vunpack.c.h.b16 %v129
  %v865 = vunpack.c.l.b16 %v130
  %v866 = vunpack.c.h.b16 %v130
  %v867 = vunpack.c.l.b16 %v131
  %v868 = vunpack.c.h.b16 %v131
  %v869 = vunpack.c.l.b16 %v132
  %v870 = vunpack.c.h.b16 %v132
  %v871 = vunpack.c.l.b16 %v133
  %v872 = vunpack.c.h.b16 %v133
  %v873 = vunpack.c.l.b16 %v134
  %v874 = vunpack.c.h.b16 %v134
  %v875 = vunpack.c.l.b16 %v135
  %v876 = vunpack.c.h.b16 %v135
  %v877 = vunpack.c.l.b16 %v136
  %v878 = vunpack.c.h.b16 %v136
  %v879 = vunpack.c.l.b16 %v137
  %v880 = vunpack.c.h.b16 %v137
  %v881 = vunpack.c.l.b16 %v138
  %v882 = vunpack.c.h.b16 %v138
  %v883 = vunpack.c.l.b16 %v139
  %v884 = vunpack.c.h.b16 %v139
  %v885 = vunpack.c.l.b16 %v140
  %v886 = vunpack.c.h.b16 %v140
  %v887 = vunpack.c.l.b16 %v141
  %v888 = vunpack.c.h.b16 %v141
  %v889 = vunpack.c.l.b16 %v142
  %v890 = vunpack.c.h.b16 %v142
  %v891 = vunpack.c.l.b16 %v143
  %v892 = vunpack.c.h.b16 %v143
  %v893 = vunpack.c.l.b16 %v144
  %v894 = vunpack.c.h.b16 %v144
  %v895 = vunpack.c.l.b16 %v145
  %v896 = vunpack.c.h.b16 %v145
  %v897 = vunpack.c.l.b16 %v146
  %v898 = vunpack.c.h.b16 %v146
  %v899 = vunpack.c.l.b16 %v147
  %v900 = vunpack.c.h.b16 %v147
  %v901 = vunpack.c.l.b16 %v148
  %v902 = vunpack.c.h.b16 %v148
  %v903 = vunpack.c.l.b16 %v149
  %v904 = vunpack.c.h.b16 %v149
  %v905 = vunpack.c.l.b16 %v150
  %v906 = vunpack.c.h.b16 %v150
  %v907 = vunpack.c.l.b16 %v151
  %v908 = vunpack.c.h.b16 %v151
  %v909 = vunpack.c.l.b16 %v152
  %v910 = vunpack.c.h.b16 %v152
  %v911 = vunpack.c.l.b16 %v153
  %v912 = vunpack.c.h.b16 %v153
  %v913 = vunpack.c.l.b16 %v154
  %v914 = vunpack.c.h.b16 %v154
  %v915 = vunpack.c.l.b16 %v155
  %v916 = vunpack.c.h.b16 %v155
  %v917 = vunpack.c.l.b16 %v156
  %v918 = vunpack.c.h.b16 %v156
  %v919 = vunpack.c.l.b16 %v157
  %v920 = vunpack.c.h.b16 %v157
  %v921 = vunpack.c.l.b16 %v158
  %v922 = vunpack.c.h.b16 %v158
  %v923 = vunpack.c.l.b16 %v159
  %v924 = vunpack.c.h.b16 %v159
  %v925 = vunpack.c.l.b16 %v160
  %v926 = vunpack.c.h.b16 %v160
  %v927 = vunpack.c.l.b16 %v161
  %v928 = vunpack.c.h.b16 %v161
  %v929 = vunpack.c.l.b16 %v162
  %v930 = vunpack.c.h.b16 %v162
  %v931 = vunpack.c.l.b16 %v163
  %v932 = vunpack.c.h.b16 %v163
  %v933 = vunpack.c.l.b16 %v164
  %v934 = vunpack.c.h.b16 %v164
  %v935 = vunpack.c.l.b16 %v165
  %v936 = vunpack.c.h.b16 %v165
  %v937 = vunpack.c.l.b16 %v166
  %v938 = vunpack.c.h.b16 %v166
  %v939 = vunpack.c.l.b16 %v167
  %v940 = vunpack.c.h.b16 %v167
  %v941 = vunpack.c.l.b16 %v168
  %v942 = vunpack.c.h.b16 %v168
  %v943 = vunpack.c.l.b16 %v169
  %v944 = vunpack.c.h.b16 %v169
  %v945 = vunpack.c.l.b16 %v170
  %v946 = vunpack.c.h.b16 %v170
  %v947 = vunpack.c.l.b16 %v171
  %v948 = vunpack.c.h.b16 %v171
  %v949 = vunpack.c.l.b16 %v172
  %v950 = vunpack.c.h.b16 %v172
  %v951 = vunpack.c.l.b16 %v173
  %v952 = vunpack.c.h.b16 %v173
  %v953 = vunpack.c.l.b16 %v174
  %v954 = vunpack.c.h.b16 %v174
  %v955 = vunpack.c.l.b16 %v175
  %v956 = vunpack.c.h.b16 %v175
  %v957 = vunpack.c.l.b16 %v176
  %v958 = vunpack.c.h.b16 %v176
  %v959 = vunpack.c.l.b16 %v177
  %v960 = vunpack.c.h.b16 %v177
  %v961 = vunpack.c.l.b16 %v178
  %v962 = vunpack.c.h.b16 %v178
  %v963 = vunpack.c.l.b16 %v179
  %v964 = vunpack.c.h.b16 %v179
  %v965 = vunpack.c.l.b16 %v180
  %v966 = vunpack.c.h.b16 %v180
  %v967 = vunpack.c.l.b16 %v181
  %v968 = vunpack.c.h.b16 %v181
  %v969 = vunpack.c.l.b16 %v182
  %v970 = vunpack.c.h.b16 %v182
  %v971 = vunpack.c.l.b16 %v183
  %v972 = vunpack.c.h.b16 %v183
  %v973 = vunpack.c.l.b16 %v184
  %v974 = vunpack.c.h.b16 %v184
  %v975 = vunpack.c.l.b16 %v185
  %v976 = vunpack.c.h.b16 %v185
  %v977 = vunpack.c.l.b16 %v186
  %v978 = vunpack.c.h.b16 %v186
  %v979 = vunpack.c.l.b16 %v187
  %v980 = vunpack.c.h.b16 %v187
  %v981 = vunpack.c.l.b16 %v188
  %v982 = vunpack.c.h.b16 %v188
  %v983 = vunpack.c.l.b16 %v189
  %v984 = vunpack.c.h.b16 %v189
  %v985 = vunpack.c.l.b16 %v190
  %v986 = vunpack.c.h.b16 %v190
  %v987 = vunpack.c.l.b16 %v191
  %v988 = vunpack.c.h.b16 %v191
  %v989 = vunpack.c.l.b16 %v192
  %v990 = vunpack.c.h.b16 %v192
  %v991 = vunpack.c.l.b16 %v193
  %v992 = vunpack.c.h.b16 %v193
  %v993 = vunpack.c.l.b16 %v194
  %v994 = vunpack.c.h.b16 %v194
  %v995 = vunpack.c.l.b16 %v195
  %v996 = vunpack.c.h.b16 %v195
  %v997 = vunpack.c.l.b16 %v196
  %v998 = vunpack.c.h.b16 %v196
  %v999 = vunpack.c.l.b16 %v197
  %v1000 = vunpack.c.h.b16 %v197
  %v1001 = vunpack.c.l.b16 %v198
  %v1002 = vunpack.c.h.b16 %v198
  %v1003 = vunpack.c.l.b16 %v199
  %v1004 = vunpack.c.h.b16 %v199
  %v1005 = vunpack.c.l.b16 %v200
  %v1006 = vunpack.c.h.b16 %v200
  %v1007 = vunpack.c.l.b16 %v201
  %v1008 = vunpack.c.h.b16 %v201
  %v1009 = vunpack.c.l.b16 %v202
  %v1010 = vunpack.c.h.b16 %v202
  %v1011 = vunpack.c.l.b16 %v203
  %v1012 = vunpack.c.h.b16 %v203
  %v1013 = vunpack.c.l.b16 %v204
  %v1014 = vunpack.c.h.b16 %v204
  %v1015 = vunpack.c.l.b16 %v205
  %v1016 = vunpack.c.h.b16 %v205
  %v1017 = vunpack.c.l.b16 %v206
  %v1018 = vunpack.c.h.b16 %v206
  %v1019 = vunpack.c.l.b16 %v207
  %v1020 = vunpack.c.h.b16 %v207
  %v1021 = vunpack.c.l.b16 %v208
  %v1022 = vunpack.c.h.b16 %v208
  %v1023 = vunpack.c.l.b16 %v209
  %v1024 = vunpack.c.h.b16 %v209
  %v1025 = vunpack.c.l.b16 %v210
  %v1026 = vunpack.c.h.b16 %v210
  %v1027 = vunpack.c.l.b16 %v211
  %v1028 = vunpack.c.h.b16 %v211
  %v1029 = vunpack.c.l.b16 %v212
  %v1030 = vunpack.c.h.b16 %v212
  %v1031 = vunpack.c.l.b16 %v213
  %v1032 = vunpack.c.h.b16 %v213
  %v1033 = vunpack.c.l.b16 %v214
  %v1034 = vunpack.c.h.b16 %v214
  %v1035 = vunpack.c.l.b16 %v215
  %v1036 = vunpack.c.h.b16 %v215
  %v1037 = vunpack.c.l.b16 %v216
  %v1038 = vunpack.c.h.b16 %v216
  %v1039 = vunpack.c.l.b16 %v217
  %v1040 = vunpack.c.h.b16 %v217
  %v1041 = vunpack.c.l.b16 %v218
  %v1042 = vunpack.c.h.b16 %v218
  %v1043 = vunpack.c.l.b16 %v219
  %v1044 = vunpack.c.h.b16 %v219
  %v1045 = vunpack.c.l.b16 %v220
  %v1046 = vunpack.c.h.b16 %v220
  %v1047 = vunpack.c.l.b16 %v221
  %v1048 = vunpack.c.h.b16 %v221
  %v1049 = vunpack.c.l.b16 %v222
  %v1050 = vunpack.c.h.b16 %v222
  %v1051 = vunpack.c.l.b16 %v223
  %v1052 = vunpack.c.h.b16 %v223
  %v1053 = vunpack.c.l.b16 %v224
  %v1054 = vunpack.c.h.b16 %v224
  %v1055 = vunpack.c.l.b16 %v225
  %v1056 = vunpack.c.h.b16 %v225
  %v1057 = vunpack.c.l.b16 %v226
  %v1058 = vunpack.c.h.b16 %v226
  %v1059 = vunpack.c.l.b16 %v227
  %v1060 = vunpack.c.h.b16 %v227
  %v1061 = vunpack.c.l.b16 %v228
  %v1062 = vunpack.c.h.b16 %v228
  %v1063 = vunpack.c.l.b16 %v229
  %v1064 = vunpack.c.h.b16 %v229
  %v1065 = vunpack.c.l.b16 %v230
  %v1066 = vunpack.c.h.b16 %v230
  %v1067 = vunpack.c.l.b16 %v231
  %v1068 = vunpack.c.h.b16 %v231
  %v1069 = vunpack.c.l.b16 %v232
  %v1070 = vunpack.c.h.b16 %v232
  %v1071 = vunpack.c.l.b16 %v233
  %v1072 = vunpack.c.h.b16 %v233
  %v1073 = vunpack.c.l.b16 %v234
  %v1074 = vunpack.c.h.b16 %v234
  %v1075 = vunpack.c.l.b16 %v235
  %v1076 = vunpack.c.h.b16 %v235
  %v1077 = vunpack.c.l.b16 %v236
  %v1078 = vunpack.c.h.b16 %v236
  %v1079 = vunpack.c.l.b16 %v237
  %v1080 = vunpack.c.h.b16 %v237
  %v1081 = vunpack.c.l.b16 %v238
  %v1082 = vunpack.c.h.b16 %v238
  %v1083 = vunpack.c.l.b16 %v239
  %v1084 = vunpack.c.h.b16 %v239
  %v1085 = vunpack.c.l.b16 %v240
  %v1086 = vunpack.c.h.b16 %v240
  %v1087 = vunpack.c.l.b16 %v241
  %v1088 = vunpack.c.h.b16 %v241
  %v1089 = vunpack.c.l.b16 %v242
  %v1090 = vunpack.c.h.b16 %v242
  %v1091 = vunpack.c.l.b16 %v243
  %v1092 = vunpack.c.h.b16 %v243
  %v1093 = vunpack.c.l.b16 %v244
  %v1094 = vunpack.c.h.b16 %v244
  %v1095 = vunpack.c.l.b16 %v245
  %v1096 = vunpack.c.h.b16 %v245
  %v1097 = vunpack.c.l.b16 %v246
  %v1098 = vunpack.c.h.b16 %v246
  %v1099 = vunpack.c.l.b16 %v247
  %v1100 = vunpack.c.h.b16 %v247
  %v1101 = vunpack.c.l.b16 %v248
  %v1102 = vunpack.c.h.b16 %v248
  %v1103 = vunpack.c.l.b16 %v249
  %v1104 = vunpack.c.h.b16 %v249
  %v1105 = vunpack.c.l.b16 %v250
  %v1106 = vunpack.c.h.b16 %v250
  %v1107 = vunpack.c.l.b16 %v251
  %v1108 = vunpack.c.h.b16 %v251
  %v1109 = vunpack.c.l.b16 %v252
  %v1110 = vunpack.c.h.b16 %v252
  %v1111 = vunpack.c.l.b16 %v253
  %v1112 = vunpack.c.h.b16 %v253
  %v1113 = vunpack.c.l.b16 %v254
  %v1114 = vunpack.c.h.b16 %v254
  %v1115 = vunpack.c.l.b16 %v255
  %v1116 = vunpack.c.h.b16 %v255
  %v1117 = vunpack.c.l.b16 %v256
  %v1118 = vunpack.c.h.b16 %v256
  %v1119 = vunpack.c.l.b16 %v257
  %v1120 = vunpack.c.h.b16 %v257
  %v1121 = vunpack.c.l.b16 %v258
  %v1122 = vunpack.c.h.b16 %v258
  %v1123 = vunpack.c.l.b16 %v259
  %v1124 = vunpack.c.h.b16 %v259
  %v1125 = vunpack.c.l.b16 %v260
  %v1126 = vunpack.c.h.b16 %v260
  %v1127 = vunpack.c.l.b16 %v261
  %v1128 = vunpack.c.h.b16 %v261
  %v1129 = vunpack.c.l.b16 %v262
  %v1130 = vunpack.c.h.b16 %v262
  %v1131 = vunpack.c.l.b16 %v263
  %v1132 = vunpack.c.h.b16 %v263
  %v1133 = vunpack.c.l.b16 %v264
  %v1134 = vunpack.c.h.b16 %v264
  %v1135 = vunpack.c.l.b16 %v265
  %v1136 = vunpack.c.h.b16 %v265
  %v1137 = vunpack.c.l.b16 %v266
  %v1138 = vunpack.c.h.b16 %v266
  %v1139 = vunpack.c.l.b16 %v267
  %v1140 = vunpack.c.h.b16 %v267
  %v1141 = vunpack.c.l.b16 %v268
  %v1142 = vunpack.c.h.b16 %v268
  %v1143 = vunpack.c.l.b16 %v269
  %v1144 = vunpack.c.h.b16 %v269
  %v1145 = vunpack.c.l.b16 %v270
  %v1146 = vunpack.c.h.b16 %v270
  %v1147 = vunpack.c.l.b16 %v271
  %v1148 = vunpack.c.h.b16 %v271
  %v1149 = vunpack.c.l.b16 %v272
  %v1150 = vunpack.c.h.b16 %v272
  %v1151 = vunpack.c.l.b16 %v273
  %v1152 = vunpack.c.h.b16 %v273
  %v1153 = vunpack.c.l.b16 %v274
  %v1154 = vunpack.c.h.b16 %v274
  %v1155 = vunpack.c.l.b16 %v275
  %v1156 = vunpack.c.h.b16 %v275
  %v1157 = vunpack.c.l.b16 %v276
  %v1158 = vunpack.c.h.b16 %v276
  %v1159 = vunpack.c.l.b16 %v277
  %v1160 = vunpack.c.h.b16 %v277
  %v1161 = vunpack.c.l.b16 %v278
  %v1162 = vunpack.c.h.b16 %v278
  %v1163 = vunpack.c.l.b16 %v279
  %v1164 = vunpack.c.h.b16 %v279
  %v1165 = vunpack.c.l.b16 %v280
  %v1166 = vunpack.c.h.b16 %v280
  %v1167 = vunpack.c.l.b16 %v281
  %v1168 = vunpack.c.h.b16 %v281
  %v1169 = vunpack.c.l.b16 %v282
  %v1170 = vunpack.c.h.b16 %v282
  %v1171 = vunpack.c.l.b16 %v283
  %v1172 = vunpack.c.h.b16 %v283
  %v1173 = vunpack.c.l.b16 %v284
  %v1174 = vunpack.c.h.b16 %v284
  %v1175 = vunpack.c.l.b16 %v285
  %v1176 = vunpack.c.h.b16 %v285
  %v1177 = vunpack.c.l.b16 %v286
  %v1178 = vunpack.c.h.b16 %v286
  %v1179 = vunpack.c.l.b16 %v287
  %v1180 = vunpack.c.h.b16 %v287
  %v1181 = vunpack.c.l.b16 %v288
  %v1182 = vunpack.c.h.b16 %v288
  %v1183 = vunpack.c.l.b16 %v289
  %v1184 = vunpack.c.h.b16 %v289
  %v1185 = vunpack.c.l.b16 %v290
  %v1186 = vunpack.c.h.b16 %v290
  %v1187 = vunpack.c.l.b16 %v291
  %v1188 = vunpack.c.h.b16 %v291
  %v1189 = vunpack.c.l.b16 %v292
  %v1190 = vunpack.c.h.b16 %v292
  %v1191 = vunpack.c.l.b16 %v293
  %v1192 = vunpack.c.h.b16 %v293
  %v1193 = vunpack.c.l.b16 %v294
  %v1194 = vunpack.c.h.b16 %v294
  %v1195 = vunpack.c.l.b16 %v295
  %v1196 = vunpack.c.h.b16 %v295
  %v1197 = vunpack.c.l.b16 %v296
  %v1198 = vunpack.c.h.b16 %v296
  %v1199 = vunpack.c.l.b16 %v297
  %v1200 = vunpack.c.h.b16 %v297
  %v1201 = vunpack.c.l.b16 %v298
  %v1202 = vunpack.c.h.b16 %v298
  %v1203 = vunpack.c.l.b16 %v299
  %v1204 = vunpack.c.h.b16 %v299
  %v1205 = vunpack.c.l.b16 %v300
  %v1206 = vunpack.c.h.b16 %v300
  %v1207 = vunpack.c.l.b16 %v301
  %v1208 = vunpack.c.h.b16 %v301
  %v1209 = vunpack.c.l.b16 %v302
  %v1210 = vunpack.c.h.b16 %v302
  %v1211 = vunpack.c.l.b16 %v303
  %v1212 = vunpack.c.h.b16 %v303
  %v1213 = vunpack.c.l.b16 %v304
  %v1214 = vunpack.c.h.b16 %v304
  %v1215 = vunpack.c.l.b16 %v305
  %v1216 = vunpack.c.h.b16 %v305
  %v1217 = vunpack.c.l.b16 %v306
  %v1218 = vunpack.c.h.b16 %v306
  %v1219 = vunpack.c.l.b16 %v307
  %v1220 = vunpack.c.h.b16 %v307
  %v1221 = vunpack.c.l.b16 %v308
  %v1222 = vunpack.c.h.b16 %v308
  %v1223 = vunpack.c.l.b16 %v309
  %v1224 = vunpack.c.h.b16 %v309
  %v1225 = vunpack.c.l.b16 %v310
  %v1226 = vunpack.c.h.b16 %v310
  %v1227 = vunpack.c.l.b16 %v311
  %v1228 = vunpack.c.h.b16 %v311
  %v1229 = vunpack.c.l.b16 %v312
  %v1230 = vunpack.c.h.b16 %v312
  %v1231 = vunpack.c.l.b16 %v313
  %v1232 = vunpack.c.h.b16 %v313
  %v1233 = vunpack.c.l.b16 %v314
  %v1234 = vunpack.c.h.b16 %v314
  %v1235 = vunpack.c.l.b16 %v315
  %v1236 = vunpack.c.h.b16 %v315
  %v1237 = vunpack.c.l.b16 %v316
  %v1238 = vunpack.c.h.b16 %v316
  %v1239 = vunpack.c.l.b16 %v317
  %v1240 = vunpack.c.h.b16 %v317
  %v1241 = vunpack.c.l.b16 %v318
  %v1242 = vunpack.c.h.b16 %v318
  %v1243 = vpack.c.b16 %v683, %v667
  %v1244 = vpack.c.b16 %v684, %v668
  %v1245 = vpack.c.b16 %v685, %v669
  %v1246 = vpack.c.b16 %v686, %v670
  %v1247 = vpack.c.b16 %v687, %v671
  %v1248 = vpack.c.b16 %v688, %v672
  %v1249 = vpack.c.b16 %v689, %v673
  %v1250 = vpack.c.b16 %v690, %v674
  %v1251 = vpack.c.b16 %v691, %v675
  %v1252 = vpack.c.b16 %v692, %v676
  %v1253 = vpack.c.b16 %v693, %v677
  %v1254 = vpack.c.b16 %v694, %v678
  %v1255 = vpack.c.b16 %v695, %v679
  %v1256 = vpack.c.b16 %v696, %v680
  %v1257 = vpack.c.b16 %v697, %v681
  %v1258 = vpack.c.b16 %v698, %v682
  %v1259 = vpack.c.b16 %v715, %v699
  %v1260 = vpack.c.b16 %v716, %v700
  %v1261 = vpack.c.b16 %v717, %v701
  %v1262 = vpack.c.b16 %v718, %v702
  %v1263 = vpack.c.b16 %v719, %v703
  %v1264 = vpack.c.b16 %v720, %v704
  %v1265 = vpack.c.b16 %v721, %v705
  %v1266 = vpack.c.b16 %v722, %v706
  %v1267 = vpack.c.b16 %v723, %v707
  %v1268 = vpack.c.b16 %v724, %v708
  %v1269 = vpack.c.b16 %v725, %v709
  %v1270 = vpack.c.b16 %v726, %v710
  %v1271 = vpack.c.b16 %v727, %v711
  %v1272 = vpack.c.b16 %v728, %v712
  %v1273 = vpack.c.b16 %v729, %v713
  %v1274 = vpack.c.b16 %v730, %v714
  %v1275 = vpack.c.b16 %v747, %v731
  %v1276 = vpack.c.b16 %v748, %v732
  %v1277 = vpack.c.b16 %v749, %v733
  %v1278 = vpack.c.b16 %v750, %v734
  %v1279 = vpack.c.b16 %v751, %v735
  %v1280 = vpack.c.b16 %v752, %v736
  %v1281 = vpack.c.b16 %v753, %v737
  %v1282 = vpack.c.b16 %v754, %v738
  %v1283 = vpack.c.b16 %v755, %v739
  %v1284 = vpack.c.b16 %v756, %v740
  %v1285 = vpack.c.b16 %v757, %v741
  %v1286 = vpack.c.b16 %v758, %v742
  %v1287 = vpack.c.b16 %v759, %v743
  %v1288 = vpack.c.b16 %v760, %v744
  %v1289 = vpack.c.b16 %v761, %v745
  %v1290 = vpack.c.b16 %v762, %v746
  %v1291 = vpack.c.b16 %v779, %v763
  %v1292 = vpack.c.b16 %v780, %v764
  %v1293 = vpack.c.b16 %v781, %v765
  %v1294 = vpack.c.b16 %v782, %v766
  %v1295 = vpack.c.b16 %v783, %v767
  %v1296 = vpack.c.b16 %v784, %v768
  %v1297 = vpack.c.b16 %v785, %v769
  %v1298 = vpack.c.b16 %v786, %v770
  %v1299 = vpack.c.b16 %v787, %v771
  %v1300 = vpack.c.b16 %v788, %v772
  %v1301 = vpack.c.b16 %v789, %v773
  %v1302 = vpack.c.b16 %v790, %v774
  %v1303 = vpack.c.b16 %v791, %v775
  %v1304 = vpack.c.b16 %v792, %v776
  %v1305 = vpack.c.b16 %v793, %v777
  %v1306 = vpack.c.b16 %v794, %v778
  %v1307 = vpack.c.b16 %v811, %v795
  %v1308 = vpack.c.b16 %v812, %v796
  %v1309 = vpack.c.b16 %v813, %v797
  %v1310 = vpack.c.b16 %v814, %v798
  %v1311 = vpack.c.b16 %v815, %v799
  %v1312 = vpack.c.b16 %v816, %v800
  %v1313 = vpack.c.b16 %v817, %v801
  %v1314 = vpack.c.b16 %v818, %v802
  %v1315 = vpack.c.b16 %v819, %v803
  %v1316 = vpack.c.b16 %v820, %v804
  %v1317 = vpack.c.b16 %v821, %v805
  %v1318 = vpack.c.b16 %v822, %v806
  %v1319 = vpack.c.b16 %v823, %v807
  %v1320 = vpack.c.b16 %v824, %v808
  %v1321 = vpack.c.b16 %v825, %v809
  %v1322 = vpack.c.b16 %v826, %v810
  %v1323 = vpack.c.b16 %v843, %v827
  %v1324 = vpack.c.b16 %v844, %v828
  %v1325 = vpack.c.b16 %v845, %v829
  %v1326 = vpack.c.b16 %v846, %v830
  %v1327 = vpack.c.b16 %v847, %v831
  %v1328 = vpack.c.b16 %v848, %v832
  %v1329 = vpack.c.b16 %v849, %v833
  %v1330 = vpack.c.b16 %v850, %v834
  %v1331 = vpack.c.b16 %v851, %v835
  %v1332 = vpack.c.b16 %v852, %v836
  %v1333 = vpack.c.b16 %v853, %v837
  %v1334 = vpack.c.b16 %v854, %v838
  %v1335 = vpack.c.b16 %v855, %v839
  %v1336 = vpack.c.b16 %v856, %v840
  %v1337 = vpack.c.b16 %v857, %v841
  %v1338 = vpack.c.b16 %v858, %v842
  %v1339 = vpack.c.b16 %v875, %v859
  %v1340 = vpack.c.b16 %v876, %v860
  %v1341 = vpack.c.b16 %v877, %v861
  %v1342 = vpack.c.b16 %v878, %v862
  %v1343 = vpack.c.b16 %v879, %v863
  %v1344 = vpack.c.b16 %v880, %v864
  %v1345 = vpack.c.b16 %v881, %v865
  %v1346 = vpack.c.b16 %v882, %v866
  %v1347 = vpack.c.b16 %v883, %v867
  %v1348 = vpack.c.b16 %v884, %v868
  %v1349 = vpack.c.b16 %v885, %v869
  %v1350 = vpack.c.b16 %v886, %v870
  %v1351 = vpack.c.b16 %v887, %v871
  %v1352 = vpack.c.b16 %v888, %v872
  %v1353 = vpack.c.b16 %v889, %v873
  %v1354 = vpack.c.b16 %v890, %v874
  %v1355 = vpack.c.b16 %v907, %v891
  %v1356 = vpack.c.b16 %v908, %v892
  %v1357 = vpack.c.b16 %v909, %v893
  %v1358 = vpack.c.b16 %v910, %v894
  %v1359 = vpack.c.b16 %v911, %v895
  %v1360 = vpack.c.b16 %v912, %v896
  %v1361 = vpack.c.b16 %v913, %v897
  %v1362 = vpack.c.b16 %v914, %v898
  %v1363 = vpack.c.b16 %v915, %v899
  %v1364 = vpack.c.b16 %v916, %v900
  %v1365 = vpack.c.b16 %v917, %v901
  %v1366 = vpack.c.b16 %v918, %v902
  %v1367 = vpack.c.b16 %v919, %v903
  %v1368 = vpack.c.b16 %v920, %v904
  %v1369 = vpack.c.b16 %v921, %v905
  %v1370 = vpack.c.b16 %v922, %v906
  %v1371 = vpack.c.b16 %v939, %v923
  %v1372 = vpack.c.b16 %v940, %v924
  %v1373 = vpack.c.b16 %v941, %v925
  %v1374 = vpack.c.b16 %v942, %v926
  %v1375 = vpack.c.b16 %v943, %v927
  %v1376 = vpack.c.b16 %v944, %v928
  %v1377 = vpack.c.b16 %v945, %v929
  %v1378 = vpack.c.b16 %v946, %v930
  %v1379 = vpack.c.b16 %v947, %v931
  %v1380 = vpack.c.b16 %v948, %v932
  %v1381 = vpack.c.b16 %v949, %v933
  %v1382 = vpack.c.b16 %v950, %v934
  %v1383 = vpack.c.b16 %v951, %v935
  %v1384 = vpack.c.b16 %v952, %v936
  %v1385 = vpack.c.b16 %v953, %v937
  %v1386 = vpack.c.b16 %v954, %v938
  %v1387 = vpack.c.b16 %v971, %v955
  %v1388 = vpack.c.b16 %v972, %v956
  %v1389 = vpack.c.b16 %v973, %v957
  %v1390 = vpack.c.b16 %v974, %v958
  %v1391 = vpack.c.b16 %v975, %v959
  %v1392 = vpack.c.b16 %v976, %v960
  %v1393 = vpack.c.b16 %v977, %v961
  %v1394 = vpack.c.b16 %v978, %v962
  %v1395 = vpack.c.b16 %v979, %v963
  %v1396 = vpack.c.b16 %v980, %v964
  %v1397 = vpack.c.b16 %v981, %v965
  %v1398 = vpack.c.b16 %v982, %v966
  %v1399 = vpack.c.b16 %v983, %v967
  %v1400 = vpack.c.b16 %v984, %v968
  %v1401 = vpack.c.b16 %v985, %v969
  %v1402 = vpack.c.b16 %v986, %v970
  %v1403 = vpack.c.b16 %v1003, %v987
  %v1404 = vpack.c.b16 %v1004, %v988
  %v1405 = vpack.c.b16 %v1005, %v989
  %v1406 = vpack.c.b16 %v1006, %v990
  %v1407 = vpack.c.b16 %v1007, %v991
  %v1408 = vpack.c.b16 %v1008, %v992
  %v1409 = vpack.c.b16 %v1009, %v993
  %v1410 = vpack.c.b16 %v1010, %v994
  %v1411 = vpack.c.b16 %v1011, %v995
  %v1412 = vpack.c.b16 %v1012, %v996
  %v1413 = vpack.c.b16 %v1013, %v997
  %v1414 = vpack.c.b16 %v1014, %v998
  %v1415 = vpack.c.b16 %v1015, %v999
  %v1416 = vpack.c.b16 %v1016, %v1000
  %v1417 = vpack.c.b16 %v1017, %v1001
  %v1418 = vpack.c.b16 %v1018, %v1002
  %v1419 = vpack.c.b16 %v1035, %v1019
  %v1420 = vpack.c.b16 %v1036, %v1020
  %v1421 = vpack.c.b16 %v1037, %v1021
  %v1422 = vpack.c.b16 %v1038, %v1022
  %v1423 = vpack.c.b16 %v1039, %v1023
  %v1424 = vpack.c.b16 %v1040, %v1024
  %v1425 = vpack.c.b16 %v1041, %v1025
  %v1426 = vpack.c.b16 %v1042, %v1026
  %v1427 = vpack.c.b16 %v1043, %v1027
  %v1428 = vpack.c.b16 %v1044, %v1028
  %v1429 = vpack.c.b16 %v1045, %v1029
  %v1430 = vpack.c.b16 %v1046, %v1030
  %v1431 = vpack.c.b16 %v1047, %v1031
  %v1432 = vpack.c.b16 %v1048, %v1032
  %v1433 = vpack.c.b16 %v1049, %v1033
  %v1434 = vpack.c.b16 %v1050, %v1034
  %v1435 = vpack.c.b16 %v1067, %v1051
  %v1436 = vpack.c.b16 %v1068, %v1052
  %v1437 = vpack.c.b16 %v1069, %v1053
  %v1438 = vpack.c.b16 %v1070, %v1054
  %v1439 = vpack.c.b16 %v1071, %v1055
  %v1440 = vpack.c.b16 %v1072, %v1056
  %v1441 = vpack.c.b16 %v1073, %v1057
  %v1442 = vpack.c.b16 %v1074, %v1058
  %v1443 = vpack.c.b16 %v1075, %v1059
  %v1444 = vpack.c.b16 %v1076, %v1060
  %v1445 = vpack.c.b16 %v1077, %v1061
  %v1446 = vpack.c.b16 %v1078, %v1062
  %v1447 = vpack.c.b16 %v1079, %v1063
  %v1448 = vpack.c.b16 %v1080, %v1064
  %v1449 = vpack.c.b16 %v1081, %v1065
  %v1450 = vpack.c.b16 %v1082, %v1066
  %v1451 = vpack.c.b16 %v1099, %v1083
  %v1452 = vpack.c.b16 %v1100, %v1084
  %v1453 = vpack.c.b16 %v1101, %v1085
  %v1454 = vpack.c.b16 %v1102, %v1086
  %v1455 = vpack.c.b16 %v1103, %v1087
  %v1456 = vpack.c.b16 %v1104, %v1088
  %v1457 = vpack.c.b16 %v1105, %v1089
  %v1458 = vpack.c.b16 %v1106, %v1090
  %v1459 = vpack.c.b16 %v1107, %v1091
  %v1460 = vpack.c.b16 %v1108, %v1092
  %v1461 = vpack.c.b16 %v1109, %v1093
  %v1462 = vpack.c.b16 %v1110, %v1094
  %v1463 = vpack.c.b16 %v1111, %v1095
  %v1464 = vpack.c.b16 %v1112, %v1096
  %v1465 = vpack.c.b16 %v1113, %v1097
  %v1466 = vpack.c.b16 %v1114, %v1098
  %v1467 = vpack.c.b16 %v1131, %v1115
  %v1468 = vpack.c.b16 %v1132, %v1116
  %v1469 = vpack.c.b16 %v1133, %v1117
  %v1470 = vpack.c.b16 %v1134, %v1118
  %v1471 = vpack.c.b16 %v1135, %v1119
  %v1472 = vpack.c.b16 %v1136, %v1120
  %v1473 = vpack.c.b16 %v1137, %v1121
  %v1474 = vpack.c.b16 %v1138, %v1122
  %v1475 = vpack.c.b16 %v1139, %v1123
  %v1476 = vpack.c.b16 %v1140, %v1124
  %v1477 = vpack.c.b16 %v1141, %v1125
  %v1478 = vpack.c.b16 %v1142, %v1126
  %v1479 = vpack.c.b16 %v1143, %v1127
  %v1480 = vpack.c.b16 %v1144, %v1128
  %v1481 = vpack.c.b16 %v1145, %v1129
  %v1482 = vpack.c.b16 %v1146, %v1130
  %v1483 = vpack.c.b16 %v1163, %v1147
  %v1484 = vpack.c.b16 %v1164, %v1148
  %v1485 = vpack.c.b16 %v1165, %v1149
  %v1486 = vpack.c.b16 %v1166, %v1150
  %v1487 = vpack.c.b16 %v1167, %v1151
  %v1488 = vpack.c.b16 %v1168, %v1152
  %v1489 = vpack.c.b16 %v1169, %v1153
  %v1490 = vpack.c.b16 %v1170, %v1154
  %v1491 = vpack.c.b16 %v1171, %v1155
  %v1492 = vpack.c.b16 %v1172, %v1156
  %v1493 = vpack.c.b16 %v1173, %v1157
  %v1494 = vpack.c.b16 %v1174, %v1158
  %v1495 = vpack.c.b16 %v1175, %v1159
  %v1496 = vpack.c.b16 %v1176, %v1160
  %v1497 = vpack.c.b16 %v1177, %v1161
  %v1498 = vpack.c.b16 %v1178, %v1162
  %v1499 = vpack.c.b16 %v1195, %v1179
  %v1500 = vpack.c.b16 %v1196, %v1180
  %v1501 = vpack.c.b16 %v1197, %v1181
  %v1502 = vpack.c.b16 %v1198, %v1182
  %v1503 = vpack.c.b16 %v1199, %v1183
  %v1504 = vpack.c.b16 %v1200, %v1184
  %v1505 = vpack.c.b16 %v1201, %v1185
  %v1506 = vpack.c.b16 %v1202, %v1186
  %v1507 = vpack.c.b16 %v1203, %v1187
  %v1508 = vpack.c.b16 %v1204, %v1188
  %v1509 = vpack.c.b16 %v1205, %v1189
  %v1510 = vpack.c.b16 %v1206, %v1190
  %v1511 = vpack.c.b16 %v1207, %v1191
  %v1512 = vpack.c.b16 %v1208, %v1192
  %v1513 = vpack.c.b16 %v1209, %v1193
  %v1514 = vpack.c.b16 %v1210, %v1194
  %v1515 = vpack.c.b16 %v1227, %v1211
  %v1516 = vpack.c.b16 %v1228, %v1212
  %v1517 = vpack.c.b16 %v1229, %v1213
  %v1518 = vpack.c.b16 %v1230, %v1214
  %v1519 = vpack.c.b16 %v1231, %v1215
  %v1520 = vpack.c.b16 %v1232, %v1216
  %v1521 = vpack.c.b16 %v1233, %v1217
  %v1522 = vpack.c.b16 %v1234, %v1218
  %v1523 = vpack.c.b16 %v1235, %v1219
  %v1524 = vpack.c.b16 %v1236, %v1220
  %v1525 = vpack.c.b16 %v1237, %v1221
  %v1526 = vpack.c.b16 %v1238, %v1222
  %v1527 = vpack.c.b16 %v1239, %v1223
  %v1528 = vpack.c.b16 %v1240, %v1224
  %v1529 = vpack.c.b16 %v1241, %v1225
  %v1530 = vpack.c.b16 %v1242, %v1226
  %vm1819 = vcmask 261120
  %v1821 = vsel %vm1819, %v361, 0
  %v1824 = vsel %vm1819, %v364, 0
  %v1827 = vsel %vm1819, %v367, 0
  %v1830 = vsel %vm1819, %v370, 0
  %1832 = vmatprep.subr.bf16.mxu0 %v1356
  %1833 = vmatpush1.bf16.msra.mxu0 %v1355
  %1834 = vmatprep.subr.bf16.mxu0 %v1340
  %1835 = vmatpush1.bf16.msra.mxu0 %v1339
  %1836 = vmatprep.subr.bf16.mxu0 %v1324
  %1837 = vmatpush1.bf16.msra.mxu0 %v1323
  %1838 = vmatprep.subr.bf16.mxu0 %v1308
  %1839 = vmatpush1.bf16.msra.mxu0 %v1307
  %1840 = vmatprep.subr.bf16.mxu0 %v1292
  %1841 = vmatpush1.bf16.msra.mxu0 %v1291
  %1842 = vmatprep.subr.bf16.mxu0 %v1276
  %1843 = vmatpush1.bf16.msra.mxu0 %v1275
  %1844 = vmatprep.subr.bf16.mxu0 %v1260
  %1845 = vmatpush1.bf16.msra.mxu0 %v1259
  %1846 = vmatprep.subr.bf16.mxu0 %v1244
  %1847 = vmatpush1.bf16.msra.mxu0 %v1243
  %1848 = vmatprep.subr.bf16.mxu0 %v1484
  %1849 = vmatpush2.bf16.msra.mxu0 %v1483
  %1850 = vmatprep.subr.bf16.mxu0 %v1468
  %1851 = vmatpush2.bf16.msra.mxu0 %v1467
  %1852 = vmatprep.subr.bf16.mxu0 %v1452
  %1853 = vmatpush2.bf16.msra.mxu0 %v1451
  %1854 = vmatprep.subr.bf16.mxu0 %v1436
  %1855 = vmatpush2.bf16.msra.mxu0 %v1435
  %1856 = vmatprep.subr.bf16.mxu0 %v1420
  %1857 = vmatpush2.bf16.msra.mxu0 %v1419
  %1858 = vmatprep.subr.bf16.mxu0 %v1404
  %1859 = vmatpush2.bf16.msra.mxu0 %v1403
  %1860 = vmatprep.subr.bf16.mxu0 %v1388
  %1861 = vmatpush2.bf16.msra.mxu0 %v1387
  %1862 = vmatprep.subr.bf16.mxu0 %v1372
  %1863 = vmatpush2.bf16.msra.mxu0 %v1371
  %1864 = vmatprep.mubr.bf16.mxu0 %v360
  %1865 = vmatmul.mubr.bf16.gmra.mxu0 %v359
  %v1866 = vpop.f32.mrf.mxu0
  %v1867 = vadd.f32 0.0, %v1866
  %v1868 = vpop.f32.mrf.mxu0
  %v1869 = vadd.f32 0.0, %v1868
  %v1870 = vpop.f32.mrf.mxu0
  %v1871 = vadd.f32 0.0, %v1870
  %v1872 = vpop.f32.mrf.mxu0
  %v1873 = vadd.f32 0.0, %v1872
  %1874 = vmatprep.mubr.bf16.mxu0 %v363
  %1875 = vmatmul.mubr.bf16.gmra.mxu0 %v362
  %v1876 = vpop.f32.mrf.mxu0
  %v1877 = vadd.f32 0.0, %v1876
  %v1878 = vpop.f32.mrf.mxu0
  %v1879 = vadd.f32 0.0, %v1878
  %v1880 = vpop.f32.mrf.mxu0
  %v1881 = vadd.f32 0.0, %v1880
  %v1882 = vpop.f32.mrf.mxu0
  %v1883 = vadd.f32 0.0, %v1882
  %1884 = vmatprep.mubr.bf16.mxu0 %v366
  %1885 = vmatmul.mubr.bf16.gmra.mxu0 %v365
  %v1886 = vpop.f32.mrf.mxu0
  %v1887 = vadd.f32 0.0, %v1886
  %v1888 = vpop.f32.mrf.mxu0
  %v1889 = vadd.f32 0.0, %v1888
  %v1890 = vpop.f32.mrf.mxu0
  %v1891 = vadd.f32 0.0, %v1890
  %v1892 = vpop.f32.mrf.mxu0
  %v1893 = vadd.f32 0.0, %v1892
  %1894 = vmatprep.mubr.bf16.mxu0 %v369
  %1895 = vmatmul.mubr.bf16.gmra.mxu0 %v368
  %v1896 = vpop.f32.mrf.mxu0
  %v1897 = vadd.f32 0.0, %v1896
  %v1898 = vpop.f32.mrf.mxu0
  %v1899 = vadd.f32 0.0, %v1898
  %v1900 = vpop.f32.mrf.mxu0
  %v1901 = vadd.f32 0.0, %v1900
  %v1902 = vpop.f32.mrf.mxu0
  %v1903 = vadd.f32 0.0, %v1902
  %1904 = vdwg.mxu0
  %1905 = vmatprep.subr.bf16.mxu0 0
  %1906 = vmatpush1.bf16.msra.mxu0 0
  %1907 = vmatprep.subr.bf16.mxu0 0
  %1908 = vmatpush1.bf16.msra.mxu0 0
  %1909 = vmatprep.subr.bf16.mxu0 0
  %1910 = vmatpush1.bf16.msra.mxu0 0
  %1911 = vmatprep.subr.bf16.mxu0 0
  %1912 = vmatpush1.bf16.msra.mxu0 0
  %1913 = vmatprep.subr.bf16.mxu0 0
  %1914 = vmatpush1.bf16.msra.mxu0 0
  %1915 = vmatprep.subr.bf16.mxu0 0
  %1916 = vmatpush1.bf16.msra.mxu0 0
  %1917 = vmatprep.subr.bf16.mxu0 %v1516
  %1918 = vmatpush1.bf16.msra.mxu0 %v1515
  %1919 = vmatprep.subr.bf16.mxu0 %v1500
  %1920 = vmatpush1.bf16.msra.mxu0 %v1499
  %1921 = vmatprep.subr.bf16.mxu0 0
  %1922 = vmatpush2.bf16.msra.mxu0 0
  %1923 = vmatprep.subr.bf16.mxu0 0
  %1924 = vmatpush2.bf16.msra.mxu0 0
  %1925 = vmatprep.subr.bf16.mxu0 0
  %1926 = vmatpush2.bf16.msra.mxu0 0
  %1927 = vmatprep.subr.bf16.mxu0 0
  %1928 = vmatpush2.bf16.msra.mxu0 0
  %1929 = vmatprep.subr.bf16.mxu0 0
  %1930 = vmatpush2.bf16.msra.mxu0 0
  %1931 = vmatprep.subr.bf16.mxu0 0
  %1932 = vmatpush2.bf16.msra.mxu0 0
  %1933 = vmatprep.subr.bf16.mxu0 0
  %1934 = vmatpush2.bf16.msra.mxu0 0
  %1935 = vmatprep.subr.bf16.mxu0 0
  %1936 = vmatpush2.bf16.msra.mxu0 0
  %1937 = vmatprep.mubr.bf16.mxu0 0
  %1938 = vmatmul.mubr.bf16.gmra.mxu0 %v1821
  %v1939 = vpop.f32.mrf.mxu0
  %v1940 = vadd.f32 %v1867, %v1939
  %v1941 = vpop.f32.mrf.mxu0
  %v1942 = vadd.f32 %v1869, %v1941
  %v1943 = vpop.f32.mrf.mxu0
  %v1944 = vadd.f32 %v1871, %v1943
  %v1945 = vpop.f32.mrf.mxu0
  %v1946 = vadd.f32 %v1873, %v1945
  %1947 = vmatprep.mubr.bf16.mxu0 0
  %1948 = vmatmul.mubr.bf16.gmra.mxu0 %v1824
  %v1949 = vpop.f32.mrf.mxu0
  %v1950 = vadd.f32 %v1877, %v1949
  %v1951 = vpop.f32.mrf.mxu0
  %v1952 = vadd.f32 %v1879, %v1951
  %v1953 = vpop.f32.mrf.mxu0
  %v1954 = vadd.f32 %v1881, %v1953
  %v1955 = vpop.f32.mrf.mxu0
  %v1956 = vadd.f32 %v1883, %v1955
  %1957 = vmatprep.mubr.bf16.mxu0 0
  %1958 = vmatmul.mubr.bf16.gmra.mxu0 %v1827
  %v1959 = vpop.f32.mrf.mxu0
  %v1960 = vadd.f32 %v1887, %v1959
  %v1961 = vpop.f32.mrf.mxu0
  %v1962 = vadd.f32 %v1889, %v1961
  %v1963 = vpop.f32.mrf.mxu0
  %v1964 = vadd.f32 %v1891, %v1963
  %v1965 = vpop.f32.mrf.mxu0
  %v1966 = vadd.f32 %v1893, %v1965
  %1967 = vmatprep.mubr.bf16.mxu0 0
  %1968 = vmatmul.mubr.bf16.gmra.mxu0 %v1830
  %v1969 = vpop.f32.mrf.mxu0
  %v1970 = vadd.f32 %v1897, %v1969
  %v1971 = vpop.f32.mrf.mxu0
  %v1972 = vadd.f32 %v1899, %v1971
  %v1973 = vpop.f32.mrf.mxu0
  %v1974 = vadd.f32 %v1901, %v1973
  %v1975 = vpop.f32.mrf.mxu0
  %v1976 = vadd.f32 %v1903, %v1975
  %1977 = vdwg.mxu0
  %1978 = vmatprep.subr.bf16.mxu0 %v1358
  %1979 = vmatpush1.bf16.msra.mxu0 %v1357
  %1980 = vmatprep.subr.bf16.mxu0 %v1342
  %1981 = vmatpush1.bf16.msra.mxu0 %v1341
  %1982 = vmatprep.subr.bf16.mxu0 %v1326
  %1983 = vmatpush1.bf16.msra.mxu0 %v1325
  %1984 = vmatprep.subr.bf16.mxu0 %v1310
  %1985 = vmatpush1.bf16.msra.mxu0 %v1309
  %1986 = vmatprep.subr.bf16.mxu0 %v1294
  %1987 = vmatpush1.bf16.msra.mxu0 %v1293
  %1988 = vmatprep.subr.bf16.mxu0 %v1278
  %1989 = vmatpush1.bf16.msra.mxu0 %v1277
  %1990 = vmatprep.subr.bf16.mxu0 %v1262
  %1991 = vmatpush1.bf16.msra.mxu0 %v1261
  %1992 = vmatprep.subr.bf16.mxu0 %v1246
  %1993 = vmatpush1.bf16.msra.mxu0 %v1245
  %1994 = vmatprep.subr.bf16.mxu0 %v1486
  %1995 = vmatpush2.bf16.msra.mxu0 %v1485
  %1996 = vmatprep.subr.bf16.mxu0 %v1470
  %1997 = vmatpush2.bf16.msra.mxu0 %v1469
  %1998 = vmatprep.subr.bf16.mxu0 %v1454
  %1999 = vmatpush2.bf16.msra.mxu0 %v1453
  %2000 = vmatprep.subr.bf16.mxu0 %v1438
  %2001 = vmatpush2.bf16.msra.mxu0 %v1437
  %2002 = vmatprep.subr.bf16.mxu0 %v1422
  %2003 = vmatpush2.bf16.msra.mxu0 %v1421
  %2004 = vmatprep.subr.bf16.mxu0 %v1406
  %2005 = vmatpush2.bf16.msra.mxu0 %v1405
  %2006 = vmatprep.subr.bf16.mxu0 %v1390
  %2007 = vmatpush2.bf16.msra.mxu0 %v1389
  %2008 = vmatprep.subr.bf16.mxu0 %v1374
  %2009 = vmatpush2.bf16.msra.mxu0 %v1373
  %2010 = vmatprep.mubr.bf16.mxu0 %v360
  %2011 = vmatmul.mubr.bf16.gmra.mxu0 %v359
  %v2012 = vpop.f32.mrf.mxu0
  %v2013 = vadd.f32 0.0, %v2012
  %v2014 = vpop.f32.mrf.mxu0
  %v2015 = vadd.f32 0.0, %v2014
  %v2016 = vpop.f32.mrf.mxu0
  %v2017 = vadd.f32 0.0, %v2016
  %v2018 = vpop.f32.mrf.mxu0
  %v2019 = vadd.f32 0.0, %v2018
  %2020 = vmatprep.mubr.bf16.mxu0 %v363
  %2021 = vmatmul.mubr.bf16.gmra.mxu0 %v362
  %v2022 = vpop.f32.mrf.mxu0
  %v2023 = vadd.f32 0.0, %v2022
  %v2024 = vpop.f32.mrf.mxu0
  %v2025 = vadd.f32 0.0, %v2024
  %v2026 = vpop.f32.mrf.mxu0
  %v2027 = vadd.f32 0.0, %v2026
  %v2028 = vpop.f32.mrf.mxu0
  %v2029 = vadd.f32 0.0, %v2028
  %2030 = vmatprep.mubr.bf16.mxu0 %v366
  %2031 = vmatmul.mubr.bf16.gmra.mxu0 %v365
  %v2032 = vpop.f32.mrf.mxu0
  %v2033 = vadd.f32 0.0, %v2032
  %v2034 = vpop.f32.mrf.mxu0
  %v2035 = vadd.f32 0.0, %v2034
  %v2036 = vpop.f32.mrf.mxu0
  %v2037 = vadd.f32 0.0, %v2036
  %v2038 = vpop.f32.mrf.mxu0
  %v2039 = vadd.f32 0.0, %v2038
  %2040 = vmatprep.mubr.bf16.mxu0 %v369
  %2041 = vmatmul.mubr.bf16.gmra.mxu0 %v368
  %v2042 = vpop.f32.mrf.mxu0
  %v2043 = vadd.f32 0.0, %v2042
  %v2044 = vpop.f32.mrf.mxu0
  %v2045 = vadd.f32 0.0, %v2044
  %v2046 = vpop.f32.mrf.mxu0
  %v2047 = vadd.f32 0.0, %v2046
  %v2048 = vpop.f32.mrf.mxu0
  %v2049 = vadd.f32 0.0, %v2048
  %2050 = vdwg.mxu0
  %2051 = vmatprep.subr.bf16.mxu0 0
  %2052 = vmatpush1.bf16.msra.mxu0 0
  %2053 = vmatprep.subr.bf16.mxu0 0
  %2054 = vmatpush1.bf16.msra.mxu0 0
  %2055 = vmatprep.subr.bf16.mxu0 0
  %2056 = vmatpush1.bf16.msra.mxu0 0
  %2057 = vmatprep.subr.bf16.mxu0 0
  %2058 = vmatpush1.bf16.msra.mxu0 0
  %2059 = vmatprep.subr.bf16.mxu0 0
  %2060 = vmatpush1.bf16.msra.mxu0 0
  %2061 = vmatprep.subr.bf16.mxu0 0
  %2062 = vmatpush1.bf16.msra.mxu0 0
  %2063 = vmatprep.subr.bf16.mxu0 %v1518
  %2064 = vmatpush1.bf16.msra.mxu0 %v1517
  %2065 = vmatprep.subr.bf16.mxu0 %v1502
  %2066 = vmatpush1.bf16.msra.mxu0 %v1501
  %2067 = vmatprep.subr.bf16.mxu0 0
  %2068 = vmatpush2.bf16.msra.mxu0 0
  %2069 = vmatprep.subr.bf16.mxu0 0
  %2070 = vmatpush2.bf16.msra.mxu0 0
  %2071 = vmatprep.subr.bf16.mxu0 0
  %2072 = vmatpush2.bf16.msra.mxu0 0
  %2073 = vmatprep.subr.bf16.mxu0 0
  %2074 = vmatpush2.bf16.msra.mxu0 0
  %2075 = vmatprep.subr.bf16.mxu0 0
  %2076 = vmatpush2.bf16.msra.mxu0 0
  %2077 = vmatprep.subr.bf16.mxu0 0
  %2078 = vmatpush2.bf16.msra.mxu0 0
  %2079 = vmatprep.subr.bf16.mxu0 0
  %2080 = vmatpush2.bf16.msra.mxu0 0
  %2081 = vmatprep.subr.bf16.mxu0 0
  %2082 = vmatpush2.bf16.msra.mxu0 0
  %2083 = vmatprep.mubr.bf16.mxu0 0
  %2084 = vmatmul.mubr.bf16.gmra.mxu0 %v1821
  %v2085 = vpop.f32.mrf.mxu0
  %v2086 = vadd.f32 %v2013, %v2085
  %v2087 = vpop.f32.mrf.mxu0
  %v2088 = vadd.f32 %v2015, %v2087
  %v2089 = vpop.f32.mrf.mxu0
  %v2090 = vadd.f32 %v2017, %v2089
  %v2091 = vpop.f32.mrf.mxu0
  %v2092 = vadd.f32 %v2019, %v2091
  %2093 = vmatprep.mubr.bf16.mxu0 0
  %2094 = vmatmul.mubr.bf16.gmra.mxu0 %v1824
  %v2095 = vpop.f32.mrf.mxu0
  %v2096 = vadd.f32 %v2023, %v2095
  %v2097 = vpop.f32.mrf.mxu0
  %v2098 = vadd.f32 %v2025, %v2097
  %v2099 = vpop.f32.mrf.mxu0
  %v2100 = vadd.f32 %v2027, %v2099
  %v2101 = vpop.f32.mrf.mxu0
  %v2102 = vadd.f32 %v2029, %v2101
  %2103 = vmatprep.mubr.bf16.mxu0 0
  %2104 = vmatmul.mubr.bf16.gmra.mxu0 %v1827
  %v2105 = vpop.f32.mrf.mxu0
  %v2106 = vadd.f32 %v2033, %v2105
  %v2107 = vpop.f32.mrf.mxu0
  %v2108 = vadd.f32 %v2035, %v2107
  %v2109 = vpop.f32.mrf.mxu0
  %v2110 = vadd.f32 %v2037, %v2109
  %v2111 = vpop.f32.mrf.mxu0
  %v2112 = vadd.f32 %v2039, %v2111
  %2113 = vmatprep.mubr.bf16.mxu0 0
  %2114 = vmatmul.mubr.bf16.gmra.mxu0 %v1830
  %v2115 = vpop.f32.mrf.mxu0
  %v2116 = vadd.f32 %v2043, %v2115
  %v2117 = vpop.f32.mrf.mxu0
  %v2118 = vadd.f32 %v2045, %v2117
  %v2119 = vpop.f32.mrf.mxu0
  %v2120 = vadd.f32 %v2047, %v2119
  %v2121 = vpop.f32.mrf.mxu0
  %v2122 = vadd.f32 %v2049, %v2121
  %2123 = vdwg.mxu0
  %2124 = vmatprep.subr.bf16.mxu0 %v1360
  %2125 = vmatpush1.bf16.msra.mxu0 %v1359
  %2126 = vmatprep.subr.bf16.mxu0 %v1344
  %2127 = vmatpush1.bf16.msra.mxu0 %v1343
  %2128 = vmatprep.subr.bf16.mxu0 %v1328
  %2129 = vmatpush1.bf16.msra.mxu0 %v1327
  %2130 = vmatprep.subr.bf16.mxu0 %v1312
  %2131 = vmatpush1.bf16.msra.mxu0 %v1311
  %2132 = vmatprep.subr.bf16.mxu0 %v1296
  %2133 = vmatpush1.bf16.msra.mxu0 %v1295
  %2134 = vmatprep.subr.bf16.mxu0 %v1280
  %2135 = vmatpush1.bf16.msra.mxu0 %v1279
  %2136 = vmatprep.subr.bf16.mxu0 %v1264
  %2137 = vmatpush1.bf16.msra.mxu0 %v1263
  %2138 = vmatprep.subr.bf16.mxu0 %v1248
  %2139 = vmatpush1.bf16.msra.mxu0 %v1247
  %2140 = vmatprep.subr.bf16.mxu0 %v1488
  %2141 = vmatpush2.bf16.msra.mxu0 %v1487
  %2142 = vmatprep.subr.bf16.mxu0 %v1472
  %2143 = vmatpush2.bf16.msra.mxu0 %v1471
  %2144 = vmatprep.subr.bf16.mxu0 %v1456
  %2145 = vmatpush2.bf16.msra.mxu0 %v1455
  %2146 = vmatprep.subr.bf16.mxu0 %v1440
  %2147 = vmatpush2.bf16.msra.mxu0 %v1439
  %2148 = vmatprep.subr.bf16.mxu0 %v1424
  %2149 = vmatpush2.bf16.msra.mxu0 %v1423
  %2150 = vmatprep.subr.bf16.mxu0 %v1408
  %2151 = vmatpush2.bf16.msra.mxu0 %v1407
  %2152 = vmatprep.subr.bf16.mxu0 %v1392
  %2153 = vmatpush2.bf16.msra.mxu0 %v1391
  %2154 = vmatprep.subr.bf16.mxu0 %v1376
  %2155 = vmatpush2.bf16.msra.mxu0 %v1375
  %2156 = vmatprep.mubr.bf16.mxu0 %v360
  %2157 = vmatmul.mubr.bf16.gmra.mxu0 %v359
  %v2158 = vpop.f32.mrf.mxu0
  %v2159 = vadd.f32 0.0, %v2158
  %v2160 = vpop.f32.mrf.mxu0
  %v2161 = vadd.f32 0.0, %v2160
  %v2162 = vpop.f32.mrf.mxu0
  %v2163 = vadd.f32 0.0, %v2162
  %v2164 = vpop.f32.mrf.mxu0
  %v2165 = vadd.f32 0.0, %v2164
  %2166 = vmatprep.mubr.bf16.mxu0 %v363
  %2167 = vmatmul.mubr.bf16.gmra.mxu0 %v362
  %v2168 = vpop.f32.mrf.mxu0
  %v2169 = vadd.f32 0.0, %v2168
  %v2170 = vpop.f32.mrf.mxu0
  %v2171 = vadd.f32 0.0, %v2170
  %v2172 = vpop.f32.mrf.mxu0
  %v2173 = vadd.f32 0.0, %v2172
  %v2174 = vpop.f32.mrf.mxu0
  %v2175 = vadd.f32 0.0, %v2174
  %2176 = vmatprep.mubr.bf16.mxu0 %v366
  %2177 = vmatmul.mubr.bf16.gmra.mxu0 %v365
  %v2178 = vpop.f32.mrf.mxu0
  %v2179 = vadd.f32 0.0, %v2178
  %v2180 = vpop.f32.mrf.mxu0
  %v2181 = vadd.f32 0.0, %v2180
  %v2182 = vpop.f32.mrf.mxu0
  %v2183 = vadd.f32 0.0, %v2182
  %v2184 = vpop.f32.mrf.mxu0
  %v2185 = vadd.f32 0.0, %v2184
  %2186 = vmatprep.mubr.bf16.mxu0 %v369
  %2187 = vmatmul.mubr.bf16.gmra.mxu0 %v368
  %v2188 = vpop.f32.mrf.mxu0
  %v2189 = vadd.f32 0.0, %v2188
  %v2190 = vpop.f32.mrf.mxu0
  %v2191 = vadd.f32 0.0, %v2190
  %v2192 = vpop.f32.mrf.mxu0
  %v2193 = vadd.f32 0.0, %v2192
  %v2194 = vpop.f32.mrf.mxu0
  %v2195 = vadd.f32 0.0, %v2194
  %2196 = vdwg.mxu0
  %2197 = vmatprep.subr.bf16.mxu0 0
  %2198 = vmatpush1.bf16.msra.mxu0 0
  %2199 = vmatprep.subr.bf16.mxu0 0
  %2200 = vmatpush1.bf16.msra.mxu0 0
  %2201 = vmatprep.subr.bf16.mxu0 0
  %2202 = vmatpush1.bf16.msra.mxu0 0
  %2203 = vmatprep.subr.bf16.mxu0 0
  %2204 = vmatpush1.bf16.msra.mxu0 0
  %2205 = vmatprep.subr.bf16.mxu0 0
  %2206 = vmatpush1.bf16.msra.mxu0 0
  %2207 = vmatprep.subr.bf16.mxu0 0
  %2208 = vmatpush1.bf16.msra.mxu0 0
  %2209 = vmatprep.subr.bf16.mxu0 %v1520
  %2210 = vmatpush1.bf16.msra.mxu0 %v1519
  %2211 = vmatprep.subr.bf16.mxu0 %v1504
  %2212 = vmatpush1.bf16.msra.mxu0 %v1503
  %2213 = vmatprep.subr.bf16.mxu0 0
  %2214 = vmatpush2.bf16.msra.mxu0 0
  %2215 = vmatprep.subr.bf16.mxu0 0
  %2216 = vmatpush2.bf16.msra.mxu0 0
  %2217 = vmatprep.subr.bf16.mxu0 0
  %2218 = vmatpush2.bf16.msra.mxu0 0
  %2219 = vmatprep.subr.bf16.mxu0 0
  %2220 = vmatpush2.bf16.msra.mxu0 0
  %2221 = vmatprep.subr.bf16.mxu0 0
  %2222 = vmatpush2.bf16.msra.mxu0 0
  %2223 = vmatprep.subr.bf16.mxu0 0
  %2224 = vmatpush2.bf16.msra.mxu0 0
  %2225 = vmatprep.subr.bf16.mxu0 0
  %2226 = vmatpush2.bf16.msra.mxu0 0
  %2227 = vmatprep.subr.bf16.mxu0 0
  %2228 = vmatpush2.bf16.msra.mxu0 0
  %2229 = vmatprep.mubr.bf16.mxu0 0
  %2230 = vmatmul.mubr.bf16.gmra.mxu0 %v1821
  %v2231 = vpop.f32.mrf.mxu0
  %v2232 = vadd.f32 %v2159, %v2231
  %v2233 = vpop.f32.mrf.mxu0
  %v2234 = vadd.f32 %v2161, %v2233
  %v2235 = vpop.f32.mrf.mxu0
  %v2236 = vadd.f32 %v2163, %v2235
  %v2237 = vpop.f32.mrf.mxu0
  %v2238 = vadd.f32 %v2165, %v2237
  %2239 = vmatprep.mubr.bf16.mxu0 0
  %2240 = vmatmul.mubr.bf16.gmra.mxu0 %v1824
  %v2241 = vpop.f32.mrf.mxu0
  %v2242 = vadd.f32 %v2169, %v2241
  %v2243 = vpop.f32.mrf.mxu0
  %v2244 = vadd.f32 %v2171, %v2243
  %v2245 = vpop.f32.mrf.mxu0
  %v2246 = vadd.f32 %v2173, %v2245
  %v2247 = vpop.f32.mrf.mxu0
  %v2248 = vadd.f32 %v2175, %v2247
  %2249 = vmatprep.mubr.bf16.mxu0 0
  %2250 = vmatmul.mubr.bf16.gmra.mxu0 %v1827
  %v2251 = vpop.f32.mrf.mxu0
  %v2252 = vadd.f32 %v2179, %v2251
  %v2253 = vpop.f32.mrf.mxu0
  %v2254 = vadd.f32 %v2181, %v2253
  %v2255 = vpop.f32.mrf.mxu0
  %v2256 = vadd.f32 %v2183, %v2255
  %v2257 = vpop.f32.mrf.mxu0
  %v2258 = vadd.f32 %v2185, %v2257
  %2259 = vmatprep.mubr.bf16.mxu0 0
  %2260 = vmatmul.mubr.bf16.gmra.mxu0 %v1830
  %v2261 = vpop.f32.mrf.mxu0
  %v2262 = vadd.f32 %v2189, %v2261
  %v2263 = vpop.f32.mrf.mxu0
  %v2264 = vadd.f32 %v2191, %v2263
  %v2265 = vpop.f32.mrf.mxu0
  %v2266 = vadd.f32 %v2193, %v2265
  %v2267 = vpop.f32.mrf.mxu0
  %v2268 = vadd.f32 %v2195, %v2267
  %2269 = vdwg.mxu0
  %2270 = vmatprep.subr.bf16.mxu0 %v1362
  %2271 = vmatpush1.bf16.msra.mxu0 %v1361
  %2272 = vmatprep.subr.bf16.mxu0 %v1346
  %2273 = vmatpush1.bf16.msra.mxu0 %v1345
  %2274 = vmatprep.subr.bf16.mxu0 %v1330
  %2275 = vmatpush1.bf16.msra.mxu0 %v1329
  %2276 = vmatprep.subr.bf16.mxu0 %v1314
  %2277 = vmatpush1.bf16.msra.mxu0 %v1313
  %2278 = vmatprep.subr.bf16.mxu0 %v1298
  %2279 = vmatpush1.bf16.msra.mxu0 %v1297
  %2280 = vmatprep.subr.bf16.mxu0 %v1282
  %2281 = vmatpush1.bf16.msra.mxu0 %v1281
  %2282 = vmatprep.subr.bf16.mxu0 %v1266
  %2283 = vmatpush1.bf16.msra.mxu0 %v1265
  %2284 = vmatprep.subr.bf16.mxu0 %v1250
  %2285 = vmatpush1.bf16.msra.mxu0 %v1249
  %2286 = vmatprep.subr.bf16.mxu0 %v1490
  %2287 = vmatpush2.bf16.msra.mxu0 %v1489
  %2288 = vmatprep.subr.bf16.mxu0 %v1474
  %2289 = vmatpush2.bf16.msra.mxu0 %v1473
  %2290 = vmatprep.subr.bf16.mxu0 %v1458
  %2291 = vmatpush2.bf16.msra.mxu0 %v1457
  %2292 = vmatprep.subr.bf16.mxu0 %v1442
  %2293 = vmatpush2.bf16.msra.mxu0 %v1441
  %2294 = vmatprep.subr.bf16.mxu0 %v1426
  %2295 = vmatpush2.bf16.msra.mxu0 %v1425
  %2296 = vmatprep.subr.bf16.mxu0 %v1410
  %2297 = vmatpush2.bf16.msra.mxu0 %v1409
  %2298 = vmatprep.subr.bf16.mxu0 %v1394
  %2299 = vmatpush2.bf16.msra.mxu0 %v1393
  %2300 = vmatprep.subr.bf16.mxu0 %v1378
  %2301 = vmatpush2.bf16.msra.mxu0 %v1377
  %2302 = vmatprep.mubr.bf16.mxu0 %v360
  %2303 = vmatmul.mubr.bf16.gmra.mxu0 %v359
  %v2304 = vpop.f32.mrf.mxu0
  %v2305 = vadd.f32 0.0, %v2304
  %v2306 = vpop.f32.mrf.mxu0
  %v2307 = vadd.f32 0.0, %v2306
  %v2308 = vpop.f32.mrf.mxu0
  %v2309 = vadd.f32 0.0, %v2308
  %v2310 = vpop.f32.mrf.mxu0
  %v2311 = vadd.f32 0.0, %v2310
  %2312 = vmatprep.mubr.bf16.mxu0 %v363
  %2313 = vmatmul.mubr.bf16.gmra.mxu0 %v362
  %v2314 = vpop.f32.mrf.mxu0
  %v2315 = vadd.f32 0.0, %v2314
  %v2316 = vpop.f32.mrf.mxu0
  %v2317 = vadd.f32 0.0, %v2316
  %v2318 = vpop.f32.mrf.mxu0
  %v2319 = vadd.f32 0.0, %v2318
  %v2320 = vpop.f32.mrf.mxu0
  %v2321 = vadd.f32 0.0, %v2320
  %2322 = vmatprep.mubr.bf16.mxu0 %v366
  %2323 = vmatmul.mubr.bf16.gmra.mxu0 %v365
  %v2324 = vpop.f32.mrf.mxu0
  %v2325 = vadd.f32 0.0, %v2324
  %v2326 = vpop.f32.mrf.mxu0
  %v2327 = vadd.f32 0.0, %v2326
  %v2328 = vpop.f32.mrf.mxu0
  %v2329 = vadd.f32 0.0, %v2328
  %v2330 = vpop.f32.mrf.mxu0
  %v2331 = vadd.f32 0.0, %v2330
  %2332 = vmatprep.mubr.bf16.mxu0 %v369
  %2333 = vmatmul.mubr.bf16.gmra.mxu0 %v368
  %v2334 = vpop.f32.mrf.mxu0
  %v2335 = vadd.f32 0.0, %v2334
  %v2336 = vpop.f32.mrf.mxu0
  %v2337 = vadd.f32 0.0, %v2336
  %v2338 = vpop.f32.mrf.mxu0
  %v2339 = vadd.f32 0.0, %v2338
  %v2340 = vpop.f32.mrf.mxu0
  %v2341 = vadd.f32 0.0, %v2340
  %2342 = vdwg.mxu0
  %2343 = vmatprep.subr.bf16.mxu0 0
  %2344 = vmatpush1.bf16.msra.mxu0 0
  %2345 = vmatprep.subr.bf16.mxu0 0
  %2346 = vmatpush1.bf16.msra.mxu0 0
  %2347 = vmatprep.subr.bf16.mxu0 0
  %2348 = vmatpush1.bf16.msra.mxu0 0
  %2349 = vmatprep.subr.bf16.mxu0 0
  %2350 = vmatpush1.bf16.msra.mxu0 0
  %2351 = vmatprep.subr.bf16.mxu0 0
  %2352 = vmatpush1.bf16.msra.mxu0 0
  %2353 = vmatprep.subr.bf16.mxu0 0
  %2354 = vmatpush1.bf16.msra.mxu0 0
  %2355 = vmatprep.subr.bf16.mxu0 %v1522
  %2356 = vmatpush1.bf16.msra.mxu0 %v1521
  %2357 = vmatprep.subr.bf16.mxu0 %v1506
  %2358 = vmatpush1.bf16.msra.mxu0 %v1505
  %2359 = vmatprep.subr.bf16.mxu0 0
  %2360 = vmatpush2.bf16.msra.mxu0 0
  %2361 = vmatprep.subr.bf16.mxu0 0
  %2362 = vmatpush2.bf16.msra.mxu0 0
  %2363 = vmatprep.subr.bf16.mxu0 0
  %2364 = vmatpush2.bf16.msra.mxu0 0
  %2365 = vmatprep.subr.bf16.mxu0 0
  %2366 = vmatpush2.bf16.msra.mxu0 0
  %2367 = vmatprep.subr.bf16.mxu0 0
  %2368 = vmatpush2.bf16.msra.mxu0 0
  %2369 = vmatprep.subr.bf16.mxu0 0
  %2370 = vmatpush2.bf16.msra.mxu0 0
  %2371 = vmatprep.subr.bf16.mxu0 0
  %2372 = vmatpush2.bf16.msra.mxu0 0
  %2373 = vmatprep.subr.bf16.mxu0 0
  %2374 = vmatpush2.bf16.msra.mxu0 0
  %2375 = vmatprep.mubr.bf16.mxu0 0
  %2376 = vmatmul.mubr.bf16.gmra.mxu0 %v1821
  %v2377 = vpop.f32.mrf.mxu0
  %v2378 = vadd.f32 %v2305, %v2377
  %v2379 = vpop.f32.mrf.mxu0
  %v2380 = vadd.f32 %v2307, %v2379
  %v2381 = vpop.f32.mrf.mxu0
  %v2382 = vadd.f32 %v2309, %v2381
  %v2383 = vpop.f32.mrf.mxu0
  %v2384 = vadd.f32 %v2311, %v2383
  %2385 = vmatprep.mubr.bf16.mxu0 0
  %2386 = vmatmul.mubr.bf16.gmra.mxu0 %v1824
  %v2387 = vpop.f32.mrf.mxu0
  %v2388 = vadd.f32 %v2315, %v2387
  %v2389 = vpop.f32.mrf.mxu0
  %v2390 = vadd.f32 %v2317, %v2389
  %v2391 = vpop.f32.mrf.mxu0
  %v2392 = vadd.f32 %v2319, %v2391
  %v2393 = vpop.f32.mrf.mxu0
  %v2394 = vadd.f32 %v2321, %v2393
  %2395 = vmatprep.mubr.bf16.mxu0 0
  %2396 = vmatmul.mubr.bf16.gmra.mxu0 %v1827
  %v2397 = vpop.f32.mrf.mxu0
  %v2398 = vadd.f32 %v2325, %v2397
  %v2399 = vpop.f32.mrf.mxu0
  %v2400 = vadd.f32 %v2327, %v2399
  %v2401 = vpop.f32.mrf.mxu0
  %v2402 = vadd.f32 %v2329, %v2401
  %v2403 = vpop.f32.mrf.mxu0
  %v2404 = vadd.f32 %v2331, %v2403
  %2405 = vmatprep.mubr.bf16.mxu0 0
  %2406 = vmatmul.mubr.bf16.gmra.mxu0 %v1830
  %v2407 = vpop.f32.mrf.mxu0
  %v2408 = vadd.f32 %v2335, %v2407
  %v2409 = vpop.f32.mrf.mxu0
  %v2410 = vadd.f32 %v2337, %v2409
  %v2411 = vpop.f32.mrf.mxu0
  %v2412 = vadd.f32 %v2339, %v2411
  %v2413 = vpop.f32.mrf.mxu0
  %v2414 = vadd.f32 %v2341, %v2413
  %2415 = vdwg.mxu0
  %2416 = vmatprep.subr.bf16.mxu0 %v1364
  %2417 = vmatpush1.bf16.msra.mxu0 %v1363
  %2418 = vmatprep.subr.bf16.mxu0 %v1348
  %2419 = vmatpush1.bf16.msra.mxu0 %v1347
  %2420 = vmatprep.subr.bf16.mxu0 %v1332
  %2421 = vmatpush1.bf16.msra.mxu0 %v1331
  %2422 = vmatprep.subr.bf16.mxu0 %v1316
  %2423 = vmatpush1.bf16.msra.mxu0 %v1315
  %2424 = vmatprep.subr.bf16.mxu0 %v1300
  %2425 = vmatpush1.bf16.msra.mxu0 %v1299
  %2426 = vmatprep.subr.bf16.mxu0 %v1284
  %2427 = vmatpush1.bf16.msra.mxu0 %v1283
  %2428 = vmatprep.subr.bf16.mxu0 %v1268
  %2429 = vmatpush1.bf16.msra.mxu0 %v1267
  %2430 = vmatprep.subr.bf16.mxu0 %v1252
  %2431 = vmatpush1.bf16.msra.mxu0 %v1251
  %2432 = vmatprep.subr.bf16.mxu0 %v1492
  %2433 = vmatpush2.bf16.msra.mxu0 %v1491
  %2434 = vmatprep.subr.bf16.mxu0 %v1476
  %2435 = vmatpush2.bf16.msra.mxu0 %v1475
  %2436 = vmatprep.subr.bf16.mxu0 %v1460
  %2437 = vmatpush2.bf16.msra.mxu0 %v1459
  %2438 = vmatprep.subr.bf16.mxu0 %v1444
  %2439 = vmatpush2.bf16.msra.mxu0 %v1443
  %2440 = vmatprep.subr.bf16.mxu0 %v1428
  %2441 = vmatpush2.bf16.msra.mxu0 %v1427
  %2442 = vmatprep.subr.bf16.mxu0 %v1412
  %2443 = vmatpush2.bf16.msra.mxu0 %v1411
  %2444 = vmatprep.subr.bf16.mxu0 %v1396
  %2445 = vmatpush2.bf16.msra.mxu0 %v1395
  %2446 = vmatprep.subr.bf16.mxu0 %v1380
  %2447 = vmatpush2.bf16.msra.mxu0 %v1379
  %2448 = vmatprep.mubr.bf16.mxu0 %v360
  %2449 = vmatmul.mubr.bf16.gmra.mxu0 %v359
  %v2450 = vpop.f32.mrf.mxu0
  %v2451 = vadd.f32 0.0, %v2450
  %v2452 = vpop.f32.mrf.mxu0
  %v2453 = vadd.f32 0.0, %v2452
  %v2454 = vpop.f32.mrf.mxu0
  %v2455 = vadd.f32 0.0, %v2454
  %v2456 = vpop.f32.mrf.mxu0
  %v2457 = vadd.f32 0.0, %v2456
  %2458 = vmatprep.mubr.bf16.mxu0 %v363
  %2459 = vmatmul.mubr.bf16.gmra.mxu0 %v362
  %v2460 = vpop.f32.mrf.mxu0
  %v2461 = vadd.f32 0.0, %v2460
  %v2462 = vpop.f32.mrf.mxu0
  %v2463 = vadd.f32 0.0, %v2462
  %v2464 = vpop.f32.mrf.mxu0
  %v2465 = vadd.f32 0.0, %v2464
  %v2466 = vpop.f32.mrf.mxu0
  %v2467 = vadd.f32 0.0, %v2466
  %2468 = vmatprep.mubr.bf16.mxu0 %v366
  %2469 = vmatmul.mubr.bf16.gmra.mxu0 %v365
  %v2470 = vpop.f32.mrf.mxu0
  %v2471 = vadd.f32 0.0, %v2470
  %v2472 = vpop.f32.mrf.mxu0
  %v2473 = vadd.f32 0.0, %v2472
  %v2474 = vpop.f32.mrf.mxu0
  %v2475 = vadd.f32 0.0, %v2474
  %v2476 = vpop.f32.mrf.mxu0
  %v2477 = vadd.f32 0.0, %v2476
  %2478 = vmatprep.mubr.bf16.mxu0 %v369
  %2479 = vmatmul.mubr.bf16.gmra.mxu0 %v368
  %v2480 = vpop.f32.mrf.mxu0
  %v2481 = vadd.f32 0.0, %v2480
  %v2482 = vpop.f32.mrf.mxu0
  %v2483 = vadd.f32 0.0, %v2482
  %v2484 = vpop.f32.mrf.mxu0
  %v2485 = vadd.f32 0.0, %v2484
  %v2486 = vpop.f32.mrf.mxu0
  %v2487 = vadd.f32 0.0, %v2486
  %2488 = vdwg.mxu0
  %2489 = vmatprep.subr.bf16.mxu0 0
  %2490 = vmatpush1.bf16.msra.mxu0 0
  %2491 = vmatprep.subr.bf16.mxu0 0
  %2492 = vmatpush1.bf16.msra.mxu0 0
  %2493 = vmatprep.subr.bf16.mxu0 0
  %2494 = vmatpush1.bf16.msra.mxu0 0
  %2495 = vmatprep.subr.bf16.mxu0 0
  %2496 = vmatpush1.bf16.msra.mxu0 0
  %2497 = vmatprep.subr.bf16.mxu0 0
  %2498 = vmatpush1.bf16.msra.mxu0 0
  %2499 = vmatprep.subr.bf16.mxu0 0
  %2500 = vmatpush1.bf16.msra.mxu0 0
  %2501 = vmatprep.subr.bf16.mxu0 %v1524
  %2502 = vmatpush1.bf16.msra.mxu0 %v1523
  %2503 = vmatprep.subr.bf16.mxu0 %v1508
  %2504 = vmatpush1.bf16.msra.mxu0 %v1507
  %2505 = vmatprep.subr.bf16.mxu0 0
  %2506 = vmatpush2.bf16.msra.mxu0 0
  %2507 = vmatprep.subr.bf16.mxu0 0
  %2508 = vmatpush2.bf16.msra.mxu0 0
  %2509 = vmatprep.subr.bf16.mxu0 0
  %2510 = vmatpush2.bf16.msra.mxu0 0
  %2511 = vmatprep.subr.bf16.mxu0 0
  %2512 = vmatpush2.bf16.msra.mxu0 0
  %2513 = vmatprep.subr.bf16.mxu0 0
  %2514 = vmatpush2.bf16.msra.mxu0 0
  %2515 = vmatprep.subr.bf16.mxu0 0
  %2516 = vmatpush2.bf16.msra.mxu0 0
  %2517 = vmatprep.subr.bf16.mxu0 0
  %2518 = vmatpush2.bf16.msra.mxu0 0
  %2519 = vmatprep.subr.bf16.mxu0 0
  %2520 = vmatpush2.bf16.msra.mxu0 0
  %2521 = vmatprep.mubr.bf16.mxu0 0
  %2522 = vmatmul.mubr.bf16.gmra.mxu0 %v1821
  %v2523 = vpop.f32.mrf.mxu0
  %v2524 = vadd.f32 %v2451, %v2523
  %v2525 = vpop.f32.mrf.mxu0
  %v2526 = vadd.f32 %v2453, %v2525
  %v2527 = vpop.f32.mrf.mxu0
  %v2528 = vadd.f32 %v2455, %v2527
  %v2529 = vpop.f32.mrf.mxu0
  %v2530 = vadd.f32 %v2457, %v2529
  %2531 = vmatprep.mubr.bf16.mxu0 0
  %2532 = vmatmul.mubr.bf16.gmra.mxu0 %v1824
  %v2533 = vpop.f32.mrf.mxu0
  %v2534 = vadd.f32 %v2461, %v2533
  %v2535 = vpop.f32.mrf.mxu0
  %v2536 = vadd.f32 %v2463, %v2535
  %v2537 = vpop.f32.mrf.mxu0
  %v2538 = vadd.f32 %v2465, %v2537
  %v2539 = vpop.f32.mrf.mxu0
  %v2540 = vadd.f32 %v2467, %v2539
  %2541 = vmatprep.mubr.bf16.mxu0 0
  %2542 = vmatmul.mubr.bf16.gmra.mxu0 %v1827
  %v2543 = vpop.f32.mrf.mxu0
  %v2544 = vadd.f32 %v2471, %v2543
  %v2545 = vpop.f32.mrf.mxu0
  %v2546 = vadd.f32 %v2473, %v2545
  %v2547 = vpop.f32.mrf.mxu0
  %v2548 = vadd.f32 %v2475, %v2547
  %v2549 = vpop.f32.mrf.mxu0
  %v2550 = vadd.f32 %v2477, %v2549
  %2551 = vmatprep.mubr.bf16.mxu0 0
  %2552 = vmatmul.mubr.bf16.gmra.mxu0 %v1830
  %v2553 = vpop.f32.mrf.mxu0
  %v2554 = vadd.f32 %v2481, %v2553
  %v2555 = vpop.f32.mrf.mxu0
  %v2556 = vadd.f32 %v2483, %v2555
  %v2557 = vpop.f32.mrf.mxu0
  %v2558 = vadd.f32 %v2485, %v2557
  %v2559 = vpop.f32.mrf.mxu0
  %v2560 = vadd.f32 %v2487, %v2559
  %2561 = vdwg.mxu0
  %2562 = vmatprep.subr.bf16.mxu0 %v1366
  %2563 = vmatpush1.bf16.msra.mxu0 %v1365
  %2564 = vmatprep.subr.bf16.mxu0 %v1350
  %2565 = vmatpush1.bf16.msra.mxu0 %v1349
  %2566 = vmatprep.subr.bf16.mxu0 %v1334
  %2567 = vmatpush1.bf16.msra.mxu0 %v1333
  %2568 = vmatprep.subr.bf16.mxu0 %v1318
  %2569 = vmatpush1.bf16.msra.mxu0 %v1317
  %2570 = vmatprep.subr.bf16.mxu0 %v1302
  %2571 = vmatpush1.bf16.msra.mxu0 %v1301
  %2572 = vmatprep.subr.bf16.mxu0 %v1286
  %2573 = vmatpush1.bf16.msra.mxu0 %v1285
  %2574 = vmatprep.subr.bf16.mxu0 %v1270
  %2575 = vmatpush1.bf16.msra.mxu0 %v1269
  %2576 = vmatprep.subr.bf16.mxu0 %v1254
  %2577 = vmatpush1.bf16.msra.mxu0 %v1253
  %2578 = vmatprep.subr.bf16.mxu0 %v1494
  %2579 = vmatpush2.bf16.msra.mxu0 %v1493
  %2580 = vmatprep.subr.bf16.mxu0 %v1478
  %2581 = vmatpush2.bf16.msra.mxu0 %v1477
  %2582 = vmatprep.subr.bf16.mxu0 %v1462
  %2583 = vmatpush2.bf16.msra.mxu0 %v1461
  %2584 = vmatprep.subr.bf16.mxu0 %v1446
  %2585 = vmatpush2.bf16.msra.mxu0 %v1445
  %2586 = vmatprep.subr.bf16.mxu0 %v1430
  %2587 = vmatpush2.bf16.msra.mxu0 %v1429
  %2588 = vmatprep.subr.bf16.mxu0 %v1414
  %2589 = vmatpush2.bf16.msra.mxu0 %v1413
  %2590 = vmatprep.subr.bf16.mxu0 %v1398
  %2591 = vmatpush2.bf16.msra.mxu0 %v1397
  %2592 = vmatprep.subr.bf16.mxu0 %v1382
  %2593 = vmatpush2.bf16.msra.mxu0 %v1381
  %2594 = vmatprep.mubr.bf16.mxu0 %v360
  %2595 = vmatmul.mubr.bf16.gmra.mxu0 %v359
  %v2596 = vpop.f32.mrf.mxu0
  %v2597 = vadd.f32 0.0, %v2596
  %v2598 = vpop.f32.mrf.mxu0
  %v2599 = vadd.f32 0.0, %v2598
  %v2600 = vpop.f32.mrf.mxu0
  %v2601 = vadd.f32 0.0, %v2600
  %v2602 = vpop.f32.mrf.mxu0
  %v2603 = vadd.f32 0.0, %v2602
  %2604 = vmatprep.mubr.bf16.mxu0 %v363
  %2605 = vmatmul.mubr.bf16.gmra.mxu0 %v362
  %v2606 = vpop.f32.mrf.mxu0
  %v2607 = vadd.f32 0.0, %v2606
  %v2608 = vpop.f32.mrf.mxu0
  %v2609 = vadd.f32 0.0, %v2608
  %v2610 = vpop.f32.mrf.mxu0
  %v2611 = vadd.f32 0.0, %v2610
  %v2612 = vpop.f32.mrf.mxu0
  %v2613 = vadd.f32 0.0, %v2612
  %2614 = vmatprep.mubr.bf16.mxu0 %v366
  %2615 = vmatmul.mubr.bf16.gmra.mxu0 %v365
  %v2616 = vpop.f32.mrf.mxu0
  %v2617 = vadd.f32 0.0, %v2616
  %v2618 = vpop.f32.mrf.mxu0
  %v2619 = vadd.f32 0.0, %v2618
  %v2620 = vpop.f32.mrf.mxu0
  %v2621 = vadd.f32 0.0, %v2620
  %v2622 = vpop.f32.mrf.mxu0
  %v2623 = vadd.f32 0.0, %v2622
  %2624 = vmatprep.mubr.bf16.mxu0 %v369
  %2625 = vmatmul.mubr.bf16.gmra.mxu0 %v368
  %v2626 = vpop.f32.mrf.mxu0
  %v2627 = vadd.f32 0.0, %v2626
  %v2628 = vpop.f32.mrf.mxu0
  %v2629 = vadd.f32 0.0, %v2628
  %v2630 = vpop.f32.mrf.mxu0
  %v2631 = vadd.f32 0.0, %v2630
  %v2632 = vpop.f32.mrf.mxu0
  %v2633 = vadd.f32 0.0, %v2632
  %2634 = vdwg.mxu0
  %2635 = vmatprep.subr.bf16.mxu0 0
  %2636 = vmatpush1.bf16.msra.mxu0 0
  %2637 = vmatprep.subr.bf16.mxu0 0
  %2638 = vmatpush1.bf16.msra.mxu0 0
  %2639 = vmatprep.subr.bf16.mxu0 0
  %2640 = vmatpush1.bf16.msra.mxu0 0
  %2641 = vmatprep.subr.bf16.mxu0 0
  %2642 = vmatpush1.bf16.msra.mxu0 0
  %2643 = vmatprep.subr.bf16.mxu0 0
  %2644 = vmatpush1.bf16.msra.mxu0 0
  %2645 = vmatprep.subr.bf16.mxu0 0
  %2646 = vmatpush1.bf16.msra.mxu0 0
  %2647 = vmatprep.subr.bf16.mxu0 %v1526
  %2648 = vmatpush1.bf16.msra.mxu0 %v1525
  %2649 = vmatprep.subr.bf16.mxu0 %v1510
  %2650 = vmatpush1.bf16.msra.mxu0 %v1509
  %2651 = vmatprep.subr.bf16.mxu0 0
  %2652 = vmatpush2.bf16.msra.mxu0 0
  %2653 = vmatprep.subr.bf16.mxu0 0
  %2654 = vmatpush2.bf16.msra.mxu0 0
  %2655 = vmatprep.subr.bf16.mxu0 0
  %2656 = vmatpush2.bf16.msra.mxu0 0
  %2657 = vmatprep.subr.bf16.mxu0 0
  %2658 = vmatpush2.bf16.msra.mxu0 0
  %2659 = vmatprep.subr.bf16.mxu0 0
  %2660 = vmatpush2.bf16.msra.mxu0 0
  %2661 = vmatprep.subr.bf16.mxu0 0
  %2662 = vmatpush2.bf16.msra.mxu0 0
  %2663 = vmatprep.subr.bf16.mxu0 0
  %2664 = vmatpush2.bf16.msra.mxu0 0
  %2665 = vmatprep.subr.bf16.mxu0 0
  %2666 = vmatpush2.bf16.msra.mxu0 0
  %2667 = vmatprep.mubr.bf16.mxu0 0
  %2668 = vmatmul.mubr.bf16.gmra.mxu0 %v1821
  %v2669 = vpop.f32.mrf.mxu0
  %v2670 = vadd.f32 %v2597, %v2669
  %v2671 = vpop.f32.mrf.mxu0
  %v2672 = vadd.f32 %v2599, %v2671
  %v2673 = vpop.f32.mrf.mxu0
  %v2674 = vadd.f32 %v2601, %v2673
  %v2675 = vpop.f32.mrf.mxu0
  %v2676 = vadd.f32 %v2603, %v2675
  %2677 = vmatprep.mubr.bf16.mxu0 0
  %2678 = vmatmul.mubr.bf16.gmra.mxu0 %v1824
  %v2679 = vpop.f32.mrf.mxu0
  %v2680 = vadd.f32 %v2607, %v2679
  %v2681 = vpop.f32.mrf.mxu0
  %v2682 = vadd.f32 %v2609, %v2681
  %v2683 = vpop.f32.mrf.mxu0
  %v2684 = vadd.f32 %v2611, %v2683
  %v2685 = vpop.f32.mrf.mxu0
  %v2686 = vadd.f32 %v2613, %v2685
  %2687 = vmatprep.mubr.bf16.mxu0 0
  %2688 = vmatmul.mubr.bf16.gmra.mxu0 %v1827
  %v2689 = vpop.f32.mrf.mxu0
  %v2690 = vadd.f32 %v2617, %v2689
  %v2691 = vpop.f32.mrf.mxu0
  %v2692 = vadd.f32 %v2619, %v2691
  %v2693 = vpop.f32.mrf.mxu0
  %v2694 = vadd.f32 %v2621, %v2693
  %v2695 = vpop.f32.mrf.mxu0
  %v2696 = vadd.f32 %v2623, %v2695
  %2697 = vmatprep.mubr.bf16.mxu0 0
  %2698 = vmatmul.mubr.bf16.gmra.mxu0 %v1830
  %v2699 = vpop.f32.mrf.mxu0
  %v2700 = vadd.f32 %v2627, %v2699
  %v2701 = vpop.f32.mrf.mxu0
  %v2702 = vadd.f32 %v2629, %v2701
  %v2703 = vpop.f32.mrf.mxu0
  %v2704 = vadd.f32 %v2631, %v2703
  %v2705 = vpop.f32.mrf.mxu0
  %v2706 = vadd.f32 %v2633, %v2705
  %2707 = vdwg.mxu0
  %2708 = vmatprep.subr.bf16.mxu0 %v1368
  %2709 = vmatpush1.bf16.msra.mxu0 %v1367
  %2710 = vmatprep.subr.bf16.mxu0 %v1352
  %2711 = vmatpush1.bf16.msra.mxu0 %v1351
  %2712 = vmatprep.subr.bf16.mxu0 %v1336
  %2713 = vmatpush1.bf16.msra.mxu0 %v1335
  %2714 = vmatprep.subr.bf16.mxu0 %v1320
  %2715 = vmatpush1.bf16.msra.mxu0 %v1319
  %2716 = vmatprep.subr.bf16.mxu0 %v1304
  %2717 = vmatpush1.bf16.msra.mxu0 %v1303
  %2718 = vmatprep.subr.bf16.mxu0 %v1288
  %2719 = vmatpush1.bf16.msra.mxu0 %v1287
  %2720 = vmatprep.subr.bf16.mxu0 %v1272
  %2721 = vmatpush1.bf16.msra.mxu0 %v1271
  %2722 = vmatprep.subr.bf16.mxu0 %v1256
  %2723 = vmatpush1.bf16.msra.mxu0 %v1255
  %2724 = vmatprep.subr.bf16.mxu0 %v1496
  %2725 = vmatpush2.bf16.msra.mxu0 %v1495
  %2726 = vmatprep.subr.bf16.mxu0 %v1480
  %2727 = vmatpush2.bf16.msra.mxu0 %v1479
  %2728 = vmatprep.subr.bf16.mxu0 %v1464
  %2729 = vmatpush2.bf16.msra.mxu0 %v1463
  %2730 = vmatprep.subr.bf16.mxu0 %v1448
  %2731 = vmatpush2.bf16.msra.mxu0 %v1447
  %2732 = vmatprep.subr.bf16.mxu0 %v1432
  %2733 = vmatpush2.bf16.msra.mxu0 %v1431
  %2734 = vmatprep.subr.bf16.mxu0 %v1416
  %2735 = vmatpush2.bf16.msra.mxu0 %v1415
  %2736 = vmatprep.subr.bf16.mxu0 %v1400
  %2737 = vmatpush2.bf16.msra.mxu0 %v1399
  %2738 = vmatprep.subr.bf16.mxu0 %v1384
  %2739 = vmatpush2.bf16.msra.mxu0 %v1383
  %2740 = vmatprep.mubr.bf16.mxu0 %v360
  %2741 = vmatmul.mubr.bf16.gmra.mxu0 %v359
  %v2742 = vpop.f32.mrf.mxu0
  %v2743 = vadd.f32 0.0, %v2742
  %v2744 = vpop.f32.mrf.mxu0
  %v2745 = vadd.f32 0.0, %v2744
  %v2746 = vpop.f32.mrf.mxu0
  %v2747 = vadd.f32 0.0, %v2746
  %v2748 = vpop.f32.mrf.mxu0
  %v2749 = vadd.f32 0.0, %v2748
  %2750 = vmatprep.mubr.bf16.mxu0 %v363
  %2751 = vmatmul.mubr.bf16.gmra.mxu0 %v362
  %v2752 = vpop.f32.mrf.mxu0
  %v2753 = vadd.f32 0.0, %v2752
  %v2754 = vpop.f32.mrf.mxu0
  %v2755 = vadd.f32 0.0, %v2754
  %v2756 = vpop.f32.mrf.mxu0
  %v2757 = vadd.f32 0.0, %v2756
  %v2758 = vpop.f32.mrf.mxu0
  %v2759 = vadd.f32 0.0, %v2758
  %2760 = vmatprep.mubr.bf16.mxu0 %v366
  %2761 = vmatmul.mubr.bf16.gmra.mxu0 %v365
  %v2762 = vpop.f32.mrf.mxu0
  %v2763 = vadd.f32 0.0, %v2762
  %v2764 = vpop.f32.mrf.mxu0
  %v2765 = vadd.f32 0.0, %v2764
  %v2766 = vpop.f32.mrf.mxu0
  %v2767 = vadd.f32 0.0, %v2766
  %v2768 = vpop.f32.mrf.mxu0
  %v2769 = vadd.f32 0.0, %v2768
  %2770 = vmatprep.mubr.bf16.mxu0 %v369
  %2771 = vmatmul.mubr.bf16.gmra.mxu0 %v368
  %v2772 = vpop.f32.mrf.mxu0
  %v2773 = vadd.f32 0.0, %v2772
  %v2774 = vpop.f32.mrf.mxu0
  %v2775 = vadd.f32 0.0, %v2774
  %v2776 = vpop.f32.mrf.mxu0
  %v2777 = vadd.f32 0.0, %v2776
  %v2778 = vpop.f32.mrf.mxu0
  %v2779 = vadd.f32 0.0, %v2778
  %2780 = vdwg.mxu0
  %2781 = vmatprep.subr.bf16.mxu0 0
  %2782 = vmatpush1.bf16.msra.mxu0 0
  %2783 = vmatprep.subr.bf16.mxu0 0
  %2784 = vmatpush1.bf16.msra.mxu0 0
  %2785 = vmatprep.subr.bf16.mxu0 0
  %2786 = vmatpush1.bf16.msra.mxu0 0
  %2787 = vmatprep.subr.bf16.mxu0 0
  %2788 = vmatpush1.bf16.msra.mxu0 0
  %2789 = vmatprep.subr.bf16.mxu0 0
  %2790 = vmatpush1.bf16.msra.mxu0 0
  %2791 = vmatprep.subr.bf16.mxu0 0
  %2792 = vmatpush1.bf16.msra.mxu0 0
  %2793 = vmatprep.subr.bf16.mxu0 %v1528
  %2794 = vmatpush1.bf16.msra.mxu0 %v1527
  %2795 = vmatprep.subr.bf16.mxu0 %v1512
  %2796 = vmatpush1.bf16.msra.mxu0 %v1511
  %2797 = vmatprep.subr.bf16.mxu0 0
  %2798 = vmatpush2.bf16.msra.mxu0 0
  %2799 = vmatprep.subr.bf16.mxu0 0
  %2800 = vmatpush2.bf16.msra.mxu0 0
  %2801 = vmatprep.subr.bf16.mxu0 0
  %2802 = vmatpush2.bf16.msra.mxu0 0
  %2803 = vmatprep.subr.bf16.mxu0 0
  %2804 = vmatpush2.bf16.msra.mxu0 0
  %2805 = vmatprep.subr.bf16.mxu0 0
  %2806 = vmatpush2.bf16.msra.mxu0 0
  %2807 = vmatprep.subr.bf16.mxu0 0
  %2808 = vmatpush2.bf16.msra.mxu0 0
  %2809 = vmatprep.subr.bf16.mxu0 0
  %2810 = vmatpush2.bf16.msra.mxu0 0
  %2811 = vmatprep.subr.bf16.mxu0 0
  %2812 = vmatpush2.bf16.msra.mxu0 0
  %2813 = vmatprep.mubr.bf16.mxu0 0
  %2814 = vmatmul.mubr.bf16.gmra.mxu0 %v1821
  %v2815 = vpop.f32.mrf.mxu0
  %v2816 = vadd.f32 %v2743, %v2815
  %v2817 = vpop.f32.mrf.mxu0
  %v2818 = vadd.f32 %v2745, %v2817
  %v2819 = vpop.f32.mrf.mxu0
  %v2820 = vadd.f32 %v2747, %v2819
  %v2821 = vpop.f32.mrf.mxu0
  %v2822 = vadd.f32 %v2749, %v2821
  %2823 = vmatprep.mubr.bf16.mxu0 0
  %2824 = vmatmul.mubr.bf16.gmra.mxu0 %v1824
  %v2825 = vpop.f32.mrf.mxu0
  %v2826 = vadd.f32 %v2753, %v2825
  %v2827 = vpop.f32.mrf.mxu0
  %v2828 = vadd.f32 %v2755, %v2827
  %v2829 = vpop.f32.mrf.mxu0
  %v2830 = vadd.f32 %v2757, %v2829
  %v2831 = vpop.f32.mrf.mxu0
  %v2832 = vadd.f32 %v2759, %v2831
  %2833 = vmatprep.mubr.bf16.mxu0 0
  %2834 = vmatmul.mubr.bf16.gmra.mxu0 %v1827
  %v2835 = vpop.f32.mrf.mxu0
  %v2836 = vadd.f32 %v2763, %v2835
  %v2837 = vpop.f32.mrf.mxu0
  %v2838 = vadd.f32 %v2765, %v2837
  %v2839 = vpop.f32.mrf.mxu0
  %v2840 = vadd.f32 %v2767, %v2839
  %v2841 = vpop.f32.mrf.mxu0
  %v2842 = vadd.f32 %v2769, %v2841
  %2843 = vmatprep.mubr.bf16.mxu0 0
  %2844 = vmatmul.mubr.bf16.gmra.mxu0 %v1830
  %v2845 = vpop.f32.mrf.mxu0
  %v2846 = vadd.f32 %v2773, %v2845
  %v2847 = vpop.f32.mrf.mxu0
  %v2848 = vadd.f32 %v2775, %v2847
  %v2849 = vpop.f32.mrf.mxu0
  %v2850 = vadd.f32 %v2777, %v2849
  %v2851 = vpop.f32.mrf.mxu0
  %v2852 = vadd.f32 %v2779, %v2851
  %2853 = vdwg.mxu0
  %2854 = vmatprep.subr.bf16.mxu0 %v1370
  %2855 = vmatpush1.bf16.msra.mxu0 %v1369
  %2856 = vmatprep.subr.bf16.mxu0 %v1354
  %2857 = vmatpush1.bf16.msra.mxu0 %v1353
  %2858 = vmatprep.subr.bf16.mxu0 %v1338
  %2859 = vmatpush1.bf16.msra.mxu0 %v1337
  %2860 = vmatprep.subr.bf16.mxu0 %v1322
  %2861 = vmatpush1.bf16.msra.mxu0 %v1321
  %2862 = vmatprep.subr.bf16.mxu0 %v1306
  %2863 = vmatpush1.bf16.msra.mxu0 %v1305
  %2864 = vmatprep.subr.bf16.mxu0 %v1290
  %2865 = vmatpush1.bf16.msra.mxu0 %v1289
  %2866 = vmatprep.subr.bf16.mxu0 %v1274
  %2867 = vmatpush1.bf16.msra.mxu0 %v1273
  %2868 = vmatprep.subr.bf16.mxu0 %v1258
  %2869 = vmatpush1.bf16.msra.mxu0 %v1257
  %2870 = vmatprep.subr.bf16.mxu0 %v1498
  %2871 = vmatpush2.bf16.msra.mxu0 %v1497
  %2872 = vmatprep.subr.bf16.mxu0 %v1482
  %2873 = vmatpush2.bf16.msra.mxu0 %v1481
  %2874 = vmatprep.subr.bf16.mxu0 %v1466
  %2875 = vmatpush2.bf16.msra.mxu0 %v1465
  %2876 = vmatprep.subr.bf16.mxu0 %v1450
  %2877 = vmatpush2.bf16.msra.mxu0 %v1449
  %2878 = vmatprep.subr.bf16.mxu0 %v1434
  %2879 = vmatpush2.bf16.msra.mxu0 %v1433
  %2880 = vmatprep.subr.bf16.mxu0 %v1418
  %2881 = vmatpush2.bf16.msra.mxu0 %v1417
  %2882 = vmatprep.subr.bf16.mxu0 %v1402
  %2883 = vmatpush2.bf16.msra.mxu0 %v1401
  %2884 = vmatprep.subr.bf16.mxu0 %v1386
  %2885 = vmatpush2.bf16.msra.mxu0 %v1385
  %2886 = vmatprep.mubr.bf16.mxu0 %v360
  %2887 = vmatmul.mubr.bf16.gmra.mxu0 %v359
  %v2888 = vpop.f32.mrf.mxu0
  %v2889 = vadd.f32 0.0, %v2888
  %v2890 = vpop.f32.mrf.mxu0
  %v2891 = vadd.f32 0.0, %v2890
  %v2892 = vpop.f32.mrf.mxu0
  %v2893 = vadd.f32 0.0, %v2892
  %v2894 = vpop.f32.mrf.mxu0
  %v2895 = vadd.f32 0.0, %v2894
  %2896 = vmatprep.mubr.bf16.mxu0 %v363
  %2897 = vmatmul.mubr.bf16.gmra.mxu0 %v362
  %v2898 = vpop.f32.mrf.mxu0
  %v2899 = vadd.f32 0.0, %v2898
  %v2900 = vpop.f32.mrf.mxu0
  %v2901 = vadd.f32 0.0, %v2900
  %v2902 = vpop.f32.mrf.mxu0
  %v2903 = vadd.f32 0.0, %v2902
  %v2904 = vpop.f32.mrf.mxu0
  %v2905 = vadd.f32 0.0, %v2904
  %2906 = vmatprep.mubr.bf16.mxu0 %v366
  %2907 = vmatmul.mubr.bf16.gmra.mxu0 %v365
  %v2908 = vpop.f32.mrf.mxu0
  %v2909 = vadd.f32 0.0, %v2908
  %v2910 = vpop.f32.mrf.mxu0
  %v2911 = vadd.f32 0.0, %v2910
  %v2912 = vpop.f32.mrf.mxu0
  %v2913 = vadd.f32 0.0, %v2912
  %v2914 = vpop.f32.mrf.mxu0
  %v2915 = vadd.f32 0.0, %v2914
  %2916 = vmatprep.mubr.bf16.mxu0 %v369
  %2917 = vmatmul.mubr.bf16.gmra.mxu0 %v368
  %v2918 = vpop.f32.mrf.mxu0
  %v2919 = vadd.f32 0.0, %v2918
  %v2920 = vpop.f32.mrf.mxu0
  %v2921 = vadd.f32 0.0, %v2920
  %v2922 = vpop.f32.mrf.mxu0
  %v2923 = vadd.f32 0.0, %v2922
  %v2924 = vpop.f32.mrf.mxu0
  %v2925 = vadd.f32 0.0, %v2924
  %2926 = vdwg.mxu0
  %2927 = vmatprep.subr.bf16.mxu0 0
  %2928 = vmatpush1.bf16.msra.mxu0 0
  %2929 = vmatprep.subr.bf16.mxu0 0
  %2930 = vmatpush1.bf16.msra.mxu0 0
  %2931 = vmatprep.subr.bf16.mxu0 0
  %2932 = vmatpush1.bf16.msra.mxu0 0
  %2933 = vmatprep.subr.bf16.mxu0 0
  %2934 = vmatpush1.bf16.msra.mxu0 0
  %2935 = vmatprep.subr.bf16.mxu0 0
  %2936 = vmatpush1.bf16.msra.mxu0 0
  %2937 = vmatprep.subr.bf16.mxu0 0
  %2938 = vmatpush1.bf16.msra.mxu0 0
  %2939 = vmatprep.subr.bf16.mxu0 %v1530
  %2940 = vmatpush1.bf16.msra.mxu0 %v1529
  %2941 = vmatprep.subr.bf16.mxu0 %v1514
  %2942 = vmatpush1.bf16.msra.mxu0 %v1513
  %2943 = vmatprep.subr.bf16.mxu0 0
  %2944 = vmatpush2.bf16.msra.mxu0 0
  %2945 = vmatprep.subr.bf16.mxu0 0
  %2946 = vmatpush2.bf16.msra.mxu0 0
  %2947 = vmatprep.subr.bf16.mxu0 0
  %2948 = vmatpush2.bf16.msra.mxu0 0
  %2949 = vmatprep.subr.bf16.mxu0 0
  %2950 = vmatpush2.bf16.msra.mxu0 0
  %2951 = vmatprep.subr.bf16.mxu0 0
  %2952 = vmatpush2.bf16.msra.mxu0 0
  %2953 = vmatprep.subr.bf16.mxu0 0
  %2954 = vmatpush2.bf16.msra.mxu0 0
  %2955 = vmatprep.subr.bf16.mxu0 0
  %2956 = vmatpush2.bf16.msra.mxu0 0
  %2957 = vmatprep.subr.bf16.mxu0 0
  %2958 = vmatpush2.bf16.msra.mxu0 0
  %2959 = vmatprep.mubr.bf16.mxu0 0
  %2960 = vmatmul.mubr.bf16.gmra.mxu0 %v1821
  %v2961 = vpop.f32.mrf.mxu0
  %v2962 = vadd.f32 %v2889, %v2961
  %v2963 = vpop.f32.mrf.mxu0
  %v2964 = vadd.f32 %v2891, %v2963
  %v2965 = vpop.f32.mrf.mxu0
  %v2966 = vadd.f32 %v2893, %v2965
  %v2967 = vpop.f32.mrf.mxu0
  %v2968 = vadd.f32 %v2895, %v2967
  %2969 = vmatprep.mubr.bf16.mxu0 0
  %2970 = vmatmul.mubr.bf16.gmra.mxu0 %v1824
  %v2971 = vpop.f32.mrf.mxu0
  %v2972 = vadd.f32 %v2899, %v2971
  %v2973 = vpop.f32.mrf.mxu0
  %v2974 = vadd.f32 %v2901, %v2973
  %v2975 = vpop.f32.mrf.mxu0
  %v2976 = vadd.f32 %v2903, %v2975
  %v2977 = vpop.f32.mrf.mxu0
  %v2978 = vadd.f32 %v2905, %v2977
  %2979 = vmatprep.mubr.bf16.mxu0 0
  %2980 = vmatmul.mubr.bf16.gmra.mxu0 %v1827
  %v2981 = vpop.f32.mrf.mxu0
  %v2982 = vadd.f32 %v2909, %v2981
  %v2983 = vpop.f32.mrf.mxu0
  %v2984 = vadd.f32 %v2911, %v2983
  %v2985 = vpop.f32.mrf.mxu0
  %v2986 = vadd.f32 %v2913, %v2985
  %v2987 = vpop.f32.mrf.mxu0
  %v2988 = vadd.f32 %v2915, %v2987
  %2989 = vmatprep.mubr.bf16.mxu0 0
  %2990 = vmatmul.mubr.bf16.gmra.mxu0 %v1830
  %v2991 = vpop.f32.mrf.mxu0
  %v2992 = vadd.f32 %v2919, %v2991
  %v2993 = vpop.f32.mrf.mxu0
  %v2994 = vadd.f32 %v2921, %v2993
  %v2995 = vpop.f32.mrf.mxu0
  %v2996 = vadd.f32 %v2923, %v2995
  %v2997 = vpop.f32.mrf.mxu0
  %v2998 = vadd.f32 %v2925, %v2997
  %2999 = vdwg.mxu0
  %v3000 = vld [vmem:[%s2] sm:$0xff]
  %v3001 = vld [vmem:[%s2 + $0x8] sm:$0xff]
  %v3002 = vld [vmem:[%s2 + $0x10] sm:$0xff]
  %v3003 = vld [vmem:[%s2 + $0x18] sm:$0xff]
  %v3004 = vld [vmem:[%s2 + $0x20] sm:$0xff]
  %v3005 = vld [vmem:[%s2 + $0x28] sm:$0xff]
  %v3006 = vld [vmem:[%s2 + $0x30] sm:$0xff]
  %v3007 = vld [vmem:[%s2 + $0x38] sm:$0xff]
  %3009 = vset.pattern.permute.xlu0 0
  %3010 = vperm.xlu0 %3009, %v3000
  %v3011 = vpop.permute.xlu0 %3010
  %3014 = vset.pattern.permute.xlu0 0
  %3015 = vperm.xlu0 %3014, %v3001
  %v3016 = vpop.permute.xlu0 %3015
  %3019 = vset.pattern.permute.xlu0 0
  %3020 = vperm.xlu0 %3019, %v3002
  %v3021 = vpop.permute.xlu0 %3020
  %3024 = vset.pattern.permute.xlu0 0
  %3025 = vperm.xlu0 %3024, %v3003
  %v3026 = vpop.permute.xlu0 %3025
  %3029 = vset.pattern.permute.xlu0 0
  %3030 = vperm.xlu0 %3029, %v3004
  %v3031 = vpop.permute.xlu0 %3030
  %3034 = vset.pattern.permute.xlu0 0
  %3035 = vperm.xlu0 %3034, %v3005
  %v3036 = vpop.permute.xlu0 %3035
  %3039 = vset.pattern.permute.xlu0 0
  %3040 = vperm.xlu0 %3039, %v3006
  %v3041 = vpop.permute.xlu0 %3040
  %3044 = vset.pattern.permute.xlu0 0
  %3045 = vperm.xlu0 %3044, %v3007
  %v3046 = vpop.permute.xlu0 %3045
  %v3048 = vmul.f32 %v1940, %v3011
  %v3049 = vmul.f32 %v1942, %v3011
  %v3050 = vmul.f32 %v2086, %v3011
  %v3051 = vmul.f32 %v2088, %v3011
  %v3052 = vmul.f32 %v2232, %v3011
  %v3053 = vmul.f32 %v2234, %v3011
  %v3054 = vmul.f32 %v2378, %v3011
  %v3055 = vmul.f32 %v2380, %v3011
  %v3056 = vmul.f32 %v2524, %v3011
  %v3057 = vmul.f32 %v2526, %v3011
  %v3058 = vmul.f32 %v2670, %v3011
  %v3059 = vmul.f32 %v2672, %v3011
  %v3060 = vmul.f32 %v2816, %v3011
  %v3061 = vmul.f32 %v2818, %v3011
  %v3062 = vmul.f32 %v2962, %v3011
  %v3063 = vmul.f32 %v2964, %v3011
  %v3064 = vmul.f32 %v1944, %v3016
  %v3065 = vmul.f32 %v1946, %v3016
  %v3066 = vmul.f32 %v2090, %v3016
  %v3067 = vmul.f32 %v2092, %v3016
  %v3068 = vmul.f32 %v2236, %v3016
  %v3069 = vmul.f32 %v2238, %v3016
  %v3070 = vmul.f32 %v2382, %v3016
  %v3071 = vmul.f32 %v2384, %v3016
  %v3072 = vmul.f32 %v2528, %v3016
  %v3073 = vmul.f32 %v2530, %v3016
  %v3074 = vmul.f32 %v2674, %v3016
  %v3075 = vmul.f32 %v2676, %v3016
  %v3076 = vmul.f32 %v2820, %v3016
  %v3077 = vmul.f32 %v2822, %v3016
  %v3078 = vmul.f32 %v2966, %v3016
  %v3079 = vmul.f32 %v2968, %v3016
  %v3080 = vmul.f32 %v1950, %v3021
  %v3081 = vmul.f32 %v1952, %v3021
  %v3082 = vmul.f32 %v2096, %v3021
  %v3083 = vmul.f32 %v2098, %v3021
  %v3084 = vmul.f32 %v2242, %v3021
  %v3085 = vmul.f32 %v2244, %v3021
  %v3086 = vmul.f32 %v2388, %v3021
  %v3087 = vmul.f32 %v2390, %v3021
  %v3088 = vmul.f32 %v2534, %v3021
  %v3089 = vmul.f32 %v2536, %v3021
  %v3090 = vmul.f32 %v2680, %v3021
  %v3091 = vmul.f32 %v2682, %v3021
  %v3092 = vmul.f32 %v2826, %v3021
  %v3093 = vmul.f32 %v2828, %v3021
  %v3094 = vmul.f32 %v2972, %v3021
  %v3095 = vmul.f32 %v2974, %v3021
  %v3096 = vmul.f32 %v1954, %v3026
  %v3097 = vmul.f32 %v1956, %v3026
  %v3098 = vmul.f32 %v2100, %v3026
  %v3099 = vmul.f32 %v2102, %v3026
  %v3100 = vmul.f32 %v2246, %v3026
  %v3101 = vmul.f32 %v2248, %v3026
  %v3102 = vmul.f32 %v2392, %v3026
  %v3103 = vmul.f32 %v2394, %v3026
  %v3104 = vmul.f32 %v2538, %v3026
  %v3105 = vmul.f32 %v2540, %v3026
  %v3106 = vmul.f32 %v2684, %v3026
  %v3107 = vmul.f32 %v2686, %v3026
  %v3108 = vmul.f32 %v2830, %v3026
  %v3109 = vmul.f32 %v2832, %v3026
  %v3110 = vmul.f32 %v2976, %v3026
  %v3111 = vmul.f32 %v2978, %v3026
  %v3112 = vmul.f32 %v1960, %v3031
  %v3113 = vmul.f32 %v1962, %v3031
  %v3114 = vmul.f32 %v2106, %v3031
  %v3115 = vmul.f32 %v2108, %v3031
  %v3116 = vmul.f32 %v2252, %v3031
  %v3117 = vmul.f32 %v2254, %v3031
  %v3118 = vmul.f32 %v2398, %v3031
  %v3119 = vmul.f32 %v2400, %v3031
  %v3120 = vmul.f32 %v2544, %v3031
  %v3121 = vmul.f32 %v2546, %v3031
  %v3122 = vmul.f32 %v2690, %v3031
  %v3123 = vmul.f32 %v2692, %v3031
  %v3124 = vmul.f32 %v2836, %v3031
  %v3125 = vmul.f32 %v2838, %v3031
  %v3126 = vmul.f32 %v2982, %v3031
  %v3127 = vmul.f32 %v2984, %v3031
  %v3128 = vmul.f32 %v1964, %v3036
  %v3129 = vmul.f32 %v1966, %v3036
  %v3130 = vmul.f32 %v2110, %v3036
  %v3131 = vmul.f32 %v2112, %v3036
  %v3132 = vmul.f32 %v2256, %v3036
  %v3133 = vmul.f32 %v2258, %v3036
  %v3134 = vmul.f32 %v2402, %v3036
  %v3135 = vmul.f32 %v2404, %v3036
  %v3136 = vmul.f32 %v2548, %v3036
  %v3137 = vmul.f32 %v2550, %v3036
  %v3138 = vmul.f32 %v2694, %v3036
  %v3139 = vmul.f32 %v2696, %v3036
  %v3140 = vmul.f32 %v2840, %v3036
  %v3141 = vmul.f32 %v2842, %v3036
  %v3142 = vmul.f32 %v2986, %v3036
  %v3143 = vmul.f32 %v2988, %v3036
  %v3144 = vmul.f32 %v1970, %v3041
  %v3145 = vmul.f32 %v1972, %v3041
  %v3146 = vmul.f32 %v2116, %v3041
  %v3147 = vmul.f32 %v2118, %v3041
  %v3148 = vmul.f32 %v2262, %v3041
  %v3149 = vmul.f32 %v2264, %v3041
  %v3150 = vmul.f32 %v2408, %v3041
  %v3151 = vmul.f32 %v2410, %v3041
  %v3152 = vmul.f32 %v2554, %v3041
  %v3153 = vmul.f32 %v2556, %v3041
  %v3154 = vmul.f32 %v2700, %v3041
  %v3155 = vmul.f32 %v2702, %v3041
  %v3156 = vmul.f32 %v2846, %v3041
  %v3157 = vmul.f32 %v2848, %v3041
  %v3158 = vmul.f32 %v2992, %v3041
  %v3159 = vmul.f32 %v2994, %v3041
  %v3160 = vmul.f32 %v1974, %v3046
  %v3161 = vmul.f32 %v1976, %v3046
  %v3162 = vmul.f32 %v2120, %v3046
  %v3163 = vmul.f32 %v2122, %v3046
  %v3164 = vmul.f32 %v2266, %v3046
  %v3165 = vmul.f32 %v2268, %v3046
  %v3166 = vmul.f32 %v2412, %v3046
  %v3167 = vmul.f32 %v2414, %v3046
  %v3168 = vmul.f32 %v2558, %v3046
  %v3169 = vmul.f32 %v2560, %v3046
  %v3170 = vmul.f32 %v2704, %v3046
  %v3171 = vmul.f32 %v2706, %v3046
  %v3172 = vmul.f32 %v2850, %v3046
  %v3173 = vmul.f32 %v2852, %v3046
  %v3174 = vmul.f32 %v2996, %v3046
  %v3175 = vmul.f32 %v2998, %v3046
  %s3176 = scalar_lea.vmem %s2, 64
  %v3177 = vld [vmem:[%s3176] sm:$0xff]
  %v3178 = vld [vmem:[%s3176 + $0x8] sm:$0xff]
  %v3179 = vld [vmem:[%s3176 + $0x10] sm:$0xff]
  %v3180 = vld [vmem:[%s3176 + $0x18] sm:$0xff]
  %v3181 = vld [vmem:[%s3176 + $0x20] sm:$0xff]
  %v3182 = vld [vmem:[%s3176 + $0x28] sm:$0xff]
  %v3183 = vld [vmem:[%s3176 + $0x30] sm:$0xff]
  %v3184 = vld [vmem:[%s3176 + $0x38] sm:$0xff]
  %3186 = vset.pattern.permute.xlu0 0
  %3187 = vperm.xlu0 %3186, %v3177
  %v3188 = vpop.permute.xlu0 %3187
  %3191 = vset.pattern.permute.xlu0 0
  %3192 = vperm.xlu0 %3191, %v3178
  %v3193 = vpop.permute.xlu0 %3192
  %3196 = vset.pattern.permute.xlu0 0
  %3197 = vperm.xlu0 %3196, %v3179
  %v3198 = vpop.permute.xlu0 %3197
  %3201 = vset.pattern.permute.xlu0 0
  %3202 = vperm.xlu0 %3201, %v3180
  %v3203 = vpop.permute.xlu0 %3202
  %3206 = vset.pattern.permute.xlu0 0
  %3207 = vperm.xlu0 %3206, %v3181
  %v3208 = vpop.permute.xlu0 %3207
  %3211 = vset.pattern.permute.xlu0 0
  %3212 = vperm.xlu0 %3211, %v3182
  %v3213 = vpop.permute.xlu0 %3212
  %3216 = vset.pattern.permute.xlu0 0
  %3217 = vperm.xlu0 %3216, %v3183
  %v3218 = vpop.permute.xlu0 %3217
  %3221 = vset.pattern.permute.xlu0 0
  %3222 = vperm.xlu0 %3221, %v3184
  %v3223 = vpop.permute.xlu0 %3222
  %v3225 = vadd.f32 %v3048, %v3188
  %v3226 = vadd.f32 %v3049, %v3188
  %v3227 = vadd.f32 %v3050, %v3188
  %v3228 = vadd.f32 %v3051, %v3188
  %v3229 = vadd.f32 %v3052, %v3188
  %v3230 = vadd.f32 %v3053, %v3188
  %v3231 = vadd.f32 %v3054, %v3188
  %v3232 = vadd.f32 %v3055, %v3188
  %v3233 = vadd.f32 %v3056, %v3188
  %v3234 = vadd.f32 %v3057, %v3188
  %v3235 = vadd.f32 %v3058, %v3188
  %v3236 = vadd.f32 %v3059, %v3188
  %v3237 = vadd.f32 %v3060, %v3188
  %v3238 = vadd.f32 %v3061, %v3188
  %v3239 = vadd.f32 %v3062, %v3188
  %v3240 = vadd.f32 %v3063, %v3188
  %v3241 = vadd.f32 %v3064, %v3193
  %v3242 = vadd.f32 %v3065, %v3193
  %v3243 = vadd.f32 %v3066, %v3193
  %v3244 = vadd.f32 %v3067, %v3193
  %v3245 = vadd.f32 %v3068, %v3193
  %v3246 = vadd.f32 %v3069, %v3193
  %v3247 = vadd.f32 %v3070, %v3193
  %v3248 = vadd.f32 %v3071, %v3193
  %v3249 = vadd.f32 %v3072, %v3193
  %v3250 = vadd.f32 %v3073, %v3193
  %v3251 = vadd.f32 %v3074, %v3193
  %v3252 = vadd.f32 %v3075, %v3193
  %v3253 = vadd.f32 %v3076, %v3193
  %v3254 = vadd.f32 %v3077, %v3193
  %v3255 = vadd.f32 %v3078, %v3193
  %v3256 = vadd.f32 %v3079, %v3193
  %v3257 = vadd.f32 %v3080, %v3198
  %v3258 = vadd.f32 %v3081, %v3198
  %v3259 = vadd.f32 %v3082, %v3198
  %v3260 = vadd.f32 %v3083, %v3198
  %v3261 = vadd.f32 %v3084, %v3198
  %v3262 = vadd.f32 %v3085, %v3198
  %v3263 = vadd.f32 %v3086, %v3198
  %v3264 = vadd.f32 %v3087, %v3198
  %v3265 = vadd.f32 %v3088, %v3198
  %v3266 = vadd.f32 %v3089, %v3198
  %v3267 = vadd.f32 %v3090, %v3198
  %v3268 = vadd.f32 %v3091, %v3198
  %v3269 = vadd.f32 %v3092, %v3198
  %v3270 = vadd.f32 %v3093, %v3198
  %v3271 = vadd.f32 %v3094, %v3198
  %v3272 = vadd.f32 %v3095, %v3198
  %v3273 = vadd.f32 %v3096, %v3203
  %v3274 = vadd.f32 %v3097, %v3203
  %v3275 = vadd.f32 %v3098, %v3203
  %v3276 = vadd.f32 %v3099, %v3203
  %v3277 = vadd.f32 %v3100, %v3203
  %v3278 = vadd.f32 %v3101, %v3203
  %v3279 = vadd.f32 %v3102, %v3203
  %v3280 = vadd.f32 %v3103, %v3203
  %v3281 = vadd.f32 %v3104, %v3203
  %v3282 = vadd.f32 %v3105, %v3203
  %v3283 = vadd.f32 %v3106, %v3203
  %v3284 = vadd.f32 %v3107, %v3203
  %v3285 = vadd.f32 %v3108, %v3203
  %v3286 = vadd.f32 %v3109, %v3203
  %v3287 = vadd.f32 %v3110, %v3203
  %v3288 = vadd.f32 %v3111, %v3203
  %v3289 = vadd.f32 %v3112, %v3208
  %v3290 = vadd.f32 %v3113, %v3208
  %v3291 = vadd.f32 %v3114, %v3208
  %v3292 = vadd.f32 %v3115, %v3208
  %v3293 = vadd.f32 %v3116, %v3208
  %v3294 = vadd.f32 %v3117, %v3208
  %v3295 = vadd.f32 %v3118, %v3208
  %v3296 = vadd.f32 %v3119, %v3208
  %v3297 = vadd.f32 %v3120, %v3208
  %v3298 = vadd.f32 %v3121, %v3208
  %v3299 = vadd.f32 %v3122, %v3208
  %v3300 = vadd.f32 %v3123, %v3208
  %v3301 = vadd.f32 %v3124, %v3208
  %v3302 = vadd.f32 %v3125, %v3208
  %v3303 = vadd.f32 %v3126, %v3208
  %v3304 = vadd.f32 %v3127, %v3208
  %v3305 = vadd.f32 %v3128, %v3213
  %v3306 = vadd.f32 %v3129, %v3213
  %v3307 = vadd.f32 %v3130, %v3213
  %v3308 = vadd.f32 %v3131, %v3213
  %v3309 = vadd.f32 %v3132, %v3213
  %v3310 = vadd.f32 %v3133, %v3213
  %v3311 = vadd.f32 %v3134, %v3213
  %v3312 = vadd.f32 %v3135, %v3213
  %v3313 = vadd.f32 %v3136, %v3213
  %v3314 = vadd.f32 %v3137, %v3213
  %v3315 = vadd.f32 %v3138, %v3213
  %v3316 = vadd.f32 %v3139, %v3213
  %v3317 = vadd.f32 %v3140, %v3213
  %v3318 = vadd.f32 %v3141, %v3213
  %v3319 = vadd.f32 %v3142, %v3213
  %v3320 = vadd.f32 %v3143, %v3213
  %v3321 = vadd.f32 %v3144, %v3218
  %v3322 = vadd.f32 %v3145, %v3218
  %v3323 = vadd.f32 %v3146, %v3218
  %v3324 = vadd.f32 %v3147, %v3218
  %v3325 = vadd.f32 %v3148, %v3218
  %v3326 = vadd.f32 %v3149, %v3218
  %v3327 = vadd.f32 %v3150, %v3218
  %v3328 = vadd.f32 %v3151, %v3218
  %v3329 = vadd.f32 %v3152, %v3218
  %v3330 = vadd.f32 %v3153, %v3218
  %v3331 = vadd.f32 %v3154, %v3218
  %v3332 = vadd.f32 %v3155, %v3218
  %v3333 = vadd.f32 %v3156, %v3218
  %v3334 = vadd.f32 %v3157, %v3218
  %v3335 = vadd.f32 %v3158, %v3218
  %v3336 = vadd.f32 %v3159, %v3218
  %v3337 = vadd.f32 %v3160, %v3223
  %v3338 = vadd.f32 %v3161, %v3223
  %v3339 = vadd.f32 %v3162, %v3223
  %v3340 = vadd.f32 %v3163, %v3223
  %v3341 = vadd.f32 %v3164, %v3223
  %v3342 = vadd.f32 %v3165, %v3223
  %v3343 = vadd.f32 %v3166, %v3223
  %v3344 = vadd.f32 %v3167, %v3223
  %v3345 = vadd.f32 %v3168, %v3223
  %v3346 = vadd.f32 %v3169, %v3223
  %v3347 = vadd.f32 %v3170, %v3223
  %v3348 = vadd.f32 %v3171, %v3223
  %v3349 = vadd.f32 %v3172, %v3223
  %v3350 = vadd.f32 %v3173, %v3223
  %v3351 = vadd.f32 %v3174, %v3223
  %v3352 = vadd.f32 %v3175, %v3223
  %v3353 = vmax.f32 %v3225, 0.0
  %v3354 = vmax.f32 %v3226, 0.0
  %v3355 = vmax.f32 %v3227, 0.0
  %v3356 = vmax.f32 %v3228, 0.0
  %v3357 = vmax.f32 %v3229, 0.0
  %v3358 = vmax.f32 %v3230, 0.0
  %v3359 = vmax.f32 %v3231, 0.0
  %v3360 = vmax.f32 %v3232, 0.0
  %v3361 = vmax.f32 %v3233, 0.0
  %v3362 = vmax.f32 %v3234, 0.0
  %v3363 = vmax.f32 %v3235, 0.0
  %v3364 = vmax.f32 %v3236, 0.0
  %v3365 = vmax.f32 %v3237, 0.0
  %v3366 = vmax.f32 %v3238, 0.0
  %v3367 = vmax.f32 %v3239, 0.0
  %v3368 = vmax.f32 %v3240, 0.0
  %v3369 = vmax.f32 %v3241, 0.0
  %v3370 = vmax.f32 %v3242, 0.0
  %v3371 = vmax.f32 %v3243, 0.0
  %v3372 = vmax.f32 %v3244, 0.0
  %v3373 = vmax.f32 %v3245, 0.0
  %v3374 = vmax.f32 %v3246, 0.0
  %v3375 = vmax.f32 %v3247, 0.0
  %v3376 = vmax.f32 %v3248, 0.0
  %v3377 = vmax.f32 %v3249, 0.0
  %v3378 = vmax.f32 %v3250, 0.0
  %v3379 = vmax.f32 %v3251, 0.0
  %v3380 = vmax.f32 %v3252, 0.0
  %v3381 = vmax.f32 %v3253, 0.0
  %v3382 = vmax.f32 %v3254, 0.0
  %v3383 = vmax.f32 %v3255, 0.0
  %v3384 = vmax.f32 %v3256, 0.0
  %v3385 = vmax.f32 %v3257, 0.0
  %v3386 = vmax.f32 %v3258, 0.0
  %v3387 = vmax.f32 %v3259, 0.0
  %v3388 = vmax.f32 %v3260, 0.0
  %v3389 = vmax.f32 %v3261, 0.0
  %v3390 = vmax.f32 %v3262, 0.0
  %v3391 = vmax.f32 %v3263, 0.0
  %v3392 = vmax.f32 %v3264, 0.0
  %v3393 = vmax.f32 %v3265, 0.0
  %v3394 = vmax.f32 %v3266, 0.0
  %v3395 = vmax.f32 %v3267, 0.0
  %v3396 = vmax.f32 %v3268, 0.0
  %v3397 = vmax.f32 %v3269, 0.0
  %v3398 = vmax.f32 %v3270, 0.0
  %v3399 = vmax.f32 %v3271, 0.0
  %v3400 = vmax.f32 %v3272, 0.0
  %v3401 = vmax.f32 %v3273, 0.0
  %v3402 = vmax.f32 %v3274, 0.0
  %v3403 = vmax.f32 %v3275, 0.0
  %v3404 = vmax.f32 %v3276, 0.0
  %v3405 = vmax.f32 %v3277, 0.0
  %v3406 = vmax.f32 %v3278, 0.0
  %v3407 = vmax.f32 %v3279, 0.0
  %v3408 = vmax.f32 %v3280, 0.0
  %v3409 = vmax.f32 %v3281, 0.0
  %v3410 = vmax.f32 %v3282, 0.0
  %v3411 = vmax.f32 %v3283, 0.0
  %v3412 = vmax.f32 %v3284, 0.0
  %v3413 = vmax.f32 %v3285, 0.0
  %v3414 = vmax.f32 %v3286, 0.0
  %v3415 = vmax.f32 %v3287, 0.0
  %v3416 = vmax.f32 %v3288, 0.0
  %v3417 = vmax.f32 %v3289, 0.0
  %v3418 = vmax.f32 %v3290, 0.0
  %v3419 = vmax.f32 %v3291, 0.0
  %v3420 = vmax.f32 %v3292, 0.0
  %v3421 = vmax.f32 %v3293, 0.0
  %v3422 = vmax.f32 %v3294, 0.0
  %v3423 = vmax.f32 %v3295, 0.0
  %v3424 = vmax.f32 %v3296, 0.0
  %v3425 = vmax.f32 %v3297, 0.0
  %v3426 = vmax.f32 %v3298, 0.0
  %v3427 = vmax.f32 %v3299, 0.0
  %v3428 = vmax.f32 %v3300, 0.0
  %v3429 = vmax.f32 %v3301, 0.0
  %v3430 = vmax.f32 %v3302, 0.0
  %v3431 = vmax.f32 %v3303, 0.0
  %v3432 = vmax.f32 %v3304, 0.0
  %v3433 = vmax.f32 %v3305, 0.0
  %v3434 = vmax.f32 %v3306, 0.0
  %v3435 = vmax.f32 %v3307, 0.0
  %v3436 = vmax.f32 %v3308, 0.0
  %v3437 = vmax.f32 %v3309, 0.0
  %v3438 = vmax.f32 %v3310, 0.0
  %v3439 = vmax.f32 %v3311, 0.0
  %v3440 = vmax.f32 %v3312, 0.0
  %v3441 = vmax.f32 %v3313, 0.0
  %v3442 = vmax.f32 %v3314, 0.0
  %v3443 = vmax.f32 %v3315, 0.0
  %v3444 = vmax.f32 %v3316, 0.0
  %v3445 = vmax.f32 %v3317, 0.0
  %v3446 = vmax.f32 %v3318, 0.0
  %v3447 = vmax.f32 %v3319, 0.0
  %v3448 = vmax.f32 %v3320, 0.0
  %v3449 = vmax.f32 %v3321, 0.0
  %v3450 = vmax.f32 %v3322, 0.0
  %v3451 = vmax.f32 %v3323, 0.0
  %v3452 = vmax.f32 %v3324, 0.0
  %v3453 = vmax.f32 %v3325, 0.0
  %v3454 = vmax.f32 %v3326, 0.0
  %v3455 = vmax.f32 %v3327, 0.0
  %v3456 = vmax.f32 %v3328, 0.0
  %v3457 = vmax.f32 %v3329, 0.0
  %v3458 = vmax.f32 %v3330, 0.0
  %v3459 = vmax.f32 %v3331, 0.0
  %v3460 = vmax.f32 %v3332, 0.0
  %v3461 = vmax.f32 %v3333, 0.0
  %v3462 = vmax.f32 %v3334, 0.0
  %v3463 = vmax.f32 %v3335, 0.0
  %v3464 = vmax.f32 %v3336, 0.0
  %v3465 = vmax.f32 %v3337, 0.0
  %v3466 = vmax.f32 %v3338, 0.0
  %v3467 = vmax.f32 %v3339, 0.0
  %v3468 = vmax.f32 %v3340, 0.0
  %v3469 = vmax.f32 %v3341, 0.0
  %v3470 = vmax.f32 %v3342, 0.0
  %v3471 = vmax.f32 %v3343, 0.0
  %v3472 = vmax.f32 %v3344, 0.0
  %v3473 = vmax.f32 %v3345, 0.0
  %v3474 = vmax.f32 %v3346, 0.0
  %v3475 = vmax.f32 %v3347, 0.0
  %v3476 = vmax.f32 %v3348, 0.0
  %v3477 = vmax.f32 %v3349, 0.0
  %v3478 = vmax.f32 %v3350, 0.0
  %v3479 = vmax.f32 %v3351, 0.0
  %v3480 = vmax.f32 %v3352, 0.0
  %v3481 = vpack.c.bf16 %v3369, %v3353
  %v3482 = vpack.c.bf16 %v3370, %v3354
  %v3483 = vpack.c.bf16 %v3371, %v3355
  %v3484 = vpack.c.bf16 %v3372, %v3356
  %v3485 = vpack.c.bf16 %v3373, %v3357
  %v3486 = vpack.c.bf16 %v3374, %v3358
  %v3487 = vpack.c.bf16 %v3375, %v3359
  %v3488 = vpack.c.bf16 %v3376, %v3360
  %v3489 = vpack.c.bf16 %v3377, %v3361
  %v3490 = vpack.c.bf16 %v3378, %v3362
  %v3491 = vpack.c.bf16 %v3379, %v3363
  %v3492 = vpack.c.bf16 %v3380, %v3364
  %v3493 = vpack.c.bf16 %v3381, %v3365
  %v3494 = vpack.c.bf16 %v3382, %v3366
  %v3495 = vpack.c.bf16 %v3383, %v3367
  %v3496 = vpack.c.bf16 %v3384, %v3368
  %v3497 = vpack.c.bf16 %v3401, %v3385
  %v3498 = vpack.c.bf16 %v3402, %v3386
  %v3499 = vpack.c.bf16 %v3403, %v3387
  %v3500 = vpack.c.bf16 %v3404, %v3388
  %v3501 = vpack.c.bf16 %v3405, %v3389
  %v3502 = vpack.c.bf16 %v3406, %v3390
  %v3503 = vpack.c.bf16 %v3407, %v3391
  %v3504 = vpack.c.bf16 %v3408, %v3392
  %v3505 = vpack.c.bf16 %v3409, %v3393
  %v3506 = vpack.c.bf16 %v3410, %v3394
  %v3507 = vpack.c.bf16 %v3411, %v3395
  %v3508 = vpack.c.bf16 %v3412, %v3396
  %v3509 = vpack.c.bf16 %v3413, %v3397
  %v3510 = vpack.c.bf16 %v3414, %v3398
  %v3511 = vpack.c.bf16 %v3415, %v3399
  %v3512 = vpack.c.bf16 %v3416, %v3400
  %v3513 = vpack.c.bf16 %v3433, %v3417
  %v3514 = vpack.c.bf16 %v3434, %v3418
  %v3515 = vpack.c.bf16 %v3435, %v3419
  %v3516 = vpack.c.bf16 %v3436, %v3420
  %v3517 = vpack.c.bf16 %v3437, %v3421
  %v3518 = vpack.c.bf16 %v3438, %v3422
  %v3519 = vpack.c.bf16 %v3439, %v3423
  %v3520 = vpack.c.bf16 %v3440, %v3424
  %v3521 = vpack.c.bf16 %v3441, %v3425
  %v3522 = vpack.c.bf16 %v3442, %v3426
  %v3523 = vpack.c.bf16 %v3443, %v3427
  %v3524 = vpack.c.bf16 %v3444, %v3428
  %v3525 = vpack.c.bf16 %v3445, %v3429
  %v3526 = vpack.c.bf16 %v3446, %v3430
  %v3527 = vpack.c.bf16 %v3447, %v3431
  %v3528 = vpack.c.bf16 %v3448, %v3432
  %v3529 = vpack.c.bf16 %v3465, %v3449
  %v3530 = vpack.c.bf16 %v3466, %v3450
  %v3531 = vpack.c.bf16 %v3467, %v3451
  %v3532 = vpack.c.bf16 %v3468, %v3452
  %v3533 = vpack.c.bf16 %v3469, %v3453
  %v3534 = vpack.c.bf16 %v3470, %v3454
  %v3535 = vpack.c.bf16 %v3471, %v3455
  %v3536 = vpack.c.bf16 %v3472, %v3456
  %v3537 = vpack.c.bf16 %v3473, %v3457
  %v3538 = vpack.c.bf16 %v3474, %v3458
  %v3539 = vpack.c.bf16 %v3475, %v3459
  %v3540 = vpack.c.bf16 %v3476, %v3460
  %v3541 = vpack.c.bf16 %v3477, %v3461
  %v3542 = vpack.c.bf16 %v3478, %v3462
  %v3543 = vpack.c.bf16 %v3479, %v3463
  %v3544 = vpack.c.bf16 %v3480, %v3464
  %v3609 = vunpack.c.l.b16 %v3481
  %v3610 = vunpack.c.l.b16 %v3482
  %v3611 = vunpack.c.l.b16 %v3483
  %v3612 = vunpack.c.l.b16 %v3484
  %v3613 = vunpack.c.l.b16 %v3485
  %v3614 = vunpack.c.l.b16 %v3486
  %v3615 = vunpack.c.l.b16 %v3487
  %v3616 = vunpack.c.l.b16 %v3488
  %v3617 = vunpack.c.l.b16 %v3489
  %v3618 = vunpack.c.l.b16 %v3490
  %v3619 = vunpack.c.l.b16 %v3491
  %v3620 = vunpack.c.l.b16 %v3492
  %v3621 = vunpack.c.l.b16 %v3493
  %v3622 = vunpack.c.l.b16 %v3494
  %v3623 = vunpack.c.l.b16 %v3495
  %v3624 = vunpack.c.l.b16 %v3496
  %v3625 = vunpack.c.h.b16 %v3481
  %v3626 = vunpack.c.h.b16 %v3482
  %v3627 = vunpack.c.h.b16 %v3483
  %v3628 = vunpack.c.h.b16 %v3484
  %v3629 = vunpack.c.h.b16 %v3485
  %v3630 = vunpack.c.h.b16 %v3486
  %v3631 = vunpack.c.h.b16 %v3487
  %v3632 = vunpack.c.h.b16 %v3488
  %v3633 = vunpack.c.h.b16 %v3489
  %v3634 = vunpack.c.h.b16 %v3490
  %v3635 = vunpack.c.h.b16 %v3491
  %v3636 = vunpack.c.h.b16 %v3492
  %v3637 = vunpack.c.h.b16 %v3493
  %v3638 = vunpack.c.h.b16 %v3494
  %v3639 = vunpack.c.h.b16 %v3495
  %v3640 = vunpack.c.h.b16 %v3496
  %v3641 = vunpack.c.l.b16 %v3497
  %v3642 = vunpack.c.l.b16 %v3498
  %v3643 = vunpack.c.l.b16 %v3499
  %v3644 = vunpack.c.l.b16 %v3500
  %v3645 = vunpack.c.l.b16 %v3501
  %v3646 = vunpack.c.l.b16 %v3502
  %v3647 = vunpack.c.l.b16 %v3503
  %v3648 = vunpack.c.l.b16 %v3504
  %v3649 = vunpack.c.l.b16 %v3505
  %v3650 = vunpack.c.l.b16 %v3506
  %v3651 = vunpack.c.l.b16 %v3507
  %v3652 = vunpack.c.l.b16 %v3508
  %v3653 = vunpack.c.l.b16 %v3509
  %v3654 = vunpack.c.l.b16 %v3510
  %v3655 = vunpack.c.l.b16 %v3511
  %v3656 = vunpack.c.l.b16 %v3512
  %v3657 = vunpack.c.h.b16 %v3497
  %v3658 = vunpack.c.h.b16 %v3498
  %v3659 = vunpack.c.h.b16 %v3499
  %v3660 = vunpack.c.h.b16 %v3500
  %v3661 = vunpack.c.h.b16 %v3501
  %v3662 = vunpack.c.h.b16 %v3502
  %v3663 = vunpack.c.h.b16 %v3503
  %v3664 = vunpack.c.h.b16 %v3504
  %v3665 = vunpack.c.h.b16 %v3505
  %v3666 = vunpack.c.h.b16 %v3506
  %v3667 = vunpack.c.h.b16 %v3507
  %v3668 = vunpack.c.h.b16 %v3508
  %v3669 = vunpack.c.h.b16 %v3509
  %v3670 = vunpack.c.h.b16 %v3510
  %v3671 = vunpack.c.h.b16 %v3511
  %v3672 = vunpack.c.h.b16 %v3512
  %v3673 = vunpack.c.l.b16 %v3513
  %v3674 = vunpack.c.l.b16 %v3514
  %v3675 = vunpack.c.l.b16 %v3515
  %v3676 = vunpack.c.l.b16 %v3516
  %v3677 = vunpack.c.l.b16 %v3517
  %v3678 = vunpack.c.l.b16 %v3518
  %v3679 = vunpack.c.l.b16 %v3519
  %v3680 = vunpack.c.l.b16 %v3520
  %v3681 = vunpack.c.l.b16 %v3521
  %v3682 = vunpack.c.l.b16 %v3522
  %v3683 = vunpack.c.l.b16 %v3523
  %v3684 = vunpack.c.l.b16 %v3524
  %v3685 = vunpack.c.l.b16 %v3525
  %v3686 = vunpack.c.l.b16 %v3526
  %v3687 = vunpack.c.l.b16 %v3527
  %v3688 = vunpack.c.l.b16 %v3528
  %v3689 = vunpack.c.h.b16 %v3513
  %v3690 = vunpack.c.h.b16 %v3514
  %v3691 = vunpack.c.h.b16 %v3515
  %v3692 = vunpack.c.h.b16 %v3516
  %v3693 = vunpack.c.h.b16 %v3517
  %v3694 = vunpack.c.h.b16 %v3518
  %v3695 = vunpack.c.h.b16 %v3519
  %v3696 = vunpack.c.h.b16 %v3520
  %v3697 = vunpack.c.h.b16 %v3521
  %v3698 = vunpack.c.h.b16 %v3522
  %v3699 = vunpack.c.h.b16 %v3523
  %v3700 = vunpack.c.h.b16 %v3524
  %v3701 = vunpack.c.h.b16 %v3525
  %v3702 = vunpack.c.h.b16 %v3526
  %v3703 = vunpack.c.h.b16 %v3527
  %v3704 = vunpack.c.h.b16 %v3528
  %v3705 = vunpack.c.l.b16 %v3529
  %v3706 = vunpack.c.l.b16 %v3530
  %v3707 = vunpack.c.l.b16 %v3531
  %v3708 = vunpack.c.l.b16 %v3532
  %v3709 = vunpack.c.l.b16 %v3533
  %v3710 = vunpack.c.l.b16 %v3534
  %v3711 = vunpack.c.l.b16 %v3535
  %v3712 = vunpack.c.l.b16 %v3536
  %v3713 = vunpack.c.l.b16 %v3537
  %v3714 = vunpack.c.l.b16 %v3538
  %v3715 = vunpack.c.l.b16 %v3539
  %v3716 = vunpack.c.l.b16 %v3540
  %v3717 = vunpack.c.l.b16 %v3541
  %v3718 = vunpack.c.l.b16 %v3542
  %v3719 = vunpack.c.l.b16 %v3543
  %v3720 = vunpack.c.l.b16 %v3544
  %v3721 = vunpack.c.h.b16 %v3529
  %v3722 = vunpack.c.h.b16 %v3530
  %v3723 = vunpack.c.h.b16 %v3531
  %v3724 = vunpack.c.h.b16 %v3532
  %v3725 = vunpack.c.h.b16 %v3533
  %v3726 = vunpack.c.h.b16 %v3534
  %v3727 = vunpack.c.h.b16 %v3535
  %v3728 = vunpack.c.h.b16 %v3536
  %v3729 = vunpack.c.h.b16 %v3537
  %v3730 = vunpack.c.h.b16 %v3538
  %v3731 = vunpack.c.h.b16 %v3539
  %v3732 = vunpack.c.h.b16 %v3540
  %v3733 = vunpack.c.h.b16 %v3541
  %v3734 = vunpack.c.h.b16 %v3542
  %v3735 = vunpack.c.h.b16 %v3543
  %v3736 = vunpack.c.h.b16 %v3544
  %v3737 = vpack.c.b16 %v3610, %v3609
  %v3738 = vpack.c.b16 %v3612, %v3611
  %v3739 = vpack.c.b16 %v3614, %v3613
  %v3740 = vpack.c.b16 %v3616, %v3615
  %v3741 = vpack.c.b16 %v3618, %v3617
  %v3742 = vpack.c.b16 %v3620, %v3619
  %v3743 = vpack.c.b16 %v3622, %v3621
  %v3744 = vpack.c.b16 %v3624, %v3623
  %v3745 = vpack.c.b16 %v3626, %v3625
  %v3746 = vpack.c.b16 %v3628, %v3627
  %v3747 = vpack.c.b16 %v3630, %v3629
  %v3748 = vpack.c.b16 %v3632, %v3631
  %v3749 = vpack.c.b16 %v3634, %v3633
  %v3750 = vpack.c.b16 %v3636, %v3635
  %v3751 = vpack.c.b16 %v3638, %v3637
  %v3752 = vpack.c.b16 %v3640, %v3639
  %v3753 = vpack.c.b16 %v3642, %v3641
  %v3754 = vpack.c.b16 %v3644, %v3643
  %v3755 = vpack.c.b16 %v3646, %v3645
  %v3756 = vpack.c.b16 %v3648, %v3647
  %v3757 = vpack.c.b16 %v3650, %v3649
  %v3758 = vpack.c.b16 %v3652, %v3651
  %v3759 = vpack.c.b16 %v3654, %v3653
  %v3760 = vpack.c.b16 %v3656, %v3655
  %v3761 = vpack.c.b16 %v3658, %v3657
  %v3762 = vpack.c.b16 %v3660, %v3659
  %v3763 = vpack.c.b16 %v3662, %v3661
  %v3764 = vpack.c.b16 %v3664, %v3663
  %v3765 = vpack.c.b16 %v3666, %v3665
  %v3766 = vpack.c.b16 %v3668, %v3667
  %v3767 = vpack.c.b16 %v3670, %v3669
  %v3768 = vpack.c.b16 %v3672, %v3671
  %v3769 = vpack.c.b16 %v3674, %v3673
  %v3770 = vpack.c.b16 %v3676, %v3675
  %v3771 = vpack.c.b16 %v3678, %v3677
  %v3772 = vpack.c.b16 %v3680, %v3679
  %v3773 = vpack.c.b16 %v3682, %v3681
  %v3774 = vpack.c.b16 %v3684, %v3683
  %v3775 = vpack.c.b16 %v3686, %v3685
  %v3776 = vpack.c.b16 %v3688, %v3687
  %v3777 = vpack.c.b16 %v3690, %v3689
  %v3778 = vpack.c.b16 %v3692, %v3691
  %v3779 = vpack.c.b16 %v3694, %v3693
  %v3780 = vpack.c.b16 %v3696, %v3695
  %v3781 = vpack.c.b16 %v3698, %v3697
  %v3782 = vpack.c.b16 %v3700, %v3699
  %v3783 = vpack.c.b16 %v3702, %v3701
  %v3784 = vpack.c.b16 %v3704, %v3703
  %v3785 = vpack.c.b16 %v3706, %v3705
  %v3786 = vpack.c.b16 %v3708, %v3707
  %v3787 = vpack.c.b16 %v3710, %v3709
  %v3788 = vpack.c.b16 %v3712, %v3711
  %v3789 = vpack.c.b16 %v3714, %v3713
  %v3790 = vpack.c.b16 %v3716, %v3715
  %v3791 = vpack.c.b16 %v3718, %v3717
  %v3792 = vpack.c.b16 %v3720, %v3719
  %v3793 = vpack.c.b16 %v3722, %v3721
  %v3794 = vpack.c.b16 %v3724, %v3723
  %v3795 = vpack.c.b16 %v3726, %v3725
  %v3796 = vpack.c.b16 %v3728, %v3727
  %v3797 = vpack.c.b16 %v3730, %v3729
  %v3798 = vpack.c.b16 %v3732, %v3731
  %v3799 = vpack.c.b16 %v3734, %v3733
  %v3800 = vpack.c.b16 %v3736, %v3735
  %3865 = vst [vmem:[%s3] sm:$0xff] %v3737
  %3866 = vst [vmem:[%s3 + $0x8] sm:$0xff] %v3738
  %3867 = vst [vmem:[%s3 + $0x10] sm:$0xff] %v3739
  %3868 = vst [vmem:[%s3 + $0x18] sm:$0xff] %v3740
  %3869 = vst [vmem:[%s3 + $0x20] sm:$0xff] %v3741
  %3870 = vst [vmem:[%s3 + $0x28] sm:$0xff] %v3742
  %3871 = vst [vmem:[%s3 + $0x30] sm:$0xff] %v3743
  %3872 = vst [vmem:[%s3 + $0x38] sm:$0xff] %v3744
  %3873 = vst [vmem:[%s3 + $0x40] sm:$0xff] %v3745
  %3874 = vst [vmem:[%s3 + $0x48] sm:$0xff] %v3746
  %3875 = vst [vmem:[%s3 + $0x50] sm:$0xff] %v3747
  %3876 = vst [vmem:[%s3 + $0x58] sm:$0xff] %v3748
  %3877 = vst [vmem:[%s3 + $0x60] sm:$0xff] %v3749
  %3878 = vst [vmem:[%s3 + $0x68] sm:$0xff] %v3750
  %3879 = vst [vmem:[%s3 + $0x70] sm:$0xff] %v3751
  %3880 = vst [vmem:[%s3 + $0x78] sm:$0xff] %v3752
  %3881 = vst [vmem:[%s3 + $0x80] sm:$0xff] %v3753
  %3882 = vst [vmem:[%s3 + $0x88] sm:$0xff] %v3754
  %3883 = vst [vmem:[%s3 + $0x90] sm:$0xff] %v3755
  %3884 = vst [vmem:[%s3 + $0x98] sm:$0xff] %v3756
  %3885 = vst [vmem:[%s3 + $0xa0] sm:$0xff] %v3757
  %3886 = vst [vmem:[%s3 + $0xa8] sm:$0xff] %v3758
  %3887 = vst [vmem:[%s3 + $0xb0] sm:$0xff] %v3759
  %3888 = vst [vmem:[%s3 + $0xb8] sm:$0xff] %v3760
  %3889 = vst [vmem:[%s3 + $0xc0] sm:$0xff] %v3761
  %3890 = vst [vmem:[%s3 + $0xc8] sm:$0xff] %v3762
  %3891 = vst [vmem:[%s3 + $0xd0] sm:$0xff] %v3763
  %3892 = vst [vmem:[%s3 + $0xd8] sm:$0xff] %v3764
  %3893 = vst [vmem:[%s3 + $0xe0] sm:$0xff] %v3765
  %3894 = vst [vmem:[%s3 + $0xe8] sm:$0xff] %v3766
  %3895 = vst [vmem:[%s3 + $0xf0] sm:$0xff] %v3767
  %3896 = vst [vmem:[%s3 + $0xf8] sm:$0xff] %v3768
  %3897 = vst [vmem:[%s3 + $0x100] sm:$0xff] %v3769
  %3898 = vst [vmem:[%s3 + $0x108] sm:$0xff] %v3770
  %3899 = vst [vmem:[%s3 + $0x110] sm:$0xff] %v3771
  %3900 = vst [vmem:[%s3 + $0x118] sm:$0xff] %v3772
  %3901 = vst [vmem:[%s3 + $0x120] sm:$0xff] %v3773
  %3902 = vst [vmem:[%s3 + $0x128] sm:$0xff] %v3774
  %3903 = vst [vmem:[%s3 + $0x130] sm:$0xff] %v3775
  %3904 = vst [vmem:[%s3 + $0x138] sm:$0xff] %v3776
  %3905 = vst [vmem:[%s3 + $0x140] sm:$0xff] %v3777
  %3906 = vst [vmem:[%s3 + $0x148] sm:$0xff] %v3778
  %3907 = vst [vmem:[%s3 + $0x150] sm:$0xff] %v3779
  %3908 = vst [vmem:[%s3 + $0x158] sm:$0xff] %v3780
  %3909 = vst [vmem:[%s3 + $0x160] sm:$0xff] %v3781
  %3910 = vst [vmem:[%s3 + $0x168] sm:$0xff] %v3782
  %3911 = vst [vmem:[%s3 + $0x170] sm:$0xff] %v3783
  %3912 = vst [vmem:[%s3 + $0x178] sm:$0xff] %v3784
  %3913 = vst [vmem:[%s3 + $0x180] sm:$0xff] %v3785
  %3914 = vst [vmem:[%s3 + $0x188] sm:$0xff] %v3786
  %3915 = vst [vmem:[%s3 + $0x190] sm:$0xff] %v3787
  %3916 = vst [vmem:[%s3 + $0x198] sm:$0xff] %v3788
  %3917 = vst [vmem:[%s3 + $0x1a0] sm:$0xff] %v3789
  %3918 = vst [vmem:[%s3 + $0x1a8] sm:$0xff] %v3790
  %3919 = vst [vmem:[%s3 + $0x1b0] sm:$0xff] %v3791
  %3920 = vst [vmem:[%s3 + $0x1b8] sm:$0xff] %v3792
  %3921 = vst [vmem:[%s3 + $0x1c0] sm:$0xff] %v3793
  %3922 = vst [vmem:[%s3 + $0x1c8] sm:$0xff] %v3794
  %3923 = vst [vmem:[%s3 + $0x1d0] sm:$0xff] %v3795
  %3924 = vst [vmem:[%s3 + $0x1d8] sm:$0xff] %v3796
  %3925 = vst [vmem:[%s3 + $0x1e0] sm:$0xff] %v3797
  %3926 = vst [vmem:[%s3 + $0x1e8] sm:$0xff] %v3798
  %3927 = vst [vmem:[%s3 + $0x1f0] sm:$0xff] %v3799
  %3928 = vst [vmem:[%s3 + $0x1f8] sm:$0xff] %v3800
  // Predicated region
  $region14: #{ds_discriminator_forward.11} parent=0 // pred_check
    _
  $region15: #{ds_discriminator_forward.11} parent=0 // pred_check_branch
    %3930 = sbr.rel (0) target = $region17
  $region16: #{ds_discriminator_forward.11} parent=0 // pred_region
    _
  $region17: #{ds_discriminator_forward.11} parent=0 // pred_fallthru
    _
  // Predicated region
  $region18: #{ds_discriminator_forward.11} parent=0 // pred_check
    _
  $region19: #{ds_discriminator_forward.11} parent=0 // pred_check_branch
    %3932 = sbr.rel (0) target = $region21
  $region20: #{ds_discriminator_forward.11} parent=0 // pred_region
    _
  $region21: #{ds_discriminator_forward.11} parent=0 // pred_fallthru
    _

// kernel: ds_discriminator_forward.12
$region0: #{ds_discriminator_forward.12}
  #allocation0 [shape = 'u32[]', space=smem, size = 0x4, offset = 0x4, fixed_abs, tag = 'smem constant byte address 0x4 - core index']
  #allocation1 [shape = 'u32[144,128]{1,0:T(1,128)}', space=vmem, size = 0x12000, scoped, tag = 'internal scratch']
  %s0 = inlined_call_operand.vmem [shape: bf16[4,144], index: 0, kind: input, shape index: {}]
  %s1 = inlined_call_operand.vmem [shape: bf16[144,8192], index: 1, kind: input, shape index: {}]
  %s2 = inlined_call_operand.vmem [shape: f32[2,4,1], index: 2, kind: input, shape index: {}]
  %s3 = inlined_call_operand.vmem [shape: bf16[4,8192], index: 3, kind: output, shape index: {}]
  %s4 = sld [smem:[#allocation0]]
  $region68: #{ds_discriminator_forward.12} parent=0
    _
  %s6 = ssub.s32 1, %s4
  %s7 = scalar_select 0, %s6, %s4
  $region1: #{ds_discriminator_forward.12} parent=0
    #allocation2 [shape = 'u8[1179648]{0}', space=vmem, size = 0x120000, scoped, tag = 'input window, operand 1']
    loop: start=0, step=1, limit=6
    $region2: #{ds_discriminator_forward.12} parent=1 // loop_pre_header
      _
    $region3: #{ds_discriminator_forward.12} parent=1 // loop_header
      %s9 = sphi 0, %s13
      %p10 = scmp.ge.s32.totalorder %s9, 6
      %s17 = sphi 0, %s17
      %s19 = sphi 0, %s17
      %s20 = sphi 0, %s19
      %s34 = sphi 0, %s20
      %s40 = sphi 0, %s42
      %s43 = sphi 0, %s40
      %s44 = sphi 0, %s43
      %s60 = sphi 0, %s44
      %s64 = sphi 0, %s64
      %s66 = sphi 0, %s64
      %s67 = sphi 0, %s66
      %s81 = sphi 0, %s67
      %s87 = sphi 0, %s89
      %s90 = sphi 0, %s87
      %s91 = sphi 0, %s90
      %s107 = sphi 0, %s91
    $region4: #{ds_discriminator_forward.12} parent=1 // loop_header_branch
      %12 = sbr.rel (%p10) target = $region8
    $region5: #{ds_discriminator_forward.12} parent=1 // loop_body
      %s14 = ssub.s32 %s9, 1
      %s15 = ssub.s32 %s9, 2
      %s16 = sadd.s32 %s9, 1
      %s18 = sadd.s32 %s17, 1
      %p21 = scmp.eq.s32.totalorder %s9, 3
      %p22 = scmp.ne.s32.totalorder %s17, %s19
      %p23 = scmp.eq.s32.totalorder %s9, 0
      %p24 = por %p22, %p23
      %p25 = scmp.ne.s32.totalorder %s17, %s19
      %p26 = scmp.eq.s32.totalorder %s14, 3
      %p27 = por %p25, %p26
      %p28 = scmp.ne.s32.totalorder %s19, %s20
      %p29 = scmp.eq.s32.totalorder %s14, 0
      %p30 = por %p28, %p29
      %p31 = scmp.ne.s32.totalorder %s19, %s20
      %p32 = scmp.eq.s32.totalorder %s15, 3
      %p33 = por %p31, %p32
      %p35 = scmp.ne.s32.totalorder %s20, %s34
      %p36 = scmp.eq.s32.totalorder %s15, 0
      %p37 = por %p35, %p36
      %s38 = ssub.s32 %s9, %s16
      %p39 = scmp.eq.s32.totalorder %s38, 0
      %s41 = sadd.s32 %s40, 1
      %s42 = scalar_select %p39, %s40, %s41
      %p45 = pneg %p39
      %p46 = scmp.eq.s32.totalorder %s9, 3
      %p47 = por %p45, %p46
      %p48 = scmp.ne.s32.totalorder %s40, %s43
      %p49 = scmp.eq.s32.totalorder %s9, 0
      %p50 = por %p48, %p49
      %p51 = scmp.ne.s32.totalorder %s40, %s43
      %p52 = scmp.eq.s32.totalorder %s14, 3
      %p53 = por %p51, %p52
      %p54 = scmp.ne.s32.totalorder %s43, %s44
      %p55 = scmp.eq.s32.totalorder %s14, 0
      %p56 = por %p54, %p55
      %p57 = scmp.ne.s32.totalorder %s43, %s44
      %p58 = scmp.eq.s32.totalorder %s15, 3
      %p59 = por %p57, %p58
      %p61 = scmp.ne.s32.totalorder %s44, %s60
      %p62 = scmp.eq.s32.totalorder %s15, 0
      %p63 = por %p61, %p62
      %s65 = sadd.s32 %s64, 1
      %p68 = scmp.eq.s32.totalorder %s9, 3
      %p69 = scmp.ne.s32.totalorder %s64, %s66
      %p70 = scmp.eq.s32.totalorder %s9, 0
      %p71 = por %p69, %p70
      %p72 = scmp.ne.s32.totalorder %s64, %s66
      %p73 = scmp.eq.s32.totalorder %s14, 3
      %p74 = por %p72, %p73
      %p75 = scmp.ne.s32.totalorder %s66, %s67
      %p76 = scmp.eq.s32.totalorder %s14, 0
      %p77 = por %p75, %p76
      %p78 = scmp.ne.s32.totalorder %s66, %s67
      %p79 = scmp.eq.s32.totalorder %s15, 3
      %p80 = por %p78, %p79
      %p82 = scmp.ne.s32.totalorder %s67, %s81
      %p83 = scmp.eq.s32.totalorder %s15, 0
      %p84 = por %p82, %p83
      %s85 = ssub.s32 %s9, %s16
      %p86 = scmp.eq.s32.totalorder %s85, 0
      %s88 = sadd.s32 %s87, 1
      %s89 = scalar_select %p86, %s87, %s88
      %p92 = pneg %p86
      %p93 = scmp.eq.s32.totalorder %s9, 3
      %p94 = por %p92, %p93
      %p95 = scmp.ne.s32.totalorder %s87, %s90
      %p96 = scmp.eq.s32.totalorder %s9, 0
      %p97 = por %p95, %p96
      %p98 = scmp.ne.s32.totalorder %s87, %s90
      %p99 = scmp.eq.s32.totalorder %s14, 3
      %p100 = por %p98, %p99
      %p101 = scmp.ne.s32.totalorder %s90, %s91
      %p102 = scmp.eq.s32.totalorder %s14, 0
      %p103 = por %p101, %p102
      %p104 = scmp.ne.s32.totalorder %s90, %s91
      %p105 = scmp.eq.s32.totalorder %s15, 3
      %p106 = por %p104, %p105
      %p108 = scmp.ne.s32.totalorder %s91, %s107
      %p109 = scmp.eq.s32.totalorder %s15, 0
      %p110 = por %p108, %p109
      %p111 = scmp.le.s32.totalorder 1, %s9
      %p112 = scmp.lt.s32.totalorder %s9, 5
      %p113 = pnand %p111, %p112
      %p114 = pneg %p113
      // Predicated region
      $region9: #{ds_discriminator_forward.12} parent=5 // pred_check
        _
      $region10: #{ds_discriminator_forward.12} parent=5 // pred_check_branch
        %116 = sbr.rel (%p113) target = $region12
      $region11: #{ds_discriminator_forward.12} parent=5 // pred_region
        %s117 = ssub.s32 %s9, 1
        // Predicated region
        $region13: #{ds_discriminator_forward.12} parent=11 // pred_check
          %p118 = pneg %p30
        $region14: #{ds_discriminator_forward.12} parent=11 // pred_check_branch
          %120 = sbr.rel (%p118) target = $region16
        $region15: #{ds_discriminator_forward.12} parent=11 // pred_region
          _
        $region16: #{ds_discriminator_forward.12} parent=11 // pred_fallthru
          _
        // Predicated region
        $region17: #{ds_discriminator_forward.12} parent=11 // pred_check
          %p121 = pneg %p77
        $region18: #{ds_discriminator_forward.12} parent=11 // pred_check_branch
          %123 = sbr.rel (%p121) target = $region20
        $region19: #{ds_discriminator_forward.12} parent=11 // pred_region
          _
        $region20: #{ds_discriminator_forward.12} parent=11 // pred_fallthru
          _
      $region12: #{ds_discriminator_forward.12} parent=5 // pred_fallthru
        _
      %p124 = scmp.lt.s32.totalorder %s9, 4
      // Predicated region
      $region21: #{ds_discriminator_forward.12} parent=5 // pred_check
        %p125 = pneg %p124
      $region22: #{ds_discriminator_forward.12} parent=5 // pred_check_branch
        %127 = sbr.rel (%p125) target = $region24
      $region23: #{ds_discriminator_forward.12} parent=5 // pred_region
        // Predicated region
        $region25: #{ds_discriminator_forward.12} parent=23 // pred_check
          %p128 = pneg %p50
        $region26: #{ds_discriminator_forward.12} parent=23 // pred_check_branch
          %130 = sbr.rel (%p128) target = $region28
        $region27: #{ds_discriminator_forward.12} parent=23 // pred_region
          %s131 = sand.u32 %s40, 1
          %s132 = sand.u32 %s40, 1
          %s133 = smul.addr %s132, 1152
          %s134 = scalar_lea.vmem [#allocation2], %s133
          %s135 = smul.u32 16, %s9
          %s136 = smul.addr %s135, 4
          %s137 = scalar_lea.vmem %s1, %s136
          // Predicated region
          $region29: #{ds_discriminator_forward.12} parent=27 // pred_check
            _
          $region30: #{ds_discriminator_forward.12} parent=27 // pred_check_branch
            %139 = sbr.rel (0) target = $region32
          $region31: #{ds_discriminator_forward.12} parent=27 // pred_region
            // Predicated region
            $region33: #{ds_discriminator_forward.12} parent=31 // pred_check
              _
            $region34: #{ds_discriminator_forward.12} parent=31 // pred_check_branch
              %141 = sbr.rel (0) target = $region36
            $region35: #{ds_discriminator_forward.12} parent=31 // pred_region
              loop: start=0, step=1, limit=1
              $region37: #{ds_discriminator_forward.12} parent=35 // loop_pre_header
                _
              $region38: #{ds_discriminator_forward.12} parent=35 // loop_header
                %s143 = sphi 0, %s147
                %p144 = scmp.ge.s32.totalorder %s143, 1
                %s148 = sphi %s137, %s137
                %s149 = sphi %s134, %s134
              $region39: #{ds_discriminator_forward.12} parent=35 // loop_header_branch
                %146 = sbr.rel (%p144) target = $region43
              $region40: #{ds_discriminator_forward.12} parent=35 // loop_body
                %v150 = vld [vmem:[%s148] sm:$0xff]
                %151 = vst [vmem:[%s149] sm:$0xff] %v150
                %v152 = vld [vmem:[%s148 + $0x8] sm:$0xff]
                %153 = vst [vmem:[%s149 + $0x8] sm:$0xff] %v152
                %v154 = vld [vmem:[%s148 + $0x10] sm:$0xff]
                %155 = vst [vmem:[%s149 + $0x10] sm:$0xff] %v154
                %v156 = vld [vmem:[%s148 + $0x18] sm:$0xff]
                %157 = vst [vmem:[%s149 + $0x18] sm:$0xff] %v156
                %v158 = vld [vmem:[%s148 + $0x20] sm:$0xff]
                %159 = vst [vmem:[%s149 + $0x20] sm:$0xff] %v158
                %v160 = vld [vmem:[%s148 + $0x28] sm:$0xff]
                %161 = vst [vmem:[%s149 + $0x28] sm:$0xff] %v160
                %v162 = vld [vmem:[%s148 + $0x30] sm:$0xff]
                %163 = vst [vmem:[%s149 + $0x30] sm:$0xff] %v162
                %v164 = vld [vmem:[%s148 + $0x38] sm:$0xff]
                %165 = vst [vmem:[%s149 + $0x38] sm:$0xff] %v164
                %v166 = vld [vmem:[%s148 + $0x100] sm:$0xff]
                %167 = vst [vmem:[%s149 + $0x40] sm:$0xff] %v166
                %v168 = vld [vmem:[%s148 + $0x108] sm:$0xff]
                %169 = vst [vmem:[%s149 + $0x48] sm:$0xff] %v168
                %v170 = vld [vmem:[%s148 + $0x110] sm:$0xff]
                %171 = vst [vmem:[%s149 + $0x50] sm:$0xff] %v170
                %v172 = vld [vmem:[%s148 + $0x118] sm:$0xff]
                %173 = vst [vmem:[%s149 + $0x58] sm:$0xff] %v172
                %v174 = vld [vmem:[%s148 + $0x120] sm:$0xff]
                %175 = vst [vmem:[%s149 + $0x60] sm:$0xff] %v174
                %v176 = vld [vmem:[%s148 + $0x128] sm:$0xff]
                %177 = vst [vmem:[%s149 + $0x68] sm:$0xff] %v176
                %v178 = vld [vmem:[%s148 + $0x130] sm:$0xff]
                %179 = vst [vmem:[%s149 + $0x70] sm:$0xff] %v178
                %v180 = vld [vmem:[%s148 + $0x138] sm:$0xff]
                %181 = vst [vmem:[%s149 + $0x78] sm:$0xff] %v180
                %v182 = vld [vmem:[%s148 + $0x200] sm:$0xff]
                %183 = vst [vmem:[%s149 + $0x80] sm:$0xff] %v182
                %v184 = vld [vmem:[%s148 + $0x208] sm:$0xff]
                %185 = vst [vmem:[%s149 + $0x88] sm:$0xff] %v184
                %v186 = vld [vmem:[%s148 + $0x210] sm:$0xff]
                %187 = vst [vmem:[%s149 + $0x90] sm:$0xff] %v186
                %v188 = vld [vmem:[%s148 + $0x218] sm:$0xff]
                %189 = vst [vmem:[%s149 + $0x98] sm:$0xff] %v188
                %v190 = vld [vmem:[%s148 + $0x220] sm:$0xff]
                %191 = vst [vmem:[%s149 + $0xa0] sm:$0xff] %v190
                %v192 = vld [vmem:[%s148 + $0x228] sm:$0xff]
                %193 = vst [vmem:[%s149 + $0xa8] sm:$0xff] %v192
                %v194 = vld [vmem:[%s148 + $0x230] sm:$0xff]
                %195 = vst [vmem:[%s149 + $0xb0] sm:$0xff] %v194
                %v196 = vld [vmem:[%s148 + $0x238] sm:$0xff]
                %197 = vst [vmem:[%s149 + $0xb8] sm:$0xff] %v196
                %v198 = vld [vmem:[%s148 + $0x300] sm:$0xff]
                %199 = vst [vmem:[%s149 + $0xc0] sm:$0xff] %v198
                %v200 = vld [vmem:[%s148 + $0x308] sm:$0xff]
                %201 = vst [vmem:[%s149 + $0xc8] sm:$0xff] %v200
                %v202 = vld [vmem:[%s148 + $0x310] sm:$0xff]
                %203 = vst [vmem:[%s149 + $0xd0] sm:$0xff] %v202
                %v204 = vld [vmem:[%s148 + $0x318] sm:$0xff]
                %205 = vst [vmem:[%s149 + $0xd8] sm:$0xff] %v204
                %v206 = vld [vmem:[%s148 + $0x320] sm:$0xff]
                %207 = vst [vmem:[%s149 + $0xe0] sm:$0xff] %v206
                %v208 = vld [vmem:[%s148 + $0x328] sm:$0xff]
                %209 = vst [vmem:[%s149 + $0xe8] sm:$0xff] %v208
                %v210 = vld [vmem:[%s148 + $0x330] sm:$0xff]
                %211 = vst [vmem:[%s149 + $0xf0] sm:$0xff] %v210
                %v212 = vld [vmem:[%s148 + $0x338] sm:$0xff]
                %213 = vst [vmem:[%s149 + $0xf8] sm:$0xff] %v212
                %v214 = vld [vmem:[%s148 + $0x400] sm:$0xff]
                %215 = vst [vmem:[%s149 + $0x100] sm:$0xff] %v214
                %v216 = vld [vmem:[%s148 + $0x408] sm:$0xff]
                %217 = vst [vmem:[%s149 + $0x108] sm:$0xff] %v216
                %v218 = vld [vmem:[%s148 + $0x410] sm:$0xff]
                %219 = vst [vmem:[%s149 + $0x110] sm:$0xff] %v218
                %v220 = vld [vmem:[%s148 + $0x418] sm:$0xff]
                %221 = vst [vmem:[%s149 + $0x118] sm:$0xff] %v220
                %v222 = vld [vmem:[%s148 + $0x420] sm:$0xff]
                %223 = vst [vmem:[%s149 + $0x120] sm:$0xff] %v222
                %v224 = vld [vmem:[%s148 + $0x428] sm:$0xff]
                %225 = vst [vmem:[%s149 + $0x128] sm:$0xff] %v224
                %v226 = vld [vmem:[%s148 + $0x430] sm:$0xff]
                %227 = vst [vmem:[%s149 + $0x130] sm:$0xff] %v226
                %v228 = vld [vmem:[%s148 + $0x438] sm:$0xff]
                %229 = vst [vmem:[%s149 + $0x138] sm:$0xff] %v228
                %v230 = vld [vmem:[%s148 + $0x500] sm:$0xff]
                %231 = vst [vmem:[%s149 + $0x140] sm:$0xff] %v230
                %v232 = vld [vmem:[%s148 + $0x508] sm:$0xff]
                %233 = vst [vmem:[%s149 + $0x148] sm:$0xff] %v232
                %v234 = vld [vmem:[%s148 + $0x510] sm:$0xff]
                %235 = vst [vmem:[%s149 + $0x150] sm:$0xff] %v234
                %v236 = vld [vmem:[%s148 + $0x518] sm:$0xff]
                %237 = vst [vmem:[%s149 + $0x158] sm:$0xff] %v236
                %v238 = vld [vmem:[%s148 + $0x520] sm:$0xff]
                %239 = vst [vmem:[%s149 + $0x160] sm:$0xff] %v238
                %v240 = vld [vmem:[%s148 + $0x528] sm:$0xff]
                %241 = vst [vmem:[%s149 + $0x168] sm:$0xff] %v240
                %v242 = vld [vmem:[%s148 + $0x530] sm:$0xff]
                %243 = vst [vmem:[%s149 + $0x170] sm:$0xff] %v242
                %v244 = vld [vmem:[%s148 + $0x538] sm:$0xff]
                %245 = vst [vmem:[%s149 + $0x178] sm:$0xff] %v244
                %v246 = vld [vmem:[%s148 + $0x600] sm:$0xff]
                %247 = vst [vmem:[%s149 + $0x180] sm:$0xff] %v246
                %v248 = vld [vmem:[%s148 + $0x608] sm:$0xff]
                %249 = vst [vmem:[%s149 + $0x188] sm:$0xff] %v248
                %v250 = vld [vmem:[%s148 + $0x610] sm:$0xff]
                %251 = vst [vmem:[%s149 + $0x190] sm:$0xff] %v250
                %v252 = vld [vmem:[%s148 + $0x618] sm:$0xff]
                %253 = vst [vmem:[%s149 + $0x198] sm:$0xff] %v252
                %v254 = vld [vmem:[%s148 + $0x620] sm:$0xff]
                %255 = vst [vmem:[%s149 + $0x1a0] sm:$0xff] %v254
                %v256 = vld [vmem:[%s148 + $0x628] sm:$0xff]
                %257 = vst [vmem:[%s149 + $0x1a8] sm:$0xff] %v256
                %v258 = vld [vmem:[%s148 + $0x630] sm:$0xff]
                %259 = vst [vmem:[%s149 + $0x1b0] sm:$0xff] %v258
                %v260 = vld [vmem:[%s148 + $0x638] sm:$0xff]
                %261 = vst [vmem:[%s149 + $0x1b8] sm:$0xff] %v260
                %v262 = vld [vmem:[%s148 + $0x700] sm:$0xff]
                %263 = vst [vmem:[%s149 + $0x1c0] sm:$0xff] %v262
                %v264 = vld [vmem:[%s148 + $0x708] sm:$0xff]
                %265 = vst [vmem:[%s149 + $0x1c8] sm:$0xff] %v264
                %v266 = vld [vmem:[%s148 + $0x710] sm:$0xff]
                %267 = vst [vmem:[%s149 + $0x1d0] sm:$0xff] %v266
                %v268 = vld [vmem:[%s148 + $0x718] sm:$0xff]
                %269 = vst [vmem:[%s149 + $0x1d8] sm:$0xff] %v268
                %v270 = vld [vmem:[%s148 + $0x720] sm:$0xff]
                %271 = vst [vmem:[%s149 + $0x1e0] sm:$0xff] %v270
                %v272 = vld [vmem:[%s148 + $0x728] sm:$0xff]
                %273 = vst [vmem:[%s149 + $0x1e8] sm:$0xff] %v272
                %v274 = vld [vmem:[%s148 + $0x730] sm:$0xff]
                %275 = vst [vmem:[%s149 + $0x1f0] sm:$0xff] %v274
                %v276 = vld [vmem:[%s148 + $0x738] sm:$0xff]
                %277 = vst [vmem:[%s149 + $0x1f8] sm:$0xff] %v276
                %v278 = vld [vmem:[%s148 + $0x800] sm:$0xff]
                %279 = vst [vmem:[%s149 + $0x200] sm:$0xff] %v278
                %v280 = vld [vmem:[%s148 + $0x808] sm:$0xff]
                %281 = vst [vmem:[%s149 + $0x208] sm:$0xff] %v280
                %v282 = vld [vmem:[%s148 + $0x810] sm:$0xff]
                %283 = vst [vmem:[%s149 + $0x210] sm:$0xff] %v282
                %v284 = vld [vmem:[%s148 + $0x818] sm:$0xff]
                %285 = vst [vmem:[%s149 + $0x218] sm:$0xff] %v284
                %v286 = vld [vmem:[%s148 + $0x820] sm:$0xff]
                %287 = vst [vmem:[%s149 + $0x220] sm:$0xff] %v286
                %v288 = vld [vmem:[%s148 + $0x828] sm:$0xff]
                %289 = vst [vmem:[%s149 + $0x228] sm:$0xff] %v288
                %v290 = vld [vmem:[%s148 + $0x830] sm:$0xff]
                %291 = vst [vmem:[%s149 + $0x230] sm:$0xff] %v290
                %v292 = vld [vmem:[%s148 + $0x838] sm:$0xff]
                %293 = vst [vmem:[%s149 + $0x238] sm:$0xff] %v292
                %v294 = vld [vmem:[%s148 + $0x900] sm:$0xff]
                %295 = vst [vmem:[%s149 + $0x240] sm:$0xff] %v294
                %v296 = vld [vmem:[%s148 + $0x908] sm:$0xff]
                %297 = vst [vmem:[%s149 + $0x248] sm:$0xff] %v296
                %v298 = vld [vmem:[%s148 + $0x910] sm:$0xff]
                %299 = vst [vmem:[%s149 + $0x250] sm:$0xff] %v298
                %v300 = vld [vmem:[%s148 + $0x918] sm:$0xff]
                %301 = vst [vmem:[%s149 + $0x258] sm:$0xff] %v300
                %v302 = vld [vmem:[%s148 + $0x920] sm:$0xff]
                %303 = vst [vmem:[%s149 + $0x260] sm:$0xff] %v302
                %v304 = vld [vmem:[%s148 + $0x928] sm:$0xff]
                %305 = vst [vmem:[%s149 + $0x268] sm:$0xff] %v304
                %v306 = vld [vmem:[%s148 + $0x930] sm:$0xff]
                %307 = vst [vmem:[%s149 + $0x270] sm:$0xff] %v306
                %v308 = vld [vmem:[%s148 + $0x938] sm:$0xff]
                %309 = vst [vmem:[%s149 + $0x278] sm:$0xff] %v308
                %v310 = vld [vmem:[%s148 + $0xa00] sm:$0xff]
                %311 = vst [vmem:[%s149 + $0x280] sm:$0xff] %v310
                %v312 = vld [vmem:[%s148 + $0xa08] sm:$0xff]
                %313 = vst [vmem:[%s149 + $0x288] sm:$0xff] %v312
                %v314 = vld [vmem:[%s148 + $0xa10] sm:$0xff]
                %315 = vst [vmem:[%s149 + $0x290] sm:$0xff] %v314
                %v316 = vld [vmem:[%s148 + $0xa18] sm:$0xff]
                %317 = vst [vmem:[%s149 + $0x298] sm:$0xff] %v316
                %v318 = vld [vmem:[%s148 + $0xa20] sm:$0xff]
                %319 = vst [vmem:[%s149 + $0x2a0] sm:$0xff] %v318
                %v320 = vld [vmem:[%s148 + $0xa28] sm:$0xff]
                %321 = vst [vmem:[%s149 + $0x2a8] sm:$0xff] %v320
                %v322 = vld [vmem:[%s148 + $0xa30] sm:$0xff]
                %323 = vst [vmem:[%s149 + $0x2b0] sm:$0xff] %v322
                %v324 = vld [vmem:[%s148 + $0xa38] sm:$0xff]
                %325 = vst [vmem:[%s149 + $0x2b8] sm:$0xff] %v324
                %v326 = vld [vmem:[%s148 + $0xb00] sm:$0xff]
                %327 = vst [vmem:[%s149 + $0x2c0] sm:$0xff] %v326
                %v328 = vld [vmem:[%s148 + $0xb08] sm:$0xff]
                %329 = vst [vmem:[%s149 + $0x2c8] sm:$0xff] %v328
                %v330 = vld [vmem:[%s148 + $0xb10] sm:$0xff]
                %331 = vst [vmem:[%s149 + $0x2d0] sm:$0xff] %v330
                %v332 = vld [vmem:[%s148 + $0xb18] sm:$0xff]
                %333 = vst [vmem:[%s149 + $0x2d8] sm:$0xff] %v332
                %v334 = vld [vmem:[%s148 + $0xb20] sm:$0xff]
                %335 = vst [vmem:[%s149 + $0x2e0] sm:$0xff] %v334
                %v336 = vld [vmem:[%s148 + $0xb28] sm:$0xff]
                %337 = vst [vmem:[%s149 + $0x2e8] sm:$0xff] %v336
                %v338 = vld [vmem:[%s148 + $0xb30] sm:$0xff]
                %339 = vst [vmem:[%s149 + $0x2f0] sm:$0xff] %v338
                %v340 = vld [vmem:[%s148 + $0xb38] sm:$0xff]
                %341 = vst [vmem:[%s149 + $0x2f8] sm:$0xff] %v340
                %v342 = vld [vmem:[%s148 + $0xc00] sm:$0xff]
                %343 = vst [vmem:[%s149 + $0x300] sm:$0xff] %v342
                %v344 = vld [vmem:[%s148 + $0xc08] sm:$0xff]
                %345 = vst [vmem:[%s149 + $0x308] sm:$0xff] %v344
                %v346 = vld [vmem:[%s148 + $0xc10] sm:$0xff]
                %347 = vst [vmem:[%s149 + $0x310] sm:$0xff] %v346
                %v348 = vld [vmem:[%s148 + $0xc18] sm:$0xff]
                %349 = vst [vmem:[%s149 + $0x318] sm:$0xff] %v348
                %v350 = vld [vmem:[%s148 + $0xc20] sm:$0xff]
                %351 = vst [vmem:[%s149 + $0x320] sm:$0xff] %v350
                %v352 = vld [vmem:[%s148 + $0xc28] sm:$0xff]
                %353 = vst [vmem:[%s149 + $0x328] sm:$0xff] %v352
                %v354 = vld [vmem:[%s148 + $0xc30] sm:$0xff]
                %355 = vst [vmem:[%s149 + $0x330] sm:$0xff] %v354
                %v356 = vld [vmem:[%s148 + $0xc38] sm:$0xff]
                %357 = vst [vmem:[%s149 + $0x338] sm:$0xff] %v356
                %v358 = vld [vmem:[%s148 + $0xd00] sm:$0xff]
                %359 = vst [vmem:[%s149 + $0x340] sm:$0xff] %v358
                %v360 = vld [vmem:[%s148 + $0xd08] sm:$0xff]
                %361 = vst [vmem:[%s149 + $0x348] sm:$0xff] %v360
                %v362 = vld [vmem:[%s148 + $0xd10] sm:$0xff]
                %363 = vst [vmem:[%s149 + $0x350] sm:$0xff] %v362
                %v364 = vld [vmem:[%s148 + $0xd18] sm:$0xff]
                %365 = vst [vmem:[%s149 + $0x358] sm:$0xff] %v364
                %v366 = vld [vmem:[%s148 + $0xd20] sm:$0xff]
                %367 = vst [vmem:[%s149 + $0x360] sm:$0xff] %v366
                %v368 = vld [vmem:[%s148 + $0xd28] sm:$0xff]
                %369 = vst [vmem:[%s149 + $0x368] sm:$0xff] %v368
                %v370 = vld [vmem:[%s148 + $0xd30] sm:$0xff]
                %371 = vst [vmem:[%s149 + $0x370] sm:$0xff] %v370
                %v372 = vld [vmem:[%s148 + $0xd38] sm:$0xff]
                %373 = vst [vmem:[%s149 + $0x378] sm:$0xff] %v372
                %v374 = vld [vmem:[%s148 + $0xe00] sm:$0xff]
                %375 = vst [vmem:[%s149 + $0x380] sm:$0xff] %v374
                %v376 = vld [vmem:[%s148 + $0xe08] sm:$0xff]
                %377 = vst [vmem:[%s149 + $0x388] sm:$0xff] %v376
                %v378 = vld [vmem:[%s148 + $0xe10] sm:$0xff]
                %379 = vst [vmem:[%s149 + $0x390] sm:$0xff] %v378
                %v380 = vld [vmem:[%s148 + $0xe18] sm:$0xff]
                %381 = vst [vmem:[%s149 + $0x398] sm:$0xff] %v380
                %v382 = vld [vmem:[%s148 + $0xe20] sm:$0xff]
                %383 = vst [vmem:[%s149 + $0x3a0] sm:$0xff] %v382
                %v384 = vld [vmem:[%s148 + $0xe28] sm:$0xff]
                %385 = vst [vmem:[%s149 + $0x3a8] sm:$0xff] %v384
                %v386 = vld [vmem:[%s148 + $0xe30] sm:$0xff]
                %387 = vst [vmem:[%s149 + $0x3b0] sm:$0xff] %v386
                %v388 = vld [vmem:[%s148 + $0xe38] sm:$0xff]
                %389 = vst [vmem:[%s149 + $0x3b8] sm:$0xff] %v388
                %v390 = vld [vmem:[%s148 + $0xf00] sm:$0xff]
                %391 = vst [vmem:[%s149 + $0x3c0] sm:$0xff] %v390
                %v392 = vld [vmem:[%s148 + $0xf08] sm:$0xff]
                %393 = vst [vmem:[%s149 + $0x3c8] sm:$0xff] %v392
                %v394 = vld [vmem:[%s148 + $0xf10] sm:$0xff]
                %395 = vst [vmem:[%s149 + $0x3d0] sm:$0xff] %v394
                %v396 = vld [vmem:[%s148 + $0xf18] sm:$0xff]
                %397 = vst [vmem:[%s149 + $0x3d8] sm:$0xff] %v396
                %v398 = vld [vmem:[%s148 + $0xf20] sm:$0xff]
                %399 = vst [vmem:[%s149 + $0x3e0] sm:$0xff] %v398
                %v400 = vld [vmem:[%s148 + $0xf28] sm:$0xff]
                %401 = vst [vmem:[%s149 + $0x3e8] sm:$0xff] %v400
                %v402 = vld [vmem:[%s148 + $0xf30] sm:$0xff]
                %403 = vst [vmem:[%s149 + $0x3f0] sm:$0xff] %v402
                %v404 = vld [vmem:[%s148 + $0xf38] sm:$0xff]
                %405 = vst [vmem:[%s149 + $0x3f8] sm:$0xff] %v404
                %v406 = vld [vmem:[%s148 + $0x1000] sm:$0xff]
                %407 = vst [vmem:[%s149 + $0x400] sm:$0xff] %v406
                %v408 = vld [vmem:[%s148 + $0x1008] sm:$0xff]
                %409 = vst [vmem:[%s149 + $0x408] sm:$0xff] %v408
                %v410 = vld [vmem:[%s148 + $0x1010] sm:$0xff]
                %411 = vst [vmem:[%s149 + $0x410] sm:$0xff] %v410
                %v412 = vld [vmem:[%s148 + $0x1018] sm:$0xff]
                %413 = vst [vmem:[%s149 + $0x418] sm:$0xff] %v412
                %v414 = vld [vmem:[%s148 + $0x1020] sm:$0xff]
                %415 = vst [vmem:[%s149 + $0x420] sm:$0xff] %v414
                %v416 = vld [vmem:[%s148 + $0x1028] sm:$0xff]
                %417 = vst [vmem:[%s149 + $0x428] sm:$0xff] %v416
                %v418 = vld [vmem:[%s148 + $0x1030] sm:$0xff]
                %419 = vst [vmem:[%s149 + $0x430] sm:$0xff] %v418
                %v420 = vld [vmem:[%s148 + $0x1038] sm:$0xff]
                %421 = vst [vmem:[%s149 + $0x438] sm:$0xff] %v420
                %v422 = vld [vmem:[%s148 + $0x1100] sm:$0xff]
                %423 = vst [vmem:[%s149 + $0x440] sm:$0xff] %v422
                %v424 = vld [vmem:[%s148 + $0x1108] sm:$0xff]
                %425 = vst [vmem:[%s149 + $0x448] sm:$0xff] %v424
                %v426 = vld [vmem:[%s148 + $0x1110] sm:$0xff]
                %427 = vst [vmem:[%s149 + $0x450] sm:$0xff] %v426
                %v428 = vld [vmem:[%s148 + $0x1118] sm:$0xff]
                %429 = vst [vmem:[%s149 + $0x458] sm:$0xff] %v428
                %v430 = vld [vmem:[%s148 + $0x1120] sm:$0xff]
                %431 = vst [vmem:[%s149 + $0x460] sm:$0xff] %v430
                %v432 = vld [vmem:[%s148 + $0x1128] sm:$0xff]
                %433 = vst [vmem:[%s149 + $0x468] sm:$0xff] %v432
                %v434 = vld [vmem:[%s148 + $0x1130] sm:$0xff]
                %435 = vst [vmem:[%s149 + $0x470] sm:$0xff] %v434
                %v436 = vld [vmem:[%s148 + $0x1138] sm:$0xff]
                %437 = vst [vmem:[%s149 + $0x478] sm:$0xff] %v436
              $region41: #{ds_discriminator_forward.12} parent=35 // loop_footer
                %s147 = sadd.s32 1, %s143
              $region42: #{ds_discriminator_forward.12} parent=35 // loop_footer_branch
                %142 = sbr.rel target = $region38
              $region43: #{ds_discriminator_forward.12} parent=35 // loop_exit
                _
            $region36: #{ds_discriminator_forward.12} parent=31 // pred_fallthru
              _
            // Predicated region
            $region44: #{ds_discriminator_forward.12} parent=31 // pred_check
              _
            $region45: #{ds_discriminator_forward.12} parent=31 // pred_check_branch
              %439 = sbr.rel target = $region47
            $region46: #{ds_discriminator_forward.12} parent=31 // pred_region
              _
            $region47: #{ds_discriminator_forward.12} parent=31 // pred_fallthru
              _
          $region32: #{ds_discriminator_forward.12} parent=27 // pred_fallthru
            _
          %440 = vnop
        $region28: #{ds_discriminator_forward.12} parent=23 // pred_fallthru
          _
      $region24: #{ds_discriminator_forward.12} parent=5 // pred_fallthru
        _
      %p441 = scmp.le.s32.totalorder 1, %s9
      %p442 = scmp.lt.s32.totalorder %s9, 5
      %p443 = pnand %p441, %p442
      %p444 = pneg %p443
      // Predicated region
      $region48: #{ds_discriminator_forward.12} parent=5 // pred_check
        _
      $region49: #{ds_discriminator_forward.12} parent=5 // pred_check_branch
        %446 = sbr.rel (%p443) target = $region51
      $region50: #{ds_discriminator_forward.12} parent=5 // pred_region
        %s447 = ssub.s32 %s9, 1
        %s448 = sand.u32 %s43, 1
        %s449 = sand.u32 %s43, 1
        %s450 = smul.addr %s449, 1152
        %s451 = scalar_lea.vmem [#allocation2], %s450
        // Predicated region
        $region52: #{ds_discriminator_forward.12} parent=50 // pred_check
          %p452 = pneg %p56
        $region53: #{ds_discriminator_forward.12} parent=50 // pred_check_branch
          %454 = sbr.rel (%p452) target = $region55
        $region54: #{ds_discriminator_forward.12} parent=50 // pred_region
          _
        $region55: #{ds_discriminator_forward.12} parent=50 // pred_fallthru
          _
        %p455 = pneg %p30
        %p456 = pneg %p27
        %s457 = sand.u32 %s43, 1
        %s458 = sand.u32 %s43, 1
        %s459 = smul.addr %s458, 1152
        %s460 = scalar_lea.vmem [#allocation2], %s459
        %p461 = pneg %p56
        %p462 = pneg %p53
        %p463 = pneg %p77
        %p464 = pneg %p74
        %p465 = pneg %p103
        %p466 = pneg %p100
        %s467 = smul.u32 16, %s14
        %p468 = scmp.lt.s32.totalorder %s467, 63
        %s469 = scalar_select %p468, %s467, 63
        %s470 = smul.addr %s469, 2
        %s471 = scalar_lea.vmem %s3, %s470
        %s472 = smul.u32 16, %s14
        %s473 = smul.u32 16, %s14
        %p474 = scmp.lt.s32.totalorder %s473, 63
        %s475 = scalar_select %p474, %s473, 63
        %s476 = smul.addr %s475, 2
        %s477 = scalar_lea.vmem %s3, %s476
        %s478 = smul.u32 16, %s14
        %v480 = vld [vmem:[%s0] sm:$0xf]
        %v481 = vld [vmem:[%s451] sm:$0xff]
        %v482 = vld [vmem:[%s451 + $0x8] sm:$0xff]
        %v483 = vld [vmem:[%s451 + $0x10] sm:$0xff]
        %v484 = vld [vmem:[%s451 + $0x18] sm:$0xff]
        %v485 = vld [vmem:[%s451 + $0x20] sm:$0xff]
        %v486 = vld [vmem:[%s451 + $0x28] sm:$0xff]
        %v487 = vld [vmem:[%s451 + $0x30] sm:$0xff]
        %v488 = vld [vmem:[%s451 + $0x38] sm:$0xff]
        %v489 = vld [vmem:[%s451 + $0x40] sm:$0xff]
        %v490 = vld [vmem:[%s451 + $0x48] sm:$0xff]
        %v491 = vld [vmem:[%s451 + $0x50] sm:$0xff]
        %v492 = vld [vmem:[%s451 + $0x58] sm:$0xff]
        %v493 = vld [vmem:[%s451 + $0x60] sm:$0xff]
        %v494 = vld [vmem:[%s451 + $0x68] sm:$0xff]
        %v495 = vld [vmem:[%s451 + $0x70] sm:$0xff]
        %v496 = vld [vmem:[%s451 + $0x78] sm:$0xff]
        %v497 = vld [vmem:[%s451 + $0x80] sm:$0xff]
        %v498 = vld [vmem:[%s451 + $0x88] sm:$0xff]
        %v499 = vld [vmem:[%s451 + $0x90] sm:$0xff]
        %v500 = vld [vmem:[%s451 + $0x98] sm:$0xff]
        %v501 = vld [vmem:[%s451 + $0xa0] sm:$0xff]
        %v502 = vld [vmem:[%s451 + $0xa8] sm:$0xff]
        %v503 = vld [vmem:[%s451 + $0xb0] sm:$0xff]
        %v504 = vld [vmem:[%s451 + $0xb8] sm:$0xff]
        %v505 = vld [vmem:[%s451 + $0xc0] sm:$0xff]
        %v506 = vld [vmem:[%s451 + $0xc8] sm:$0xff]
        %v507 = vld [vmem:[%s451 + $0xd0] sm:$0xff]
        %v508 = vld [vmem:[%s451 + $0xd8] sm:$0xff]
        %v509 = vld [vmem:[%s451 + $0xe0] sm:$0xff]
        %v510 = vld [vmem:[%s451 + $0xe8] sm:$0xff]
        %v511 = vld [vmem:[%s451 + $0xf0] sm:$0xff]
        %v512 = vld [vmem:[%s451 + $0xf8] sm:$0xff]
        %v513 = vld [vmem:[%s451 + $0x100] sm:$0xff]
        %v514 = vld [vmem:[%s451 + $0x108] sm:$0xff]
        %v515 = vld [vmem:[%s451 + $0x110] sm:$0xff]
        %v516 = vld [vmem:[%s451 + $0x118] sm:$0xff]
        %v517 = vld [vmem:[%s451 + $0x120] sm:$0xff]
        %v518 = vld [vmem:[%s451 + $0x128] sm:$0xff]
        %v519 = vld [vmem:[%s451 + $0x130] sm:$0xff]
        %v520 = vld [vmem:[%s451 + $0x138] sm:$0xff]
        %v521 = vld [vmem:[%s451 + $0x140] sm:$0xff]
        %v522 = vld [vmem:[%s451 + $0x148] sm:$0xff]
        %v523 = vld [vmem:[%s451 + $0x150] sm:$0xff]
        %v524 = vld [vmem:[%s451 + $0x158] sm:$0xff]
        %v525 = vld [vmem:[%s451 + $0x160] sm:$0xff]
        %v526 = vld [vmem:[%s451 + $0x168] sm:$0xff]
        %v527 = vld [vmem:[%s451 + $0x170] sm:$0xff]
        %v528 = vld [vmem:[%s451 + $0x178] sm:$0xff]
        %v529 = vld [vmem:[%s451 + $0x180] sm:$0xff]
        %v530 = vld [vmem:[%s451 + $0x188] sm:$0xff]
        %v531 = vld [vmem:[%s451 + $0x190] sm:$0xff]
        %v532 = vld [vmem:[%s451 + $0x198] sm:$0xff]
        %v533 = vld [vmem:[%s451 + $0x1a0] sm:$0xff]
        %v534 = vld [vmem:[%s451 + $0x1a8] sm:$0xff]
        %v535 = vld [vmem:[%s451 + $0x1b0] sm:$0xff]
        %v536 = vld [vmem:[%s451 + $0x1b8] sm:$0xff]
        %v537 = vld [vmem:[%s451 + $0x1c0] sm:$0xff]
        %v538 = vld [vmem:[%s451 + $0x1c8] sm:$0xff]
        %v539 = vld [vmem:[%s451 + $0x1d0] sm:$0xff]
        %v540 = vld [vmem:[%s451 + $0x1d8] sm:$0xff]
        %v541 = vld [vmem:[%s451 + $0x1e0] sm:$0xff]
        %v542 = vld [vmem:[%s451 + $0x1e8] sm:$0xff]
        %v543 = vld [vmem:[%s451 + $0x1f0] sm:$0xff]
        %v544 = vld [vmem:[%s451 + $0x1f8] sm:$0xff]
        %v545 = vld [vmem:[%s451 + $0x200] sm:$0xff]
        %v546 = vld [vmem:[%s451 + $0x208] sm:$0xff]
        %v547 = vld [vmem:[%s451 + $0x210] sm:$0xff]
        %v548 = vld [vmem:[%s451 + $0x218] sm:$0xff]
        %v549 = vld [vmem:[%s451 + $0x220] sm:$0xff]
        %v550 = vld [vmem:[%s451 + $0x228] sm:$0xff]
        %v551 = vld [vmem:[%s451 + $0x230] sm:$0xff]
        %v552 = vld [vmem:[%s451 + $0x238] sm:$0xff]
        %v553 = vld [vmem:[%s451 + $0x240] sm:$0xff]
        %v554 = vld [vmem:[%s451 + $0x248] sm:$0xff]
        %v555 = vld [vmem:[%s451 + $0x250] sm:$0xff]
        %v556 = vld [vmem:[%s451 + $0x258] sm:$0xff]
        %v557 = vld [vmem:[%s451 + $0x260] sm:$0xff]
        %v558 = vld [vmem:[%s451 + $0x268] sm:$0xff]
        %v559 = vld [vmem:[%s451 + $0x270] sm:$0xff]
        %v560 = vld [vmem:[%s451 + $0x278] sm:$0xff]
        %v561 = vld [vmem:[%s451 + $0x280] sm:$0xff]
        %v562 = vld [vmem:[%s451 + $0x288] sm:$0xff]
        %v563 = vld [vmem:[%s451 + $0x290] sm:$0xff]
        %v564 = vld [vmem:[%s451 + $0x298] sm:$0xff]
        %v565 = vld [vmem:[%s451 + $0x2a0] sm:$0xff]
        %v566 = vld [vmem:[%s451 + $0x2a8] sm:$0xff]
        %v567 = vld [vmem:[%s451 + $0x2b0] sm:$0xff]
        %v568 = vld [vmem:[%s451 + $0x2b8] sm:$0xff]
        %v569 = vld [vmem:[%s451 + $0x2c0] sm:$0xff]
        %v570 = vld [vmem:[%s451 + $0x2c8] sm:$0xff]
        %v571 = vld [vmem:[%s451 + $0x2d0] sm:$0xff]
        %v572 = vld [vmem:[%s451 + $0x2d8] sm:$0xff]
        %v573 = vld [vmem:[%s451 + $0x2e0] sm:$0xff]
        %v574 = vld [vmem:[%s451 + $0x2e8] sm:$0xff]
        %v575 = vld [vmem:[%s451 + $0x2f0] sm:$0xff]
        %v576 = vld [vmem:[%s451 + $0x2f8] sm:$0xff]
        %v577 = vld [vmem:[%s451 + $0x300] sm:$0xff]
        %v578 = vld [vmem:[%s451 + $0x308] sm:$0xff]
        %v579 = vld [vmem:[%s451 + $0x310] sm:$0xff]
        %v580 = vld [vmem:[%s451 + $0x318] sm:$0xff]
        %v581 = vld [vmem:[%s451 + $0x320] sm:$0xff]
        %v582 = vld [vmem:[%s451 + $0x328] sm:$0xff]
        %v583 = vld [vmem:[%s451 + $0x330] sm:$0xff]
        %v584 = vld [vmem:[%s451 + $0x338] sm:$0xff]
        %v585 = vld [vmem:[%s451 + $0x340] sm:$0xff]
        %v586 = vld [vmem:[%s451 + $0x348] sm:$0xff]
        %v587 = vld [vmem:[%s451 + $0x350] sm:$0xff]
        %v588 = vld [vmem:[%s451 + $0x358] sm:$0xff]
        %v589 = vld [vmem:[%s451 + $0x360] sm:$0xff]
        %v590 = vld [vmem:[%s451 + $0x368] sm:$0xff]
        %v591 = vld [vmem:[%s451 + $0x370] sm:$0xff]
        %v592 = vld [vmem:[%s451 + $0x378] sm:$0xff]
        %v593 = vld [vmem:[%s451 + $0x380] sm:$0xff]
        %v594 = vld [vmem:[%s451 + $0x388] sm:$0xff]
        %v595 = vld [vmem:[%s451 + $0x390] sm:$0xff]
        %v596 = vld [vmem:[%s451 + $0x398] sm:$0xff]
        %v597 = vld [vmem:[%s451 + $0x3a0] sm:$0xff]
        %v598 = vld [vmem:[%s451 + $0x3a8] sm:$0xff]
        %v599 = vld [vmem:[%s451 + $0x3b0] sm:$0xff]
        %v600 = vld [vmem:[%s451 + $0x3b8] sm:$0xff]
        %v601 = vld [vmem:[%s451 + $0x3c0] sm:$0xff]
        %v602 = vld [vmem:[%s451 + $0x3c8] sm:$0xff]
        %v603 = vld [vmem:[%s451 + $0x3d0] sm:$0xff]
        %v604 = vld [vmem:[%s451 + $0x3d8] sm:$0xff]
        %v605 = vld [vmem:[%s451 + $0x3e0] sm:$0xff]
        %v606 = vld [vmem:[%s451 + $0x3e8] sm:$0xff]
        %v607 = vld [vmem:[%s451 + $0x3f0] sm:$0xff]
        %v608 = vld [vmem:[%s451 + $0x3f8] sm:$0xff]
        %v609 = vld [vmem:[%s451 + $0x400] sm:$0xff]
        %v610 = vld [vmem:[%s451 + $0x408] sm:$0xff]
        %v611 = vld [vmem:[%s451 + $0x410] sm:$0xff]
        %v612 = vld [vmem:[%s451 + $0x418] sm:$0xff]
        %v613 = vld [vmem:[%s451 + $0x420] sm:$0xff]
        %v614 = vld [vmem:[%s451 + $0x428] sm:$0xff]
        %v615 = vld [vmem:[%s451 + $0x430] sm:$0xff]
        %v616 = vld [vmem:[%s451 + $0x438] sm:$0xff]
        %v617 = vld [vmem:[%s451 + $0x440] sm:$0xff]
        %v618 = vld [vmem:[%s451 + $0x448] sm:$0xff]
        %v619 = vld [vmem:[%s451 + $0x450] sm:$0xff]
        %v620 = vld [vmem:[%s451 + $0x458] sm:$0xff]
        %v621 = vld [vmem:[%s451 + $0x460] sm:$0xff]
        %v622 = vld [vmem:[%s451 + $0x468] sm:$0xff]
        %v623 = vld [vmem:[%s451 + $0x470] sm:$0xff]
        %v624 = vld [vmem:[%s451 + $0x478] sm:$0xff]
        %v627 = vunpack.c.l.s4 1983009808
        %v628 = vunpack.c.0.s8 %v627
        %v629 = vlaneseq
        %v630 = vshrl.u32 %v629, 7
        %v631 = vsub.s32 %v628, %v630
        %v632 = vrot.slane %v480, %v631
        %v633 = vcombine.high %v632, %v632
        %v779 = vunpack.c.l.b16 %v481
        %v780 = vunpack.c.h.b16 %v481
        %v781 = vunpack.c.l.b16 %v482
        %v782 = vunpack.c.h.b16 %v482
        %v783 = vunpack.c.l.b16 %v483
        %v784 = vunpack.c.h.b16 %v483
        %v785 = vunpack.c.l.b16 %v484
        %v786 = vunpack.c.h.b16 %v484
        %v787 = vunpack.c.l.b16 %v485
        %v788 = vunpack.c.h.b16 %v485
        %v789 = vunpack.c.l.b16 %v486
        %v790 = vunpack.c.h.b16 %v486
        %v791 = vunpack.c.l.b16 %v487
        %v792 = vunpack.c.h.b16 %v487
        %v793 = vunpack.c.l.b16 %v488
        %v794 = vunpack.c.h.b16 %v488
        %v795 = vunpack.c.l.b16 %v489
        %v796 = vunpack.c.h.b16 %v489
        %v797 = vunpack.c.l.b16 %v490
        %v798 = vunpack.c.h.b16 %v490
        %v799 = vunpack.c.l.b16 %v491
        %v800 = vunpack.c.h.b16 %v491
        %v801 = vunpack.c.l.b16 %v492
        %v802 = vunpack.c.h.b16 %v492
        %v803 = vunpack.c.l.b16 %v493
        %v804 = vunpack.c.h.b16 %v493
        %v805 = vunpack.c.l.b16 %v494
        %v806 = vunpack.c.h.b16 %v494
        %v807 = vunpack.c.l.b16 %v495
        %v808 = vunpack.c.h.b16 %v495
        %v809 = vunpack.c.l.b16 %v496
        %v810 = vunpack.c.h.b16 %v496
        %v811 = vunpack.c.l.b16 %v497
        %v812 = vunpack.c.h.b16 %v497
        %v813 = vunpack.c.l.b16 %v498
        %v814 = vunpack.c.h.b16 %v498
        %v815 = vunpack.c.l.b16 %v499
        %v816 = vunpack.c.h.b16 %v499
        %v817 = vunpack.c.l.b16 %v500
        %v818 = vunpack.c.h.b16 %v500
        %v819 = vunpack.c.l.b16 %v501
        %v820 = vunpack.c.h.b16 %v501
        %v821 = vunpack.c.l.b16 %v502
        %v822 = vunpack.c.h.b16 %v502
        %v823 = vunpack.c.l.b16 %v503
        %v824 = vunpack.c.h.b16 %v503
        %v825 = vunpack.c.l.b16 %v504
        %v826 = vunpack.c.h.b16 %v504
        %v827 = vunpack.c.l.b16 %v505
        %v828 = vunpack.c.h.b16 %v505
        %v829 = vunpack.c.l.b16 %v506
        %v830 = vunpack.c.h.b16 %v506
        %v831 = vunpack.c.l.b16 %v507
        %v832 = vunpack.c.h.b16 %v507
        %v833 = vunpack.c.l.b16 %v508
        %v834 = vunpack.c.h.b16 %v508
        %v835 = vunpack.c.l.b16 %v509
        %v836 = vunpack.c.h.b16 %v509
        %v837 = vunpack.c.l.b16 %v510
        %v838 = vunpack.c.h.b16 %v510
        %v839 = vunpack.c.l.b16 %v511
        %v840 = vunpack.c.h.b16 %v511
        %v841 = vunpack.c.l.b16 %v512
        %v842 = vunpack.c.h.b16 %v512
        %v843 = vunpack.c.l.b16 %v513
        %v844 = vunpack.c.h.b16 %v513
        %v845 = vunpack.c.l.b16 %v514
        %v846 = vunpack.c.h.b16 %v514
        %v847 = vunpack.c.l.b16 %v515
        %v848 = vunpack.c.h.b16 %v515
        %v849 = vunpack.c.l.b16 %v516
        %v850 = vunpack.c.h.b16 %v516
        %v851 = vunpack.c.l.b16 %v517
        %v852 = vunpack.c.h.b16 %v517
        %v853 = vunpack.c.l.b16 %v518
        %v854 = vunpack.c.h.b16 %v518
        %v855 = vunpack.c.l.b16 %v519
        %v856 = vunpack.c.h.b16 %v519
        %v857 = vunpack.c.l.b16 %v520
        %v858 = vunpack.c.h.b16 %v520
        %v859 = vunpack.c.l.b16 %v521
        %v860 = vunpack.c.h.b16 %v521
        %v861 = vunpack.c.l.b16 %v522
        %v862 = vunpack.c.h.b16 %v522
        %v863 = vunpack.c.l.b16 %v523
        %v864 = vunpack.c.h.b16 %v523
        %v865 = vunpack.c.l.b16 %v524
        %v866 = vunpack.c.h.b16 %v524
        %v867 = vunpack.c.l.b16 %v525
        %v868 = vunpack.c.h.b16 %v525
        %v869 = vunpack.c.l.b16 %v526
        %v870 = vunpack.c.h.b16 %v526
        %v871 = vunpack.c.l.b16 %v527
        %v872 = vunpack.c.h.b16 %v527
        %v873 = vunpack.c.l.b16 %v528
        %v874 = vunpack.c.h.b16 %v528
        %v875 = vunpack.c.l.b16 %v529
        %v876 = vunpack.c.h.b16 %v529
        %v877 = vunpack.c.l.b16 %v530
        %v878 = vunpack.c.h.b16 %v530
        %v879 = vunpack.c.l.b16 %v531
        %v880 = vunpack.c.h.b16 %v531
        %v881 = vunpack.c.l.b16 %v532
        %v882 = vunpack.c.h.b16 %v532
        %v883 = vunpack.c.l.b16 %v533
        %v884 = vunpack.c.h.b16 %v533
        %v885 = vunpack.c.l.b16 %v534
        %v886 = vunpack.c.h.b16 %v534
        %v887 = vunpack.c.l.b16 %v535
        %v888 = vunpack.c.h.b16 %v535
        %v889 = vunpack.c.l.b16 %v536
        %v890 = vunpack.c.h.b16 %v536
        %v891 = vunpack.c.l.b16 %v537
        %v892 = vunpack.c.h.b16 %v537
        %v893 = vunpack.c.l.b16 %v538
        %v894 = vunpack.c.h.b16 %v538
        %v895 = vunpack.c.l.b16 %v539
        %v896 = vunpack.c.h.b16 %v539
        %v897 = vunpack.c.l.b16 %v540
        %v898 = vunpack.c.h.b16 %v540
        %v899 = vunpack.c.l.b16 %v541
        %v900 = vunpack.c.h.b16 %v541
        %v901 = vunpack.c.l.b16 %v542
        %v902 = vunpack.c.h.b16 %v542
        %v903 = vunpack.c.l.b16 %v543
        %v904 = vunpack.c.h.b16 %v543
        %v905 = vunpack.c.l.b16 %v544
        %v906 = vunpack.c.h.b16 %v544
        %v907 = vunpack.c.l.b16 %v545
        %v908 = vunpack.c.h.b16 %v545
        %v909 = vunpack.c.l.b16 %v546
        %v910 = vunpack.c.h.b16 %v546
        %v911 = vunpack.c.l.b16 %v547
        %v912 = vunpack.c.h.b16 %v547
        %v913 = vunpack.c.l.b16 %v548
        %v914 = vunpack.c.h.b16 %v548
        %v915 = vunpack.c.l.b16 %v549
        %v916 = vunpack.c.h.b16 %v549
        %v917 = vunpack.c.l.b16 %v550
        %v918 = vunpack.c.h.b16 %v550
        %v919 = vunpack.c.l.b16 %v551
        %v920 = vunpack.c.h.b16 %v551
        %v921 = vunpack.c.l.b16 %v552
        %v922 = vunpack.c.h.b16 %v552
        %v923 = vunpack.c.l.b16 %v553
        %v924 = vunpack.c.h.b16 %v553
        %v925 = vunpack.c.l.b16 %v554
        %v926 = vunpack.c.h.b16 %v554
        %v927 = vunpack.c.l.b16 %v555
        %v928 = vunpack.c.h.b16 %v555
        %v929 = vunpack.c.l.b16 %v556
        %v930 = vunpack.c.h.b16 %v556
        %v931 = vunpack.c.l.b16 %v557
        %v932 = vunpack.c.h.b16 %v557
        %v933 = vunpack.c.l.b16 %v558
        %v934 = vunpack.c.h.b16 %v558
        %v935 = vunpack.c.l.b16 %v559
        %v936 = vunpack.c.h.b16 %v559
        %v937 = vunpack.c.l.b16 %v560
        %v938 = vunpack.c.h.b16 %v560
        %v939 = vunpack.c.l.b16 %v561
        %v940 = vunpack.c.h.b16 %v561
        %v941 = vunpack.c.l.b16 %v562
        %v942 = vunpack.c.h.b16 %v562
        %v943 = vunpack.c.l.b16 %v563
        %v944 = vunpack.c.h.b16 %v563
        %v945 = vunpack.c.l.b16 %v564
        %v946 = vunpack.c.h.b16 %v564
        %v947 = vunpack.c.l.b16 %v565
        %v948 = vunpack.c.h.b16 %v565
        %v949 = vunpack.c.l.b16 %v566
        %v950 = vunpack.c.h.b16 %v566
        %v951 = vunpack.c.l.b16 %v567
        %v952 = vunpack.c.h.b16 %v567
        %v953 = vunpack.c.l.b16 %v568
        %v954 = vunpack.c.h.b16 %v568
        %v955 = vunpack.c.l.b16 %v569
        %v956 = vunpack.c.h.b16 %v569
        %v957 = vunpack.c.l.b16 %v570
        %v958 = vunpack.c.h.b16 %v570
        %v959 = vunpack.c.l.b16 %v571
        %v960 = vunpack.c.h.b16 %v571
        %v961 = vunpack.c.l.b16 %v572
        %v962 = vunpack.c.h.b16 %v572
        %v963 = vunpack.c.l.b16 %v573
        %v964 = vunpack.c.h.b16 %v573
        %v965 = vunpack.c.l.b16 %v574
        %v966 = vunpack.c.h.b16 %v574
        %v967 = vunpack.c.l.b16 %v575
        %v968 = vunpack.c.h.b16 %v575
        %v969 = vunpack.c.l.b16 %v576
        %v970 = vunpack.c.h.b16 %v576
        %v971 = vunpack.c.l.b16 %v577
        %v972 = vunpack.c.h.b16 %v577
        %v973 = vunpack.c.l.b16 %v578
        %v974 = vunpack.c.h.b16 %v578
        %v975 = vunpack.c.l.b16 %v579
        %v976 = vunpack.c.h.b16 %v579
        %v977 = vunpack.c.l.b16 %v580
        %v978 = vunpack.c.h.b16 %v580
        %v979 = vunpack.c.l.b16 %v581
        %v980 = vunpack.c.h.b16 %v581
        %v981 = vunpack.c.l.b16 %v582
        %v982 = vunpack.c.h.b16 %v582
        %v983 = vunpack.c.l.b16 %v583
        %v984 = vunpack.c.h.b16 %v583
        %v985 = vunpack.c.l.b16 %v584
        %v986 = vunpack.c.h.b16 %v584
        %v987 = vunpack.c.l.b16 %v585
        %v988 = vunpack.c.h.b16 %v585
        %v989 = vunpack.c.l.b16 %v586
        %v990 = vunpack.c.h.b16 %v586
        %v991 = vunpack.c.l.b16 %v587
        %v992 = vunpack.c.h.b16 %v587
        %v993 = vunpack.c.l.b16 %v588
        %v994 = vunpack.c.h.b16 %v588
        %v995 = vunpack.c.l.b16 %v589
        %v996 = vunpack.c.h.b16 %v589
        %v997 = vunpack.c.l.b16 %v590
        %v998 = vunpack.c.h.b16 %v590
        %v999 = vunpack.c.l.b16 %v591
        %v1000 = vunpack.c.h.b16 %v591
        %v1001 = vunpack.c.l.b16 %v592
        %v1002 = vunpack.c.h.b16 %v592
        %v1003 = vunpack.c.l.b16 %v593
        %v1004 = vunpack.c.h.b16 %v593
        %v1005 = vunpack.c.l.b16 %v594
        %v1006 = vunpack.c.h.b16 %v594
        %v1007 = vunpack.c.l.b16 %v595
        %v1008 = vunpack.c.h.b16 %v595
        %v1009 = vunpack.c.l.b16 %v596
        %v1010 = vunpack.c.h.b16 %v596
        %v1011 = vunpack.c.l.b16 %v597
        %v1012 = vunpack.c.h.b16 %v597
        %v1013 = vunpack.c.l.b16 %v598
        %v1014 = vunpack.c.h.b16 %v598
        %v1015 = vunpack.c.l.b16 %v599
        %v1016 = vunpack.c.h.b16 %v599
        %v1017 = vunpack.c.l.b16 %v600
        %v1018 = vunpack.c.h.b16 %v600
        %v1019 = vunpack.c.l.b16 %v601
        %v1020 = vunpack.c.h.b16 %v601
        %v1021 = vunpack.c.l.b16 %v602
        %v1022 = vunpack.c.h.b16 %v602
        %v1023 = vunpack.c.l.b16 %v603
        %v1024 = vunpack.c.h.b16 %v603
        %v1025 = vunpack.c.l.b16 %v604
        %v1026 = vunpack.c.h.b16 %v604
        %v1027 = vunpack.c.l.b16 %v605
        %v1028 = vunpack.c.h.b16 %v605
        %v1029 = vunpack.c.l.b16 %v606
        %v1030 = vunpack.c.h.b16 %v606
        %v1031 = vunpack.c.l.b16 %v607
        %v1032 = vunpack.c.h.b16 %v607
        %v1033 = vunpack.c.l.b16 %v608
        %v1034 = vunpack.c.h.b16 %v608
        %v1035 = vunpack.c.l.b16 %v609
        %v1036 = vunpack.c.h.b16 %v609
        %v1037 = vunpack.c.l.b16 %v610
        %v1038 = vunpack.c.h.b16 %v610
        %v1039 = vunpack.c.l.b16 %v611
        %v1040 = vunpack.c.h.b16 %v611
        %v1041 = vunpack.c.l.b16 %v612
        %v1042 = vunpack.c.h.b16 %v612
        %v1043 = vunpack.c.l.b16 %v613
        %v1044 = vunpack.c.h.b16 %v613
        %v1045 = vunpack.c.l.b16 %v614
        %v1046 = vunpack.c.h.b16 %v614
        %v1047 = vunpack.c.l.b16 %v615
        %v1048 = vunpack.c.h.b16 %v615
        %v1049 = vunpack.c.l.b16 %v616
        %v1050 = vunpack.c.h.b16 %v616
        %v1051 = vunpack.c.l.b16 %v617
        %v1052 = vunpack.c.h.b16 %v617
        %v1053 = vunpack.c.l.b16 %v618
        %v1054 = vunpack.c.h.b16 %v618
        %v1055 = vunpack.c.l.b16 %v619
        %v1056 = vunpack.c.h.b16 %v619
        %v1057 = vunpack.c.l.b16 %v620
        %v1058 = vunpack.c.h.b16 %v620
        %v1059 = vunpack.c.l.b16 %v621
        %v1060 = vunpack.c.h.b16 %v621
        %v1061 = vunpack.c.l.b16 %v622
        %v1062 = vunpack.c.h.b16 %v622
        %v1063 = vunpack.c.l.b16 %v623
        %v1064 = vunpack.c.h.b16 %v623
        %v1065 = vunpack.c.l.b16 %v624
        %v1066 = vunpack.c.h.b16 %v624
        %v1067 = vpack.c.b16 %v795, %v779
        %v1068 = vpack.c.b16 %v796, %v780
        %v1069 = vpack.c.b16 %v797, %v781
        %v1070 = vpack.c.b16 %v798, %v782
        %v1071 = vpack.c.b16 %v799, %v783
        %v1072 = vpack.c.b16 %v800, %v784
        %v1073 = vpack.c.b16 %v801, %v785
        %v1074 = vpack.c.b16 %v802, %v786
        %v1075 = vpack.c.b16 %v803, %v787
        %v1076 = vpack.c.b16 %v804, %v788
        %v1077 = vpack.c.b16 %v805, %v789
        %v1078 = vpack.c.b16 %v806, %v790
        %v1079 = vpack.c.b16 %v807, %v791
        %v1080 = vpack.c.b16 %v808, %v792
        %v1081 = vpack.c.b16 %v809, %v793
        %v1082 = vpack.c.b16 %v810, %v794
        %v1083 = vpack.c.b16 %v827, %v811
        %v1084 = vpack.c.b16 %v828, %v812
        %v1085 = vpack.c.b16 %v829, %v813
        %v1086 = vpack.c.b16 %v830, %v814
        %v1087 = vpack.c.b16 %v831, %v815
        %v1088 = vpack.c.b16 %v832, %v816
        %v1089 = vpack.c.b16 %v833, %v817
        %v1090 = vpack.c.b16 %v834, %v818
        %v1091 = vpack.c.b16 %v835, %v819
        %v1092 = vpack.c.b16 %v836, %v820
        %v1093 = vpack.c.b16 %v837, %v821
        %v1094 = vpack.c.b16 %v838, %v822
        %v1095 = vpack.c.b16 %v839, %v823
        %v1096 = vpack.c.b16 %v840, %v824
        %v1097 = vpack.c.b16 %v841, %v825
        %v1098 = vpack.c.b16 %v842, %v826
        %v1099 = vpack.c.b16 %v859, %v843
        %v1100 = vpack.c.b16 %v860, %v844
        %v1101 = vpack.c.b16 %v861, %v845
        %v1102 = vpack.c.b16 %v862, %v846
        %v1103 = vpack.c.b16 %v863, %v847
        %v1104 = vpack.c.b16 %v864, %v848
        %v1105 = vpack.c.b16 %v865, %v849
        %v1106 = vpack.c.b16 %v866, %v850
        %v1107 = vpack.c.b16 %v867, %v851
        %v1108 = vpack.c.b16 %v868, %v852
        %v1109 = vpack.c.b16 %v869, %v853
        %v1110 = vpack.c.b16 %v870, %v854
        %v1111 = vpack.c.b16 %v871, %v855
        %v1112 = vpack.c.b16 %v872, %v856
        %v1113 = vpack.c.b16 %v873, %v857
        %v1114 = vpack.c.b16 %v874, %v858
        %v1115 = vpack.c.b16 %v891, %v875
        %v1116 = vpack.c.b16 %v892, %v876
        %v1117 = vpack.c.b16 %v893, %v877
        %v1118 = vpack.c.b16 %v894, %v878
        %v1119 = vpack.c.b16 %v895, %v879
        %v1120 = vpack.c.b16 %v896, %v880
        %v1121 = vpack.c.b16 %v897, %v881
        %v1122 = vpack.c.b16 %v898, %v882
        %v1123 = vpack.c.b16 %v899, %v883
        %v1124 = vpack.c.b16 %v900, %v884
        %v1125 = vpack.c.b16 %v901, %v885
        %v1126 = vpack.c.b16 %v902, %v886
        %v1127 = vpack.c.b16 %v903, %v887
        %v1128 = vpack.c.b16 %v904, %v888
        %v1129 = vpack.c.b16 %v905, %v889
        %v1130 = vpack.c.b16 %v906, %v890
        %v1131 = vpack.c.b16 %v923, %v907
        %v1132 = vpack.c.b16 %v924, %v908
        %v1133 = vpack.c.b16 %v925, %v909
        %v1134 = vpack.c.b16 %v926, %v910
        %v1135 = vpack.c.b16 %v927, %v911
        %v1136 = vpack.c.b16 %v928, %v912
        %v1137 = vpack.c.b16 %v929, %v913
        %v1138 = vpack.c.b16 %v930, %v914
        %v1139 = vpack.c.b16 %v931, %v915
        %v1140 = vpack.c.b16 %v932, %v916
        %v1141 = vpack.c.b16 %v933, %v917
        %v1142 = vpack.c.b16 %v934, %v918
        %v1143 = vpack.c.b16 %v935, %v919
        %v1144 = vpack.c.b16 %v936, %v920
        %v1145 = vpack.c.b16 %v937, %v921
        %v1146 = vpack.c.b16 %v938, %v922
        %v1147 = vpack.c.b16 %v955, %v939
        %v1148 = vpack.c.b16 %v956, %v940
        %v1149 = vpack.c.b16 %v957, %v941
        %v1150 = vpack.c.b16 %v958, %v942
        %v1151 = vpack.c.b16 %v959, %v943
        %v1152 = vpack.c.b16 %v960, %v944
        %v1153 = vpack.c.b16 %v961, %v945
        %v1154 = vpack.c.b16 %v962, %v946
        %v1155 = vpack.c.b16 %v963, %v947
        %v1156 = vpack.c.b16 %v964, %v948
        %v1157 = vpack.c.b16 %v965, %v949
        %v1158 = vpack.c.b16 %v966, %v950
        %v1159 = vpack.c.b16 %v967, %v951
        %v1160 = vpack.c.b16 %v968, %v952
        %v1161 = vpack.c.b16 %v969, %v953
        %v1162 = vpack.c.b16 %v970, %v954
        %v1163 = vpack.c.b16 %v987, %v971
        %v1164 = vpack.c.b16 %v988, %v972
        %v1165 = vpack.c.b16 %v989, %v973
        %v1166 = vpack.c.b16 %v990, %v974
        %v1167 = vpack.c.b16 %v991, %v975
        %v1168 = vpack.c.b16 %v992, %v976
        %v1169 = vpack.c.b16 %v993, %v977
        %v1170 = vpack.c.b16 %v994, %v978
        %v1171 = vpack.c.b16 %v995, %v979
        %v1172 = vpack.c.b16 %v996, %v980
        %v1173 = vpack.c.b16 %v997, %v981
        %v1174 = vpack.c.b16 %v998, %v982
        %v1175 = vpack.c.b16 %v999, %v983
        %v1176 = vpack.c.b16 %v1000, %v984
        %v1177 = vpack.c.b16 %v1001, %v985
        %v1178 = vpack.c.b16 %v1002, %v986
        %v1179 = vpack.c.b16 %v1019, %v1003
        %v1180 = vpack.c.b16 %v1020, %v1004
        %v1181 = vpack.c.b16 %v1021, %v1005
        %v1182 = vpack.c.b16 %v1022, %v1006
        %v1183 = vpack.c.b16 %v1023, %v1007
        %v1184 = vpack.c.b16 %v1024, %v1008
        %v1185 = vpack.c.b16 %v1025, %v1009
        %v1186 = vpack.c.b16 %v1026, %v1010
        %v1187 = vpack.c.b16 %v1027, %v1011
        %v1188 = vpack.c.b16 %v1028, %v1012
        %v1189 = vpack.c.b16 %v1029, %v1013
        %v1190 = vpack.c.b16 %v1030, %v1014
        %v1191 = vpack.c.b16 %v1031, %v1015
        %v1192 = vpack.c.b16 %v1032, %v1016
        %v1193 = vpack.c.b16 %v1033, %v1017
        %v1194 = vpack.c.b16 %v1034, %v1018
        %v1195 = vpack.c.b16 %v1051, %v1035
        %v1196 = vpack.c.b16 %v1052, %v1036
        %v1197 = vpack.c.b16 %v1053, %v1037
        %v1198 = vpack.c.b16 %v1054, %v1038
        %v1199 = vpack.c.b16 %v1055, %v1039
        %v1200 = vpack.c.b16 %v1056, %v1040
        %v1201 = vpack.c.b16 %v1057, %v1041
        %v1202 = vpack.c.b16 %v1058, %v1042
        %v1203 = vpack.c.b16 %v1059, %v1043
        %v1204 = vpack.c.b16 %v1060, %v1044
        %v1205 = vpack.c.b16 %v1061, %v1045
        %v1206 = vpack.c.b16 %v1062, %v1046
        %v1207 = vpack.c.b16 %v1063, %v1047
        %v1208 = vpack.c.b16 %v1064, %v1048
        %v1209 = vpack.c.b16 %v1065, %v1049
        %v1210 = vpack.c.b16 %v1066, %v1050
        %vm1355 = vcmask 130048
        %v1357 = vsel %vm1355, %v633, 0
        %1359 = vmatprep.subr.bf16.mxu0 %v1180
        %1360 = vmatpush1.bf16.msra.mxu0 %v1179
        %1361 = vmatprep.subr.bf16.mxu0 %v1164
        %1362 = vmatpush1.bf16.msra.mxu0 %v1163
        %1363 = vmatprep.subr.bf16.mxu0 %v1148
        %1364 = vmatpush1.bf16.msra.mxu0 %v1147
        %1365 = vmatprep.subr.bf16.mxu0 %v1132
        %1366 = vmatpush1.bf16.msra.mxu0 %v1131
        %1367 = vmatprep.subr.bf16.mxu0 %v1116
        %1368 = vmatpush1.bf16.msra.mxu0 %v1115
        %1369 = vmatprep.subr.bf16.mxu0 %v1100
        %1370 = vmatpush1.bf16.msra.mxu0 %v1099
        %1371 = vmatprep.subr.bf16.mxu0 %v1084
        %1372 = vmatpush1.bf16.msra.mxu0 %v1083
        %1373 = vmatprep.subr.bf16.mxu0 %v1068
        %1374 = vmatpush1.bf16.msra.mxu0 %v1067
        %1375 = vmatprep.subr.bf16.mxu0 0
        %1376 = vmatpush2.bf16.msra.mxu0 0
        %1377 = vmatprep.subr.bf16.mxu0 0
        %1378 = vmatpush2.bf16.msra.mxu0 0
        %1379 = vmatprep.subr.bf16.mxu0 0
        %1380 = vmatpush2.bf16.msra.mxu0 0
        %1381 = vmatprep.subr.bf16.mxu0 0
        %1382 = vmatpush2.bf16.msra.mxu0 0
        %1383 = vmatprep.subr.bf16.mxu0 0
        %1384 = vmatpush2.bf16.msra.mxu0 0
        %1385 = vmatprep.subr.bf16.mxu0 0
        %1386 = vmatpush2.bf16.msra.mxu0 0
        %1387 = vmatprep.subr.bf16.mxu0 0
        %1388 = vmatpush2.bf16.msra.mxu0 0
        %1389 = vmatprep.subr.bf16.mxu0 %v1196
        %1390 = vmatpush2.bf16.msra.mxu0 %v1195
        %1391 = vmatprep.mubr.bf16.mxu0 %v1357
        %1392 = vmatmul.mubr.bf16.gmra.mxu0 %v632
        %v1393 = vpop.f32.mrf.mxu0
        %v1394 = vadd.f32 0.0, %v1393
        %v1395 = vpop.f32.mrf.mxu0
        %v1396 = vadd.f32 0.0, %v1395
        %v1397 = vpop.f32.mrf.mxu0
        %v1398 = vpop.f32.mrf.mxu0
        %1399 = vdwg.mxu0
        %1400 = vmatprep.subr.bf16.mxu0 %v1182
        %1401 = vmatpush1.bf16.msra.mxu0 %v1181
        %1402 = vmatprep.subr.bf16.mxu0 %v1166
        %1403 = vmatpush1.bf16.msra.mxu0 %v1165
        %1404 = vmatprep.subr.bf16.mxu0 %v1150
        %1405 = vmatpush1.bf16.msra.mxu0 %v1149
        %1406 = vmatprep.subr.bf16.mxu0 %v1134
        %1407 = vmatpush1.bf16.msra.mxu0 %v1133
        %1408 = vmatprep.subr.bf16.mxu0 %v1118
        %1409 = vmatpush1.bf16.msra.mxu0 %v1117
        %1410 = vmatprep.subr.bf16.mxu0 %v1102
        %1411 = vmatpush1.bf16.msra.mxu0 %v1101
        %1412 = vmatprep.subr.bf16.mxu0 %v1086
        %1413 = vmatpush1.bf16.msra.mxu0 %v1085
        %1414 = vmatprep.subr.bf16.mxu0 %v1070
        %1415 = vmatpush1.bf16.msra.mxu0 %v1069
        %1416 = vmatprep.subr.bf16.mxu0 0
        %1417 = vmatpush2.bf16.msra.mxu0 0
        %1418 = vmatprep.subr.bf16.mxu0 0
        %1419 = vmatpush2.bf16.msra.mxu0 0
        %1420 = vmatprep.subr.bf16.mxu0 0
        %1421 = vmatpush2.bf16.msra.mxu0 0
        %1422 = vmatprep.subr.bf16.mxu0 0
        %1423 = vmatpush2.bf16.msra.mxu0 0
        %1424 = vmatprep.subr.bf16.mxu0 0
        %1425 = vmatpush2.bf16.msra.mxu0 0
        %1426 = vmatprep.subr.bf16.mxu0 0
        %1427 = vmatpush2.bf16.msra.mxu0 0
        %1428 = vmatprep.subr.bf16.mxu0 0
        %1429 = vmatpush2.bf16.msra.mxu0 0
        %1430 = vmatprep.subr.bf16.mxu0 %v1198
        %1431 = vmatpush2.bf16.msra.mxu0 %v1197
        %1432 = vmatprep.mubr.bf16.mxu0 %v1357
        %1433 = vmatmul.mubr.bf16.gmra.mxu0 %v632
        %v1434 = vpop.f32.mrf.mxu0
        %v1435 = vadd.f32 0.0, %v1434
        %v1436 = vpop.f32.mrf.mxu0
        %v1437 = vadd.f32 0.0, %v1436
        %v1438 = vpop.f32.mrf.mxu0
        %v1439 = vpop.f32.mrf.mxu0
        %1440 = vdwg.mxu0
        %1441 = vmatprep.subr.bf16.mxu0 %v1184
        %1442 = vmatpush1.bf16.msra.mxu0 %v1183
        %1443 = vmatprep.subr.bf16.mxu0 %v1168
        %1444 = vmatpush1.bf16.msra.mxu0 %v1167
        %1445 = vmatprep.subr.bf16.mxu0 %v1152
        %1446 = vmatpush1.bf16.msra.mxu0 %v1151
        %1447 = vmatprep.subr.bf16.mxu0 %v1136
        %1448 = vmatpush1.bf16.msra.mxu0 %v1135
        %1449 = vmatprep.subr.bf16.mxu0 %v1120
        %1450 = vmatpush1.bf16.msra.mxu0 %v1119
        %1451 = vmatprep.subr.bf16.mxu0 %v1104
        %1452 = vmatpush1.bf16.msra.mxu0 %v1103
        %1453 = vmatprep.subr.bf16.mxu0 %v1088
        %1454 = vmatpush1.bf16.msra.mxu0 %v1087
        %1455 = vmatprep.subr.bf16.mxu0 %v1072
        %1456 = vmatpush1.bf16.msra.mxu0 %v1071
        %1457 = vmatprep.subr.bf16.mxu0 0
        %1458 = vmatpush2.bf16.msra.mxu0 0
        %1459 = vmatprep.subr.bf16.mxu0 0
        %1460 = vmatpush2.bf16.msra.mxu0 0
        %1461 = vmatprep.subr.bf16.mxu0 0
        %1462 = vmatpush2.bf16.msra.mxu0 0
        %1463 = vmatprep.subr.bf16.mxu0 0
        %1464 = vmatpush2.bf16.msra.mxu0 0
        %1465 = vmatprep.subr.bf16.mxu0 0
        %1466 = vmatpush2.bf16.msra.mxu0 0
        %1467 = vmatprep.subr.bf16.mxu0 0
        %1468 = vmatpush2.bf16.msra.mxu0 0
        %1469 = vmatprep.subr.bf16.mxu0 0
        %1470 = vmatpush2.bf16.msra.mxu0 0
        %1471 = vmatprep.subr.bf16.mxu0 %v1200
        %1472 = vmatpush2.bf16.msra.mxu0 %v1199
        %1473 = vmatprep.mubr.bf16.mxu0 %v1357
        %1474 = vmatmul.mubr.bf16.gmra.mxu0 %v632
        %v1475 = vpop.f32.mrf.mxu0
        %v1476 = vadd.f32 0.0, %v1475
        %v1477 = vpop.f32.mrf.mxu0
        %v1478 = vadd.f32 0.0, %v1477
        %v1479 = vpop.f32.mrf.mxu0
        %v1480 = vpop.f32.mrf.mxu0
        %1481 = vdwg.mxu0
        %1482 = vmatprep.subr.bf16.mxu0 %v1186
        %1483 = vmatpush1.bf16.msra.mxu0 %v1185
        %1484 = vmatprep.subr.bf16.mxu0 %v1170
        %1485 = vmatpush1.bf16.msra.mxu0 %v1169
        %1486 = vmatprep.subr.bf16.mxu0 %v1154
        %1487 = vmatpush1.bf16.msra.mxu0 %v1153
        %1488 = vmatprep.subr.bf16.mxu0 %v1138
        %1489 = vmatpush1.bf16.msra.mxu0 %v1137
        %1490 = vmatprep.subr.bf16.mxu0 %v1122
        %1491 = vmatpush1.bf16.msra.mxu0 %v1121
        %1492 = vmatprep.subr.bf16.mxu0 %v1106
        %1493 = vmatpush1.bf16.msra.mxu0 %v1105
        %1494 = vmatprep.subr.bf16.mxu0 %v1090
        %1495 = vmatpush1.bf16.msra.mxu0 %v1089
        %1496 = vmatprep.subr.bf16.mxu0 %v1074
        %1497 = vmatpush1.bf16.msra.mxu0 %v1073
        %1498 = vmatprep.subr.bf16.mxu0 0
        %1499 = vmatpush2.bf16.msra.mxu0 0
        %1500 = vmatprep.subr.bf16.mxu0 0
        %1501 = vmatpush2.bf16.msra.mxu0 0
        %1502 = vmatprep.subr.bf16.mxu0 0
        %1503 = vmatpush2.bf16.msra.mxu0 0
        %1504 = vmatprep.subr.bf16.mxu0 0
        %1505 = vmatpush2.bf16.msra.mxu0 0
        %1506 = vmatprep.subr.bf16.mxu0 0
        %1507 = vmatpush2.bf16.msra.mxu0 0
        %1508 = vmatprep.subr.bf16.mxu0 0
        %1509 = vmatpush2.bf16.msra.mxu0 0
        %1510 = vmatprep.subr.bf16.mxu0 0
        %1511 = vmatpush2.bf16.msra.mxu0 0
        %1512 = vmatprep.subr.bf16.mxu0 %v1202
        %1513 = vmatpush2.bf16.msra.mxu0 %v1201
        %1514 = vmatprep.mubr.bf16.mxu0 %v1357
        %1515 = vmatmul.mubr.bf16.gmra.mxu0 %v632
        %v1516 = vpop.f32.mrf.mxu0
        %v1517 = vadd.f32 0.0, %v1516
        %v1518 = vpop.f32.mrf.mxu0
        %v1519 = vadd.f32 0.0, %v1518
        %v1520 = vpop.f32.mrf.mxu0
        %v1521 = vpop.f32.mrf.mxu0
        %1522 = vdwg.mxu0
        %1523 = vmatprep.subr.bf16.mxu0 %v1188
        %1524 = vmatpush1.bf16.msra.mxu0 %v1187
        %1525 = vmatprep.subr.bf16.mxu0 %v1172
        %1526 = vmatpush1.bf16.msra.mxu0 %v1171
        %1527 = vmatprep.subr.bf16.mxu0 %v1156
        %1528 = vmatpush1.bf16.msra.mxu0 %v1155
        %1529 = vmatprep.subr.bf16.mxu0 %v1140
        %1530 = vmatpush1.bf16.msra.mxu0 %v1139
        %1531 = vmatprep.subr.bf16.mxu0 %v1124
        %1532 = vmatpush1.bf16.msra.mxu0 %v1123
        %1533 = vmatprep.subr.bf16.mxu0 %v1108
        %1534 = vmatpush1.bf16.msra.mxu0 %v1107
        %1535 = vmatprep.subr.bf16.mxu0 %v1092
        %1536 = vmatpush1.bf16.msra.mxu0 %v1091
        %1537 = vmatprep.subr.bf16.mxu0 %v1076
        %1538 = vmatpush1.bf16.msra.mxu0 %v1075
        %1539 = vmatprep.subr.bf16.mxu0 0
        %1540 = vmatpush2.bf16.msra.mxu0 0
        %1541 = vmatprep.subr.bf16.mxu0 0
        %1542 = vmatpush2.bf16.msra.mxu0 0
        %1543 = vmatprep.subr.bf16.mxu0 0
        %1544 = vmatpush2.bf16.msra.mxu0 0
        %1545 = vmatprep.subr.bf16.mxu0 0
        %1546 = vmatpush2.bf16.msra.mxu0 0
        %1547 = vmatprep.subr.bf16.mxu0 0
        %1548 = vmatpush2.bf16.msra.mxu0 0
        %1549 = vmatprep.subr.bf16.mxu0 0
        %1550 = vmatpush2.bf16.msra.mxu0 0
        %1551 = vmatprep.subr.bf16.mxu0 0
        %1552 = vmatpush2.bf16.msra.mxu0 0
        %1553 = vmatprep.subr.bf16.mxu0 %v1204
        %1554 = vmatpush2.bf16.msra.mxu0 %v1203
        %1555 = vmatprep.mubr.bf16.mxu0 %v1357
        %1556 = vmatmul.mubr.bf16.gmra.mxu0 %v632
        %v1557 = vpop.f32.mrf.mxu0
        %v1558 = vadd.f32 0.0, %v1557
        %v1559 = vpop.f32.mrf.mxu0
        %v1560 = vadd.f32 0.0, %v1559
        %v1561 = vpop.f32.mrf.mxu0
        %v1562 = vpop.f32.mrf.mxu0
        %1563 = vdwg.mxu0
        %1564 = vmatprep.subr.bf16.mxu0 %v1190
        %1565 = vmatpush1.bf16.msra.mxu0 %v1189
        %1566 = vmatprep.subr.bf16.mxu0 %v1174
        %1567 = vmatpush1.bf16.msra.mxu0 %v1173
        %1568 = vmatprep.subr.bf16.mxu0 %v1158
        %1569 = vmatpush1.bf16.msra.mxu0 %v1157
        %1570 = vmatprep.subr.bf16.mxu0 %v1142
        %1571 = vmatpush1.bf16.msra.mxu0 %v1141
        %1572 = vmatprep.subr.bf16.mxu0 %v1126
        %1573 = vmatpush1.bf16.msra.mxu0 %v1125
        %1574 = vmatprep.subr.bf16.mxu0 %v1110
        %1575 = vmatpush1.bf16.msra.mxu0 %v1109
        %1576 = vmatprep.subr.bf16.mxu0 %v1094
        %1577 = vmatpush1.bf16.msra.mxu0 %v1093
        %1578 = vmatprep.subr.bf16.mxu0 %v1078
        %1579 = vmatpush1.bf16.msra.mxu0 %v1077
        %1580 = vmatprep.subr.bf16.mxu0 0
        %1581 = vmatpush2.bf16.msra.mxu0 0
        %1582 = vmatprep.subr.bf16.mxu0 0
        %1583 = vmatpush2.bf16.msra.mxu0 0
        %1584 = vmatprep.subr.bf16.mxu0 0
        %1585 = vmatpush2.bf16.msra.mxu0 0
        %1586 = vmatprep.subr.bf16.mxu0 0
        %1587 = vmatpush2.bf16.msra.mxu0 0
        %1588 = vmatprep.subr.bf16.mxu0 0
        %1589 = vmatpush2.bf16.msra.mxu0 0
        %1590 = vmatprep.subr.bf16.mxu0 0
        %1591 = vmatpush2.bf16.msra.mxu0 0
        %1592 = vmatprep.subr.bf16.mxu0 0
        %1593 = vmatpush2.bf16.msra.mxu0 0
        %1594 = vmatprep.subr.bf16.mxu0 %v1206
        %1595 = vmatpush2.bf16.msra.mxu0 %v1205
        %1596 = vmatprep.mubr.bf16.mxu0 %v1357
        %1597 = vmatmul.mubr.bf16.gmra.mxu0 %v632
        %v1598 = vpop.f32.mrf.mxu0
        %v1599 = vadd.f32 0.0, %v1598
        %v1600 = vpop.f32.mrf.mxu0
        %v1601 = vadd.f32 0.0, %v1600
        %v1602 = vpop.f32.mrf.mxu0
        %v1603 = vpop.f32.mrf.mxu0
        %1604 = vdwg.mxu0
        %1605 = vmatprep.subr.bf16.mxu0 %v1192
        %1606 = vmatpush1.bf16.msra.mxu0 %v1191
        %1607 = vmatprep.subr.bf16.mxu0 %v1176
        %1608 = vmatpush1.bf16.msra.mxu0 %v1175
        %1609 = vmatprep.subr.bf16.mxu0 %v1160
        %1610 = vmatpush1.bf16.msra.mxu0 %v1159
        %1611 = vmatprep.subr.bf16.mxu0 %v1144
        %1612 = vmatpush1.bf16.msra.mxu0 %v1143
        %1613 = vmatprep.subr.bf16.mxu0 %v1128
        %1614 = vmatpush1.bf16.msra.mxu0 %v1127
        %1615 = vmatprep.subr.bf16.mxu0 %v1112
        %1616 = vmatpush1.bf16.msra.mxu0 %v1111
        %1617 = vmatprep.subr.bf16.mxu0 %v1096
        %1618 = vmatpush1.bf16.msra.mxu0 %v1095
        %1619 = vmatprep.subr.bf16.mxu0 %v1080
        %1620 = vmatpush1.bf16.msra.mxu0 %v1079
        %1621 = vmatprep.subr.bf16.mxu0 0
        %1622 = vmatpush2.bf16.msra.mxu0 0
        %1623 = vmatprep.subr.bf16.mxu0 0
        %1624 = vmatpush2.bf16.msra.mxu0 0
        %1625 = vmatprep.subr.bf16.mxu0 0
        %1626 = vmatpush2.bf16.msra.mxu0 0
        %1627 = vmatprep.subr.bf16.mxu0 0
        %1628 = vmatpush2.bf16.msra.mxu0 0
        %1629 = vmatprep.subr.bf16.mxu0 0
        %1630 = vmatpush2.bf16.msra.mxu0 0
        %1631 = vmatprep.subr.bf16.mxu0 0
        %1632 = vmatpush2.bf16.msra.mxu0 0
        %1633 = vmatprep.subr.bf16.mxu0 0
        %1634 = vmatpush2.bf16.msra.mxu0 0
        %1635 = vmatprep.subr.bf16.mxu0 %v1208
        %1636 = vmatpush2.bf16.msra.mxu0 %v1207
        %1637 = vmatprep.mubr.bf16.mxu0 %v1357
        %1638 = vmatmul.mubr.bf16.gmra.mxu0 %v632
        %v1639 = vpop.f32.mrf.mxu0
        %v1640 = vadd.f32 0.0, %v1639
        %v1641 = vpop.f32.mrf.mxu0
        %v1642 = vadd.f32 0.0, %v1641
        %v1643 = vpop.f32.mrf.mxu0
        %v1644 = vpop.f32.mrf.mxu0
        %1645 = vdwg.mxu0
        %1646 = vmatprep.subr.bf16.mxu0 %v1194
        %1647 = vmatpush1.bf16.msra.mxu0 %v1193
        %1648 = vmatprep.subr.bf16.mxu0 %v1178
        %1649 = vmatpush1.bf16.msra.mxu0 %v1177
        %1650 = vmatprep.subr.bf16.mxu0 %v1162
        %1651 = vmatpush1.bf16.msra.mxu0 %v1161
        %1652 = vmatprep.subr.bf16.mxu0 %v1146
        %1653 = vmatpush1.bf16.msra.mxu0 %v1145
        %1654 = vmatprep.subr.bf16.mxu0 %v1130
        %1655 = vmatpush1.bf16.msra.mxu0 %v1129
        %1656 = vmatprep.subr.bf16.mxu0 %v1114
        %1657 = vmatpush1.bf16.msra.mxu0 %v1113
        %1658 = vmatprep.subr.bf16.mxu0 %v1098
        %1659 = vmatpush1.bf16.msra.mxu0 %v1097
        %1660 = vmatprep.subr.bf16.mxu0 %v1082
        %1661 = vmatpush1.bf16.msra.mxu0 %v1081
        %1662 = vmatprep.subr.bf16.mxu0 0
        %1663 = vmatpush2.bf16.msra.mxu0 0
        %1664 = vmatprep.subr.bf16.mxu0 0
        %1665 = vmatpush2.bf16.msra.mxu0 0
        %1666 = vmatprep.subr.bf16.mxu0 0
        %1667 = vmatpush2.bf16.msra.mxu0 0
        %1668 = vmatprep.subr.bf16.mxu0 0
        %1669 = vmatpush2.bf16.msra.mxu0 0
        %1670 = vmatprep.subr.bf16.mxu0 0
        %1671 = vmatpush2.bf16.msra.mxu0 0
        %1672 = vmatprep.subr.bf16.mxu0 0
        %1673 = vmatpush2.bf16.msra.mxu0 0
        %1674 = vmatprep.subr.bf16.mxu0 0
        %1675 = vmatpush2.bf16.msra.mxu0 0
        %1676 = vmatprep.subr.bf16.mxu0 %v1210
        %1677 = vmatpush2.bf16.msra.mxu0 %v1209
        %1678 = vmatprep.mubr.bf16.mxu0 %v1357
        %1679 = vmatmul.mubr.bf16.gmra.mxu0 %v632
        %v1680 = vpop.f32.mrf.mxu0
        %v1681 = vadd.f32 0.0, %v1680
        %v1682 = vpop.f32.mrf.mxu0
        %v1683 = vadd.f32 0.0, %v1682
        %v1684 = vpop.f32.mrf.mxu0
        %v1685 = vpop.f32.mrf.mxu0
        %1686 = vdwg.mxu0
        %v1687 = vld [vmem:[%s2] sm:$0xf]
        %1689 = vset.pattern.permute.xlu0 0
        %1690 = vperm.xlu0 %1689, %v1687
        %v1691 = vpop.permute.xlu0 %1690
        %v1693 = vmul.f32 %v1394, %v1691
        %v1694 = vmul.f32 %v1396, %v1691
        %v1695 = vmul.f32 %v1435, %v1691
        %v1696 = vmul.f32 %v1437, %v1691
        %v1697 = vmul.f32 %v1476, %v1691
        %v1698 = vmul.f32 %v1478, %v1691
        %v1699 = vmul.f32 %v1517, %v1691
        %v1700 = vmul.f32 %v1519, %v1691
        %v1701 = vmul.f32 %v1558, %v1691
        %v1702 = vmul.f32 %v1560, %v1691
        %v1703 = vmul.f32 %v1599, %v1691
        %v1704 = vmul.f32 %v1601, %v1691
        %v1705 = vmul.f32 %v1640, %v1691
        %v1706 = vmul.f32 %v1642, %v1691
        %v1707 = vmul.f32 %v1681, %v1691
        %v1708 = vmul.f32 %v1683, %v1691
        %s1709 = scalar_lea.vmem %s2, 4
        %v1710 = vld [vmem:[%s1709] sm:$0xf]
        %1712 = vset.pattern.permute.xlu0 0
        %1713 = vperm.xlu0 %1712, %v1710
        %v1714 = vpop.permute.xlu0 %1713
        %v1716 = vadd.f32 %v1693, %v1714
        %v1717 = vadd.f32 %v1694, %v1714
        %v1718 = vadd.f32 %v1695, %v1714
        %v1719 = vadd.f32 %v1696, %v1714
        %v1720 = vadd.f32 %v1697, %v1714
        %v1721 = vadd.f32 %v1698, %v1714
        %v1722 = vadd.f32 %v1699, %v1714
        %v1723 = vadd.f32 %v1700, %v1714
        %v1724 = vadd.f32 %v1701, %v1714
        %v1725 = vadd.f32 %v1702, %v1714
        %v1726 = vadd.f32 %v1703, %v1714
        %v1727 = vadd.f32 %v1704, %v1714
        %v1728 = vadd.f32 %v1705, %v1714
        %v1729 = vadd.f32 %v1706, %v1714
        %v1730 = vadd.f32 %v1707, %v1714
        %v1731 = vadd.f32 %v1708, %v1714
        %v1732 = vsub.f32 0.0, %v1716
        %v1733 = vsub.f32 0.0, %v1717
        %v1734 = vsub.f32 0.0, %v1718
        %v1735 = vsub.f32 0.0, %v1719
        %v1736 = vsub.f32 0.0, %v1720
        %v1737 = vsub.f32 0.0, %v1721
        %v1738 = vsub.f32 0.0, %v1722
        %v1739 = vsub.f32 0.0, %v1723
        %v1740 = vsub.f32 0.0, %v1724
        %v1741 = vsub.f32 0.0, %v1725
        %v1742 = vsub.f32 0.0, %v1726
        %v1743 = vsub.f32 0.0, %v1727
        %v1744 = vsub.f32 0.0, %v1728
        %v1745 = vsub.f32 0.0, %v1729
        %v1746 = vsub.f32 0.0, %v1730
        %v1747 = vsub.f32 0.0, %v1731
        %v1748 = vmul.f32 %v1732, 1.442695
        %v1749 = vpow.pop %v1748
        %v1750 = vmul.f32 %v1733, 1.442695
        %v1751 = vpow.pop %v1750
        %v1752 = vmul.f32 %v1734, 1.442695
        %v1753 = vpow.pop %v1752
        %v1754 = vmul.f32 %v1735, 1.442695
        %v1755 = vpow.pop %v1754
        %v1756 = vmul.f32 %v1736, 1.442695
        %v1757 = vpow.pop %v1756
        %v1758 = vmul.f32 %v1737, 1.442695
        %v1759 = vpow.pop %v1758
        %v1760 = vmul.f32 %v1738, 1.442695
        %v1761 = vpow.pop %v1760
        %v1762 = vmul.f32 %v1739, 1.442695
        %v1763 = vpow.pop %v1762
        %v1764 = vmul.f32 %v1740, 1.442695
        %v1765 = vpow.pop %v1764
        %v1766 = vmul.f32 %v1741, 1.442695
        %v1767 = vpow.pop %v1766
        %v1768 = vmul.f32 %v1742, 1.442695
        %v1769 = vpow.pop %v1768
        %v1770 = vmul.f32 %v1743, 1.442695
        %v1771 = vpow.pop %v1770
        %v1772 = vmul.f32 %v1744, 1.442695
        %v1773 = vpow.pop %v1772
        %v1774 = vmul.f32 %v1745, 1.442695
        %v1775 = vpow.pop %v1774
        %v1776 = vmul.f32 %v1746, 1.442695
        %v1777 = vpow.pop %v1776
        %v1778 = vmul.f32 %v1747, 1.442695
        %v1779 = vpow.pop %v1778
        %v1780 = vadd.f32 %v1749, 1.0
        %v1781 = vadd.f32 %v1751, 1.0
        %v1782 = vadd.f32 %v1753, 1.0
        %v1783 = vadd.f32 %v1755, 1.0
        %v1784 = vadd.f32 %v1757, 1.0
        %v1785 = vadd.f32 %v1759, 1.0
        %v1786 = vadd.f32 %v1761, 1.0
        %v1787 = vadd.f32 %v1763, 1.0
        %v1788 = vadd.f32 %v1765, 1.0
        %v1789 = vadd.f32 %v1767, 1.0
        %v1790 = vadd.f32 %v1769, 1.0
        %v1791 = vadd.f32 %v1771, 1.0
        %v1792 = vadd.f32 %v1773, 1.0
        %v1793 = vadd.f32 %v1775, 1.0
        %v1794 = vadd.f32 %v1777, 1.0
        %v1795 = vadd.f32 %v1779, 1.0
        %v1796 = vrcp.pop %v1780
        %v1797 = vrcp.pop %v1781
        %v1798 = vrcp.pop %v1782
        %v1799 = vrcp.pop %v1783
        %v1800 = vrcp.pop %v1784
        %v1801 = vrcp.pop %v1785
        %v1802 = vrcp.pop %v1786
        %v1803 = vrcp.pop %v1787
        %v1804 = vrcp.pop %v1788
        %v1805 = vrcp.pop %v1789
        %v1806 = vrcp.pop %v1790
        %v1807 = vrcp.pop %v1791
        %v1808 = vrcp.pop %v1792
        %v1809 = vrcp.pop %v1793
        %v1810 = vrcp.pop %v1794
        %v1811 = vrcp.pop %v1795
        %v1812 = vpack.c.bf16 %v1796, %v1796
        %v1813 = vpack.c.bf16 %v1797, %v1797
        %v1814 = vpack.c.bf16 %v1798, %v1798
        %v1815 = vpack.c.bf16 %v1799, %v1799
        %v1816 = vpack.c.bf16 %v1800, %v1800
        %v1817 = vpack.c.bf16 %v1801, %v1801
        %v1818 = vpack.c.bf16 %v1802, %v1802
        %v1819 = vpack.c.bf16 %v1803, %v1803
        %v1820 = vpack.c.bf16 %v1804, %v1804
        %v1821 = vpack.c.bf16 %v1805, %v1805
        %v1822 = vpack.c.bf16 %v1806, %v1806
        %v1823 = vpack.c.bf16 %v1807, %v1807
        %v1824 = vpack.c.bf16 %v1808, %v1808
        %v1825 = vpack.c.bf16 %v1809, %v1809
        %v1826 = vpack.c.bf16 %v1810, %v1810
        %v1827 = vpack.c.bf16 %v1811, %v1811
        %v1844 = vcombine.low %v1812, %v1813
        %v1845 = vcombine.low %v1814, %v1815
        %v1847 = vunpack.c.l.s4 1983009808
        %v1848 = vunpack.c.0.s8 %v1847
        %v1849 = vlaneseq
        %v1850 = vshrl.u32 %v1849, 7
        %v1851 = vsub.s32 %v1848, %v1850
        %v1852 = vrot.slane %v1844, %v1851
        %v1854 = vunpack.c.l.s4 1983009808
        %v1855 = vunpack.c.0.s8 %v1854
        %v1856 = vlaneseq
        %v1857 = vshrl.u32 %v1856, 7
        %v1858 = vsub.s32 %v1855, %v1857
        %v1859 = vrot.slane %v1845, %v1858
        %v1860 = vcombine.low %v1852, %v1859
        %v1861 = vcombine.low %v1816, %v1817
        %v1862 = vcombine.low %v1818, %v1819
        %v1864 = vunpack.c.l.s4 1983009808
        %v1865 = vunpack.c.0.s8 %v1864
        %v1866 = vlaneseq
        %v1867 = vshrl.u32 %v1866, 7
        %v1868 = vsub.s32 %v1865, %v1867
        %v1869 = vrot.slane %v1861, %v1868
        %v1871 = vunpack.c.l.s4 1983009808
        %v1872 = vunpack.c.0.s8 %v1871
        %v1873 = vlaneseq
        %v1874 = vshrl.u32 %v1873, 7
        %v1875 = vsub.s32 %v1872, %v1874
        %v1876 = vrot.slane %v1862, %v1875
        %v1877 = vcombine.low %v1869, %v1876
        %v1878 = vcombine.low %v1820, %v1821
        %v1879 = vcombine.low %v1822, %v1823
        %v1881 = vunpack.c.l.s4 1983009808
        %v1882 = vunpack.c.0.s8 %v1881
        %v1883 = vlaneseq
        %v1884 = vshrl.u32 %v1883, 7
        %v1885 = vsub.s32 %v1882, %v1884
        %v1886 = vrot.slane %v1878, %v1885
        %v1888 = vunpack.c.l.s4 1983009808
        %v1889 = vunpack.c.0.s8 %v1888
        %v1890 = vlaneseq
        %v1891 = vshrl.u32 %v1890, 7
        %v1892 = vsub.s32 %v1889, %v1891
        %v1893 = vrot.slane %v1879, %v1892
        %v1894 = vcombine.low %v1886, %v1893
        %v1895 = vcombine.low %v1824, %v1825
        %v1896 = vcombine.low %v1826, %v1827
        %v1898 = vunpack.c.l.s4 1983009808
        %v1899 = vunpack.c.0.s8 %v1898
        %v1900 = vlaneseq
        %v1901 = vshrl.u32 %v1900, 7
        %v1902 = vsub.s32 %v1899, %v1901
        %v1903 = vrot.slane %v1895, %v1902
        %v1905 = vunpack.c.l.s4 1983009808
        %v1906 = vunpack.c.0.s8 %v1905
        %v1907 = vlaneseq
        %v1908 = vshrl.u32 %v1907, 7
        %v1909 = vsub.s32 %v1906, %v1908
        %v1910 = vrot.slane %v1896, %v1909
        %v1911 = vcombine.low %v1903, %v1910
        %1916 = vst [vmem:[%s477] sm:$0xff] %v1860
        %1917 = vst [vmem:[%s477 + $0x8] sm:$0xff] %v1877
        %1918 = vst [vmem:[%s477 + $0x10] sm:$0xff] %v1894
        %1919 = vst [vmem:[%s477 + $0x18] sm:$0xff] %v1911
        %s1920 = smul.u32 16, %s14
        %p1921 = scmp.lt.s32.totalorder %s1920, 63
        %s1922 = scalar_select %p1921, %s1920, 63
        %s1923 = smul.addr %s1922, 2
        %s1924 = scalar_lea.vmem %s3, %s1923
        // Predicated region
        $region56: #{ds_discriminator_forward.12} parent=50 // pred_check
          %p1925 = pneg %p100
        $region57: #{ds_discriminator_forward.12} parent=50 // pred_check_branch
          %1927 = sbr.rel (%p1925) target = $region59
        $region58: #{ds_discriminator_forward.12} parent=50 // pred_region
          %s1928 = smul.u32 16, %s14
        $region59: #{ds_discriminator_forward.12} parent=50 // pred_fallthru
          _
      $region51: #{ds_discriminator_forward.12} parent=5 // pred_fallthru
        _
      %p1929 = scmp.le.s32.totalorder 2, %s9
      // Predicated region
      $region60: #{ds_discriminator_forward.12} parent=5 // pred_check
        %p1930 = pneg %p1929
      $region61: #{ds_discriminator_forward.12} parent=5 // pred_check_branch
        %1932 = sbr.rel (%p1930) target = $region63
      $region62: #{ds_discriminator_forward.12} parent=5 // pred_region
        %s1933 = ssub.s32 %s9, 2
        // Predicated region
        $region64: #{ds_discriminator_forward.12} parent=62 // pred_check
          %p1934 = pneg %p106
        $region65: #{ds_discriminator_forward.12} parent=62 // pred_check_branch
          %1936 = sbr.rel (%p1934) target = $region67
        $region66: #{ds_discriminator_forward.12} parent=62 // pred_region
          %s1937 = smul.u32 16, %s15
          %p1938 = scmp.lt.s32.totalorder %s1937, 63
          %s1939 = scalar_select %p1938, %s1937, 63
          %s1940 = smul.addr %s1939, 2
          %s1941 = scalar_lea.vmem %s3, %s1940
        $region67: #{ds_discriminator_forward.12} parent=62 // pred_fallthru
          _
      $region63: #{ds_discriminator_forward.12} parent=5 // pred_fallthru
        _
    $region6: #{ds_discriminator_forward.12} parent=1 // loop_footer
      %s13 = sadd.s32 1, %s9
    $region7: #{ds_discriminator_forward.12} parent=1 // loop_footer_branch
      %8 = sbr.rel target = $region3
    $region8: #{ds_discriminator_forward.12} parent=1 // loop_exit
      _

// kernel: ds_discriminator_forward.13
$region0: #{ds_discriminator_forward.13}
  #allocation0 [shape = 'u32[]', space=smem, size = 0x4, offset = 0x4, fixed_abs, tag = 'smem constant byte address 0x4 - core index']
  #allocation1 [shape = 'u32[144,128]{1,0:T(1,128)}', space=vmem, size = 0x12000, scoped, tag = 'internal scratch']
  %s0 = inlined_call_operand.vmem [shape: bf16[4,32], index: 0, kind: input, shape index: {}]
  %s1 = inlined_call_operand.vmem [shape: bf16[32,8192], index: 1, kind: input, shape index: {}]
  %s2 = inlined_call_operand.vmem [shape: f32[2,4,1], index: 2, kind: input, shape index: {}]
  %s3 = inlined_call_operand.vmem [shape: bf16[4,8192], index: 3, kind: output, shape index: {}]
  %s4 = sld [smem:[#allocation0]]
  $region68: #{ds_discriminator_forward.13} parent=0
    _
  %s6 = ssub.s32 1, %s4
  %s7 = scalar_select 0, %s6, %s4
  $region1: #{ds_discriminator_forward.13} parent=0
    #allocation2 [shape = 'u8[262144]{0}', space=vmem, size = 0x40000, scoped, tag = 'input window, operand 1']
    loop: start=0, step=1, limit=6
    $region2: #{ds_discriminator_forward.13} parent=1 // loop_pre_header
      _
    $region3: #{ds_discriminator_forward.13} parent=1 // loop_header
      %s9 = sphi 0, %s13
      %p10 = scmp.ge.s32.totalorder %s9, 6
      %s17 = sphi 0, %s17
      %s19 = sphi 0, %s17
      %s20 = sphi 0, %s19
      %s34 = sphi 0, %s20
      %s40 = sphi 0, %s42
      %s43 = sphi 0, %s40
      %s44 = sphi 0, %s43
      %s60 = sphi 0, %s44
      %s64 = sphi 0, %s64
      %s66 = sphi 0, %s64
      %s67 = sphi 0, %s66
      %s81 = sphi 0, %s67
      %s87 = sphi 0, %s89
      %s90 = sphi 0, %s87
      %s91 = sphi 0, %s90
      %s107 = sphi 0, %s91
    $region4: #{ds_discriminator_forward.13} parent=1 // loop_header_branch
      %12 = sbr.rel (%p10) target = $region8
    $region5: #{ds_discriminator_forward.13} parent=1 // loop_body
      %s14 = ssub.s32 %s9, 1
      %s15 = ssub.s32 %s9, 2
      %s16 = sadd.s32 %s9, 1
      %s18 = sadd.s32 %s17, 1
      %p21 = scmp.eq.s32.totalorder %s9, 3
      %p22 = scmp.ne.s32.totalorder %s17, %s19
      %p23 = scmp.eq.s32.totalorder %s9, 0
      %p24 = por %p22, %p23
      %p25 = scmp.ne.s32.totalorder %s17, %s19
      %p26 = scmp.eq.s32.totalorder %s14, 3
      %p27 = por %p25, %p26
      %p28 = scmp.ne.s32.totalorder %s19, %s20
      %p29 = scmp.eq.s32.totalorder %s14, 0
      %p30 = por %p28, %p29
      %p31 = scmp.ne.s32.totalorder %s19, %s20
      %p32 = scmp.eq.s32.totalorder %s15, 3
      %p33 = por %p31, %p32
      %p35 = scmp.ne.s32.totalorder %s20, %s34
      %p36 = scmp.eq.s32.totalorder %s15, 0
      %p37 = por %p35, %p36
      %s38 = ssub.s32 %s9, %s16
      %p39 = scmp.eq.s32.totalorder %s38, 0
      %s41 = sadd.s32 %s40, 1
      %s42 = scalar_select %p39, %s40, %s41
      %p45 = pneg %p39
      %p46 = scmp.eq.s32.totalorder %s9, 3
      %p47 = por %p45, %p46
      %p48 = scmp.ne.s32.totalorder %s40, %s43
      %p49 = scmp.eq.s32.totalorder %s9, 0
      %p50 = por %p48, %p49
      %p51 = scmp.ne.s32.totalorder %s40, %s43
      %p52 = scmp.eq.s32.totalorder %s14, 3
      %p53 = por %p51, %p52
      %p54 = scmp.ne.s32.totalorder %s43, %s44
      %p55 = scmp.eq.s32.totalorder %s14, 0
      %p56 = por %p54, %p55
      %p57 = scmp.ne.s32.totalorder %s43, %s44
      %p58 = scmp.eq.s32.totalorder %s15, 3
      %p59 = por %p57, %p58
      %p61 = scmp.ne.s32.totalorder %s44, %s60
      %p62 = scmp.eq.s32.totalorder %s15, 0
      %p63 = por %p61, %p62
      %s65 = sadd.s32 %s64, 1
      %p68 = scmp.eq.s32.totalorder %s9, 3
      %p69 = scmp.ne.s32.totalorder %s64, %s66
      %p70 = scmp.eq.s32.totalorder %s9, 0
      %p71 = por %p69, %p70
      %p72 = scmp.ne.s32.totalorder %s64, %s66
      %p73 = scmp.eq.s32.totalorder %s14, 3
      %p74 = por %p72, %p73
      %p75 = scmp.ne.s32.totalorder %s66, %s67
      %p76 = scmp.eq.s32.totalorder %s14, 0
      %p77 = por %p75, %p76
      %p78 = scmp.ne.s32.totalorder %s66, %s67
      %p79 = scmp.eq.s32.totalorder %s15, 3
      %p80 = por %p78, %p79
      %p82 = scmp.ne.s32.totalorder %s67, %s81
      %p83 = scmp.eq.s32.totalorder %s15, 0
      %p84 = por %p82, %p83
      %s85 = ssub.s32 %s9, %s16
      %p86 = scmp.eq.s32.totalorder %s85, 0
      %s88 = sadd.s32 %s87, 1
      %s89 = scalar_select %p86, %s87, %s88
      %p92 = pneg %p86
      %p93 = scmp.eq.s32.totalorder %s9, 3
      %p94 = por %p92, %p93
      %p95 = scmp.ne.s32.totalorder %s87, %s90
      %p96 = scmp.eq.s32.totalorder %s9, 0
      %p97 = por %p95, %p96
      %p98 = scmp.ne.s32.totalorder %s87, %s90
      %p99 = scmp.eq.s32.totalorder %s14, 3
      %p100 = por %p98, %p99
      %p101 = scmp.ne.s32.totalorder %s90, %s91
      %p102 = scmp.eq.s32.totalorder %s14, 0
      %p103 = por %p101, %p102
      %p104 = scmp.ne.s32.totalorder %s90, %s91
      %p105 = scmp.eq.s32.totalorder %s15, 3
      %p106 = por %p104, %p105
      %p108 = scmp.ne.s32.totalorder %s91, %s107
      %p109 = scmp.eq.s32.totalorder %s15, 0
      %p110 = por %p108, %p109
      %p111 = scmp.le.s32.totalorder 1, %s9
      %p112 = scmp.lt.s32.totalorder %s9, 5
      %p113 = pnand %p111, %p112
      %p114 = pneg %p113
      // Predicated region
      $region9: #{ds_discriminator_forward.13} parent=5 // pred_check
        _
      $region10: #{ds_discriminator_forward.13} parent=5 // pred_check_branch
        %116 = sbr.rel (%p113) target = $region12
      $region11: #{ds_discriminator_forward.13} parent=5 // pred_region
        %s117 = ssub.s32 %s9, 1
        // Predicated region
        $region13: #{ds_discriminator_forward.13} parent=11 // pred_check
          %p118 = pneg %p30
        $region14: #{ds_discriminator_forward.13} parent=11 // pred_check_branch
          %120 = sbr.rel (%p118) target = $region16
        $region15: #{ds_discriminator_forward.13} parent=11 // pred_region
          _
        $region16: #{ds_discriminator_forward.13} parent=11 // pred_fallthru
          _
        // Predicated region
        $region17: #{ds_discriminator_forward.13} parent=11 // pred_check
          %p121 = pneg %p77
        $region18: #{ds_discriminator_forward.13} parent=11 // pred_check_branch
          %123 = sbr.rel (%p121) target = $region20
        $region19: #{ds_discriminator_forward.13} parent=11 // pred_region
          _
        $region20: #{ds_discriminator_forward.13} parent=11 // pred_fallthru
          _
      $region12: #{ds_discriminator_forward.13} parent=5 // pred_fallthru
        _
      %p124 = scmp.lt.s32.totalorder %s9, 4
      // Predicated region
      $region21: #{ds_discriminator_forward.13} parent=5 // pred_check
        %p125 = pneg %p124
      $region22: #{ds_discriminator_forward.13} parent=5 // pred_check_branch
        %127 = sbr.rel (%p125) target = $region24
      $region23: #{ds_discriminator_forward.13} parent=5 // pred_region
        // Predicated region
        $region25: #{ds_discriminator_forward.13} parent=23 // pred_check
          %p128 = pneg %p50
        $region26: #{ds_discriminator_forward.13} parent=23 // pred_check_branch
          %130 = sbr.rel (%p128) target = $region28
        $region27: #{ds_discriminator_forward.13} parent=23 // pred_region
          %s131 = sand.u32 %s40, 1
          %s132 = sand.u32 %s40, 1
          %s133 = smul.addr %s132, 256
          %s134 = scalar_lea.vmem [#allocation2], %s133
          %s135 = smul.u32 16, %s9
          %s136 = smul.addr %s135, 4
          %s137 = scalar_lea.vmem %s1, %s136
          // Predicated region
          $region29: #{ds_discriminator_forward.13} parent=27 // pred_check
            _
          $region30: #{ds_discriminator_forward.13} parent=27 // pred_check_branch
            %139 = sbr.rel (0) target = $region32
          $region31: #{ds_discriminator_forward.13} parent=27 // pred_region
            // Predicated region
            $region33: #{ds_discriminator_forward.13} parent=31 // pred_check
              _
            $region34: #{ds_discriminator_forward.13} parent=31 // pred_check_branch
              %141 = sbr.rel (0) target = $region36
            $region35: #{ds_discriminator_forward.13} parent=31 // pred_region
              loop: start=0, step=1, limit=1
              $region37: #{ds_discriminator_forward.13} parent=35 // loop_pre_header
                _
              $region38: #{ds_discriminator_forward.13} parent=35 // loop_header
                %s143 = sphi 0, %s147
                %p144 = scmp.ge.s32.totalorder %s143, 1
                %s148 = sphi %s137, %s137
                %s149 = sphi %s134, %s134
              $region39: #{ds_discriminator_forward.13} parent=35 // loop_header_branch
                %146 = sbr.rel (%p144) target = $region43
              $region40: #{ds_discriminator_forward.13} parent=35 // loop_body
                %v150 = vld [vmem:[%s148] sm:$0xff]
                %151 = vst [vmem:[%s149] sm:$0xff] %v150
                %v152 = vld [vmem:[%s148 + $0x8] sm:$0xff]
                %153 = vst [vmem:[%s149 + $0x8] sm:$0xff] %v152
                %v154 = vld [vmem:[%s148 + $0x10] sm:$0xff]
                %155 = vst [vmem:[%s149 + $0x10] sm:$0xff] %v154
                %v156 = vld [vmem:[%s148 + $0x18] sm:$0xff]
                %157 = vst [vmem:[%s149 + $0x18] sm:$0xff] %v156
                %v158 = vld [vmem:[%s148 + $0x20] sm:$0xff]
                %159 = vst [vmem:[%s149 + $0x20] sm:$0xff] %v158
                %v160 = vld [vmem:[%s148 + $0x28] sm:$0xff]
                %161 = vst [vmem:[%s149 + $0x28] sm:$0xff] %v160
                %v162 = vld [vmem:[%s148 + $0x30] sm:$0xff]
                %163 = vst [vmem:[%s149 + $0x30] sm:$0xff] %v162
                %v164 = vld [vmem:[%s148 + $0x38] sm:$0xff]
                %165 = vst [vmem:[%s149 + $0x38] sm:$0xff] %v164
                %v166 = vld [vmem:[%s148 + $0x100] sm:$0xff]
                %167 = vst [vmem:[%s149 + $0x40] sm:$0xff] %v166
                %v168 = vld [vmem:[%s148 + $0x108] sm:$0xff]
                %169 = vst [vmem:[%s149 + $0x48] sm:$0xff] %v168
                %v170 = vld [vmem:[%s148 + $0x110] sm:$0xff]
                %171 = vst [vmem:[%s149 + $0x50] sm:$0xff] %v170
                %v172 = vld [vmem:[%s148 + $0x118] sm:$0xff]
                %173 = vst [vmem:[%s149 + $0x58] sm:$0xff] %v172
                %v174 = vld [vmem:[%s148 + $0x120] sm:$0xff]
                %175 = vst [vmem:[%s149 + $0x60] sm:$0xff] %v174
                %v176 = vld [vmem:[%s148 + $0x128] sm:$0xff]
                %177 = vst [vmem:[%s149 + $0x68] sm:$0xff] %v176
                %v178 = vld [vmem:[%s148 + $0x130] sm:$0xff]
                %179 = vst [vmem:[%s149 + $0x70] sm:$0xff] %v178
                %v180 = vld [vmem:[%s148 + $0x138] sm:$0xff]
                %181 = vst [vmem:[%s149 + $0x78] sm:$0xff] %v180
                %v182 = vld [vmem:[%s148 + $0x200] sm:$0xff]
                %183 = vst [vmem:[%s149 + $0x80] sm:$0xff] %v182
                %v184 = vld [vmem:[%s148 + $0x208] sm:$0xff]
                %185 = vst [vmem:[%s149 + $0x88] sm:$0xff] %v184
                %v186 = vld [vmem:[%s148 + $0x210] sm:$0xff]
                %187 = vst [vmem:[%s149 + $0x90] sm:$0xff] %v186
                %v188 = vld [vmem:[%s148 + $0x218] sm:$0xff]
                %189 = vst [vmem:[%s149 + $0x98] sm:$0xff] %v188
                %v190 = vld [vmem:[%s148 + $0x220] sm:$0xff]
                %191 = vst [vmem:[%s149 + $0xa0] sm:$0xff] %v190
                %v192 = vld [vmem:[%s148 + $0x228] sm:$0xff]
                %193 = vst [vmem:[%s149 + $0xa8] sm:$0xff] %v192
                %v194 = vld [vmem:[%s148 + $0x230] sm:$0xff]
                %195 = vst [vmem:[%s149 + $0xb0] sm:$0xff] %v194
                %v196 = vld [vmem:[%s148 + $0x238] sm:$0xff]
                %197 = vst [vmem:[%s149 + $0xb8] sm:$0xff] %v196
                %v198 = vld [vmem:[%s148 + $0x300] sm:$0xff]
                %199 = vst [vmem:[%s149 + $0xc0] sm:$0xff] %v198
                %v200 = vld [vmem:[%s148 + $0x308] sm:$0xff]
                %201 = vst [vmem:[%s149 + $0xc8] sm:$0xff] %v200
                %v202 = vld [vmem:[%s148 + $0x310] sm:$0xff]
                %203 = vst [vmem:[%s149 + $0xd0] sm:$0xff] %v202
                %v204 = vld [vmem:[%s148 + $0x318] sm:$0xff]
                %205 = vst [vmem:[%s149 + $0xd8] sm:$0xff] %v204
                %v206 = vld [vmem:[%s148 + $0x320] sm:$0xff]
                %207 = vst [vmem:[%s149 + $0xe0] sm:$0xff] %v206
                %v208 = vld [vmem:[%s148 + $0x328] sm:$0xff]
                %209 = vst [vmem:[%s149 + $0xe8] sm:$0xff] %v208
                %v210 = vld [vmem:[%s148 + $0x330] sm:$0xff]
                %211 = vst [vmem:[%s149 + $0xf0] sm:$0xff] %v210
                %v212 = vld [vmem:[%s148 + $0x338] sm:$0xff]
                %213 = vst [vmem:[%s149 + $0xf8] sm:$0xff] %v212
              $region41: #{ds_discriminator_forward.13} parent=35 // loop_footer
                %s147 = sadd.s32 1, %s143
              $region42: #{ds_discriminator_forward.13} parent=35 // loop_footer_branch
                %142 = sbr.rel target = $region38
              $region43: #{ds_discriminator_forward.13} parent=35 // loop_exit
                _
            $region36: #{ds_discriminator_forward.13} parent=31 // pred_fallthru
              _
            // Predicated region
            $region44: #{ds_discriminator_forward.13} parent=31 // pred_check
              _
            $region45: #{ds_discriminator_forward.13} parent=31 // pred_check_branch
              %215 = sbr.rel target = $region47
            $region46: #{ds_discriminator_forward.13} parent=31 // pred_region
              _
            $region47: #{ds_discriminator_forward.13} parent=31 // pred_fallthru
              _
          $region32: #{ds_discriminator_forward.13} parent=27 // pred_fallthru
            _
          %216 = vnop
        $region28: #{ds_discriminator_forward.13} parent=23 // pred_fallthru
          _
      $region24: #{ds_discriminator_forward.13} parent=5 // pred_fallthru
        _
      %p217 = scmp.le.s32.totalorder 1, %s9
      %p218 = scmp.lt.s32.totalorder %s9, 5
      %p219 = pnand %p217, %p218
      %p220 = pneg %p219
      // Predicated region
      $region48: #{ds_discriminator_forward.13} parent=5 // pred_check
        _
      $region49: #{ds_discriminator_forward.13} parent=5 // pred_check_branch
        %222 = sbr.rel (%p219) target = $region51
      $region50: #{ds_discriminator_forward.13} parent=5 // pred_region
        %s223 = ssub.s32 %s9, 1
        %s224 = sand.u32 %s43, 1
        %s225 = sand.u32 %s43, 1
        %s226 = smul.addr %s225, 256
        %s227 = scalar_lea.vmem [#allocation2], %s226
        // Predicated region
        $region52: #{ds_discriminator_forward.13} parent=50 // pred_check
          %p228 = pneg %p56
        $region53: #{ds_discriminator_forward.13} parent=50 // pred_check_branch
          %230 = sbr.rel (%p228) target = $region55
        $region54: #{ds_discriminator_forward.13} parent=50 // pred_region
          _
        $region55: #{ds_discriminator_forward.13} parent=50 // pred_fallthru
          _
        %p231 = pneg %p30
        %p232 = pneg %p27
        %s233 = sand.u32 %s43, 1
        %s234 = sand.u32 %s43, 1
        %s235 = smul.addr %s234, 256
        %s236 = scalar_lea.vmem [#allocation2], %s235
        %p237 = pneg %p56
        %p238 = pneg %p53
        %p239 = pneg %p77
        %p240 = pneg %p74
        %p241 = pneg %p103
        %p242 = pneg %p100
        %s243 = smul.u32 16, %s14
        %p244 = scmp.lt.s32.totalorder %s243, 63
        %s245 = scalar_select %p244, %s243, 63
        %s246 = smul.addr %s245, 2
        %s247 = scalar_lea.vmem %s3, %s246
        %s248 = smul.u32 16, %s14
        %s249 = smul.u32 16, %s14
        %p250 = scmp.lt.s32.totalorder %s249, 63
        %s251 = scalar_select %p250, %s249, 63
        %s252 = smul.addr %s251, 2
        %s253 = scalar_lea.vmem %s3, %s252
        %s254 = smul.u32 16, %s14
        %v256 = vld [vmem:[%s0] sm:$0x3]
        %v257 = vld [vmem:[%s227] sm:$0xff]
        %v258 = vld [vmem:[%s227 + $0x8] sm:$0xff]
        %v259 = vld [vmem:[%s227 + $0x10] sm:$0xff]
        %v260 = vld [vmem:[%s227 + $0x18] sm:$0xff]
        %v261 = vld [vmem:[%s227 + $0x20] sm:$0xff]
        %v262 = vld [vmem:[%s227 + $0x28] sm:$0xff]
        %v263 = vld [vmem:[%s227 + $0x30] sm:$0xff]
        %v264 = vld [vmem:[%s227 + $0x38] sm:$0xff]
        %v265 = vld [vmem:[%s227 + $0x40] sm:$0xff]
        %v266 = vld [vmem:[%s227 + $0x48] sm:$0xff]
        %v267 = vld [vmem:[%s227 + $0x50] sm:$0xff]
        %v268 = vld [vmem:[%s227 + $0x58] sm:$0xff]
        %v269 = vld [vmem:[%s227 + $0x60] sm:$0xff]
        %v270 = vld [vmem:[%s227 + $0x68] sm:$0xff]
        %v271 = vld [vmem:[%s227 + $0x70] sm:$0xff]
        %v272 = vld [vmem:[%s227 + $0x78] sm:$0xff]
        %v273 = vld [vmem:[%s227 + $0x80] sm:$0xff]
        %v274 = vld [vmem:[%s227 + $0x88] sm:$0xff]
        %v275 = vld [vmem:[%s227 + $0x90] sm:$0xff]
        %v276 = vld [vmem:[%s227 + $0x98] sm:$0xff]
        %v277 = vld [vmem:[%s227 + $0xa0] sm:$0xff]
        %v278 = vld [vmem:[%s227 + $0xa8] sm:$0xff]
        %v279 = vld [vmem:[%s227 + $0xb0] sm:$0xff]
        %v280 = vld [vmem:[%s227 + $0xb8] sm:$0xff]
        %v281 = vld [vmem:[%s227 + $0xc0] sm:$0xff]
        %v282 = vld [vmem:[%s227 + $0xc8] sm:$0xff]
        %v283 = vld [vmem:[%s227 + $0xd0] sm:$0xff]
        %v284 = vld [vmem:[%s227 + $0xd8] sm:$0xff]
        %v285 = vld [vmem:[%s227 + $0xe0] sm:$0xff]
        %v286 = vld [vmem:[%s227 + $0xe8] sm:$0xff]
        %v287 = vld [vmem:[%s227 + $0xf0] sm:$0xff]
        %v288 = vld [vmem:[%s227 + $0xf8] sm:$0xff]
        %v321 = vunpack.c.l.b16 %v257
        %v322 = vunpack.c.h.b16 %v257
        %v323 = vunpack.c.l.b16 %v258
        %v324 = vunpack.c.h.b16 %v258
        %v325 = vunpack.c.l.b16 %v259
        %v326 = vunpack.c.h.b16 %v259
        %v327 = vunpack.c.l.b16 %v260
        %v328 = vunpack.c.h.b16 %v260
        %v329 = vunpack.c.l.b16 %v261
        %v330 = vunpack.c.h.b16 %v261
        %v331 = vunpack.c.l.b16 %v262
        %v332 = vunpack.c.h.b16 %v262
        %v333 = vunpack.c.l.b16 %v263
        %v334 = vunpack.c.h.b16 %v263
        %v335 = vunpack.c.l.b16 %v264
        %v336 = vunpack.c.h.b16 %v264
        %v337 = vunpack.c.l.b16 %v265
        %v338 = vunpack.c.h.b16 %v265
        %v339 = vunpack.c.l.b16 %v266
        %v340 = vunpack.c.h.b16 %v266
        %v341 = vunpack.c.l.b16 %v267
        %v342 = vunpack.c.h.b16 %v267
        %v343 = vunpack.c.l.b16 %v268
        %v344 = vunpack.c.h.b16 %v268
        %v345 = vunpack.c.l.b16 %v269
        %v346 = vunpack.c.h.b16 %v269
        %v347 = vunpack.c.l.b16 %v270
        %v348 = vunpack.c.h.b16 %v270
        %v349 = vunpack.c.l.b16 %v271
        %v350 = vunpack.c.h.b16 %v271
        %v351 = vunpack.c.l.b16 %v272
        %v352 = vunpack.c.h.b16 %v272
        %v353 = vunpack.c.l.b16 %v273
        %v354 = vunpack.c.h.b16 %v273
        %v355 = vunpack.c.l.b16 %v274
        %v356 = vunpack.c.h.b16 %v274
        %v357 = vunpack.c.l.b16 %v275
        %v358 = vunpack.c.h.b16 %v275
        %v359 = vunpack.c.l.b16 %v276
        %v360 = vunpack.c.h.b16 %v276
        %v361 = vunpack.c.l.b16 %v277
        %v362 = vunpack.c.h.b16 %v277
        %v363 = vunpack.c.l.b16 %v278
        %v364 = vunpack.c.h.b16 %v278
        %v365 = vunpack.c.l.b16 %v279
        %v366 = vunpack.c.h.b16 %v279
        %v367 = vunpack.c.l.b16 %v280
        %v368 = vunpack.c.h.b16 %v280
        %v369 = vunpack.c.l.b16 %v281
        %v370 = vunpack.c.h.b16 %v281
        %v371 = vunpack.c.l.b16 %v282
        %v372 = vunpack.c.h.b16 %v282
        %v373 = vunpack.c.l.b16 %v283
        %v374 = vunpack.c.h.b16 %v283
        %v375 = vunpack.c.l.b16 %v284
        %v376 = vunpack.c.h.b16 %v284
        %v377 = vunpack.c.l.b16 %v285
        %v378 = vunpack.c.h.b16 %v285
        %v379 = vunpack.c.l.b16 %v286
        %v380 = vunpack.c.h.b16 %v286
        %v381 = vunpack.c.l.b16 %v287
        %v382 = vunpack.c.h.b16 %v287
        %v383 = vunpack.c.l.b16 %v288
        %v384 = vunpack.c.h.b16 %v288
        %v385 = vpack.c.b16 %v337, %v321
        %v386 = vpack.c.b16 %v338, %v322
        %v387 = vpack.c.b16 %v339, %v323
        %v388 = vpack.c.b16 %v340, %v324
        %v389 = vpack.c.b16 %v341, %v325
        %v390 = vpack.c.b16 %v342, %v326
        %v391 = vpack.c.b16 %v343, %v327
        %v392 = vpack.c.b16 %v344, %v328
        %v393 = vpack.c.b16 %v345, %v329
        %v394 = vpack.c.b16 %v346, %v330
        %v395 = vpack.c.b16 %v347, %v331
        %v396 = vpack.c.b16 %v348, %v332
        %v397 = vpack.c.b16 %v349, %v333
        %v398 = vpack.c.b16 %v350, %v334
        %v399 = vpack.c.b16 %v351, %v335
        %v400 = vpack.c.b16 %v352, %v336
        %v401 = vpack.c.b16 %v369, %v353
        %v402 = vpack.c.b16 %v370, %v354
        %v403 = vpack.c.b16 %v371, %v355
        %v404 = vpack.c.b16 %v372, %v356
        %v405 = vpack.c.b16 %v373, %v357
        %v406 = vpack.c.b16 %v374, %v358
        %v407 = vpack.c.b16 %v375, %v359
        %v408 = vpack.c.b16 %v376, %v360
        %v409 = vpack.c.b16 %v377, %v361
        %v410 = vpack.c.b16 %v378, %v362
        %v411 = vpack.c.b16 %v379, %v363
        %v412 = vpack.c.b16 %v380, %v364
        %v413 = vpack.c.b16 %v381, %v365
        %v414 = vpack.c.b16 %v382, %v366
        %v415 = vpack.c.b16 %v383, %v367
        %v416 = vpack.c.b16 %v384, %v368
        %vm449 = vcmask 261120
        %v451 = vsel %vm449, %v256, 0
        %453 = vmatprep.subr.bf16.mxu0 0
        %454 = vmatpush1.bf16.msra.mxu0 0
        %455 = vmatprep.subr.bf16.mxu0 0
        %456 = vmatpush1.bf16.msra.mxu0 0
        %457 = vmatprep.subr.bf16.mxu0 0
        %458 = vmatpush1.bf16.msra.mxu0 0
        %459 = vmatprep.subr.bf16.mxu0 0
        %460 = vmatpush1.bf16.msra.mxu0 0
        %461 = vmatprep.subr.bf16.mxu0 0
        %462 = vmatpush1.bf16.msra.mxu0 0
        %463 = vmatprep.subr.bf16.mxu0 0
        %464 = vmatpush1.bf16.msra.mxu0 0
        %465 = vmatprep.subr.bf16.mxu0 %v402
        %466 = vmatpush1.bf16.msra.mxu0 %v401
        %467 = vmatprep.subr.bf16.mxu0 %v386
        %468 = vmatpush1.bf16.msra.mxu0 %v385
        %469 = vmatprep.subr.bf16.mxu0 0
        %470 = vmatpush2.bf16.msra.mxu0 0
        %471 = vmatprep.subr.bf16.mxu0 0
        %472 = vmatpush2.bf16.msra.mxu0 0
        %473 = vmatprep.subr.bf16.mxu0 0
        %474 = vmatpush2.bf16.msra.mxu0 0
        %475 = vmatprep.subr.bf16.mxu0 0
        %476 = vmatpush2.bf16.msra.mxu0 0
        %477 = vmatprep.subr.bf16.mxu0 0
        %478 = vmatpush2.bf16.msra.mxu0 0
        %479 = vmatprep.subr.bf16.mxu0 0
        %480 = vmatpush2.bf16.msra.mxu0 0
        %481 = vmatprep.subr.bf16.mxu0 0
        %482 = vmatpush2.bf16.msra.mxu0 0
        %483 = vmatprep.subr.bf16.mxu0 0
        %484 = vmatpush2.bf16.msra.mxu0 0
        %485 = vmatprep.mubr.bf16.mxu0 0
        %486 = vmatmul.mubr.bf16.gmra.mxu0 %v451
        %v487 = vpop.f32.mrf.mxu0
        %v488 = vadd.f32 0.0, %v487
        %v489 = vpop.f32.mrf.mxu0
        %v490 = vadd.f32 0.0, %v489
        %v491 = vpop.f32.mrf.mxu0
        %v492 = vpop.f32.mrf.mxu0
        %493 = vdwg.mxu0
        %494 = vmatprep.subr.bf16.mxu0 0
        %495 = vmatpush1.bf16.msra.mxu0 0
        %496 = vmatprep.subr.bf16.mxu0 0
        %497 = vmatpush1.bf16.msra.mxu0 0
        %498 = vmatprep.subr.bf16.mxu0 0
        %499 = vmatpush1.bf16.msra.mxu0 0
        %500 = vmatprep.subr.bf16.mxu0 0
        %501 = vmatpush1.bf16.msra.mxu0 0
        %502 = vmatprep.subr.bf16.mxu0 0
        %503 = vmatpush1.bf16.msra.mxu0 0
        %504 = vmatprep.subr.bf16.mxu0 0
        %505 = vmatpush1.bf16.msra.mxu0 0
        %506 = vmatprep.subr.bf16.mxu0 %v404
        %507 = vmatpush1.bf16.msra.mxu0 %v403
        %508 = vmatprep.subr.bf16.mxu0 %v388
        %509 = vmatpush1.bf16.msra.mxu0 %v387
        %510 = vmatprep.subr.bf16.mxu0 0
        %511 = vmatpush2.bf16.msra.mxu0 0
        %512 = vmatprep.subr.bf16.mxu0 0
        %513 = vmatpush2.bf16.msra.mxu0 0
        %514 = vmatprep.subr.bf16.mxu0 0
        %515 = vmatpush2.bf16.msra.mxu0 0
        %516 = vmatprep.subr.bf16.mxu0 0
        %517 = vmatpush2.bf16.msra.mxu0 0
        %518 = vmatprep.subr.bf16.mxu0 0
        %519 = vmatpush2.bf16.msra.mxu0 0
        %520 = vmatprep.subr.bf16.mxu0 0
        %521 = vmatpush2.bf16.msra.mxu0 0
        %522 = vmatprep.subr.bf16.mxu0 0
        %523 = vmatpush2.bf16.msra.mxu0 0
        %524 = vmatprep.subr.bf16.mxu0 0
        %525 = vmatpush2.bf16.msra.mxu0 0
        %526 = vmatprep.mubr.bf16.mxu0 0
        %527 = vmatmul.mubr.bf16.gmra.mxu0 %v451
        %v528 = vpop.f32.mrf.mxu0
        %v529 = vadd.f32 0.0, %v528
        %v530 = vpop.f32.mrf.mxu0
        %v531 = vadd.f32 0.0, %v530
        %v532 = vpop.f32.mrf.mxu0
        %v533 = vpop.f32.mrf.mxu0
        %534 = vdwg.mxu0
        %535 = vmatprep.subr.bf16.mxu0 0
        %536 = vmatpush1.bf16.msra.mxu0 0
        %537 = vmatprep.subr.bf16.mxu0 0
        %538 = vmatpush1.bf16.msra.mxu0 0
        %539 = vmatprep.subr.bf16.mxu0 0
        %540 = vmatpush1.bf16.msra.mxu0 0
        %541 = vmatprep.subr.bf16.mxu0 0
        %542 = vmatpush1.bf16.msra.mxu0 0
        %543 = vmatprep.subr.bf16.mxu0 0
        %544 = vmatpush1.bf16.msra.mxu0 0
        %545 = vmatprep.subr.bf16.mxu0 0
        %546 = vmatpush1.bf16.msra.mxu0 0
        %547 = vmatprep.subr.bf16.mxu0 %v406
        %548 = vmatpush1.bf16.msra.mxu0 %v405
        %549 = vmatprep.subr.bf16.mxu0 %v390
        %550 = vmatpush1.bf16.msra.mxu0 %v389
        %551 = vmatprep.subr.bf16.mxu0 0
        %552 = vmatpush2.bf16.msra.mxu0 0
        %553 = vmatprep.subr.bf16.mxu0 0
        %554 = vmatpush2.bf16.msra.mxu0 0
        %555 = vmatprep.subr.bf16.mxu0 0
        %556 = vmatpush2.bf16.msra.mxu0 0
        %557 = vmatprep.subr.bf16.mxu0 0
        %558 = vmatpush2.bf16.msra.mxu0 0
        %559 = vmatprep.subr.bf16.mxu0 0
        %560 = vmatpush2.bf16.msra.mxu0 0
        %561 = vmatprep.subr.bf16.mxu0 0
        %562 = vmatpush2.bf16.msra.mxu0 0
        %563 = vmatprep.subr.bf16.mxu0 0
        %564 = vmatpush2.bf16.msra.mxu0 0
        %565 = vmatprep.subr.bf16.mxu0 0
        %566 = vmatpush2.bf16.msra.mxu0 0
        %567 = vmatprep.mubr.bf16.mxu0 0
        %568 = vmatmul.mubr.bf16.gmra.mxu0 %v451
        %v569 = vpop.f32.mrf.mxu0
        %v570 = vadd.f32 0.0, %v569
        %v571 = vpop.f32.mrf.mxu0
        %v572 = vadd.f32 0.0, %v571
        %v573 = vpop.f32.mrf.mxu0
        %v574 = vpop.f32.mrf.mxu0
        %575 = vdwg.mxu0
        %576 = vmatprep.subr.bf16.mxu0 0
        %577 = vmatpush1.bf16.msra.mxu0 0
        %578 = vmatprep.subr.bf16.mxu0 0
        %579 = vmatpush1.bf16.msra.mxu0 0
        %580 = vmatprep.subr.bf16.mxu0 0
        %581 = vmatpush1.bf16.msra.mxu0 0
        %582 = vmatprep.subr.bf16.mxu0 0
        %583 = vmatpush1.bf16.msra.mxu0 0
        %584 = vmatprep.subr.bf16.mxu0 0
        %585 = vmatpush1.bf16.msra.mxu0 0
        %586 = vmatprep.subr.bf16.mxu0 0
        %587 = vmatpush1.bf16.msra.mxu0 0
        %588 = vmatprep.subr.bf16.mxu0 %v408
        %589 = vmatpush1.bf16.msra.mxu0 %v407
        %590 = vmatprep.subr.bf16.mxu0 %v392
        %591 = vmatpush1.bf16.msra.mxu0 %v391
        %592 = vmatprep.subr.bf16.mxu0 0
        %593 = vmatpush2.bf16.msra.mxu0 0
        %594 = vmatprep.subr.bf16.mxu0 0
        %595 = vmatpush2.bf16.msra.mxu0 0
        %596 = vmatprep.subr.bf16.mxu0 0
        %597 = vmatpush2.bf16.msra.mxu0 0
        %598 = vmatprep.subr.bf16.mxu0 0
        %599 = vmatpush2.bf16.msra.mxu0 0
        %600 = vmatprep.subr.bf16.mxu0 0
        %601 = vmatpush2.bf16.msra.mxu0 0
        %602 = vmatprep.subr.bf16.mxu0 0
        %603 = vmatpush2.bf16.msra.mxu0 0
        %604 = vmatprep.subr.bf16.mxu0 0
        %605 = vmatpush2.bf16.msra.mxu0 0
        %606 = vmatprep.subr.bf16.mxu0 0
        %607 = vmatpush2.bf16.msra.mxu0 0
        %608 = vmatprep.mubr.bf16.mxu0 0
        %609 = vmatmul.mubr.bf16.gmra.mxu0 %v451
        %v610 = vpop.f32.mrf.mxu0
        %v611 = vadd.f32 0.0, %v610
        %v612 = vpop.f32.mrf.mxu0
        %v613 = vadd.f32 0.0, %v612
        %v614 = vpop.f32.mrf.mxu0
        %v615 = vpop.f32.mrf.mxu0
        %616 = vdwg.mxu0
        %617 = vmatprep.subr.bf16.mxu0 0
        %618 = vmatpush1.bf16.msra.mxu0 0
        %619 = vmatprep.subr.bf16.mxu0 0
        %620 = vmatpush1.bf16.msra.mxu0 0
        %621 = vmatprep.subr.bf16.mxu0 0
        %622 = vmatpush1.bf16.msra.mxu0 0
        %623 = vmatprep.subr.bf16.mxu0 0
        %624 = vmatpush1.bf16.msra.mxu0 0
        %625 = vmatprep.subr.bf16.mxu0 0
        %626 = vmatpush1.bf16.msra.mxu0 0
        %627 = vmatprep.subr.bf16.mxu0 0
        %628 = vmatpush1.bf16.msra.mxu0 0
        %629 = vmatprep.subr.bf16.mxu0 %v410
        %630 = vmatpush1.bf16.msra.mxu0 %v409
        %631 = vmatprep.subr.bf16.mxu0 %v394
        %632 = vmatpush1.bf16.msra.mxu0 %v393
        %633 = vmatprep.subr.bf16.mxu0 0
        %634 = vmatpush2.bf16.msra.mxu0 0
        %635 = vmatprep.subr.bf16.mxu0 0
        %636 = vmatpush2.bf16.msra.mxu0 0
        %637 = vmatprep.subr.bf16.mxu0 0
        %638 = vmatpush2.bf16.msra.mxu0 0
        %639 = vmatprep.subr.bf16.mxu0 0
        %640 = vmatpush2.bf16.msra.mxu0 0
        %641 = vmatprep.subr.bf16.mxu0 0
        %642 = vmatpush2.bf16.msra.mxu0 0
        %643 = vmatprep.subr.bf16.mxu0 0
        %644 = vmatpush2.bf16.msra.mxu0 0
        %645 = vmatprep.subr.bf16.mxu0 0
        %646 = vmatpush2.bf16.msra.mxu0 0
        %647 = vmatprep.subr.bf16.mxu0 0
        %648 = vmatpush2.bf16.msra.mxu0 0
        %649 = vmatprep.mubr.bf16.mxu0 0
        %650 = vmatmul.mubr.bf16.gmra.mxu0 %v451
        %v651 = vpop.f32.mrf.mxu0
        %v652 = vadd.f32 0.0, %v651
        %v653 = vpop.f32.mrf.mxu0
        %v654 = vadd.f32 0.0, %v653
        %v655 = vpop.f32.mrf.mxu0
        %v656 = vpop.f32.mrf.mxu0
        %657 = vdwg.mxu0
        %658 = vmatprep.subr.bf16.mxu0 0
        %659 = vmatpush1.bf16.msra.mxu0 0
        %660 = vmatprep.subr.bf16.mxu0 0
        %661 = vmatpush1.bf16.msra.mxu0 0
        %662 = vmatprep.subr.bf16.mxu0 0
        %663 = vmatpush1.bf16.msra.mxu0 0
        %664 = vmatprep.subr.bf16.mxu0 0
        %665 = vmatpush1.bf16.msra.mxu0 0
        %666 = vmatprep.subr.bf16.mxu0 0
        %667 = vmatpush1.bf16.msra.mxu0 0
        %668 = vmatprep.subr.bf16.mxu0 0
        %669 = vmatpush1.bf16.msra.mxu0 0
        %670 = vmatprep.subr.bf16.mxu0 %v412
        %671 = vmatpush1.bf16.msra.mxu0 %v411
        %672 = vmatprep.subr.bf16.mxu0 %v396
        %673 = vmatpush1.bf16.msra.mxu0 %v395
        %674 = vmatprep.subr.bf16.mxu0 0
        %675 = vmatpush2.bf16.msra.mxu0 0
        %676 = vmatprep.subr.bf16.mxu0 0
        %677 = vmatpush2.bf16.msra.mxu0 0
        %678 = vmatprep.subr.bf16.mxu0 0
        %679 = vmatpush2.bf16.msra.mxu0 0
        %680 = vmatprep.subr.bf16.mxu0 0
        %681 = vmatpush2.bf16.msra.mxu0 0
        %682 = vmatprep.subr.bf16.mxu0 0
        %683 = vmatpush2.bf16.msra.mxu0 0
        %684 = vmatprep.subr.bf16.mxu0 0
        %685 = vmatpush2.bf16.msra.mxu0 0
        %686 = vmatprep.subr.bf16.mxu0 0
        %687 = vmatpush2.bf16.msra.mxu0 0
        %688 = vmatprep.subr.bf16.mxu0 0
        %689 = vmatpush2.bf16.msra.mxu0 0
        %690 = vmatprep.mubr.bf16.mxu0 0
        %691 = vmatmul.mubr.bf16.gmra.mxu0 %v451
        %v692 = vpop.f32.mrf.mxu0
        %v693 = vadd.f32 0.0, %v692
        %v694 = vpop.f32.mrf.mxu0
        %v695 = vadd.f32 0.0, %v694
        %v696 = vpop.f32.mrf.mxu0
        %v697 = vpop.f32.mrf.mxu0
        %698 = vdwg.mxu0
        %699 = vmatprep.subr.bf16.mxu0 0
        %700 = vmatpush1.bf16.msra.mxu0 0
        %701 = vmatprep.subr.bf16.mxu0 0
        %702 = vmatpush1.bf16.msra.mxu0 0
        %703 = vmatprep.subr.bf16.mxu0 0
        %704 = vmatpush1.bf16.msra.mxu0 0
        %705 = vmatprep.subr.bf16.mxu0 0
        %706 = vmatpush1.bf16.msra.mxu0 0
        %707 = vmatprep.subr.bf16.mxu0 0
        %708 = vmatpush1.bf16.msra.mxu0 0
        %709 = vmatprep.subr.bf16.mxu0 0
        %710 = vmatpush1.bf16.msra.mxu0 0
        %711 = vmatprep.subr.bf16.mxu0 %v414
        %712 = vmatpush1.bf16.msra.mxu0 %v413
        %713 = vmatprep.subr.bf16.mxu0 %v398
        %714 = vmatpush1.bf16.msra.mxu0 %v397
        %715 = vmatprep.subr.bf16.mxu0 0
        %716 = vmatpush2.bf16.msra.mxu0 0
        %717 = vmatprep.subr.bf16.mxu0 0
        %718 = vmatpush2.bf16.msra.mxu0 0
        %719 = vmatprep.subr.bf16.mxu0 0
        %720 = vmatpush2.bf16.msra.mxu0 0
        %721 = vmatprep.subr.bf16.mxu0 0
        %722 = vmatpush2.bf16.msra.mxu0 0
        %723 = vmatprep.subr.bf16.mxu0 0
        %724 = vmatpush2.bf16.msra.mxu0 0
        %725 = vmatprep.subr.bf16.mxu0 0
        %726 = vmatpush2.bf16.msra.mxu0 0
        %727 = vmatprep.subr.bf16.mxu0 0
        %728 = vmatpush2.bf16.msra.mxu0 0
        %729 = vmatprep.subr.bf16.mxu0 0
        %730 = vmatpush2.bf16.msra.mxu0 0
        %731 = vmatprep.mubr.bf16.mxu0 0
        %732 = vmatmul.mubr.bf16.gmra.mxu0 %v451
        %v733 = vpop.f32.mrf.mxu0
        %v734 = vadd.f32 0.0, %v733
        %v735 = vpop.f32.mrf.mxu0
        %v736 = vadd.f32 0.0, %v735
        %v737 = vpop.f32.mrf.mxu0
        %v738 = vpop.f32.mrf.mxu0
        %739 = vdwg.mxu0
        %740 = vmatprep.subr.bf16.mxu0 0
        %741 = vmatpush1.bf16.msra.mxu0 0
        %742 = vmatprep.subr.bf16.mxu0 0
        %743 = vmatpush1.bf16.msra.mxu0 0
        %744 = vmatprep.subr.bf16.mxu0 0
        %745 = vmatpush1.bf16.msra.mxu0 0
        %746 = vmatprep.subr.bf16.mxu0 0
        %747 = vmatpush1.bf16.msra.mxu0 0
        %748 = vmatprep.subr.bf16.mxu0 0
        %749 = vmatpush1.bf16.msra.mxu0 0
        %750 = vmatprep.subr.bf16.mxu0 0
        %751 = vmatpush1.bf16.msra.mxu0 0
        %752 = vmatprep.subr.bf16.mxu0 %v416
        %753 = vmatpush1.bf16.msra.mxu0 %v415
        %754 = vmatprep.subr.bf16.mxu0 %v400
        %755 = vmatpush1.bf16.msra.mxu0 %v399
        %756 = vmatprep.subr.bf16.mxu0 0
        %757 = vmatpush2.bf16.msra.mxu0 0
        %758 = vmatprep.subr.bf16.mxu0 0
        %759 = vmatpush2.bf16.msra.mxu0 0
        %760 = vmatprep.subr.bf16.mxu0 0
        %761 = vmatpush2.bf16.msra.mxu0 0
        %762 = vmatprep.subr.bf16.mxu0 0
        %763 = vmatpush2.bf16.msra.mxu0 0
        %764 = vmatprep.subr.bf16.mxu0 0
        %765 = vmatpush2.bf16.msra.mxu0 0
        %766 = vmatprep.subr.bf16.mxu0 0
        %767 = vmatpush2.bf16.msra.mxu0 0
        %768 = vmatprep.subr.bf16.mxu0 0
        %769 = vmatpush2.bf16.msra.mxu0 0
        %770 = vmatprep.subr.bf16.mxu0 0
        %771 = vmatpush2.bf16.msra.mxu0 0
        %772 = vmatprep.mubr.bf16.mxu0 0
        %773 = vmatmul.mubr.bf16.gmra.mxu0 %v451
        %v774 = vpop.f32.mrf.mxu0
        %v775 = vadd.f32 0.0, %v774
        %v776 = vpop.f32.mrf.mxu0
        %v777 = vadd.f32 0.0, %v776
        %v778 = vpop.f32.mrf.mxu0
        %v779 = vpop.f32.mrf.mxu0
        %780 = vdwg.mxu0
        %v781 = vld [vmem:[%s2] sm:$0xf]
        %783 = vset.pattern.permute.xlu0 0
        %784 = vperm.xlu0 %783, %v781
        %v785 = vpop.permute.xlu0 %784
        %v787 = vmul.f32 %v488, %v785
        %v788 = vmul.f32 %v490, %v785
        %v789 = vmul.f32 %v529, %v785
        %v790 = vmul.f32 %v531, %v785
        %v791 = vmul.f32 %v570, %v785
        %v792 = vmul.f32 %v572, %v785
        %v793 = vmul.f32 %v611, %v785
        %v794 = vmul.f32 %v613, %v785
        %v795 = vmul.f32 %v652, %v785
        %v796 = vmul.f32 %v654, %v785
        %v797 = vmul.f32 %v693, %v785
        %v798 = vmul.f32 %v695, %v785
        %v799 = vmul.f32 %v734, %v785
        %v800 = vmul.f32 %v736, %v785
        %v801 = vmul.f32 %v775, %v785
        %v802 = vmul.f32 %v777, %v785
        %s803 = scalar_lea.vmem %s2, 4
        %v804 = vld [vmem:[%s803] sm:$0xf]
        %806 = vset.pattern.permute.xlu0 0
        %807 = vperm.xlu0 %806, %v804
        %v808 = vpop.permute.xlu0 %807
        %v810 = vadd.f32 %v787, %v808
        %v811 = vadd.f32 %v788, %v808
        %v812 = vadd.f32 %v789, %v808
        %v813 = vadd.f32 %v790, %v808
        %v814 = vadd.f32 %v791, %v808
        %v815 = vadd.f32 %v792, %v808
        %v816 = vadd.f32 %v793, %v808
        %v817 = vadd.f32 %v794, %v808
        %v818 = vadd.f32 %v795, %v808
        %v819 = vadd.f32 %v796, %v808
        %v820 = vadd.f32 %v797, %v808
        %v821 = vadd.f32 %v798, %v808
        %v822 = vadd.f32 %v799, %v808
        %v823 = vadd.f32 %v800, %v808
        %v824 = vadd.f32 %v801, %v808
        %v825 = vadd.f32 %v802, %v808
        %vm826 = vcmp.ge.f32.partialorder %v810, 0.0
        %vm827 = vcmp.ge.f32.partialorder %v811, 0.0
        %vm828 = vcmp.ge.f32.partialorder %v812, 0.0
        %vm829 = vcmp.ge.f32.partialorder %v813, 0.0
        %vm830 = vcmp.ge.f32.partialorder %v814, 0.0
        %vm831 = vcmp.ge.f32.partialorder %v815, 0.0
        %vm832 = vcmp.ge.f32.partialorder %v816, 0.0
        %vm833 = vcmp.ge.f32.partialorder %v817, 0.0
        %vm834 = vcmp.ge.f32.partialorder %v818, 0.0
        %vm835 = vcmp.ge.f32.partialorder %v819, 0.0
        %vm836 = vcmp.ge.f32.partialorder %v820, 0.0
        %vm837 = vcmp.ge.f32.partialorder %v821, 0.0
        %vm838 = vcmp.ge.f32.partialorder %v822, 0.0
        %vm839 = vcmp.ge.f32.partialorder %v823, 0.0
        %vm840 = vcmp.ge.f32.partialorder %v824, 0.0
        %vm841 = vcmp.ge.f32.partialorder %v825, 0.0
        %v842 = vmul.f32 %v810, 0.2
        %v843 = vmul.f32 %v811, 0.2
        %v844 = vmul.f32 %v812, 0.2
        %v845 = vmul.f32 %v813, 0.2
        %v846 = vmul.f32 %v814, 0.2
        %v847 = vmul.f32 %v815, 0.2
        %v848 = vmul.f32 %v816, 0.2
        %v849 = vmul.f32 %v817, 0.2
        %v850 = vmul.f32 %v818, 0.2
        %v851 = vmul.f32 %v819, 0.2
        %v852 = vmul.f32 %v820, 0.2
        %v853 = vmul.f32 %v821, 0.2
        %v854 = vmul.f32 %v822, 0.2
        %v855 = vmul.f32 %v823, 0.2
        %v856 = vmul.f32 %v824, 0.2
        %v857 = vmul.f32 %v825, 0.2
        %v858 = vsel %vm826, %v810, %v842
        %v859 = vsel %vm827, %v811, %v843
        %v860 = vsel %vm828, %v812, %v844
        %v861 = vsel %vm829, %v813, %v845
        %v862 = vsel %vm830, %v814, %v846
        %v863 = vsel %vm831, %v815, %v847
        %v864 = vsel %vm832, %v816, %v848
        %v865 = vsel %vm833, %v817, %v849
        %v866 = vsel %vm834, %v818, %v850
        %v867 = vsel %vm835, %v819, %v851
        %v868 = vsel %vm836, %v820, %v852
        %v869 = vsel %vm837, %v821, %v853
        %v870 = vsel %vm838, %v822, %v854
        %v871 = vsel %vm839, %v823, %v855
        %v872 = vsel %vm840, %v824, %v856
        %v873 = vsel %vm841, %v825, %v857
        %v874 = vpack.c.bf16 %v858, %v858
        %v875 = vpack.c.bf16 %v859, %v859
        %v876 = vpack.c.bf16 %v860, %v860
        %v877 = vpack.c.bf16 %v861, %v861
        %v878 = vpack.c.bf16 %v862, %v862
        %v879 = vpack.c.bf16 %v863, %v863
        %v880 = vpack.c.bf16 %v864, %v864
        %v881 = vpack.c.bf16 %v865, %v865
        %v882 = vpack.c.bf16 %v866, %v866
        %v883 = vpack.c.bf16 %v867, %v867
        %v884 = vpack.c.bf16 %v868, %v868
        %v885 = vpack.c.bf16 %v869, %v869
        %v886 = vpack.c.bf16 %v870, %v870
        %v887 = vpack.c.bf16 %v871, %v871
        %v888 = vpack.c.bf16 %v872, %v872
        %v889 = vpack.c.bf16 %v873, %v873
        %v906 = vcombine.low %v874, %v875
        %v907 = vcombine.low %v876, %v877
        %v909 = vunpack.c.l.s4 1983009808
        %v910 = vunpack.c.0.s8 %v909
        %v911 = vlaneseq
        %v912 = vshrl.u32 %v911, 7
        %v913 = vsub.s32 %v910, %v912
        %v914 = vrot.slane %v906, %v913
        %v916 = vunpack.c.l.s4 1983009808
        %v917 = vunpack.c.0.s8 %v916
        %v918 = vlaneseq
        %v919 = vshrl.u32 %v918, 7
        %v920 = vsub.s32 %v917, %v919
        %v921 = vrot.slane %v907, %v920
        %v922 = vcombine.low %v914, %v921
        %v923 = vcombine.low %v878, %v879
        %v924 = vcombine.low %v880, %v881
        %v926 = vunpack.c.l.s4 1983009808
        %v927 = vunpack.c.0.s8 %v926
        %v928 = vlaneseq
        %v929 = vshrl.u32 %v928, 7
        %v930 = vsub.s32 %v927, %v929
        %v931 = vrot.slane %v923, %v930
        %v933 = vunpack.c.l.s4 1983009808
        %v934 = vunpack.c.0.s8 %v933
        %v935 = vlaneseq
        %v936 = vshrl.u32 %v935, 7
        %v937 = vsub.s32 %v934, %v936
        %v938 = vrot.slane %v924, %v937
        %v939 = vcombine.low %v931, %v938
        %v940 = vcombine.low %v882, %v883
        %v941 = vcombine.low %v884, %v885
        %v943 = vunpack.c.l.s4 1983009808
        %v944 = vunpack.c.0.s8 %v943
        %v945 = vlaneseq
        %v946 = vshrl.u32 %v945, 7
        %v947 = vsub.s32 %v944, %v946
        %v948 = vrot.slane %v940, %v947
        %v950 = vunpack.c.l.s4 1983009808
        %v951 = vunpack.c.0.s8 %v950
        %v952 = vlaneseq
        %v953 = vshrl.u32 %v952, 7
        %v954 = vsub.s32 %v951, %v953
        %v955 = vrot.slane %v941, %v954
        %v956 = vcombine.low %v948, %v955
        %v957 = vcombine.low %v886, %v887
        %v958 = vcombine.low %v888, %v889
        %v960 = vunpack.c.l.s4 1983009808
        %v961 = vunpack.c.0.s8 %v960
        %v962 = vlaneseq
        %v963 = vshrl.u32 %v962, 7
        %v964 = vsub.s32 %v961, %v963
        %v965 = vrot.slane %v957, %v964
        %v967 = vunpack.c.l.s4 1983009808
        %v968 = vunpack.c.0.s8 %v967
        %v969 = vlaneseq
        %v970 = vshrl.u32 %v969, 7
        %v971 = vsub.s32 %v968, %v970
        %v972 = vrot.slane %v958, %v971
        %v973 = vcombine.low %v965, %v972
        %978 = vst [vmem:[%s253] sm:$0xff] %v922
        %979 = vst [vmem:[%s253 + $0x8] sm:$0xff] %v939
        %980 = vst [vmem:[%s253 + $0x10] sm:$0xff] %v956
        %981 = vst [vmem:[%s253 + $0x18] sm:$0xff] %v973
        %s982 = smul.u32 16, %s14
        %p983 = scmp.lt.s32.totalorder %s982, 63
        %s984 = scalar_select %p983, %s982, 63
        %s985 = smul.addr %s984, 2
        %s986 = scalar_lea.vmem %s3, %s985
        // Predicated region
        $region56: #{ds_discriminator_forward.13} parent=50 // pred_check
          %p987 = pneg %p100
        $region57: #{ds_discriminator_forward.13} parent=50 // pred_check_branch
          %989 = sbr.rel (%p987) target = $region59
        $region58: #{ds_discriminator_forward.13} parent=50 // pred_region
          %s990 = smul.u32 16, %s14
        $region59: #{ds_discriminator_forward.13} parent=50 // pred_fallthru
          _
      $region51: #{ds_discriminator_forward.13} parent=5 // pred_fallthru
        _
      %p991 = scmp.le.s32.totalorder 2, %s9
      // Predicated region
      $region60: #{ds_discriminator_forward.13} parent=5 // pred_check
        %p992 = pneg %p991
      $region61: #{ds_discriminator_forward.13} parent=5 // pred_check_branch
        %994 = sbr.rel (%p992) target = $region63
      $region62: #{ds_discriminator_forward.13} parent=5 // pred_region
        %s995 = ssub.s32 %s9, 2
        // Predicated region
        $region64: #{ds_discriminator_forward.13} parent=62 // pred_check
          %p996 = pneg %p106
        $region65: #{ds_discriminator_forward.13} parent=62 // pred_check_branch
          %998 = sbr.rel (%p996) target = $region67
        $region66: #{ds_discriminator_forward.13} parent=62 // pred_region
          %s999 = smul.u32 16, %s15
          %p1000 = scmp.lt.s32.totalorder %s999, 63
          %s1001 = scalar_select %p1000, %s999, 63
          %s1002 = smul.addr %s1001, 2
          %s1003 = scalar_lea.vmem %s3, %s1002
        $region67: #{ds_discriminator_forward.13} parent=62 // pred_fallthru
          _
      $region63: #{ds_discriminator_forward.13} parent=5 // pred_fallthru
        _
    $region6: #{ds_discriminator_forward.13} parent=1 // loop_footer
      %s13 = sadd.s32 1, %s9
    $region7: #{ds_discriminator_forward.13} parent=1 // loop_footer_branch
      %8 = sbr.rel target = $region3
    $region8: #{ds_discriminator_forward.13} parent=1 // loop_exit
      _

// kernel: ds_discriminator_forward.14
$region0: #{ds_discriminator_forward.14}
  #allocation0 [shape = 'u32[]', space=smem, size = 0x4, offset = 0x4, fixed_abs, tag = 'smem constant byte address 0x4 - core index']
  #allocation1 [shape = 'u32[144,128]{1,0:T(1,128)}', space=vmem, size = 0x12000, scoped, tag = 'internal scratch']
  %s0 = inlined_call_operand.vmem [shape: bf16[8,64], index: 0, kind: input, shape index: {}]
  %s1 = inlined_call_operand.vmem [shape: bf16[64,2048], index: 1, kind: input, shape index: {}]
  %s2 = inlined_call_operand.vmem [shape: f32[2,8,1], index: 2, kind: input, shape index: {}]
  %s3 = inlined_call_operand.vmem [shape: bf16[8,2048], index: 3, kind: output, shape index: {}]
  %s4 = sld [smem:[#allocation0]]
  $region22: #{ds_discriminator_forward.14} parent=0
    _
  %s6 = ssub.s32 1, %s4
  %s7 = scalar_select 0, %s6, %s4
  // Predicated region
  $region2: #{ds_discriminator_forward.14} parent=0 // pred_check
    _
  $region3: #{ds_discriminator_forward.14} parent=0 // pred_check_branch
    %9 = sbr.rel (0) target = $region5
  $region4: #{ds_discriminator_forward.14} parent=0 // pred_region
    _
  $region5: #{ds_discriminator_forward.14} parent=0 // pred_fallthru
    _
  // Predicated region
  $region6: #{ds_discriminator_forward.14} parent=0 // pred_check
    _
  $region7: #{ds_discriminator_forward.14} parent=0 // pred_check_branch
    %11 = sbr.rel (0) target = $region9
  $region8: #{ds_discriminator_forward.14} parent=0 // pred_region
    _
  $region9: #{ds_discriminator_forward.14} parent=0 // pred_fallthru
    _
  // Predicated region
  $region10: #{ds_discriminator_forward.14} parent=0 // pred_check
    _
  $region11: #{ds_discriminator_forward.14} parent=0 // pred_check_branch
    %13 = sbr.rel (0) target = $region13
  $region12: #{ds_discriminator_forward.14} parent=0 // pred_region
    _
  $region13: #{ds_discriminator_forward.14} parent=0 // pred_fallthru
    _
  %v15 = vld [vmem:[%s0] sm:$0xf]
  %v16 = vld [vmem:[%s1] sm:$0xff]
  %v17 = vld [vmem:[%s1 + $0x8] sm:$0xff]
  %v18 = vld [vmem:[%s1 + $0x10] sm:$0xff]
  %v19 = vld [vmem:[%s1 + $0x18] sm:$0xff]
  %v20 = vld [vmem:[%s1 + $0x20] sm:$0xff]
  %v21 = vld [vmem:[%s1 + $0x28] sm:$0xff]
  %v22 = vld [vmem:[%s1 + $0x30] sm:$0xff]
  %v23 = vld [vmem:[%s1 + $0x38] sm:$0xff]
  %v24 = vld [vmem:[%s1 + $0x40] sm:$0xff]
  %v25 = vld [vmem:[%s1 + $0x48] sm:$0xff]
  %v26 = vld [vmem:[%s1 + $0x50] sm:$0xff]
  %v27 = vld [vmem:[%s1 + $0x58] sm:$0xff]
  %v28 = vld [vmem:[%s1 + $0x60] sm:$0xff]
  %v29 = vld [vmem:[%s1 + $0x68] sm:$0xff]
  %v30 = vld [vmem:[%s1 + $0x70] sm:$0xff]
  %v31 = vld [vmem:[%s1 + $0x78] sm:$0xff]
  %v32 = vld [vmem:[%s1 + $0x80] sm:$0xff]
  %v33 = vld [vmem:[%s1 + $0x88] sm:$0xff]
  %v34 = vld [vmem:[%s1 + $0x90] sm:$0xff]
  %v35 = vld [vmem:[%s1 + $0x98] sm:$0xff]
  %v36 = vld [vmem:[%s1 + $0xa0] sm:$0xff]
  %v37 = vld [vmem:[%s1 + $0xa8] sm:$0xff]
  %v38 = vld [vmem:[%s1 + $0xb0] sm:$0xff]
  %v39 = vld [vmem:[%s1 + $0xb8] sm:$0xff]
  %v40 = vld [vmem:[%s1 + $0xc0] sm:$0xff]
  %v41 = vld [vmem:[%s1 + $0xc8] sm:$0xff]
  %v42 = vld [vmem:[%s1 + $0xd0] sm:$0xff]
  %v43 = vld [vmem:[%s1 + $0xd8] sm:$0xff]
  %v44 = vld [vmem:[%s1 + $0xe0] sm:$0xff]
  %v45 = vld [vmem:[%s1 + $0xe8] sm:$0xff]
  %v46 = vld [vmem:[%s1 + $0xf0] sm:$0xff]
  %v47 = vld [vmem:[%s1 + $0xf8] sm:$0xff]
  %v48 = vld [vmem:[%s1 + $0x100] sm:$0xff]
  %v49 = vld [vmem:[%s1 + $0x108] sm:$0xff]
  %v50 = vld [vmem:[%s1 + $0x110] sm:$0xff]
  %v51 = vld [vmem:[%s1 + $0x118] sm:$0xff]
  %v52 = vld [vmem:[%s1 + $0x120] sm:$0xff]
  %v53 = vld [vmem:[%s1 + $0x128] sm:$0xff]
  %v54 = vld [vmem:[%s1 + $0x130] sm:$0xff]
  %v55 = vld [vmem:[%s1 + $0x138] sm:$0xff]
  %v56 = vld [vmem:[%s1 + $0x140] sm:$0xff]
  %v57 = vld [vmem:[%s1 + $0x148] sm:$0xff]
  %v58 = vld [vmem:[%s1 + $0x150] sm:$0xff]
  %v59 = vld [vmem:[%s1 + $0x158] sm:$0xff]
  %v60 = vld [vmem:[%s1 + $0x160] sm:$0xff]
  %v61 = vld [vmem:[%s1 + $0x168] sm:$0xff]
  %v62 = vld [vmem:[%s1 + $0x170] sm:$0xff]
  %v63 = vld [vmem:[%s1 + $0x178] sm:$0xff]
  %v64 = vld [vmem:[%s1 + $0x180] sm:$0xff]
  %v65 = vld [vmem:[%s1 + $0x188] sm:$0xff]
  %v66 = vld [vmem:[%s1 + $0x190] sm:$0xff]
  %v67 = vld [vmem:[%s1 + $0x198] sm:$0xff]
  %v68 = vld [vmem:[%s1 + $0x1a0] sm:$0xff]
  %v69 = vld [vmem:[%s1 + $0x1a8] sm:$0xff]
  %v70 = vld [vmem:[%s1 + $0x1b0] sm:$0xff]
  %v71 = vld [vmem:[%s1 + $0x1b8] sm:$0xff]
  %v72 = vld [vmem:[%s1 + $0x1c0] sm:$0xff]
  %v73 = vld [vmem:[%s1 + $0x1c8] sm:$0xff]
  %v74 = vld [vmem:[%s1 + $0x1d0] sm:$0xff]
  %v75 = vld [vmem:[%s1 + $0x1d8] sm:$0xff]
  %v76 = vld [vmem:[%s1 + $0x1e0] sm:$0xff]
  %v77 = vld [vmem:[%s1 + $0x1e8] sm:$0xff]
  %v78 = vld [vmem:[%s1 + $0x1f0] sm:$0xff]
  %v79 = vld [vmem:[%s1 + $0x1f8] sm:$0xff]
  %v144 = vunpack.c.l.b16 %v16
  %v145 = vunpack.c.h.b16 %v16
  %v146 = vunpack.c.l.b16 %v17
  %v147 = vunpack.c.h.b16 %v17
  %v148 = vunpack.c.l.b16 %v18
  %v149 = vunpack.c.h.b16 %v18
  %v150 = vunpack.c.l.b16 %v19
  %v151 = vunpack.c.h.b16 %v19
  %v152 = vunpack.c.l.b16 %v20
  %v153 = vunpack.c.h.b16 %v20
  %v154 = vunpack.c.l.b16 %v21
  %v155 = vunpack.c.h.b16 %v21
  %v156 = vunpack.c.l.b16 %v22
  %v157 = vunpack.c.h.b16 %v22
  %v158 = vunpack.c.l.b16 %v23
  %v159 = vunpack.c.h.b16 %v23
  %v160 = vunpack.c.l.b16 %v24
  %v161 = vunpack.c.h.b16 %v24
  %v162 = vunpack.c.l.b16 %v25
  %v163 = vunpack.c.h.b16 %v25
  %v164 = vunpack.c.l.b16 %v26
  %v165 = vunpack.c.h.b16 %v26
  %v166 = vunpack.c.l.b16 %v27
  %v167 = vunpack.c.h.b16 %v27
  %v168 = vunpack.c.l.b16 %v28
  %v169 = vunpack.c.h.b16 %v28
  %v170 = vunpack.c.l.b16 %v29
  %v171 = vunpack.c.h.b16 %v29
  %v172 = vunpack.c.l.b16 %v30
  %v173 = vunpack.c.h.b16 %v30
  %v174 = vunpack.c.l.b16 %v31
  %v175 = vunpack.c.h.b16 %v31
  %v176 = vunpack.c.l.b16 %v32
  %v177 = vunpack.c.h.b16 %v32
  %v178 = vunpack.c.l.b16 %v33
  %v179 = vunpack.c.h.b16 %v33
  %v180 = vunpack.c.l.b16 %v34
  %v181 = vunpack.c.h.b16 %v34
  %v182 = vunpack.c.l.b16 %v35
  %v183 = vunpack.c.h.b16 %v35
  %v184 = vunpack.c.l.b16 %v36
  %v185 = vunpack.c.h.b16 %v36
  %v186 = vunpack.c.l.b16 %v37
  %v187 = vunpack.c.h.b16 %v37
  %v188 = vunpack.c.l.b16 %v38
  %v189 = vunpack.c.h.b16 %v38
  %v190 = vunpack.c.l.b16 %v39
  %v191 = vunpack.c.h.b16 %v39
  %v192 = vunpack.c.l.b16 %v40
  %v193 = vunpack.c.h.b16 %v40
  %v194 = vunpack.c.l.b16 %v41
  %v195 = vunpack.c.h.b16 %v41
  %v196 = vunpack.c.l.b16 %v42
  %v197 = vunpack.c.h.b16 %v42
  %v198 = vunpack.c.l.b16 %v43
  %v199 = vunpack.c.h.b16 %v43
  %v200 = vunpack.c.l.b16 %v44
  %v201 = vunpack.c.h.b16 %v44
  %v202 = vunpack.c.l.b16 %v45
  %v203 = vunpack.c.h.b16 %v45
  %v204 = vunpack.c.l.b16 %v46
  %v205 = vunpack.c.h.b16 %v46
  %v206 = vunpack.c.l.b16 %v47
  %v207 = vunpack.c.h.b16 %v47
  %v208 = vunpack.c.l.b16 %v48
  %v209 = vunpack.c.h.b16 %v48
  %v210 = vunpack.c.l.b16 %v49
  %v211 = vunpack.c.h.b16 %v49
  %v212 = vunpack.c.l.b16 %v50
  %v213 = vunpack.c.h.b16 %v50
  %v214 = vunpack.c.l.b16 %v51
  %v215 = vunpack.c.h.b16 %v51
  %v216 = vunpack.c.l.b16 %v52
  %v217 = vunpack.c.h.b16 %v52
  %v218 = vunpack.c.l.b16 %v53
  %v219 = vunpack.c.h.b16 %v53
  %v220 = vunpack.c.l.b16 %v54
  %v221 = vunpack.c.h.b16 %v54
  %v222 = vunpack.c.l.b16 %v55
  %v223 = vunpack.c.h.b16 %v55
  %v224 = vunpack.c.l.b16 %v56
  %v225 = vunpack.c.h.b16 %v56
  %v226 = vunpack.c.l.b16 %v57
  %v227 = vunpack.c.h.b16 %v57
  %v228 = vunpack.c.l.b16 %v58
  %v229 = vunpack.c.h.b16 %v58
  %v230 = vunpack.c.l.b16 %v59
  %v231 = vunpack.c.h.b16 %v59
  %v232 = vunpack.c.l.b16 %v60
  %v233 = vunpack.c.h.b16 %v60
  %v234 = vunpack.c.l.b16 %v61
  %v235 = vunpack.c.h.b16 %v61
  %v236 = vunpack.c.l.b16 %v62
  %v237 = vunpack.c.h.b16 %v62
  %v238 = vunpack.c.l.b16 %v63
  %v239 = vunpack.c.h.b16 %v63
  %v240 = vunpack.c.l.b16 %v64
  %v241 = vunpack.c.h.b16 %v64
  %v242 = vunpack.c.l.b16 %v65
  %v243 = vunpack.c.h.b16 %v65
  %v244 = vunpack.c.l.b16 %v66
  %v245 = vunpack.c.h.b16 %v66
  %v246 = vunpack.c.l.b16 %v67
  %v247 = vunpack.c.h.b16 %v67
  %v248 = vunpack.c.l.b16 %v68
  %v249 = vunpack.c.h.b16 %v68
  %v250 = vunpack.c.l.b16 %v69
  %v251 = vunpack.c.h.b16 %v69
  %v252 = vunpack.c.l.b16 %v70
  %v253 = vunpack.c.h.b16 %v70
  %v254 = vunpack.c.l.b16 %v71
  %v255 = vunpack.c.h.b16 %v71
  %v256 = vunpack.c.l.b16 %v72
  %v257 = vunpack.c.h.b16 %v72
  %v258 = vunpack.c.l.b16 %v73
  %v259 = vunpack.c.h.b16 %v73
  %v260 = vunpack.c.l.b16 %v74
  %v261 = vunpack.c.h.b16 %v74
  %v262 = vunpack.c.l.b16 %v75
  %v263 = vunpack.c.h.b16 %v75
  %v264 = vunpack.c.l.b16 %v76
  %v265 = vunpack.c.h.b16 %v76
  %v266 = vunpack.c.l.b16 %v77
  %v267 = vunpack.c.h.b16 %v77
  %v268 = vunpack.c.l.b16 %v78
  %v269 = vunpack.c.h.b16 %v78
  %v270 = vunpack.c.l.b16 %v79
  %v271 = vunpack.c.h.b16 %v79
  %v272 = vpack.c.b16 %v160, %v144
  %v273 = vpack.c.b16 %v161, %v145
  %v274 = vpack.c.b16 %v162, %v146
  %v275 = vpack.c.b16 %v163, %v147
  %v276 = vpack.c.b16 %v164, %v148
  %v277 = vpack.c.b16 %v165, %v149
  %v278 = vpack.c.b16 %v166, %v150
  %v279 = vpack.c.b16 %v167, %v151
  %v280 = vpack.c.b16 %v168, %v152
  %v281 = vpack.c.b16 %v169, %v153
  %v282 = vpack.c.b16 %v170, %v154
  %v283 = vpack.c.b16 %v171, %v155
  %v284 = vpack.c.b16 %v172, %v156
  %v285 = vpack.c.b16 %v173, %v157
  %v286 = vpack.c.b16 %v174, %v158
  %v287 = vpack.c.b16 %v175, %v159
  %v288 = vpack.c.b16 %v192, %v176
  %v289 = vpack.c.b16 %v193, %v177
  %v290 = vpack.c.b16 %v194, %v178
  %v291 = vpack.c.b16 %v195, %v179
  %v292 = vpack.c.b16 %v196, %v180
  %v293 = vpack.c.b16 %v197, %v181
  %v294 = vpack.c.b16 %v198, %v182
  %v295 = vpack.c.b16 %v199, %v183
  %v296 = vpack.c.b16 %v200, %v184
  %v297 = vpack.c.b16 %v201, %v185
  %v298 = vpack.c.b16 %v202, %v186
  %v299 = vpack.c.b16 %v203, %v187
  %v300 = vpack.c.b16 %v204, %v188
  %v301 = vpack.c.b16 %v205, %v189
  %v302 = vpack.c.b16 %v206, %v190
  %v303 = vpack.c.b16 %v207, %v191
  %v304 = vpack.c.b16 %v224, %v208
  %v305 = vpack.c.b16 %v225, %v209
  %v306 = vpack.c.b16 %v226, %v210
  %v307 = vpack.c.b16 %v227, %v211
  %v308 = vpack.c.b16 %v228, %v212
  %v309 = vpack.c.b16 %v229, %v213
  %v310 = vpack.c.b16 %v230, %v214
  %v311 = vpack.c.b16 %v231, %v215
  %v312 = vpack.c.b16 %v232, %v216
  %v313 = vpack.c.b16 %v233, %v217
  %v314 = vpack.c.b16 %v234, %v218
  %v315 = vpack.c.b16 %v235, %v219
  %v316 = vpack.c.b16 %v236, %v220
  %v317 = vpack.c.b16 %v237, %v221
  %v318 = vpack.c.b16 %v238, %v222
  %v319 = vpack.c.b16 %v239, %v223
  %v320 = vpack.c.b16 %v256, %v240
  %v321 = vpack.c.b16 %v257, %v241
  %v322 = vpack.c.b16 %v258, %v242
  %v323 = vpack.c.b16 %v259, %v243
  %v324 = vpack.c.b16 %v260, %v244
  %v325 = vpack.c.b16 %v261, %v245
  %v326 = vpack.c.b16 %v262, %v246
  %v327 = vpack.c.b16 %v263, %v247
  %v328 = vpack.c.b16 %v264, %v248
  %v329 = vpack.c.b16 %v265, %v249
  %v330 = vpack.c.b16 %v266, %v250
  %v331 = vpack.c.b16 %v267, %v251
  %v332 = vpack.c.b16 %v268, %v252
  %v333 = vpack.c.b16 %v269, %v253
  %v334 = vpack.c.b16 %v270, %v254
  %v335 = vpack.c.b16 %v271, %v255
  %vm400 = vcmask 523264
  %v402 = vsel %vm400, %v15, 0
  %404 = vmatprep.subr.bf16.mxu0 0
  %405 = vmatpush1.bf16.msra.mxu0 0
  %406 = vmatprep.subr.bf16.mxu0 0
  %407 = vmatpush1.bf16.msra.mxu0 0
  %408 = vmatprep.subr.bf16.mxu0 0
  %409 = vmatpush1.bf16.msra.mxu0 0
  %410 = vmatprep.subr.bf16.mxu0 0
  %411 = vmatpush1.bf16.msra.mxu0 0
  %412 = vmatprep.subr.bf16.mxu0 %v321
  %413 = vmatpush1.bf16.msra.mxu0 %v320
  %414 = vmatprep.subr.bf16.mxu0 %v305
  %415 = vmatpush1.bf16.msra.mxu0 %v304
  %416 = vmatprep.subr.bf16.mxu0 %v289
  %417 = vmatpush1.bf16.msra.mxu0 %v288
  %418 = vmatprep.subr.bf16.mxu0 %v273
  %419 = vmatpush1.bf16.msra.mxu0 %v272
  %420 = vmatprep.subr.bf16.mxu0 0
  %421 = vmatpush2.bf16.msra.mxu0 0
  %422 = vmatprep.subr.bf16.mxu0 0
  %423 = vmatpush2.bf16.msra.mxu0 0
  %424 = vmatprep.subr.bf16.mxu0 0
  %425 = vmatpush2.bf16.msra.mxu0 0
  %426 = vmatprep.subr.bf16.mxu0 0
  %427 = vmatpush2.bf16.msra.mxu0 0
  %428 = vmatprep.subr.bf16.mxu0 0
  %429 = vmatpush2.bf16.msra.mxu0 0
  %430 = vmatprep.subr.bf16.mxu0 0
  %431 = vmatpush2.bf16.msra.mxu0 0
  %432 = vmatprep.subr.bf16.mxu0 0
  %433 = vmatpush2.bf16.msra.mxu0 0
  %434 = vmatprep.subr.bf16.mxu0 0
  %435 = vmatpush2.bf16.msra.mxu0 0
  %436 = vmatprep.mubr.bf16.mxu0 0
  %437 = vmatmul.mubr.bf16.gmra.mxu0 %v402
  %v438 = vpop.f32.mrf.mxu0
  %v439 = vadd.f32 0.0, %v438
  %v440 = vpop.f32.mrf.mxu0
  %v441 = vadd.f32 0.0, %v440
  %v442 = vpop.f32.mrf.mxu0
  %v443 = vpop.f32.mrf.mxu0
  %444 = vdwg.mxu0
  %445 = vmatprep.subr.bf16.mxu0 0
  %446 = vmatpush1.bf16.msra.mxu0 0
  %447 = vmatprep.subr.bf16.mxu0 0
  %448 = vmatpush1.bf16.msra.mxu0 0
  %449 = vmatprep.subr.bf16.mxu0 0
  %450 = vmatpush1.bf16.msra.mxu0 0
  %451 = vmatprep.subr.bf16.mxu0 0
  %452 = vmatpush1.bf16.msra.mxu0 0
  %453 = vmatprep.subr.bf16.mxu0 %v323
  %454 = vmatpush1.bf16.msra.mxu0 %v322
  %455 = vmatprep.subr.bf16.mxu0 %v307
  %456 = vmatpush1.bf16.msra.mxu0 %v306
  %457 = vmatprep.subr.bf16.mxu0 %v291
  %458 = vmatpush1.bf16.msra.mxu0 %v290
  %459 = vmatprep.subr.bf16.mxu0 %v275
  %460 = vmatpush1.bf16.msra.mxu0 %v274
  %461 = vmatprep.subr.bf16.mxu0 0
  %462 = vmatpush2.bf16.msra.mxu0 0
  %463 = vmatprep.subr.bf16.mxu0 0
  %464 = vmatpush2.bf16.msra.mxu0 0
  %465 = vmatprep.subr.bf16.mxu0 0
  %466 = vmatpush2.bf16.msra.mxu0 0
  %467 = vmatprep.subr.bf16.mxu0 0
  %468 = vmatpush2.bf16.msra.mxu0 0
  %469 = vmatprep.subr.bf16.mxu0 0
  %470 = vmatpush2.bf16.msra.mxu0 0
  %471 = vmatprep.subr.bf16.mxu0 0
  %472 = vmatpush2.bf16.msra.mxu0 0
  %473 = vmatprep.subr.bf16.mxu0 0
  %474 = vmatpush2.bf16.msra.mxu0 0
  %475 = vmatprep.subr.bf16.mxu0 0
  %476 = vmatpush2.bf16.msra.mxu0 0
  %477 = vmatprep.mubr.bf16.mxu0 0
  %478 = vmatmul.mubr.bf16.gmra.mxu0 %v402
  %v479 = vpop.f32.mrf.mxu0
  %v480 = vadd.f32 0.0, %v479
  %v481 = vpop.f32.mrf.mxu0
  %v482 = vadd.f32 0.0, %v481
  %v483 = vpop.f32.mrf.mxu0
  %v484 = vpop.f32.mrf.mxu0
  %485 = vdwg.mxu0
  %486 = vmatprep.subr.bf16.mxu0 0
  %487 = vmatpush1.bf16.msra.mxu0 0
  %488 = vmatprep.subr.bf16.mxu0 0
  %489 = vmatpush1.bf16.msra.mxu0 0
  %490 = vmatprep.subr.bf16.mxu0 0
  %491 = vmatpush1.bf16.msra.mxu0 0
  %492 = vmatprep.subr.bf16.mxu0 0
  %493 = vmatpush1.bf16.msra.mxu0 0
  %494 = vmatprep.subr.bf16.mxu0 %v325
  %495 = vmatpush1.bf16.msra.mxu0 %v324
  %496 = vmatprep.subr.bf16.mxu0 %v309
  %497 = vmatpush1.bf16.msra.mxu0 %v308
  %498 = vmatprep.subr.bf16.mxu0 %v293
  %499 = vmatpush1.bf16.msra.mxu0 %v292
  %500 = vmatprep.subr.bf16.mxu0 %v277
  %501 = vmatpush1.bf16.msra.mxu0 %v276
  %502 = vmatprep.subr.bf16.mxu0 0
  %503 = vmatpush2.bf16.msra.mxu0 0
  %504 = vmatprep.subr.bf16.mxu0 0
  %505 = vmatpush2.bf16.msra.mxu0 0
  %506 = vmatprep.subr.bf16.mxu0 0
  %507 = vmatpush2.bf16.msra.mxu0 0
  %508 = vmatprep.subr.bf16.mxu0 0
  %509 = vmatpush2.bf16.msra.mxu0 0
  %510 = vmatprep.subr.bf16.mxu0 0
  %511 = vmatpush2.bf16.msra.mxu0 0
  %512 = vmatprep.subr.bf16.mxu0 0
  %513 = vmatpush2.bf16.msra.mxu0 0
  %514 = vmatprep.subr.bf16.mxu0 0
  %515 = vmatpush2.bf16.msra.mxu0 0
  %516 = vmatprep.subr.bf16.mxu0 0
  %517 = vmatpush2.bf16.msra.mxu0 0
  %518 = vmatprep.mubr.bf16.mxu0 0
  %519 = vmatmul.mubr.bf16.gmra.mxu0 %v402
  %v520 = vpop.f32.mrf.mxu0
  %v521 = vadd.f32 0.0, %v520
  %v522 = vpop.f32.mrf.mxu0
  %v523 = vadd.f32 0.0, %v522
  %v524 = vpop.f32.mrf.mxu0
  %v525 = vpop.f32.mrf.mxu0
  %526 = vdwg.mxu0
  %527 = vmatprep.subr.bf16.mxu0 0
  %528 = vmatpush1.bf16.msra.mxu0 0
  %529 = vmatprep.subr.bf16.mxu0 0
  %530 = vmatpush1.bf16.msra.mxu0 0
  %531 = vmatprep.subr.bf16.mxu0 0
  %532 = vmatpush1.bf16.msra.mxu0 0
  %533 = vmatprep.subr.bf16.mxu0 0
  %534 = vmatpush1.bf16.msra.mxu0 0
  %535 = vmatprep.subr.bf16.mxu0 %v327
  %536 = vmatpush1.bf16.msra.mxu0 %v326
  %537 = vmatprep.subr.bf16.mxu0 %v311
  %538 = vmatpush1.bf16.msra.mxu0 %v310
  %539 = vmatprep.subr.bf16.mxu0 %v295
  %540 = vmatpush1.bf16.msra.mxu0 %v294
  %541 = vmatprep.subr.bf16.mxu0 %v279
  %542 = vmatpush1.bf16.msra.mxu0 %v278
  %543 = vmatprep.subr.bf16.mxu0 0
  %544 = vmatpush2.bf16.msra.mxu0 0
  %545 = vmatprep.subr.bf16.mxu0 0
  %546 = vmatpush2.bf16.msra.mxu0 0
  %547 = vmatprep.subr.bf16.mxu0 0
  %548 = vmatpush2.bf16.msra.mxu0 0
  %549 = vmatprep.subr.bf16.mxu0 0
  %550 = vmatpush2.bf16.msra.mxu0 0
  %551 = vmatprep.subr.bf16.mxu0 0
  %552 = vmatpush2.bf16.msra.mxu0 0
  %553 = vmatprep.subr.bf16.mxu0 0
  %554 = vmatpush2.bf16.msra.mxu0 0
  %555 = vmatprep.subr.bf16.mxu0 0
  %556 = vmatpush2.bf16.msra.mxu0 0
  %557 = vmatprep.subr.bf16.mxu0 0
  %558 = vmatpush2.bf16.msra.mxu0 0
  %559 = vmatprep.mubr.bf16.mxu0 0
  %560 = vmatmul.mubr.bf16.gmra.mxu0 %v402
  %v561 = vpop.f32.mrf.mxu0
  %v562 = vadd.f32 0.0, %v561
  %v563 = vpop.f32.mrf.mxu0
  %v564 = vadd.f32 0.0, %v563
  %v565 = vpop.f32.mrf.mxu0
  %v566 = vpop.f32.mrf.mxu0
  %567 = vdwg.mxu0
  %568 = vmatprep.subr.bf16.mxu0 0
  %569 = vmatpush1.bf16.msra.mxu0 0
  %570 = vmatprep.subr.bf16.mxu0 0
  %571 = vmatpush1.bf16.msra.mxu0 0
  %572 = vmatprep.subr.bf16.mxu0 0
  %573 = vmatpush1.bf16.msra.mxu0 0
  %574 = vmatprep.subr.bf16.mxu0 0
  %575 = vmatpush1.bf16.msra.mxu0 0
  %576 = vmatprep.subr.bf16.mxu0 %v329
  %577 = vmatpush1.bf16.msra.mxu0 %v328
  %578 = vmatprep.subr.bf16.mxu0 %v313
  %579 = vmatpush1.bf16.msra.mxu0 %v312
  %580 = vmatprep.subr.bf16.mxu0 %v297
  %581 = vmatpush1.bf16.msra.mxu0 %v296
  %582 = vmatprep.subr.bf16.mxu0 %v281
  %583 = vmatpush1.bf16.msra.mxu0 %v280
  %584 = vmatprep.subr.bf16.mxu0 0
  %585 = vmatpush2.bf16.msra.mxu0 0
  %586 = vmatprep.subr.bf16.mxu0 0
  %587 = vmatpush2.bf16.msra.mxu0 0
  %588 = vmatprep.subr.bf16.mxu0 0
  %589 = vmatpush2.bf16.msra.mxu0 0
  %590 = vmatprep.subr.bf16.mxu0 0
  %591 = vmatpush2.bf16.msra.mxu0 0
  %592 = vmatprep.subr.bf16.mxu0 0
  %593 = vmatpush2.bf16.msra.mxu0 0
  %594 = vmatprep.subr.bf16.mxu0 0
  %595 = vmatpush2.bf16.msra.mxu0 0
  %596 = vmatprep.subr.bf16.mxu0 0
  %597 = vmatpush2.bf16.msra.mxu0 0
  %598 = vmatprep.subr.bf16.mxu0 0
  %599 = vmatpush2.bf16.msra.mxu0 0
  %600 = vmatprep.mubr.bf16.mxu0 0
  %601 = vmatmul.mubr.bf16.gmra.mxu0 %v402
  %v602 = vpop.f32.mrf.mxu0
  %v603 = vadd.f32 0.0, %v602
  %v604 = vpop.f32.mrf.mxu0
  %v605 = vadd.f32 0.0, %v604
  %v606 = vpop.f32.mrf.mxu0
  %v607 = vpop.f32.mrf.mxu0
  %608 = vdwg.mxu0
  %609 = vmatprep.subr.bf16.mxu0 0
  %610 = vmatpush1.bf16.msra.mxu0 0
  %611 = vmatprep.subr.bf16.mxu0 0
  %612 = vmatpush1.bf16.msra.mxu0 0
  %613 = vmatprep.subr.bf16.mxu0 0
  %614 = vmatpush1.bf16.msra.mxu0 0
  %615 = vmatprep.subr.bf16.mxu0 0
  %616 = vmatpush1.bf16.msra.mxu0 0
  %617 = vmatprep.subr.bf16.mxu0 %v331
  %618 = vmatpush1.bf16.msra.mxu0 %v330
  %619 = vmatprep.subr.bf16.mxu0 %v315
  %620 = vmatpush1.bf16.msra.mxu0 %v314
  %621 = vmatprep.subr.bf16.mxu0 %v299
  %622 = vmatpush1.bf16.msra.mxu0 %v298
  %623 = vmatprep.subr.bf16.mxu0 %v283
  %624 = vmatpush1.bf16.msra.mxu0 %v282
  %625 = vmatprep.subr.bf16.mxu0 0
  %626 = vmatpush2.bf16.msra.mxu0 0
  %627 = vmatprep.subr.bf16.mxu0 0
  %628 = vmatpush2.bf16.msra.mxu0 0
  %629 = vmatprep.subr.bf16.mxu0 0
  %630 = vmatpush2.bf16.msra.mxu0 0
  %631 = vmatprep.subr.bf16.mxu0 0
  %632 = vmatpush2.bf16.msra.mxu0 0
  %633 = vmatprep.subr.bf16.mxu0 0
  %634 = vmatpush2.bf16.msra.mxu0 0
  %635 = vmatprep.subr.bf16.mxu0 0
  %636 = vmatpush2.bf16.msra.mxu0 0
  %637 = vmatprep.subr.bf16.mxu0 0
  %638 = vmatpush2.bf16.msra.mxu0 0
  %639 = vmatprep.subr.bf16.mxu0 0
  %640 = vmatpush2.bf16.msra.mxu0 0
  %641 = vmatprep.mubr.bf16.mxu0 0
  %642 = vmatmul.mubr.bf16.gmra.mxu0 %v402
  %v643 = vpop.f32.mrf.mxu0
  %v644 = vadd.f32 0.0, %v643
  %v645 = vpop.f32.mrf.mxu0
  %v646 = vadd.f32 0.0, %v645
  %v647 = vpop.f32.mrf.mxu0
  %v648 = vpop.f32.mrf.mxu0
  %649 = vdwg.mxu0
  %650 = vmatprep.subr.bf16.mxu0 0
  %651 = vmatpush1.bf16.msra.mxu0 0
  %652 = vmatprep.subr.bf16.mxu0 0
  %653 = vmatpush1.bf16.msra.mxu0 0
  %654 = vmatprep.subr.bf16.mxu0 0
  %655 = vmatpush1.bf16.msra.mxu0 0
  %656 = vmatprep.subr.bf16.mxu0 0
  %657 = vmatpush1.bf16.msra.mxu0 0
  %658 = vmatprep.subr.bf16.mxu0 %v333
  %659 = vmatpush1.bf16.msra.mxu0 %v332
  %660 = vmatprep.subr.bf16.mxu0 %v317
  %661 = vmatpush1.bf16.msra.mxu0 %v316
  %662 = vmatprep.subr.bf16.mxu0 %v301
  %663 = vmatpush1.bf16.msra.mxu0 %v300
  %664 = vmatprep.subr.bf16.mxu0 %v285
  %665 = vmatpush1.bf16.msra.mxu0 %v284
  %666 = vmatprep.subr.bf16.mxu0 0
  %667 = vmatpush2.bf16.msra.mxu0 0
  %668 = vmatprep.subr.bf16.mxu0 0
  %669 = vmatpush2.bf16.msra.mxu0 0
  %670 = vmatprep.subr.bf16.mxu0 0
  %671 = vmatpush2.bf16.msra.mxu0 0
  %672 = vmatprep.subr.bf16.mxu0 0
  %673 = vmatpush2.bf16.msra.mxu0 0
  %674 = vmatprep.subr.bf16.mxu0 0
  %675 = vmatpush2.bf16.msra.mxu0 0
  %676 = vmatprep.subr.bf16.mxu0 0
  %677 = vmatpush2.bf16.msra.mxu0 0
  %678 = vmatprep.subr.bf16.mxu0 0
  %679 = vmatpush2.bf16.msra.mxu0 0
  %680 = vmatprep.subr.bf16.mxu0 0
  %681 = vmatpush2.bf16.msra.mxu0 0
  %682 = vmatprep.mubr.bf16.mxu0 0
  %683 = vmatmul.mubr.bf16.gmra.mxu0 %v402
  %v684 = vpop.f32.mrf.mxu0
  %v685 = vadd.f32 0.0, %v684
  %v686 = vpop.f32.mrf.mxu0
  %v687 = vadd.f32 0.0, %v686
  %v688 = vpop.f32.mrf.mxu0
  %v689 = vpop.f32.mrf.mxu0
  %690 = vdwg.mxu0
  %691 = vmatprep.subr.bf16.mxu0 0
  %692 = vmatpush1.bf16.msra.mxu0 0
  %693 = vmatprep.subr.bf16.mxu0 0
  %694 = vmatpush1.bf16.msra.mxu0 0
  %695 = vmatprep.subr.bf16.mxu0 0
  %696 = vmatpush1.bf16.msra.mxu0 0
  %697 = vmatprep.subr.bf16.mxu0 0
  %698 = vmatpush1.bf16.msra.mxu0 0
  %699 = vmatprep.subr.bf16.mxu0 %v335
  %700 = vmatpush1.bf16.msra.mxu0 %v334
  %701 = vmatprep.subr.bf16.mxu0 %v319
  %702 = vmatpush1.bf16.msra.mxu0 %v318
  %703 = vmatprep.subr.bf16.mxu0 %v303
  %704 = vmatpush1.bf16.msra.mxu0 %v302
  %705 = vmatprep.subr.bf16.mxu0 %v287
  %706 = vmatpush1.bf16.msra.mxu0 %v286
  %707 = vmatprep.subr.bf16.mxu0 0
  %708 = vmatpush2.bf16.msra.mxu0 0
  %709 = vmatprep.subr.bf16.mxu0 0
  %710 = vmatpush2.bf16.msra.mxu0 0
  %711 = vmatprep.subr.bf16.mxu0 0
  %712 = vmatpush2.bf16.msra.mxu0 0
  %713 = vmatprep.subr.bf16.mxu0 0
  %714 = vmatpush2.bf16.msra.mxu0 0
  %715 = vmatprep.subr.bf16.mxu0 0
  %716 = vmatpush2.bf16.msra.mxu0 0
  %717 = vmatprep.subr.bf16.mxu0 0
  %718 = vmatpush2.bf16.msra.mxu0 0
  %719 = vmatprep.subr.bf16.mxu0 0
  %720 = vmatpush2.bf16.msra.mxu0 0
  %721 = vmatprep.subr.bf16.mxu0 0
  %722 = vmatpush2.bf16.msra.mxu0 0
  %723 = vmatprep.mubr.bf16.mxu0 0
  %724 = vmatmul.mubr.bf16.gmra.mxu0 %v402
  %v725 = vpop.f32.mrf.mxu0
  %v726 = vadd.f32 0.0, %v725
  %v727 = vpop.f32.mrf.mxu0
  %v728 = vadd.f32 0.0, %v727
  %v729 = vpop.f32.mrf.mxu0
  %v730 = vpop.f32.mrf.mxu0
  %731 = vdwg.mxu0
  %v732 = vld [vmem:[%s2] sm:$0xff]
  %s733 = scalar_lea.vmem %s2, 8
  %v734 = vld [vmem:[%s733] sm:$0xff]
  %v735 = vadd.f32 %v439, %v441
  %v736 = vadd.f32 %v735, %v480
  %v737 = vadd.f32 %v736, %v482
  %v738 = vadd.f32 %v737, %v521
  %v739 = vadd.f32 %v738, %v523
  %v740 = vadd.f32 %v739, %v562
  %v741 = vadd.f32 %v740, %v564
  %742 = vadd.xlane.f32.xlu0 %v741
  %v743 = vpop.xlane.xlu0 %742
  %v744 = vrcp.pop 1024.0
  %v745 = vmul.f32 %v743, %v744
  %v746 = vsub.f32 %v439, %v745
  %v747 = vsub.f32 %v441, %v745
  %v748 = vsub.f32 %v480, %v745
  %v749 = vsub.f32 %v482, %v745
  %v750 = vsub.f32 %v521, %v745
  %v751 = vsub.f32 %v523, %v745
  %v752 = vsub.f32 %v562, %v745
  %v753 = vsub.f32 %v564, %v745
  %v754 = vmul.f32 %v746, %v746
  %v755 = vmul.f32 %v747, %v747
  %v756 = vmul.f32 %v748, %v748
  %v757 = vmul.f32 %v749, %v749
  %v758 = vmul.f32 %v750, %v750
  %v759 = vmul.f32 %v751, %v751
  %v760 = vmul.f32 %v752, %v752
  %v761 = vmul.f32 %v753, %v753
  %v762 = vadd.f32 %v754, %v755
  %v763 = vadd.f32 %v762, %v756
  %v764 = vadd.f32 %v763, %v757
  %v765 = vadd.f32 %v764, %v758
  %v766 = vadd.f32 %v765, %v759
  %v767 = vadd.f32 %v766, %v760
  %v768 = vadd.f32 %v767, %v761
  %769 = vadd.xlane.f32.xlu0 %v768
  %v770 = vpop.xlane.xlu0 %769
  %v771 = vmul.f32 %v770, %v744
  %v772 = vadd.f32 %v771, 1e-05
  %v773 = vrsqrt.pop %v772
  %v774 = vmul.f32 %v746, %v773
  %v775 = vmul.f32 %v747, %v773
  %v776 = vmul.f32 %v748, %v773
  %v777 = vmul.f32 %v749, %v773
  %v778 = vmul.f32 %v750, %v773
  %v779 = vmul.f32 %v751, %v773
  %v780 = vmul.f32 %v752, %v773
  %v781 = vmul.f32 %v753, %v773
  %783 = vset.pattern.permute.xlu0 0
  %784 = vperm.xlu0 %783, %v732
  %v785 = vpop.permute.xlu0 %784
  %v787 = vmul.f32 %v774, %v785
  %v788 = vmul.f32 %v775, %v785
  %v789 = vmul.f32 %v776, %v785
  %v790 = vmul.f32 %v777, %v785
  %v791 = vmul.f32 %v778, %v785
  %v792 = vmul.f32 %v779, %v785
  %v793 = vmul.f32 %v780, %v785
  %v794 = vmul.f32 %v781, %v785
  %796 = vset.pattern.permute.xlu0 0
  %797 = vperm.xlu0 %796, %v734
  %v798 = vpop.permute.xlu0 %797
  %v800 = vadd.f32 %v787, %v798
  %v801 = vadd.f32 %v788, %v798
  %v802 = vadd.f32 %v789, %v798
  %v803 = vadd.f32 %v790, %v798
  %v804 = vadd.f32 %v791, %v798
  %v805 = vadd.f32 %v792, %v798
  %v806 = vadd.f32 %v793, %v798
  %v807 = vadd.f32 %v794, %v798
  %vm808 = vcmp.ge.f32.partialorder %v800, 0.0
  %vm809 = vcmp.ge.f32.partialorder %v801, 0.0
  %vm810 = vcmp.ge.f32.partialorder %v802, 0.0
  %vm811 = vcmp.ge.f32.partialorder %v803, 0.0
  %vm812 = vcmp.ge.f32.partialorder %v804, 0.0
  %vm813 = vcmp.ge.f32.partialorder %v805, 0.0
  %vm814 = vcmp.ge.f32.partialorder %v806, 0.0
  %vm815 = vcmp.ge.f32.partialorder %v807, 0.0
  %v816 = vmul.f32 %v800, 0.2
  %v817 = vmul.f32 %v801, 0.2
  %v818 = vmul.f32 %v802, 0.2
  %v819 = vmul.f32 %v803, 0.2
  %v820 = vmul.f32 %v804, 0.2
  %v821 = vmul.f32 %v805, 0.2
  %v822 = vmul.f32 %v806, 0.2
  %v823 = vmul.f32 %v807, 0.2
  %v824 = vsel %vm808, %v800, %v816
  %v825 = vsel %vm809, %v801, %v817
  %v826 = vsel %vm810, %v802, %v818
  %v827 = vsel %vm811, %v803, %v819
  %v828 = vsel %vm812, %v804, %v820
  %v829 = vsel %vm813, %v805, %v821
  %v830 = vsel %vm814, %v806, %v822
  %v831 = vsel %vm815, %v807, %v823
  %v832 = vadd.f32 %v603, %v605
  %v833 = vadd.f32 %v832, %v644
  %v834 = vadd.f32 %v833, %v646
  %v835 = vadd.f32 %v834, %v685
  %v836 = vadd.f32 %v835, %v687
  %v837 = vadd.f32 %v836, %v726
  %v838 = vadd.f32 %v837, %v728
  %839 = vadd.xlane.f32.xlu0 %v838
  %v840 = vpop.xlane.xlu0 %839
  %v841 = vmul.f32 %v840, %v744
  %v842 = vsub.f32 %v603, %v841
  %v843 = vsub.f32 %v605, %v841
  %v844 = vsub.f32 %v644, %v841
  %v845 = vsub.f32 %v646, %v841
  %v846 = vsub.f32 %v685, %v841
  %v847 = vsub.f32 %v687, %v841
  %v848 = vsub.f32 %v726, %v841
  %v849 = vsub.f32 %v728, %v841
  %v850 = vmul.f32 %v842, %v842
  %v851 = vmul.f32 %v843, %v843
  %v852 = vmul.f32 %v844, %v844
  %v853 = vmul.f32 %v845, %v845
  %v854 = vmul.f32 %v846, %v846
  %v855 = vmul.f32 %v847, %v847
  %v856 = vmul.f32 %v848, %v848
  %v857 = vmul.f32 %v849, %v849
  %v858 = vadd.f32 %v850, %v851
  %v859 = vadd.f32 %v858, %v852
  %v860 = vadd.f32 %v859, %v853
  %v861 = vadd.f32 %v860, %v854
  %v862 = vadd.f32 %v861, %v855
  %v863 = vadd.f32 %v862, %v856
  %v864 = vadd.f32 %v863, %v857
  %865 = vadd.xlane.f32.xlu0 %v864
  %v866 = vpop.xlane.xlu0 %865
  %v867 = vmul.f32 %v866, %v744
  %v868 = vadd.f32 %v867, 1e-05
  %v869 = vrsqrt.pop %v868
  %v870 = vmul.f32 %v842, %v869
  %v871 = vmul.f32 %v843, %v869
  %v872 = vmul.f32 %v844, %v869
  %v873 = vmul.f32 %v845, %v869
  %v874 = vmul.f32 %v846, %v869
  %v875 = vmul.f32 %v847, %v869
  %v876 = vmul.f32 %v848, %v869
  %v877 = vmul.f32 %v849, %v869
  %v878 = vmul.f32 %v870, %v785
  %v879 = vmul.f32 %v871, %v785
  %v880 = vmul.f32 %v872, %v785
  %v881 = vmul.f32 %v873, %v785
  %v882 = vmul.f32 %v874, %v785
  %v883 = vmul.f32 %v875, %v785
  %v884 = vmul.f32 %v876, %v785
  %v885 = vmul.f32 %v877, %v785
  %v886 = vadd.f32 %v878, %v798
  %v887 = vadd.f32 %v879, %v798
  %v888 = vadd.f32 %v880, %v798
  %v889 = vadd.f32 %v881, %v798
  %v890 = vadd.f32 %v882, %v798
  %v891 = vadd.f32 %v883, %v798
  %v892 = vadd.f32 %v884, %v798
  %v893 = vadd.f32 %v885, %v798
  %vm894 = vcmp.ge.f32.partialorder %v886, 0.0
  %vm895 = vcmp.ge.f32.partialorder %v887, 0.0
  %vm896 = vcmp.ge.f32.partialorder %v888, 0.0
  %vm897 = vcmp.ge.f32.partialorder %v889, 0.0
  %vm898 = vcmp.ge.f32.partialorder %v890, 0.0
  %vm899 = vcmp.ge.f32.partialorder %v891, 0.0
  %vm900 = vcmp.ge.f32.partialorder %v892, 0.0
  %vm901 = vcmp.ge.f32.partialorder %v893, 0.0
  %v902 = vmul.f32 %v886, 0.2
  %v903 = vmul.f32 %v887, 0.2
  %v904 = vmul.f32 %v888, 0.2
  %v905 = vmul.f32 %v889, 0.2
  %v906 = vmul.f32 %v890, 0.2
  %v907 = vmul.f32 %v891, 0.2
  %v908 = vmul.f32 %v892, 0.2
  %v909 = vmul.f32 %v893, 0.2
  %v910 = vsel %vm894, %v886, %v902
  %v911 = vsel %vm895, %v887, %v903
  %v912 = vsel %vm896, %v888, %v904
  %v913 = vsel %vm897, %v889, %v905
  %v914 = vsel %vm898, %v890, %v906
  %v915 = vsel %vm899, %v891, %v907
  %v916 = vsel %vm900, %v892, %v908
  %v917 = vsel %vm901, %v893, %v909
  %v918 = vpack.c.bf16 %v824, %v824
  %v919 = vpack.c.bf16 %v825, %v825
  %v920 = vpack.c.bf16 %v826, %v826
  %v921 = vpack.c.bf16 %v827, %v827
  %v922 = vpack.c.bf16 %v828, %v828
  %v923 = vpack.c.bf16 %v829, %v829
  %v924 = vpack.c.bf16 %v830, %v830
  %v925 = vpack.c.bf16 %v831, %v831
  %v926 = vpack.c.bf16 %v910, %v910
  %v927 = vpack.c.bf16 %v911, %v911
  %v928 = vpack.c.bf16 %v912, %v912
  %v929 = vpack.c.bf16 %v913, %v913
  %v930 = vpack.c.bf16 %v914, %v914
  %v931 = vpack.c.bf16 %v915, %v915
  %v932 = vpack.c.bf16 %v916, %v916
  %v933 = vpack.c.bf16 %v917, %v917
  %v950 = vunpack.c.l.b16 %v918
  %v951 = vunpack.c.l.b16 %v919
  %v952 = vunpack.c.l.b16 %v920
  %v953 = vunpack.c.l.b16 %v921
  %v954 = vunpack.c.l.b16 %v922
  %v955 = vunpack.c.l.b16 %v923
  %v956 = vunpack.c.l.b16 %v924
  %v957 = vunpack.c.l.b16 %v925
  %v958 = vunpack.c.l.b16 %v926
  %v959 = vunpack.c.l.b16 %v927
  %v960 = vunpack.c.l.b16 %v928
  %v961 = vunpack.c.l.b16 %v929
  %v962 = vunpack.c.l.b16 %v930
  %v963 = vunpack.c.l.b16 %v931
  %v964 = vunpack.c.l.b16 %v932
  %v965 = vunpack.c.l.b16 %v933
  %v966 = vpack.c.b16 %v951, %v950
  %v967 = vpack.c.b16 %v953, %v952
  %v968 = vpack.c.b16 %v955, %v954
  %v969 = vpack.c.b16 %v957, %v956
  %v970 = vpack.c.b16 %v959, %v958
  %v971 = vpack.c.b16 %v961, %v960
  %v972 = vpack.c.b16 %v963, %v962
  %v973 = vpack.c.b16 %v965, %v964
  %982 = vst [vmem:[%s3] sm:$0xff] %v966
  %983 = vst [vmem:[%s3 + $0x8] sm:$0xff] %v967
  %984 = vst [vmem:[%s3 + $0x10] sm:$0xff] %v968
  %985 = vst [vmem:[%s3 + $0x18] sm:$0xff] %v969
  %986 = vst [vmem:[%s3 + $0x20] sm:$0xff] %v970
  %987 = vst [vmem:[%s3 + $0x28] sm:$0xff] %v971
  %988 = vst [vmem:[%s3 + $0x30] sm:$0xff] %v972
  %989 = vst [vmem:[%s3 + $0x38] sm:$0xff] %v973
  // Predicated region
  $region14: #{ds_discriminator_forward.14} parent=0 // pred_check
    _
  $region15: #{ds_discriminator_forward.14} parent=0 // pred_check_branch
    %991 = sbr.rel (0) target = $region17
  $region16: #{ds_discriminator_forward.14} parent=0 // pred_region
    _
  $region17: #{ds_discriminator_forward.14} parent=0 // pred_fallthru
    _
  // Predicated region
  $region18: #{ds_discriminator_forward.14} parent=0 // pred_check
    _
  $region19: #{ds_discriminator_forward.14} parent=0 // pred_check_branch
    %993 = sbr.rel (0) target = $region21
  $region20: #{ds_discriminator_forward.14} parent=0 // pred_region
    _
  $region21: #{ds_discriminator_forward.14} parent=0 // pred_fallthru
    _

// kernel: ds_discriminator_forward.15
$region0: #{ds_discriminator_forward.15}
  #allocation0 [shape = 'u32[]', space=smem, size = 0x4, offset = 0x4, fixed_abs, tag = 'smem constant byte address 0x4 - core index']
  #allocation1 [shape = 'u32[144,128]{1,0:T(1,128)}', space=vmem, size = 0x12000, scoped, tag = 'internal scratch']
  %s0 = inlined_call_operand.vmem [shape: bf16[16,128], index: 0, kind: input, shape index: {}]
  %s1 = inlined_call_operand.vmem [shape: bf16[128,512], index: 1, kind: input, shape index: {}]
  %s2 = inlined_call_operand.vmem [shape: f32[2,16,1], index: 2, kind: input, shape index: {}]
  %s3 = inlined_call_operand.vmem [shape: bf16[16,512], index: 3, kind: output, shape index: {}]
  %s4 = sld [smem:[#allocation0]]
  $region22: #{ds_discriminator_forward.15} parent=0
    _
  %s6 = ssub.s32 1, %s4
  %s7 = scalar_select 0, %s6, %s4
  // Predicated region
  $region2: #{ds_discriminator_forward.15} parent=0 // pred_check
    _
  $region3: #{ds_discriminator_forward.15} parent=0 // pred_check_branch
    %9 = sbr.rel (0) target = $region5
  $region4: #{ds_discriminator_forward.15} parent=0 // pred_region
    _
  $region5: #{ds_discriminator_forward.15} parent=0 // pred_fallthru
    _
  // Predicated region
  $region6: #{ds_discriminator_forward.15} parent=0 // pred_check
    _
  $region7: #{ds_discriminator_forward.15} parent=0 // pred_check_branch
    %11 = sbr.rel (0) target = $region9
  $region8: #{ds_discriminator_forward.15} parent=0 // pred_region
    _
  $region9: #{ds_discriminator_forward.15} parent=0 // pred_fallthru
    _
  // Predicated region
  $region10: #{ds_discriminator_forward.15} parent=0 // pred_check
    _
  $region11: #{ds_discriminator_forward.15} parent=0 // pred_check_branch
    %13 = sbr.rel (0) target = $region13
  $region12: #{ds_discriminator_forward.15} parent=0 // pred_region
    _
  $region13: #{ds_discriminator_forward.15} parent=0 // pred_fallthru
    _
  %v15 = vld [vmem:[%s0] sm:$0xf]
  %v16 = vld [vmem:[%s0 + $0x4] sm:$0xf]
  %v17 = vld [vmem:[%s1] sm:$0xff]
  %v18 = vld [vmem:[%s1 + $0x8] sm:$0xff]
  %v19 = vld [vmem:[%s1 + $0x10] sm:$0xff]
  %v20 = vld [vmem:[%s1 + $0x18] sm:$0xff]
  %v21 = vld [vmem:[%s1 + $0x20] sm:$0xff]
  %v22 = vld [vmem:[%s1 + $0x28] sm:$0xff]
  %v23 = vld [vmem:[%s1 + $0x30] sm:$0xff]
  %v24 = vld [vmem:[%s1 + $0x38] sm:$0xff]
  %v25 = vld [vmem:[%s1 + $0x40] sm:$0xff]
  %v26 = vld [vmem:[%s1 + $0x48] sm:$0xff]
  %v27 = vld [vmem:[%s1 + $0x50] sm:$0xff]
  %v28 = vld [vmem:[%s1 + $0x58] sm:$0xff]
  %v29 = vld [vmem:[%s1 + $0x60] sm:$0xff]
  %v30 = vld [vmem:[%s1 + $0x68] sm:$0xff]
  %v31 = vld [vmem:[%s1 + $0x70] sm:$0xff]
  %v32 = vld [vmem:[%s1 + $0x78] sm:$0xff]
  %v33 = vld [vmem:[%s1 + $0x80] sm:$0xff]
  %v34 = vld [vmem:[%s1 + $0x88] sm:$0xff]
  %v35 = vld [vmem:[%s1 + $0x90] sm:$0xff]
  %v36 = vld [vmem:[%s1 + $0x98] sm:$0xff]
  %v37 = vld [vmem:[%s1 + $0xa0] sm:$0xff]
  %v38 = vld [vmem:[%s1 + $0xa8] sm:$0xff]
  %v39 = vld [vmem:[%s1 + $0xb0] sm:$0xff]
  %v40 = vld [vmem:[%s1 + $0xb8] sm:$0xff]
  %v41 = vld [vmem:[%s1 + $0xc0] sm:$0xff]
  %v42 = vld [vmem:[%s1 + $0xc8] sm:$0xff]
  %v43 = vld [vmem:[%s1 + $0xd0] sm:$0xff]
  %v44 = vld [vmem:[%s1 + $0xd8] sm:$0xff]
  %v45 = vld [vmem:[%s1 + $0xe0] sm:$0xff]
  %v46 = vld [vmem:[%s1 + $0xe8] sm:$0xff]
  %v47 = vld [vmem:[%s1 + $0xf0] sm:$0xff]
  %v48 = vld [vmem:[%s1 + $0xf8] sm:$0xff]
  %v51 = vunpack.c.l.b16 %v15
  %v52 = vunpack.c.l.b16 %v16
  %v53 = vpack.c.b16 %v52, %v51
  %v87 = vunpack.c.l.b16 %v17
  %v88 = vunpack.c.h.b16 %v17
  %v89 = vunpack.c.l.b16 %v18
  %v90 = vunpack.c.h.b16 %v18
  %v91 = vunpack.c.l.b16 %v19
  %v92 = vunpack.c.h.b16 %v19
  %v93 = vunpack.c.l.b16 %v20
  %v94 = vunpack.c.h.b16 %v20
  %v95 = vunpack.c.l.b16 %v21
  %v96 = vunpack.c.h.b16 %v21
  %v97 = vunpack.c.l.b16 %v22
  %v98 = vunpack.c.h.b16 %v22
  %v99 = vunpack.c.l.b16 %v23
  %v100 = vunpack.c.h.b16 %v23
  %v101 = vunpack.c.l.b16 %v24
  %v102 = vunpack.c.h.b16 %v24
  %v103 = vunpack.c.l.b16 %v25
  %v104 = vunpack.c.h.b16 %v25
  %v105 = vunpack.c.l.b16 %v26
  %v106 = vunpack.c.h.b16 %v26
  %v107 = vunpack.c.l.b16 %v27
  %v108 = vunpack.c.h.b16 %v27
  %v109 = vunpack.c.l.b16 %v28
  %v110 = vunpack.c.h.b16 %v28
  %v111 = vunpack.c.l.b16 %v29
  %v112 = vunpack.c.h.b16 %v29
  %v113 = vunpack.c.l.b16 %v30
  %v114 = vunpack.c.h.b16 %v30
  %v115 = vunpack.c.l.b16 %v31
  %v116 = vunpack.c.h.b16 %v31
  %v117 = vunpack.c.l.b16 %v32
  %v118 = vunpack.c.h.b16 %v32
  %v119 = vunpack.c.l.b16 %v33
  %v120 = vunpack.c.h.b16 %v33
  %v121 = vunpack.c.l.b16 %v34
  %v122 = vunpack.c.h.b16 %v34
  %v123 = vunpack.c.l.b16 %v35
  %v124 = vunpack.c.h.b16 %v35
  %v125 = vunpack.c.l.b16 %v36
  %v126 = vunpack.c.h.b16 %v36
  %v127 = vunpack.c.l.b16 %v37
  %v128 = vunpack.c.h.b16 %v37
  %v129 = vunpack.c.l.b16 %v38
  %v130 = vunpack.c.h.b16 %v38
  %v131 = vunpack.c.l.b16 %v39
  %v132 = vunpack.c.h.b16 %v39
  %v133 = vunpack.c.l.b16 %v40
  %v134 = vunpack.c.h.b16 %v40
  %v135 = vunpack.c.l.b16 %v41
  %v136 = vunpack.c.h.b16 %v41
  %v137 = vunpack.c.l.b16 %v42
  %v138 = vunpack.c.h.b16 %v42
  %v139 = vunpack.c.l.b16 %v43
  %v140 = vunpack.c.h.b16 %v43
  %v141 = vunpack.c.l.b16 %v44
  %v142 = vunpack.c.h.b16 %v44
  %v143 = vunpack.c.l.b16 %v45
  %v144 = vunpack.c.h.b16 %v45
  %v145 = vunpack.c.l.b16 %v46
  %v146 = vunpack.c.h.b16 %v46
  %v147 = vunpack.c.l.b16 %v47
  %v148 = vunpack.c.h.b16 %v47
  %v149 = vunpack.c.l.b16 %v48
  %v150 = vunpack.c.h.b16 %v48
  %v151 = vpack.c.b16 %v91, %v87
  %v152 = vpack.c.b16 %v92, %v88
  %v153 = vpack.c.b16 %v93, %v89
  %v154 = vpack.c.b16 %v94, %v90
  %v155 = vpack.c.b16 %v99, %v95
  %v156 = vpack.c.b16 %v100, %v96
  %v157 = vpack.c.b16 %v101, %v97
  %v158 = vpack.c.b16 %v102, %v98
  %v159 = vpack.c.b16 %v107, %v103
  %v160 = vpack.c.b16 %v108, %v104
  %v161 = vpack.c.b16 %v109, %v105
  %v162 = vpack.c.b16 %v110, %v106
  %v163 = vpack.c.b16 %v115, %v111
  %v164 = vpack.c.b16 %v116, %v112
  %v165 = vpack.c.b16 %v117, %v113
  %v166 = vpack.c.b16 %v118, %v114
  %v167 = vpack.c.b16 %v123, %v119
  %v168 = vpack.c.b16 %v124, %v120
  %v169 = vpack.c.b16 %v125, %v121
  %v170 = vpack.c.b16 %v126, %v122
  %v171 = vpack.c.b16 %v131, %v127
  %v172 = vpack.c.b16 %v132, %v128
  %v173 = vpack.c.b16 %v133, %v129
  %v174 = vpack.c.b16 %v134, %v130
  %v175 = vpack.c.b16 %v139, %v135
  %v176 = vpack.c.b16 %v140, %v136
  %v177 = vpack.c.b16 %v141, %v137
  %v178 = vpack.c.b16 %v142, %v138
  %v179 = vpack.c.b16 %v147, %v143
  %v180 = vpack.c.b16 %v148, %v144
  %v181 = vpack.c.b16 %v149, %v145
  %v182 = vpack.c.b16 %v150, %v146
  %215 = vmatprep.subr.bf16.mxu0 %v180
  %216 = vmatpush1.bf16.msra.mxu0 %v179
  %217 = vmatprep.subr.bf16.mxu0 %v176
  %218 = vmatpush1.bf16.msra.mxu0 %v175
  %219 = vmatprep.subr.bf16.mxu0 %v172
  %220 = vmatpush1.bf16.msra.mxu0 %v171
  %221 = vmatprep.subr.bf16.mxu0 %v168
  %222 = vmatpush1.bf16.msra.mxu0 %v167
  %223 = vmatprep.subr.bf16.mxu0 %v164
  %224 = vmatpush1.bf16.msra.mxu0 %v163
  %225 = vmatprep.subr.bf16.mxu0 %v160
  %226 = vmatpush1.bf16.msra.mxu0 %v159
  %227 = vmatprep.subr.bf16.mxu0 %v156
  %228 = vmatpush1.bf16.msra.mxu0 %v155
  %229 = vmatprep.subr.bf16.mxu0 %v152
  %230 = vmatpush1.bf16.msra.mxu0 %v151
  %231 = vmatprep.subr.bf16.mxu0 0
  %232 = vmatpush2.bf16.msra.mxu0 0
  %233 = vmatprep.subr.bf16.mxu0 0
  %234 = vmatpush2.bf16.msra.mxu0 0
  %235 = vmatprep.subr.bf16.mxu0 0
  %236 = vmatpush2.bf16.msra.mxu0 0
  %237 = vmatprep.subr.bf16.mxu0 0
  %238 = vmatpush2.bf16.msra.mxu0 0
  %239 = vmatprep.subr.bf16.mxu0 0
  %240 = vmatpush2.bf16.msra.mxu0 0
  %241 = vmatprep.subr.bf16.mxu0 0
  %242 = vmatpush2.bf16.msra.mxu0 0
  %243 = vmatprep.subr.bf16.mxu0 0
  %244 = vmatpush2.bf16.msra.mxu0 0
  %245 = vmatprep.subr.bf16.mxu0 0
  %246 = vmatpush2.bf16.msra.mxu0 0
  %247 = vmatprep.mubr.bf16.mxu0 0
  %248 = vmatmul.mubr.bf16.gmra.mxu0 %v53
  %v249 = vpop.f32.mrf.mxu0
  %v250 = vadd.f32 0.0, %v249
  %v251 = vpop.f32.mrf.mxu0
  %v252 = vadd.f32 0.0, %v251
  %v253 = vpop.f32.mrf.mxu0
  %v254 = vadd.f32 0.0, %v253
  %v255 = vpop.f32.mrf.mxu0
  %v256 = vadd.f32 0.0, %v255
  %257 = vdwg.mxu0
  %258 = vmatprep.subr.bf16.mxu0 %v182
  %259 = vmatpush1.bf16.msra.mxu0 %v181
  %260 = vmatprep.subr.bf16.mxu0 %v178
  %261 = vmatpush1.bf16.msra.mxu0 %v177
  %262 = vmatprep.subr.bf16.mxu0 %v174
  %263 = vmatpush1.bf16.msra.mxu0 %v173
  %264 = vmatprep.subr.bf16.mxu0 %v170
  %265 = vmatpush1.bf16.msra.mxu0 %v169
  %266 = vmatprep.subr.bf16.mxu0 %v166
  %267 = vmatpush1.bf16.msra.mxu0 %v165
  %268 = vmatprep.subr.bf16.mxu0 %v162
  %269 = vmatpush1.bf16.msra.mxu0 %v161
  %270 = vmatprep.subr.bf16.mxu0 %v158
  %271 = vmatpush1.bf16.msra.mxu0 %v157
  %272 = vmatprep.subr.bf16.mxu0 %v154
  %273 = vmatpush1.bf16.msra.mxu0 %v153
  %274 = vmatprep.subr.bf16.mxu0 0
  %275 = vmatpush2.bf16.msra.mxu0 0
  %276 = vmatprep.subr.bf16.mxu0 0
  %277 = vmatpush2.bf16.msra.mxu0 0
  %278 = vmatprep.subr.bf16.mxu0 0
  %279 = vmatpush2.bf16.msra.mxu0 0
  %280 = vmatprep.subr.bf16.mxu0 0
  %281 = vmatpush2.bf16.msra.mxu0 0
  %282 = vmatprep.subr.bf16.mxu0 0
  %283 = vmatpush2.bf16.msra.mxu0 0
  %284 = vmatprep.subr.bf16.mxu0 0
  %285 = vmatpush2.bf16.msra.mxu0 0
  %286 = vmatprep.subr.bf16.mxu0 0
  %287 = vmatpush2.bf16.msra.mxu0 0
  %288 = vmatprep.subr.bf16.mxu0 0
  %289 = vmatpush2.bf16.msra.mxu0 0
  %290 = vmatprep.mubr.bf16.mxu0 0
  %291 = vmatmul.mubr.bf16.gmra.mxu0 %v53
  %v292 = vpop.f32.mrf.mxu0
  %v293 = vadd.f32 0.0, %v292
  %v294 = vpop.f32.mrf.mxu0
  %v295 = vadd.f32 0.0, %v294
  %v296 = vpop.f32.mrf.mxu0
  %v297 = vadd.f32 0.0, %v296
  %v298 = vpop.f32.mrf.mxu0
  %v299 = vadd.f32 0.0, %v298
  %300 = vdwg.mxu0
  %v301 = vld [vmem:[%s2] sm:$0xff]
  %v302 = vld [vmem:[%s2 + $0x8] sm:$0xff]
  %s303 = scalar_lea.vmem %s2, 16
  %v304 = vld [vmem:[%s303] sm:$0xff]
  %v305 = vld [vmem:[%s303 + $0x8] sm:$0xff]
  %v306 = vadd.f32 %v250, %v252
  %307 = vadd.xlane.f32.xlu0 %v306
  %v308 = vpop.xlane.xlu0 %307
  %v309 = vadd.f32 %v254, %v256
  %310 = vadd.xlane.f32.xlu0 %v309
  %v311 = vpop.xlane.xlu0 %310
  %v312 = vrcp.pop 256.0
  %v313 = vmul.f32 %v308, %v312
  %v314 = vmul.f32 %v311, %v312
  %v315 = vsub.f32 %v250, %v313
  %v316 = vsub.f32 %v252, %v313
  %v317 = vsub.f32 %v254, %v314
  %v318 = vsub.f32 %v256, %v314
  %v319 = vmul.f32 %v315, %v315
  %v320 = vmul.f32 %v316, %v316
  %v321 = vmul.f32 %v317, %v317
  %v322 = vmul.f32 %v318, %v318
  %v323 = vadd.f32 %v319, %v320
  %324 = vadd.xlane.f32.xlu0 %v323
  %v325 = vpop.xlane.xlu0 %324
  %v326 = vadd.f32 %v321, %v322
  %327 = vadd.xlane.f32.xlu0 %v326
  %v328 = vpop.xlane.xlu0 %327
  %v329 = vmul.f32 %v325, %v312
  %v330 = vmul.f32 %v328, %v312
  %v331 = vadd.f32 %v329, 1e-05
  %v332 = vadd.f32 %v330, 1e-05
  %v333 = vrsqrt.pop %v331
  %v334 = vrsqrt.pop %v332
  %v335 = vmul.f32 %v315, %v333
  %v336 = vmul.f32 %v316, %v333
  %v337 = vmul.f32 %v317, %v334
  %v338 = vmul.f32 %v318, %v334
  %340 = vset.pattern.permute.xlu0 0
  %341 = vperm.xlu0 %340, %v301
  %v342 = vpop.permute.xlu0 %341
  %345 = vset.pattern.permute.xlu0 0
  %346 = vperm.xlu0 %345, %v302
  %v347 = vpop.permute.xlu0 %346
  %v349 = vmul.f32 %v335, %v342
  %v350 = vmul.f32 %v336, %v342
  %v351 = vmul.f32 %v337, %v347
  %v352 = vmul.f32 %v338, %v347
  %354 = vset.pattern.permute.xlu0 0
  %355 = vperm.xlu0 %354, %v304
  %v356 = vpop.permute.xlu0 %355
  %359 = vset.pattern.permute.xlu0 0
  %360 = vperm.xlu0 %359, %v305
  %v361 = vpop.permute.xlu0 %360
  %v363 = vadd.f32 %v349, %v356
  %v364 = vadd.f32 %v350, %v356
  %v365 = vadd.f32 %v351, %v361
  %v366 = vadd.f32 %v352, %v361
  %vm367 = vcmp.ge.f32.partialorder %v363, 0.0
  %vm368 = vcmp.ge.f32.partialorder %v364, 0.0
  %vm369 = vcmp.ge.f32.partialorder %v365, 0.0
  %vm370 = vcmp.ge.f32.partialorder %v366, 0.0
  %v371 = vmul.f32 %v363, 0.2
  %v372 = vmul.f32 %v364, 0.2
  %v373 = vmul.f32 %v365, 0.2
  %v374 = vmul.f32 %v366, 0.2
  %v375 = vsel %vm367, %v363, %v371
  %v376 = vsel %vm368, %v364, %v372
  %v377 = vsel %vm369, %v365, %v373
  %v378 = vsel %vm370, %v366, %v374
  %v379 = vadd.f32 %v293, %v295
  %380 = vadd.xlane.f32.xlu0 %v379
  %v381 = vpop.xlane.xlu0 %380
  %v382 = vadd.f32 %v297, %v299
  %383 = vadd.xlane.f32.xlu0 %v382
  %v384 = vpop.xlane.xlu0 %383
  %v385 = vmul.f32 %v381, %v312
  %v386 = vmul.f32 %v384, %v312
  %v387 = vsub.f32 %v293, %v385
  %v388 = vsub.f32 %v295, %v385
  %v389 = vsub.f32 %v297, %v386
  %v390 = vsub.f32 %v299, %v386
  %v391 = vmul.f32 %v387, %v387
  %v392 = vmul.f32 %v388, %v388
  %v393 = vmul.f32 %v389, %v389
  %v394 = vmul.f32 %v390, %v390
  %v395 = vadd.f32 %v391, %v392
  %396 = vadd.xlane.f32.xlu0 %v395
  %v397 = vpop.xlane.xlu0 %396
  %v398 = vadd.f32 %v393, %v394
  %399 = vadd.xlane.f32.xlu0 %v398
  %v400 = vpop.xlane.xlu0 %399
  %v401 = vmul.f32 %v397, %v312
  %v402 = vmul.f32 %v400, %v312
  %v403 = vadd.f32 %v401, 1e-05
  %v404 = vadd.f32 %v402, 1e-05
  %v405 = vrsqrt.pop %v403
  %v406 = vrsqrt.pop %v404
  %v407 = vmul.f32 %v387, %v405
  %v408 = vmul.f32 %v388, %v405
  %v409 = vmul.f32 %v389, %v406
  %v410 = vmul.f32 %v390, %v406
  %v411 = vmul.f32 %v407, %v342
  %v412 = vmul.f32 %v408, %v342
  %v413 = vmul.f32 %v409, %v347
  %v414 = vmul.f32 %v410, %v347
  %v415 = vadd.f32 %v411, %v356
  %v416 = vadd.f32 %v412, %v356
  %v417 = vadd.f32 %v413, %v361
  %v418 = vadd.f32 %v414, %v361
  %vm419 = vcmp.ge.f32.partialorder %v415, 0.0
  %vm420 = vcmp.ge.f32.partialorder %v416, 0.0
  %vm421 = vcmp.ge.f32.partialorder %v417, 0.0
  %vm422 = vcmp.ge.f32.partialorder %v418, 0.0
  %v423 = vmul.f32 %v415, 0.2
  %v424 = vmul.f32 %v416, 0.2
  %v425 = vmul.f32 %v417, 0.2
  %v426 = vmul.f32 %v418, 0.2
  %v427 = vsel %vm419, %v415, %v423
  %v428 = vsel %vm420, %v416, %v424
  %v429 = vsel %vm421, %v417, %v425
  %v430 = vsel %vm422, %v418, %v426
  %v431 = vpack.c.bf16 %v377, %v375
  %v432 = vpack.c.bf16 %v378, %v376
  %v433 = vpack.c.bf16 %v429, %v427
  %v434 = vpack.c.bf16 %v430, %v428
  %v439 = vunpack.c.l.b16 %v431
  %v440 = vunpack.c.l.b16 %v432
  %v441 = vunpack.c.l.b16 %v433
  %v442 = vunpack.c.l.b16 %v434
  %v443 = vunpack.c.h.b16 %v431
  %v444 = vunpack.c.h.b16 %v432
  %v445 = vunpack.c.h.b16 %v433
  %v446 = vunpack.c.h.b16 %v434
  %v447 = vpack.c.b16 %v440, %v439
  %v448 = vpack.c.b16 %v442, %v441
  %v449 = vpack.c.b16 %v444, %v443
  %v450 = vpack.c.b16 %v446, %v445
  %455 = vst [vmem:[%s3] sm:$0xff] %v447
  %456 = vst [vmem:[%s3 + $0x8] sm:$0xff] %v448
  %457 = vst [vmem:[%s3 + $0x10] sm:$0xff] %v449
  %458 = vst [vmem:[%s3 + $0x18] sm:$0xff] %v450
  // Predicated region
  $region14: #{ds_discriminator_forward.15} parent=0 // pred_check
    _
  $region15: #{ds_discriminator_forward.15} parent=0 // pred_check_branch
    %460 = sbr.rel (0) target = $region17
  $region16: #{ds_discriminator_forward.15} parent=0 // pred_region
    _
  $region17: #{ds_discriminator_forward.15} parent=0 // pred_fallthru
    _
  // Predicated region
  $region18: #{ds_discriminator_forward.15} parent=0 // pred_check
    _
  $region19: #{ds_discriminator_forward.15} parent=0 // pred_check_branch
    %462 = sbr.rel (0) target = $region21
  $region20: #{ds_discriminator_forward.15} parent=0 // pred_region
    _
  $region21: #{ds_discriminator_forward.15} parent=0 // pred_fallthru
    _

// kernel: ds_discriminator_forward.16
$region0: #{ds_discriminator_forward.16}
  #allocation0 [shape = 'u32[]', space=smem, size = 0x4, offset = 0x4, fixed_abs, tag = 'smem constant byte address 0x4 - core index']
  #allocation1 [shape = 'u32[144,128]{1,0:T(1,128)}', space=vmem, size = 0x12000, scoped, tag = 'internal scratch']
  %s0 = inlined_call_operand.vmem [shape: bf16[24,256], index: 0, kind: input, shape index: {}]
  %s1 = inlined_call_operand.vmem [shape: bf16[256,128], index: 1, kind: input, shape index: {}]
  %s2 = inlined_call_operand.vmem [shape: f32[2,24,1], index: 2, kind: input, shape index: {}]
  %s3 = inlined_call_operand.vmem [shape: bf16[24,128], index: 3, kind: output, shape index: {}]
  %s4 = sld [smem:[#allocation0]]
  $region22: #{ds_discriminator_forward.16} parent=0
    _
  %s6 = ssub.s32 1, %s4
  %s7 = scalar_select 0, %s6, %s4
  // Predicated region
  $region2: #{ds_discriminator_forward.16} parent=0 // pred_check
    _
  $region3: #{ds_discriminator_forward.16} parent=0 // pred_check_branch
    %9 = sbr.rel (0) target = $region5
  $region4: #{ds_discriminator_forward.16} parent=0 // pred_region
    _
  $region5: #{ds_discriminator_forward.16} parent=0 // pred_fallthru
    _
  // Predicated region
  $region6: #{ds_discriminator_forward.16} parent=0 // pred_check
    _
  $region7: #{ds_discriminator_forward.16} parent=0 // pred_check_branch
    %11 = sbr.rel (0) target = $region9
  $region8: #{ds_discriminator_forward.16} parent=0 // pred_region
    _
  $region9: #{ds_discriminator_forward.16} parent=0 // pred_fallthru
    _
  // Predicated region
  $region10: #{ds_discriminator_forward.16} parent=0 // pred_check
    _
  $region11: #{ds_discriminator_forward.16} parent=0 // pred_check_branch
    %13 = sbr.rel (0) target = $region13
  $region12: #{ds_discriminator_forward.16} parent=0 // pred_region
    _
  $region13: #{ds_discriminator_forward.16} parent=0 // pred_fallthru
    _
  %v15 = vld [vmem:[%s0] sm:$0xff]
  %v16 = vld [vmem:[%s0 + $0x8] sm:$0xff]
  %v17 = vld [vmem:[%s0 + $0x10] sm:$0xff]
  %v18 = vld [vmem:[%s1] sm:$0xf]
  %v19 = vld [vmem:[%s1 + $0x4] sm:$0xf]
  %v20 = vld [vmem:[%s1 + $0x8] sm:$0xf]
  %v21 = vld [vmem:[%s1 + $0xc] sm:$0xf]
  %v22 = vld [vmem:[%s1 + $0x10] sm:$0xf]
  %v23 = vld [vmem:[%s1 + $0x14] sm:$0xf]
  %v24 = vld [vmem:[%s1 + $0x18] sm:$0xf]
  %v25 = vld [vmem:[%s1 + $0x1c] sm:$0xf]
  %v26 = vld [vmem:[%s1 + $0x20] sm:$0xf]
  %v27 = vld [vmem:[%s1 + $0x24] sm:$0xf]
  %v28 = vld [vmem:[%s1 + $0x28] sm:$0xf]
  %v29 = vld [vmem:[%s1 + $0x2c] sm:$0xf]
  %v30 = vld [vmem:[%s1 + $0x30] sm:$0xf]
  %v31 = vld [vmem:[%s1 + $0x34] sm:$0xf]
  %v32 = vld [vmem:[%s1 + $0x38] sm:$0xf]
  %v33 = vld [vmem:[%s1 + $0x3c] sm:$0xf]
  %v34 = vld [vmem:[%s1 + $0x40] sm:$0xf]
  %v35 = vld [vmem:[%s1 + $0x44] sm:$0xf]
  %v36 = vld [vmem:[%s1 + $0x48] sm:$0xf]
  %v37 = vld [vmem:[%s1 + $0x4c] sm:$0xf]
  %v38 = vld [vmem:[%s1 + $0x50] sm:$0xf]
  %v39 = vld [vmem:[%s1 + $0x54] sm:$0xf]
  %v40 = vld [vmem:[%s1 + $0x58] sm:$0xf]
  %v41 = vld [vmem:[%s1 + $0x5c] sm:$0xf]
  %v42 = vld [vmem:[%s1 + $0x60] sm:$0xf]
  %v43 = vld [vmem:[%s1 + $0x64] sm:$0xf]
  %v44 = vld [vmem:[%s1 + $0x68] sm:$0xf]
  %v45 = vld [vmem:[%s1 + $0x6c] sm:$0xf]
  %v46 = vld [vmem:[%s1 + $0x70] sm:$0xf]
  %v47 = vld [vmem:[%s1 + $0x74] sm:$0xf]
  %v48 = vld [vmem:[%s1 + $0x78] sm:$0xf]
  %v49 = vld [vmem:[%s1 + $0x7c] sm:$0xf]
  %v53 = vunpack.c.l.b16 %v15
  %v54 = vunpack.c.h.b16 %v15
  %v55 = vunpack.c.l.b16 %v16
  %v56 = vunpack.c.h.b16 %v16
  %v57 = vunpack.c.l.b16 %v17
  %v58 = vunpack.c.h.b16 %v17
  %v59 = vpack.c.b16 %v55, %v53
  %v60 = vpack.c.b16 %v56, %v54
  %v61 = vpack.c.b16 %v57, %v57
  %v62 = vpack.c.b16 %v58, %v58
  %v99 = vunpack.c.l.b16 %v18
  %v100 = vunpack.c.l.b16 %v19
  %v101 = vunpack.c.l.b16 %v20
  %v102 = vunpack.c.l.b16 %v21
  %v103 = vunpack.c.l.b16 %v22
  %v104 = vunpack.c.l.b16 %v23
  %v105 = vunpack.c.l.b16 %v24
  %v106 = vunpack.c.l.b16 %v25
  %v107 = vunpack.c.l.b16 %v26
  %v108 = vunpack.c.l.b16 %v27
  %v109 = vunpack.c.l.b16 %v28
  %v110 = vunpack.c.l.b16 %v29
  %v111 = vunpack.c.l.b16 %v30
  %v112 = vunpack.c.l.b16 %v31
  %v113 = vunpack.c.l.b16 %v32
  %v114 = vunpack.c.l.b16 %v33
  %v115 = vunpack.c.l.b16 %v34
  %v116 = vunpack.c.l.b16 %v35
  %v117 = vunpack.c.l.b16 %v36
  %v118 = vunpack.c.l.b16 %v37
  %v119 = vunpack.c.l.b16 %v38
  %v120 = vunpack.c.l.b16 %v39
  %v121 = vunpack.c.l.b16 %v40
  %v122 = vunpack.c.l.b16 %v41
  %v123 = vunpack.c.l.b16 %v42
  %v124 = vunpack.c.l.b16 %v43
  %v125 = vunpack.c.l.b16 %v44
  %v126 = vunpack.c.l.b16 %v45
  %v127 = vunpack.c.l.b16 %v46
  %v128 = vunpack.c.l.b16 %v47
  %v129 = vunpack.c.l.b16 %v48
  %v130 = vunpack.c.l.b16 %v49
  %v131 = vpack.c.b16 %v100, %v99
  %v132 = vpack.c.b16 %v102, %v101
  %v133 = vpack.c.b16 %v104, %v103
  %v134 = vpack.c.b16 %v106, %v105
  %v135 = vpack.c.b16 %v108, %v107
  %v136 = vpack.c.b16 %v110, %v109
  %v137 = vpack.c.b16 %v112, %v111
  %v138 = vpack.c.b16 %v114, %v113
  %v139 = vpack.c.b16 %v116, %v115
  %v140 = vpack.c.b16 %v118, %v117
  %v141 = vpack.c.b16 %v120, %v119
  %v142 = vpack.c.b16 %v122, %v121
  %v143 = vpack.c.b16 %v124, %v123
  %v144 = vpack.c.b16 %v126, %v125
  %v145 = vpack.c.b16 %v128, %v127
  %v146 = vpack.c.b16 %v130, %v129
  %163 = vmatprep.subr.bf16.mxu0 0
  %164 = vmatpush1.bf16.msra.mxu0 %v138
  %165 = vmatprep.subr.bf16.mxu0 0
  %166 = vmatpush1.bf16.msra.mxu0 %v137
  %167 = vmatprep.subr.bf16.mxu0 0
  %168 = vmatpush1.bf16.msra.mxu0 %v136
  %169 = vmatprep.subr.bf16.mxu0 0
  %170 = vmatpush1.bf16.msra.mxu0 %v135
  %171 = vmatprep.subr.bf16.mxu0 0
  %172 = vmatpush1.bf16.msra.mxu0 %v134
  %173 = vmatprep.subr.bf16.mxu0 0
  %174 = vmatpush1.bf16.msra.mxu0 %v133
  %175 = vmatprep.subr.bf16.mxu0 0
  %176 = vmatpush1.bf16.msra.mxu0 %v132
  %177 = vmatprep.subr.bf16.mxu0 0
  %178 = vmatpush1.bf16.msra.mxu0 %v131
  %179 = vmatprep.subr.bf16.mxu0 0
  %180 = vmatpush2.bf16.msra.mxu0 %v146
  %181 = vmatprep.subr.bf16.mxu0 0
  %182 = vmatpush2.bf16.msra.mxu0 %v145
  %183 = vmatprep.subr.bf16.mxu0 0
  %184 = vmatpush2.bf16.msra.mxu0 %v144
  %185 = vmatprep.subr.bf16.mxu0 0
  %186 = vmatpush2.bf16.msra.mxu0 %v143
  %187 = vmatprep.subr.bf16.mxu0 0
  %188 = vmatpush2.bf16.msra.mxu0 %v142
  %189 = vmatprep.subr.bf16.mxu0 0
  %190 = vmatpush2.bf16.msra.mxu0 %v141
  %191 = vmatprep.subr.bf16.mxu0 0
  %192 = vmatpush2.bf16.msra.mxu0 %v140
  %193 = vmatprep.subr.bf16.mxu0 0
  %194 = vmatpush2.bf16.msra.mxu0 %v139
  %195 = vmatprep.mubr.bf16.mxu0 %v60
  %196 = vmatmul.mubr.bf16.gmra.mxu0 %v59
  %v197 = vpop.f32.mrf.mxu0
  %v198 = vadd.f32 0.0, %v197
  %v199 = vpop.f32.mrf.mxu0
  %v200 = vpop.f32.mrf.mxu0
  %v201 = vadd.f32 0.0, %v200
  %v202 = vpop.f32.mrf.mxu0
  %203 = vmatprep.mubr.bf16.mxu0 %v62
  %204 = vmatmul.mubr.bf16.gmra.mxu0 %v61
  %v205 = vpop.f32.mrf.mxu0
  %v206 = vadd.f32 0.0, %v205
  %v207 = vpop.f32.mrf.mxu0
  %v208 = vpop.f32.mrf.mxu0
  %v209 = vpop.f32.mrf.mxu0
  %210 = vdwg.mxu0
  %v211 = vld [vmem:[%s2] sm:$0xff]
  %v212 = vld [vmem:[%s2 + $0x8] sm:$0xff]
  %v213 = vld [vmem:[%s2 + $0x10] sm:$0xff]
  %s214 = scalar_lea.vmem %s2, 24
  %v215 = vld [vmem:[%s214] sm:$0xff]
  %v216 = vld [vmem:[%s214 + $0x8] sm:$0xff]
  %v217 = vld [vmem:[%s214 + $0x10] sm:$0xff]
  %vm218 = vcmask 523264
  %v219 = vsel %vm218, %v198, 0.0
  %220 = vadd.xlane.f32.xlu0 %v219
  %v221 = vpop.xlane.xlu0 %220
  %v222 = vsel %vm218, %v201, 0.0
  %223 = vadd.xlane.f32.xlu0 %v222
  %v224 = vpop.xlane.xlu0 %223
  %v225 = vsel %vm218, %v206, 0.0
  %226 = vadd.xlane.f32.xlu0 %v225
  %v227 = vpop.xlane.xlu0 %226
  %v228 = vrcp.pop 64.0
  %v229 = vmul.f32 %v221, %v228
  %v230 = vmul.f32 %v224, %v228
  %v231 = vmul.f32 %v227, %v228
  %v232 = vsub.f32 %v198, %v229
  %v233 = vsub.f32 %v201, %v230
  %v234 = vsub.f32 %v206, %v231
  %v235 = vmul.f32 %v232, %v232
  %v236 = vmul.f32 %v233, %v233
  %v237 = vmul.f32 %v234, %v234
  %v238 = vsel %vm218, %v235, 0.0
  %239 = vadd.xlane.f32.xlu0 %v238
  %v240 = vpop.xlane.xlu0 %239
  %v241 = vsel %vm218, %v236, 0.0
  %242 = vadd.xlane.f32.xlu0 %v241
  %v243 = vpop.xlane.xlu0 %242
  %v244 = vsel %vm218, %v237, 0.0
  %245 = vadd.xlane.f32.xlu0 %v244
  %v246 = vpop.xlane.xlu0 %245
  %v247 = vmul.f32 %v240, %v228
  %v248 = vmul.f32 %v243, %v228
  %v249 = vmul.f32 %v246, %v228
  %v250 = vadd.f32 %v247, 1e-05
  %v251 = vadd.f32 %v248, 1e-05
  %v252 = vadd.f32 %v249, 1e-05
  %v253 = vrsqrt.pop %v250
  %v254 = vrsqrt.pop %v251
  %v255 = vrsqrt.pop %v252
  %v256 = vmul.f32 %v232, %v253
  %v257 = vmul.f32 %v233, %v254
  %v258 = vmul.f32 %v234, %v255
  %260 = vset.pattern.permute.xlu0 0
  %261 = vperm.xlu0 %260, %v211
  %v262 = vpop.permute.xlu0 %261
  %265 = vset.pattern.permute.xlu0 0
  %266 = vperm.xlu0 %265, %v212
  %v267 = vpop.permute.xlu0 %266
  %270 = vset.pattern.permute.xlu0 0
  %271 = vperm.xlu0 %270, %v213
  %v272 = vpop.permute.xlu0 %271
  %v274 = vmul.f32 %v256, %v262
  %v275 = vmul.f32 %v257, %v267
  %v276 = vmul.f32 %v258, %v272
  %278 = vset.pattern.permute.xlu0 0
  %279 = vperm.xlu0 %278, %v215
  %v280 = vpop.permute.xlu0 %279
  %283 = vset.pattern.permute.xlu0 0
  %284 = vperm.xlu0 %283, %v216
  %v285 = vpop.permute.xlu0 %284
  %288 = vset.pattern.permute.xlu0 0
  %289 = vperm.xlu0 %288, %v217
  %v290 = vpop.permute.xlu0 %289
  %v292 = vadd.f32 %v274, %v280
  %v293 = vadd.f32 %v275, %v285
  %v294 = vadd.f32 %v276, %v290
  %vm295 = vcmp.ge.f32.partialorder %v292, 0.0
  %vm296 = vcmp.ge.f32.partialorder %v293, 0.0
  %vm297 = vcmp.ge.f32.partialorder %v294, 0.0
  %v298 = vmul.f32 %v292, 0.2
  %v299 = vmul.f32 %v293, 0.2
  %v300 = vmul.f32 %v294, 0.2
  %v301 = vsel %vm295, %v292, %v298
  %v302 = vsel %vm296, %v293, %v299
  %v303 = vsel %vm297, %v294, %v300
  %307 = vrot.lane.b32.xlu0 %v198, 64
  %v308 = vpop.permute.xlu0 %307
  %309 = vrot.lane.b32.xlu0 %v201, 64
  %v310 = vpop.permute.xlu0 %309
  %311 = vrot.lane.b32.xlu0 %v206, 64
  %v312 = vpop.permute.xlu0 %311
  %v316 = vsel %vm218, %v308, 0.0
  %317 = vadd.xlane.f32.xlu0 %v316
  %v318 = vpop.xlane.xlu0 %317
  %v319 = vsel %vm218, %v310, 0.0
  %320 = vadd.xlane.f32.xlu0 %v319
  %v321 = vpop.xlane.xlu0 %320
  %v322 = vsel %vm218, %v312, 0.0
  %323 = vadd.xlane.f32.xlu0 %v322
  %v324 = vpop.xlane.xlu0 %323
  %v325 = vmul.f32 %v318, %v228
  %v326 = vmul.f32 %v321, %v228
  %v327 = vmul.f32 %v324, %v228
  %v328 = vsub.f32 %v198, %v325
  %v329 = vsub.f32 %v201, %v326
  %v330 = vsub.f32 %v206, %v327
  %v331 = vmul.f32 %v328, %v328
  %v332 = vmul.f32 %v329, %v329
  %v333 = vmul.f32 %v330, %v330
  %337 = vrot.lane.b32.xlu0 %v331, 64
  %v338 = vpop.permute.xlu0 %337
  %339 = vrot.lane.b32.xlu0 %v332, 64
  %v340 = vpop.permute.xlu0 %339
  %341 = vrot.lane.b32.xlu0 %v333, 64
  %v342 = vpop.permute.xlu0 %341
  %v346 = vsel %vm218, %v338, 0.0
  %347 = vadd.xlane.f32.xlu0 %v346
  %v348 = vpop.xlane.xlu0 %347
  %v349 = vsel %vm218, %v340, 0.0
  %350 = vadd.xlane.f32.xlu0 %v349
  %v351 = vpop.xlane.xlu0 %350
  %v352 = vsel %vm218, %v342, 0.0
  %353 = vadd.xlane.f32.xlu0 %v352
  %v354 = vpop.xlane.xlu0 %353
  %v355 = vmul.f32 %v348, %v228
  %v356 = vmul.f32 %v351, %v228
  %v357 = vmul.f32 %v354, %v228
  %v358 = vadd.f32 %v355, 1e-05
  %v359 = vadd.f32 %v356, 1e-05
  %v360 = vadd.f32 %v357, 1e-05
  %v361 = vrsqrt.pop %v358
  %v362 = vrsqrt.pop %v359
  %v363 = vrsqrt.pop %v360
  %v364 = vmul.f32 %v328, %v361
  %v365 = vmul.f32 %v329, %v362
  %v366 = vmul.f32 %v330, %v363
  %v367 = vmul.f32 %v364, %v262
  %v368 = vmul.f32 %v365, %v267
  %v369 = vmul.f32 %v366, %v272
  %v370 = vadd.f32 %v367, %v280
  %v371 = vadd.f32 %v368, %v285
  %v372 = vadd.f32 %v369, %v290
  %vm373 = vcmp.ge.f32.partialorder %v370, 0.0
  %vm374 = vcmp.ge.f32.partialorder %v371, 0.0
  %vm375 = vcmp.ge.f32.partialorder %v372, 0.0
  %v376 = vmul.f32 %v370, 0.2
  %v377 = vmul.f32 %v371, 0.2
  %v378 = vmul.f32 %v372, 0.2
  %v379 = vsel %vm373, %v370, %v376
  %v380 = vsel %vm374, %v371, %v377
  %v381 = vsel %vm375, %v372, %v378
  %v382 = vsel %vm218, %v301, %v379
  %v383 = vsel %vm218, %v302, %v380
  %v384 = vsel %vm218, %v303, %v381
  %v385 = vpack.c.bf16 %v383, %v382
  %v386 = vpack.c.bf16 %v384, %v384
  %v389 = vunpack.c.l.b16 %v385
  %v390 = vunpack.c.h.b16 %v385
  %v391 = vunpack.c.l.b16 %v386
  %v392 = vpack.c.b16 %v389, %v389
  %v393 = vpack.c.b16 %v390, %v390
  %v394 = vpack.c.b16 %v391, %v391
  %398 = vst [vmem:[%s3] sm:$0xf] %v392
  %399 = vst [vmem:[%s3 + $0x4] sm:$0xf] %v393
  %400 = vst [vmem:[%s3 + $0x8] sm:$0xf] %v394
  // Predicated region
  $region14: #{ds_discriminator_forward.16} parent=0 // pred_check
    _
  $region15: #{ds_discriminator_forward.16} parent=0 // pred_check_branch
    %402 = sbr.rel (0) target = $region17
  $region16: #{ds_discriminator_forward.16} parent=0 // pred_region
    _
  $region17: #{ds_discriminator_forward.16} parent=0 // pred_fallthru
    _
  // Predicated region
  $region18: #{ds_discriminator_forward.16} parent=0 // pred_check
    _
  $region19: #{ds_discriminator_forward.16} parent=0 // pred_check_branch
    %404 = sbr.rel (0) target = $region21
  $region20: #{ds_discriminator_forward.16} parent=0 // pred_region
    _
  $region21: #{ds_discriminator_forward.16} parent=0 // pred_fallthru
    _

// kernel: ds_discriminator_forward.17
$region0: #{ds_discriminator_forward.17}
  #allocation0 [shape = 'u32[]', space=smem, size = 0x4, offset = 0x4, fixed_abs, tag = 'smem constant byte address 0x4 - core index']
  #allocation1 [shape = 'u32[144,128]{1,0:T(1,128)}', space=vmem, size = 0x12000, scoped, tag = 'internal scratch']
  #allocation2 [shape = 'f32[1,1]{1,0:T(1,128)S(1)}', space=vmem, size = 0x200, scoped, tag = 'scoped memory for ds_discriminator_forward.17']
  %s0 = inlined_call_operand.vmem [shape: bf16[32,384], index: 0, kind: input, shape index: {}]
  %s1 = inlined_call_operand.vmem [shape: bf16[384,32], index: 1, kind: input, shape index: {}]
  %s2 = inlined_call_operand.vmem [shape: f32[2,32,1], index: 2, kind: input, shape index: {}]
  %s3 = inlined_call_operand.vmem [shape: f32[32,16], index: 3, kind: input, shape index: {}]
  %s4 = inlined_call_operand.<no memory space> [shape: f32[1,1], index: 4, kind: input, shape index: {}]
  %s5 = inlined_call_operand.hbm [shape: f32[1,2], index: 5, kind: output, shape index: {}]
  %s6 = sld [smem:[#allocation0]]
  $region30: #{ds_discriminator_forward.17} parent=0
    _
  %s8 = ssub.s32 1, %s6
  %s9 = scalar_select 0, %s8, %s6
  %v10 = vstv %s4
  %11 = vst [vmem:[#allocation2] sm:$0x1] %v10
  $region1: #{ds_discriminator_forward.17} parent=0
    #allocation3 [shape = 'u8[512]{0}', space=vmem, size = 0x400, scoped, tag = 'output window, operand 0, single buffered']
    #allocation4 [shape = 's32[1]{0}', space=sflag, size = 0x4, scoped, tag = 'scoped memory for ds_discriminator_forward.17']
    %12 = vsyncpa [#allocation4], 0
    // Predicated region
    $region2: #{ds_discriminator_forward.17} parent=1 // pred_check
      _
    $region3: #{ds_discriminator_forward.17} parent=1 // pred_check_branch
      %14 = sbr.rel (0) target = $region5
    $region4: #{ds_discriminator_forward.17} parent=1 // pred_region
      _
    $region5: #{ds_discriminator_forward.17} parent=1 // pred_fallthru
      _
    // Predicated region
    $region6: #{ds_discriminator_forward.17} parent=1 // pred_check
      _
    $region7: #{ds_discriminator_forward.17} parent=1 // pred_check_branch
      %16 = sbr.rel (0) target = $region9
    $region8: #{ds_discriminator_forward.17} parent=1 // pred_region
      _
    $region9: #{ds_discriminator_forward.17} parent=1 // pred_fallthru
      _
    // Predicated region
    $region10: #{ds_discriminator_forward.17} parent=1 // pred_check
      _
    $region11: #{ds_discriminator_forward.17} parent=1 // pred_check_branch
      %18 = sbr.rel (0) target = $region13
    $region12: #{ds_discriminator_forward.17} parent=1 // pred_region
      _
    $region13: #{ds_discriminator_forward.17} parent=1 // pred_fallthru
      _
    // Predicated region
    $region14: #{ds_discriminator_forward.17} parent=1 // pred_check
      _
    $region15: #{ds_discriminator_forward.17} parent=1 // pred_check_branch
      %20 = sbr.rel (0) target = $region17
    $region16: #{ds_discriminator_forward.17} parent=1 // pred_region
      _
    $region17: #{ds_discriminator_forward.17} parent=1 // pred_fallthru
      _
    // Predicated region
    $region18: #{ds_discriminator_forward.17} parent=1 // pred_check
      _
    $region19: #{ds_discriminator_forward.17} parent=1 // pred_check_branch
      %22 = sbr.rel (0) target = $region21
    $region20: #{ds_discriminator_forward.17} parent=1 // pred_region
      _
    $region21: #{ds_discriminator_forward.17} parent=1 // pred_fallthru
      _
    %v24 = vld [vmem:[%s0] sm:$0xff]
    %v25 = vld [vmem:[%s0 + $0x8] sm:$0xf]
    %v26 = vld [vmem:[%s0 + $0xc] sm:$0xff]
    %v27 = vld [vmem:[%s0 + $0x14] sm:$0xf]
    %v28 = vld [vmem:[%s0 + $0x18] sm:$0xff]
    %v29 = vld [vmem:[%s0 + $0x20] sm:$0xf]
    %v30 = vld [vmem:[%s0 + $0x24] sm:$0xff]
    %v31 = vld [vmem:[%s0 + $0x2c] sm:$0xf]
    %v32 = vld [vmem:[%s1] sm:$0xf]
    %v33 = vld [vmem:[%s1 + $0x4] sm:$0xf]
    %v34 = vld [vmem:[%s1 + $0x8] sm:$0xf]
    %v35 = vld [vmem:[%s1 + $0xc] sm:$0xf]
    %v36 = vld [vmem:[%s1 + $0x10] sm:$0xf]
    %v37 = vld [vmem:[%s1 + $0x14] sm:$0xf]
    %v38 = vld [vmem:[%s1 + $0x18] sm:$0xf]
    %v39 = vld [vmem:[%s1 + $0x1c] sm:$0xf]
    %v40 = vld [vmem:[%s1 + $0x20] sm:$0xf]
    %v41 = vld [vmem:[%s1 + $0x24] sm:$0xf]
    %v42 = vld [vmem:[%s1 + $0x28] sm:$0xf]
    %v43 = vld [vmem:[%s1 + $0x2c] sm:$0xf]
    %v44 = vld [vmem:[%s1 + $0x30] sm:$0xf]
    %v45 = vld [vmem:[%s1 + $0x34] sm:$0xf]
    %v46 = vld [vmem:[%s1 + $0x38] sm:$0xf]
    %v47 = vld [vmem:[%s1 + $0x3c] sm:$0xf]
    %v48 = vld [vmem:[%s1 + $0x40] sm:$0xf]
    %v49 = vld [vmem:[%s1 + $0x44] sm:$0xf]
    %v50 = vld [vmem:[%s1 + $0x48] sm:$0xf]
    %v51 = vld [vmem:[%s1 + $0x4c] sm:$0xf]
    %v52 = vld [vmem:[%s1 + $0x50] sm:$0xf]
    %v53 = vld [vmem:[%s1 + $0x54] sm:$0xf]
    %v54 = vld [vmem:[%s1 + $0x58] sm:$0xf]
    %v55 = vld [vmem:[%s1 + $0x5c] sm:$0xf]
    %v56 = vld [vmem:[%s1 + $0x60] sm:$0xf]
    %v57 = vld [vmem:[%s1 + $0x64] sm:$0xf]
    %v58 = vld [vmem:[%s1 + $0x68] sm:$0xf]
    %v59 = vld [vmem:[%s1 + $0x6c] sm:$0xf]
    %v60 = vld [vmem:[%s1 + $0x70] sm:$0xf]
    %v61 = vld [vmem:[%s1 + $0x74] sm:$0xf]
    %v62 = vld [vmem:[%s1 + $0x78] sm:$0xf]
    %v63 = vld [vmem:[%s1 + $0x7c] sm:$0xf]
    %v64 = vld [vmem:[%s1 + $0x80] sm:$0xf]
    %v65 = vld [vmem:[%s1 + $0x84] sm:$0xf]
    %v66 = vld [vmem:[%s1 + $0x88] sm:$0xf]
    %v67 = vld [vmem:[%s1 + $0x8c] sm:$0xf]
    %v68 = vld [vmem:[%s1 + $0x90] sm:$0xf]
    %v69 = vld [vmem:[%s1 + $0x94] sm:$0xf]
    %v70 = vld [vmem:[%s1 + $0x98] sm:$0xf]
    %v71 = vld [vmem:[%s1 + $0x9c] sm:$0xf]
    %v72 = vld [vmem:[%s1 + $0xa0] sm:$0xf]
    %v73 = vld [vmem:[%s1 + $0xa4] sm:$0xf]
    %v74 = vld [vmem:[%s1 + $0xa8] sm:$0xf]
    %v75 = vld [vmem:[%s1 + $0xac] sm:$0xf]
    %v76 = vld [vmem:[%s1 + $0xb0] sm:$0xf]
    %v77 = vld [vmem:[%s1 + $0xb4] sm:$0xf]
    %v78 = vld [vmem:[%s1 + $0xb8] sm:$0xf]
    %v79 = vld [vmem:[%s1 + $0xbc] sm:$0xf]
    %v88 = vunpack.c.l.b16 %v24
    %v89 = vunpack.c.h.b16 %v24
    %v90 = vunpack.c.l.b16 %v25
    %v91 = vunpack.c.l.b16 %v26
    %v92 = vunpack.c.h.b16 %v26
    %v93 = vunpack.c.l.b16 %v27
    %v94 = vunpack.c.l.b16 %v28
    %v95 = vunpack.c.h.b16 %v28
    %v96 = vunpack.c.l.b16 %v29
    %v97 = vunpack.c.l.b16 %v30
    %v98 = vunpack.c.h.b16 %v30
    %v99 = vunpack.c.l.b16 %v31
    %v100 = vpack.c.b16 %v91, %v88
    %v101 = vpack.c.b16 %v92, %v89
    %v102 = vpack.c.b16 %v93, %v90
    %v103 = vpack.c.b16 %v97, %v94
    %v104 = vpack.c.b16 %v98, %v95
    %v105 = vpack.c.b16 %v99, %v96
    %v160 = vunpack.c.l.b16 %v32
    %v161 = vunpack.c.l.b16 %v33
    %v162 = vunpack.c.l.b16 %v34
    %v163 = vunpack.c.l.b16 %v35
    %v164 = vunpack.c.l.b16 %v36
    %v165 = vunpack.c.l.b16 %v37
    %v166 = vunpack.c.l.b16 %v38
    %v167 = vunpack.c.l.b16 %v39
    %v168 = vunpack.c.l.b16 %v40
    %v169 = vunpack.c.l.b16 %v41
    %v170 = vunpack.c.l.b16 %v42
    %v171 = vunpack.c.l.b16 %v43
    %v172 = vunpack.c.l.b16 %v44
    %v173 = vunpack.c.l.b16 %v45
    %v174 = vunpack.c.l.b16 %v46
    %v175 = vunpack.c.l.b16 %v47
    %v176 = vunpack.c.l.b16 %v48
    %v177 = vunpack.c.l.b16 %v49
    %v178 = vunpack.c.l.b16 %v50
    %v179 = vunpack.c.l.b16 %v51
    %v180 = vunpack.c.l.b16 %v52
    %v181 = vunpack.c.l.b16 %v53
    %v182 = vunpack.c.l.b16 %v54
    %v183 = vunpack.c.l.b16 %v55
    %v184 = vunpack.c.l.b16 %v56
    %v185 = vunpack.c.l.b16 %v57
    %v186 = vunpack.c.l.b16 %v58
    %v187 = vunpack.c.l.b16 %v59
    %v188 = vunpack.c.l.b16 %v60
    %v189 = vunpack.c.l.b16 %v61
    %v190 = vunpack.c.l.b16 %v62
    %v191 = vunpack.c.l.b16 %v63
    %v192 = vunpack.c.l.b16 %v64
    %v193 = vunpack.c.l.b16 %v65
    %v194 = vunpack.c.l.b16 %v66
    %v195 = vunpack.c.l.b16 %v67
    %v196 = vunpack.c.l.b16 %v68
    %v197 = vunpack.c.l.b16 %v69
    %v198 = vunpack.c.l.b16 %v70
    %v199 = vunpack.c.l.b16 %v71
    %v200 = vunpack.c.l.b16 %v72
    %v201 = vunpack.c.l.b16 %v73
    %v202 = vunpack.c.l.b16 %v74
    %v203 = vunpack.c.l.b16 %v75
    %v204 = vunpack.c.l.b16 %v76
    %v205 = vunpack.c.l.b16 %v77
    %v206 = vunpack.c.l.b16 %v78
    %v207 = vunpack.c.l.b16 %v79
    %v208 = vpack.c.b16 %v161, %v160
    %v209 = vpack.c.b16 %v163, %v162
    %v210 = vpack.c.b16 %v165, %v164
    %v211 = vpack.c.b16 %v167, %v166
    %v212 = vpack.c.b16 %v169, %v168
    %v213 = vpack.c.b16 %v171, %v170
    %v214 = vpack.c.b16 %v173, %v172
    %v215 = vpack.c.b16 %v175, %v174
    %v216 = vpack.c.b16 %v177, %v176
    %v217 = vpack.c.b16 %v179, %v178
    %v218 = vpack.c.b16 %v181, %v180
    %v219 = vpack.c.b16 %v183, %v182
    %v220 = vpack.c.b16 %v185, %v184
    %v221 = vpack.c.b16 %v187, %v186
    %v222 = vpack.c.b16 %v189, %v188
    %v223 = vpack.c.b16 %v191, %v190
    %v224 = vpack.c.b16 %v193, %v192
    %v225 = vpack.c.b16 %v195, %v194
    %v226 = vpack.c.b16 %v197, %v196
    %v227 = vpack.c.b16 %v199, %v198
    %v228 = vpack.c.b16 %v201, %v200
    %v229 = vpack.c.b16 %v203, %v202
    %v230 = vpack.c.b16 %v205, %v204
    %v231 = vpack.c.b16 %v207, %v206
    %256 = vmatprep.subr.bf16.mxu0 0
    %257 = vmatpush1.bf16.msra.mxu0 %v215
    %258 = vmatprep.subr.bf16.mxu0 0
    %259 = vmatpush1.bf16.msra.mxu0 %v214
    %260 = vmatprep.subr.bf16.mxu0 0
    %261 = vmatpush1.bf16.msra.mxu0 %v213
    %262 = vmatprep.subr.bf16.mxu0 0
    %263 = vmatpush1.bf16.msra.mxu0 %v212
    %264 = vmatprep.subr.bf16.mxu0 0
    %265 = vmatpush1.bf16.msra.mxu0 %v211
    %266 = vmatprep.subr.bf16.mxu0 0
    %267 = vmatpush1.bf16.msra.mxu0 %v210
    %268 = vmatprep.subr.bf16.mxu0 0
    %269 = vmatpush1.bf16.msra.mxu0 %v209
    %270 = vmatprep.subr.bf16.mxu0 0
    %271 = vmatpush1.bf16.msra.mxu0 %v208
    %272 = vmatprep.subr.bf16.mxu0 0
    %273 = vmatpush2.bf16.msra.mxu0 %v223
    %274 = vmatprep.subr.bf16.mxu0 0
    %275 = vmatpush2.bf16.msra.mxu0 %v222
    %276 = vmatprep.subr.bf16.mxu0 0
    %277 = vmatpush2.bf16.msra.mxu0 %v221
    %278 = vmatprep.subr.bf16.mxu0 0
    %279 = vmatpush2.bf16.msra.mxu0 %v220
    %280 = vmatprep.subr.bf16.mxu0 0
    %281 = vmatpush2.bf16.msra.mxu0 %v219
    %282 = vmatprep.subr.bf16.mxu0 0
    %283 = vmatpush2.bf16.msra.mxu0 %v218
    %284 = vmatprep.subr.bf16.mxu0 0
    %285 = vmatpush2.bf16.msra.mxu0 %v217
    %286 = vmatprep.subr.bf16.mxu0 0
    %287 = vmatpush2.bf16.msra.mxu0 %v216
    %288 = vmatprep.mubr.bf16.mxu0 %v101
    %289 = vmatmul.mubr.bf16.gmra.mxu0 %v100
    %v290 = vpop.f32.mrf.mxu0
    %v291 = vadd.f32 0.0, %v290
    %v292 = vpop.f32.mrf.mxu0
    %v293 = vpop.f32.mrf.mxu0
    %v294 = vadd.f32 0.0, %v293
    %v295 = vpop.f32.mrf.mxu0
    %296 = vmatprep.mubr.bf16.mxu0 %v104
    %297 = vmatmul.mubr.bf16.gmra.mxu0 %v103
    %v298 = vpop.f32.mrf.mxu0
    %v299 = vadd.f32 0.0, %v298
    %v300 = vpop.f32.mrf.mxu0
    %v301 = vpop.f32.mrf.mxu0
    %v302 = vadd.f32 0.0, %v301
    %v303 = vpop.f32.mrf.mxu0
    %304 = vdwg.mxu0
    %305 = vmatprep.subr.bf16.mxu0 0
    %306 = vmatpush1.bf16.msra.mxu0 %v231
    %307 = vmatprep.subr.bf16.mxu0 0
    %308 = vmatpush1.bf16.msra.mxu0 %v230
    %309 = vmatprep.subr.bf16.mxu0 0
    %310 = vmatpush1.bf16.msra.mxu0 %v229
    %311 = vmatprep.subr.bf16.mxu0 0
    %312 = vmatpush1.bf16.msra.mxu0 %v228
    %313 = vmatprep.subr.bf16.mxu0 0
    %314 = vmatpush1.bf16.msra.mxu0 %v227
    %315 = vmatprep.subr.bf16.mxu0 0
    %316 = vmatpush1.bf16.msra.mxu0 %v226
    %317 = vmatprep.subr.bf16.mxu0 0
    %318 = vmatpush1.bf16.msra.mxu0 %v225
    %319 = vmatprep.subr.bf16.mxu0 0
    %320 = vmatpush1.bf16.msra.mxu0 %v224
    %321 = vmatprep.subr.bf16.mxu0 0
    %322 = vmatpush2.bf16.msra.mxu0 0
    %323 = vmatprep.subr.bf16.mxu0 0
    %324 = vmatpush2.bf16.msra.mxu0 0
    %325 = vmatprep.subr.bf16.mxu0 0
    %326 = vmatpush2.bf16.msra.mxu0 0
    %327 = vmatprep.subr.bf16.mxu0 0
    %328 = vmatpush2.bf16.msra.mxu0 0
    %329 = vmatprep.subr.bf16.mxu0 0
    %330 = vmatpush2.bf16.msra.mxu0 0
    %331 = vmatprep.subr.bf16.mxu0 0
    %332 = vmatpush2.bf16.msra.mxu0 0
    %333 = vmatprep.subr.bf16.mxu0 0
    %334 = vmatpush2.bf16.msra.mxu0 0
    %335 = vmatprep.subr.bf16.mxu0 0
    %336 = vmatpush2.bf16.msra.mxu0 0
    %337 = vmatprep.mubr.bf16.mxu0 0
    %338 = vmatmul.mubr.bf16.gmra.mxu0 %v102
    %v339 = vpop.f32.mrf.mxu0
    %v340 = vadd.f32 %v291, %v339
    %v341 = vpop.f32.mrf.mxu0
    %v342 = vpop.f32.mrf.mxu0
    %v343 = vadd.f32 %v294, %v342
    %v344 = vpop.f32.mrf.mxu0
    %345 = vmatprep.mubr.bf16.mxu0 0
    %346 = vmatmul.mubr.bf16.gmra.mxu0 %v105
    %v347 = vpop.f32.mrf.mxu0
    %v348 = vadd.f32 %v299, %v347
    %v349 = vpop.f32.mrf.mxu0
    %v350 = vpop.f32.mrf.mxu0
    %v351 = vadd.f32 %v302, %v350
    %v352 = vpop.f32.mrf.mxu0
    %353 = vdwg.mxu0
    %v354 = vld [vmem:[%s2] sm:$0xff]
    %v355 = vld [vmem:[%s2 + $0x8] sm:$0xff]
    %v356 = vld [vmem:[%s2 + $0x10] sm:$0xff]
    %v357 = vld [vmem:[%s2 + $0x18] sm:$0xff]
    %s358 = scalar_lea.vmem %s2, 32
    %v359 = vld [vmem:[%s358] sm:$0xff]
    %v360 = vld [vmem:[%s358 + $0x8] sm:$0xff]
    %v361 = vld [vmem:[%s358 + $0x10] sm:$0xff]
    %v362 = vld [vmem:[%s358 + $0x18] sm:$0xff]
    %v363 = vld [vmem:[%s3] sm:$0xff]
    %v364 = vld [vmem:[%s3 + $0x8] sm:$0xff]
    %v365 = vld [vmem:[%s3 + $0x10] sm:$0xff]
    %v366 = vld [vmem:[%s3 + $0x18] sm:$0xff]
    %vm367 = vcmask 130048
    %v368 = vsel %vm367, %v340, 0.0
    %369 = vadd.xlane.f32.xlu0 %v368
    %v370 = vpop.xlane.xlu0 %369
    %v371 = vsel %vm367, %v343, 0.0
    %372 = vadd.xlane.f32.xlu0 %v371
    %v373 = vpop.xlane.xlu0 %372
    %v374 = vsel %vm367, %v348, 0.0
    %375 = vadd.xlane.f32.xlu0 %v374
    %v376 = vpop.xlane.xlu0 %375
    %v377 = vsel %vm367, %v351, 0.0
    %378 = vadd.xlane.f32.xlu0 %v377
    %v379 = vpop.xlane.xlu0 %378
    %v380 = vrcp.pop 16.0
    %v381 = vmul.f32 %v370, %v380
    %v382 = vmul.f32 %v373, %v380
    %v383 = vmul.f32 %v376, %v380
    %v384 = vmul.f32 %v379, %v380
    %v385 = vsub.f32 %v340, %v381
    %v386 = vsub.f32 %v343, %v382
    %v387 = vsub.f32 %v348, %v383
    %v388 = vsub.f32 %v351, %v384
    %v389 = vmul.f32 %v385, %v385
    %v390 = vmul.f32 %v386, %v386
    %v391 = vmul.f32 %v387, %v387
    %v392 = vmul.f32 %v388, %v388
    %v393 = vsel %vm367, %v389, 0.0
    %394 = vadd.xlane.f32.xlu0 %v393
    %v395 = vpop.xlane.xlu0 %394
    %v396 = vsel %vm367, %v390, 0.0
    %397 = vadd.xlane.f32.xlu0 %v396
    %v398 = vpop.xlane.xlu0 %397
    %v399 = vsel %vm367, %v391, 0.0
    %400 = vadd.xlane.f32.xlu0 %v399
    %v401 = vpop.xlane.xlu0 %400
    %v402 = vsel %vm367, %v392, 0.0
    %403 = vadd.xlane.f32.xlu0 %v402
    %v404 = vpop.xlane.xlu0 %403
    %v405 = vmul.f32 %v395, %v380
    %v406 = vmul.f32 %v398, %v380
    %v407 = vmul.f32 %v401, %v380
    %v408 = vmul.f32 %v404, %v380
    %v409 = vadd.f32 %v405, 1e-05
    %v410 = vadd.f32 %v406, 1e-05
    %v411 = vadd.f32 %v407, 1e-05
    %v412 = vadd.f32 %v408, 1e-05
    %v413 = vrsqrt.pop %v409
    %v414 = vrsqrt.pop %v410
    %v415 = vrsqrt.pop %v411
    %v416 = vrsqrt.pop %v412
    %v417 = vmul.f32 %v385, %v413
    %v418 = vmul.f32 %v386, %v414
    %v419 = vmul.f32 %v387, %v415
    %v420 = vmul.f32 %v388, %v416
    %422 = vset.pattern.permute.xlu0 0
    %423 = vperm.xlu0 %422, %v354
    %v424 = vpop.permute.xlu0 %423
    %427 = vset.pattern.permute.xlu0 0
    %428 = vperm.xlu0 %427, %v355
    %v429 = vpop.permute.xlu0 %428
    %432 = vset.pattern.permute.xlu0 0
    %433 = vperm.xlu0 %432, %v356
    %v434 = vpop.permute.xlu0 %433
    %437 = vset.pattern.permute.xlu0 0
    %438 = vperm.xlu0 %437, %v357
    %v439 = vpop.permute.xlu0 %438
    %v441 = vmul.f32 %v417, %v424
    %v442 = vmul.f32 %v418, %v429
    %v443 = vmul.f32 %v419, %v434
    %v444 = vmul.f32 %v420, %v439
    %446 = vset.pattern.permute.xlu0 0
    %447 = vperm.xlu0 %446, %v359
    %v448 = vpop.permute.xlu0 %447
    %451 = vset.pattern.permute.xlu0 0
    %452 = vperm.xlu0 %451, %v360
    %v453 = vpop.permute.xlu0 %452
    %456 = vset.pattern.permute.xlu0 0
    %457 = vperm.xlu0 %456, %v361
    %v458 = vpop.permute.xlu0 %457
    %461 = vset.pattern.permute.xlu0 0
    %462 = vperm.xlu0 %461, %v362
    %v463 = vpop.permute.xlu0 %462
    %v465 = vadd.f32 %v441, %v448
    %v466 = vadd.f32 %v442, %v453
    %v467 = vadd.f32 %v443, %v458
    %v468 = vadd.f32 %v444, %v463
    %vm469 = vcmp.ge.f32.partialorder %v465, 0.0
    %vm470 = vcmp.ge.f32.partialorder %v466, 0.0
    %vm471 = vcmp.ge.f32.partialorder %v467, 0.0
    %vm472 = vcmp.ge.f32.partialorder %v468, 0.0
    %v473 = vmul.f32 %v465, 0.2
    %v474 = vmul.f32 %v466, 0.2
    %v475 = vmul.f32 %v467, 0.2
    %v476 = vmul.f32 %v468, 0.2
    %v477 = vsel %vm469, %v465, %v473
    %v478 = vsel %vm470, %v466, %v474
    %v479 = vsel %vm471, %v467, %v475
    %v480 = vsel %vm472, %v468, %v476
    %v481 = vmul.f32 %v363, %v477
    %v482 = vmul.f32 %v364, %v478
    %v483 = vmul.f32 %v365, %v479
    %v484 = vmul.f32 %v366, %v480
    %v485 = vsel %vm367, %v481, 0.0
    %486 = vadd.xlane.f32.xlu0 %v485
    %v487 = vpop.xlane.xlu0 %486
    %v488 = vsel %vm367, %v482, 0.0
    %489 = vadd.xlane.f32.xlu0 %v488
    %v490 = vpop.xlane.xlu0 %489
    %v491 = vsel %vm367, %v483, 0.0
    %492 = vadd.xlane.f32.xlu0 %v491
    %v493 = vpop.xlane.xlu0 %492
    %v494 = vsel %vm367, %v484, 0.0
    %495 = vadd.xlane.f32.xlu0 %v494
    %v496 = vpop.xlane.xlu0 %495
    %v497 = vadd.f32 %v487, %v490
    %v498 = vadd.f32 %v497, %v493
    %v499 = vadd.f32 %v498, %v496
    %v500 = vrot.slane %v499, 4
    %v501 = vadd.f32 %v499, %v500
    %v502 = vrot.slane %v501, 2
    %v503 = vadd.f32 %v501, %v502
    %v504 = vrot.slane %v503, 1
    %v505 = vadd.f32 %v503, %v504
    %510 = vrot.lane.b32.xlu0 %v340, 112
    %v511 = vpop.permute.xlu0 %510
    %512 = vrot.lane.b32.xlu0 %v343, 112
    %v513 = vpop.permute.xlu0 %512
    %514 = vrot.lane.b32.xlu0 %v348, 112
    %v515 = vpop.permute.xlu0 %514
    %516 = vrot.lane.b32.xlu0 %v351, 112
    %v517 = vpop.permute.xlu0 %516
    %v522 = vsel %vm367, %v511, 0.0
    %523 = vadd.xlane.f32.xlu0 %v522
    %v524 = vpop.xlane.xlu0 %523
    %v525 = vsel %vm367, %v513, 0.0
    %526 = vadd.xlane.f32.xlu0 %v525
    %v527 = vpop.xlane.xlu0 %526
    %v528 = vsel %vm367, %v515, 0.0
    %529 = vadd.xlane.f32.xlu0 %v528
    %v530 = vpop.xlane.xlu0 %529
    %v531 = vsel %vm367, %v517, 0.0
    %532 = vadd.xlane.f32.xlu0 %v531
    %v533 = vpop.xlane.xlu0 %532
    %v534 = vmul.f32 %v524, %v380
    %v535 = vmul.f32 %v527, %v380
    %v536 = vmul.f32 %v530, %v380
    %v537 = vmul.f32 %v533, %v380
    %v538 = vsub.f32 %v340, %v534
    %v539 = vsub.f32 %v343, %v535
    %v540 = vsub.f32 %v348, %v536
    %v541 = vsub.f32 %v351, %v537
    %v542 = vmul.f32 %v538, %v538
    %v543 = vmul.f32 %v539, %v539
    %v544 = vmul.f32 %v540, %v540
    %v545 = vmul.f32 %v541, %v541
    %550 = vrot.lane.b32.xlu0 %v542, 112
    %v551 = vpop.permute.xlu0 %550
    %552 = vrot.lane.b32.xlu0 %v543, 112
    %v553 = vpop.permute.xlu0 %552
    %554 = vrot.lane.b32.xlu0 %v544, 112
    %v555 = vpop.permute.xlu0 %554
    %556 = vrot.lane.b32.xlu0 %v545, 112
    %v557 = vpop.permute.xlu0 %556
    %v562 = vsel %vm367, %v551, 0.0
    %563 = vadd.xlane.f32.xlu0 %v562
    %v564 = vpop.xlane.xlu0 %563
    %v565 = vsel %vm367, %v553, 0.0
    %566 = vadd.xlane.f32.xlu0 %v565
    %v567 = vpop.xlane.xlu0 %566
    %v568 = vsel %vm367, %v555, 0.0
    %569 = vadd.xlane.f32.xlu0 %v568
    %v570 = vpop.xlane.xlu0 %569
    %v571 = vsel %vm367, %v557, 0.0
    %572 = vadd.xlane.f32.xlu0 %v571
    %v573 = vpop.xlane.xlu0 %572
    %v574 = vmul.f32 %v564, %v380
    %v575 = vmul.f32 %v567, %v380
    %v576 = vmul.f32 %v570, %v380
    %v577 = vmul.f32 %v573, %v380
    %v578 = vadd.f32 %v574, 1e-05
    %v579 = vadd.f32 %v575, 1e-05
    %v580 = vadd.f32 %v576, 1e-05
    %v581 = vadd.f32 %v577, 1e-05
    %v582 = vrsqrt.pop %v578
    %v583 = vrsqrt.pop %v579
    %v584 = vrsqrt.pop %v580
    %v585 = vrsqrt.pop %v581
    %v586 = vmul.f32 %v538, %v582
    %v587 = vmul.f32 %v539, %v583
    %v588 = vmul.f32 %v540, %v584
    %v589 = vmul.f32 %v541, %v585
    %v590 = vmul.f32 %v586, %v424
    %v591 = vmul.f32 %v587, %v429
    %v592 = vmul.f32 %v588, %v434
    %v593 = vmul.f32 %v589, %v439
    %v594 = vadd.f32 %v590, %v448
    %v595 = vadd.f32 %v591, %v453
    %v596 = vadd.f32 %v592, %v458
    %v597 = vadd.f32 %v593, %v463
    %vm598 = vcmp.ge.f32.partialorder %v594, 0.0
    %vm599 = vcmp.ge.f32.partialorder %v595, 0.0
    %vm600 = vcmp.ge.f32.partialorder %v596, 0.0
    %vm601 = vcmp.ge.f32.partialorder %v597, 0.0
    %v602 = vmul.f32 %v594, 0.2
    %v603 = vmul.f32 %v595, 0.2
    %v604 = vmul.f32 %v596, 0.2
    %v605 = vmul.f32 %v597, 0.2
    %v606 = vsel %vm598, %v594, %v602
    %v607 = vsel %vm599, %v595, %v603
    %v608 = vsel %vm600, %v596, %v604
    %v609 = vsel %vm601, %v597, %v605
    %614 = vrot.lane.b32.xlu0 %v606, 112
    %v615 = vpop.permute.xlu0 %614
    %616 = vrot.lane.b32.xlu0 %v607, 112
    %v617 = vpop.permute.xlu0 %616
    %618 = vrot.lane.b32.xlu0 %v608, 112
    %v619 = vpop.permute.xlu0 %618
    %620 = vrot.lane.b32.xlu0 %v609, 112
    %v621 = vpop.permute.xlu0 %620
    %v626 = vmul.f32 %v363, %v615
    %v627 = vmul.f32 %v364, %v617
    %v628 = vmul.f32 %v365, %v619
    %v629 = vmul.f32 %v366, %v621
    %v630 = vsel %vm367, %v626, 0.0
    %631 = vadd.xlane.f32.xlu0 %v630
    %v632 = vpop.xlane.xlu0 %631
    %v633 = vsel %vm367, %v627, 0.0
    %634 = vadd.xlane.f32.xlu0 %v633
    %v635 = vpop.xlane.xlu0 %634
    %v636 = vsel %vm367, %v628, 0.0
    %637 = vadd.xlane.f32.xlu0 %v636
    %v638 = vpop.xlane.xlu0 %637
    %v639 = vsel %vm367, %v629, 0.0
    %640 = vadd.xlane.f32.xlu0 %v639
    %v641 = vpop.xlane.xlu0 %640
    %v642 = vadd.f32 %v632, %v635
    %v643 = vadd.f32 %v642, %v638
    %v644 = vadd.f32 %v643, %v641
    %v645 = vrot.slane %v644, 4
    %v646 = vadd.f32 %v644, %v645
    %v647 = vrot.slane %v646, 2
    %v648 = vadd.f32 %v646, %v647
    %v649 = vrot.slane %v648, 1
    %v650 = vadd.f32 %v648, %v649
    %vm651 = vcmask 7168
    %v652 = vsel %vm651, %v505, %v650
    %v653 = vld [vmem:[#allocation2] sm:$0x1]
    %655 = vset.pattern.permute.xlu0 0
    %656 = vperm.xlu0 %655, %v653
    %v657 = vpop.permute.xlu0 %656
    %v659 = vlaneseq
    %v660 = vshrl.u32 %v659, 7
    %v661 = vsub.s32 0, %v660
    %v662 = vrot.slane %v657, %v661
    %v663 = vadd.f32 %v652, %v662
    %vm664 = vcmask 8192
    %665 = vst.msk [vmem:[#allocation3] sm:$0x1] %vm664, %v663
    // Predicated region
    $region22: #{ds_discriminator_forward.17} parent=1 // pred_check
      _
    $region23: #{ds_discriminator_forward.17} parent=1 // pred_check_branch
      %667 = sbr.rel (0) target = $region25
    $region24: #{ds_discriminator_forward.17} parent=1 // pred_region
      %s669 = ssub.s32 16, 16
      %670 = vsyncadd [#allocation4], %s669
      %s672 = sshll.u32 [#allocation3], 4
      %s673 = int_to_ptr.vmem [resolvable:$true] %s672
      %675 = dma.vmem_to_hbm [thread:$0]  %s673, 16, %s5, [#allocation4]
    $region25: #{ds_discriminator_forward.17} parent=1 // pred_fallthru
      _
    // Predicated region
    $region26: #{ds_discriminator_forward.17} parent=1 // pred_check
      _
    $region27: #{ds_discriminator_forward.17} parent=1 // pred_check_branch
      %677 = sbr.rel (0) target = $region29
    $region28: #{ds_discriminator_forward.17} parent=1 // pred_region
      %678 = dma.done [#allocation4], 16
    $region29: #{ds_discriminator_forward.17} parent=1 // pred_fallthru
      _
    %679 = vsyncpa [#allocation4], 1

</llo_original>
